<compile_context>
chip_gen: v6e
topology: v6e:2x2x1
jax: 0.10.0
libtpu: 0.0.40
codegen_flags: <defaults>
</compile_context>

<pallas_src>
import functools
import math

import jax
import jax.numpy as jnp
import numpy as np
from jax.experimental import pallas as pl
from jax.experimental.pallas import tpu as pltpu


def _round_up(a, m):
    return -(-a // m) * m


def _conv_transpose_kernel(x_ref, w_ref, b_ref, o_ref, *,
                           s, kh_sub, kw_sub, tqh, qw, cout, scale, lane_dense):
    """One grid step: all s*s residue outputs for one (batch, output-row-tile).

    x_ref: (1, 1, TQH+KH-1, Qw+KW-1, Cin)  undilated, zero-padded input row slab
    w_ref: (s*s*KH, KW*Cin, Cout)          flipped sub-kernels (bf16, unscaled)
    b_ref: (1, Cout)                       bias
    o_ref: (s, s, 1, TQH, Qw*Cout)         [lane_dense]  or (s, s, 1, TQH, Qw, Cout)
    """
    slab = x_ref[0, 0]                               # (slab_rows, Wp, Cin)
    cin = slab.shape[-1]
    kdim = kw_sub * cin

    # Partial im2col over the width taps, hoisted out of every residue / row-tap loop:
    #   im2col[r, q, bw*Cin + ci] = slab[r, q + bw, ci]      (bf16 operands for the MXU)
    im2col = jnp.concatenate(
        [slab[:, bw:bw + qw, :] for bw in range(kw_sub)], axis=-1
    ).astype(jnp.bfloat16)                           # (slab_rows, Qw, KW*Cin)

    # One (M, K) LHS per row tap; static slices, reshape only merges leading dims.
    lhs = [im2col[ah:ah + tqh].reshape(tqh * qw, kdim) for ah in range(kh_sub)]

    w_all = w_ref[...]                               # (s*s*KH, KW*Cin, Cout) bf16
    bias = b_ref[...].astype(jnp.float32)            # (1, Cout)

    for rh in range(s):                              # small static unroll (s*s residues)
        for rw in range(s):
            base = (rh * s + rw) * kh_sub
            acc = jnp.zeros((tqh * qw, cout), jnp.float32)
            for ah in range(kh_sub):
                acc += jnp.dot(lhs[ah], w_all[base + ah],
                               preferred_element_type=jnp.float32)
            # Equal-LR scale + bias in the f32 epilogue, cast once at the store.
            res = (acc * scale + bias).reshape(tqh, qw, cout)
            if lane_dense:
                # Merge (Qw, Cout) into the lane axis -> dense vector stores.
                res = res.reshape(tqh, qw * cout)
            o_ref[rh, rw, 0] = res.astype(o_ref.dtype)


def equal_conv_transpose2d(x, weight, bias, *, stride=1, padding=0):
    """Forward of EqualConvTranspose2d.

    x:      (N, Cin, H, W)       NCHW, like the PyTorch module
    weight: (Cin, Cout, kH, kW)  raw (unscaled) ConvTranspose2d weight
    bias:   (Cout,)
    """
    n, cin, h, w = x.shape
    wcin, cout, kh, kw = weight.shape
    assert wcin == cin, "weight in_channels mismatch"
    s, p = int(stride), int(padding)
    # TODO(synk): output_padding, dilation and groups of nn.ConvTranspose2d not implemented.

    ho = (h - 1) * s - 2 * p + kh
    wo = (w - 1) * s - 2 * p + kw
    assert ho > 0 and wo > 0, "non-positive output size"

    # Equal-LR: fan_in = weight.size(1) * weight[0][0].numel() = Cout * kH * kW
    scale = math.sqrt(2.0 / (cout * kh * kw))

    # ---- sub-pixel decomposition (wrapper-side weight packing; tiny tensors) ---------
    kh_sub, kw_sub = -(-kh // s), -(-kw // s)        # taps per residue (ceil)
    # Zero-pad kernel spatially so every residue has the same number of taps.
    w_p = jnp.pad(weight, ((0, 0), (0, 0), (0, kh_sub * s - kh), (0, kw_sub * s - kw)))
    # (Cin,Cout,KH,s,KW,s) -> flip row/col taps -> (rh,rw,ah,bw,Cin,Cout) -> pack (bf16)
    w_r = w_p.reshape(cin, cout, kh_sub, s, kw_sub, s)
    w_f = w_r[:, :, ::-1, :, ::-1, :]
    w_packed = jnp.transpose(w_f, (3, 5, 2, 4, 0, 1)).reshape(
        s * s * kh_sub, kw_sub * cin, cout).astype(jnp.bfloat16)
    b2 = bias.reshape(1, cout).astype(jnp.float32)

    # Residue-grid ("full", p=0) output sizes; final crop by p handles the padding.
    qh, qw = h + kh_sub - 1, w + kw_sub - 1
    qw_pad = _round_up(qw, 8)                        # sublane/lane friendly width

    # ---- row tile: multiple of 8, ~512 MXU rows, bounded VMEM -------------------------
    tqh = min(_round_up(qh, 8), _round_up(max(8, -(-512 // qw_pad)), 8))
    esize = x.dtype.itemsize

    def _block_bytes(t):
        slab = (t + kh_sub - 1) * (qw_pad + kw_sub - 1) * cin * esize
        outb = s * s * t * qw_pad * cout * 4
        wb = s * s * kh_sub * kw_sub * cin * cout * 2
        tmp = (kh_sub + 1) * (t + kh_sub - 1) * qw_pad * kw_sub * cin * 2 \
            + 2 * t * qw_pad * cout * 4
        return 2 * (slab + outb + wb) + tmp          # inputs/outputs double-buffered

    while tqh > 8 and _block_bytes(tqh) > 12 * 1024 * 1024:
        tqh -= 8
    qh_pad = _round_up(qh, tqh)
    n_tiles = qh_pad // tqh
    slab_rows = tqh + kh_sub - 1
    wp_pad = qw_pad + kw_sub - 1
    hp_pad = qh_pad + kh_sub - 1

    # ---- input plumbing: NHWC, zero-pad, overlapping row slabs (halo in HBM) ----------
    # TODO(synk): accept NHWC at the model boundary to drop this transpose entirely.
    x_nhwc = jnp.transpose(x, (0, 2, 3, 1))
    x_padded = jnp.pad(
        x_nhwc,
        ((0, 0),
         (kh_sub - 1, hp_pad - h - (kh_sub - 1)),
         (kw_sub - 1, wp_pad - w - (kw_sub - 1)),
         (0, 0)))
    row_idx = (jnp.arange(n_tiles) * tqh)[:, None] + jnp.arange(slab_rows)[None, :]
    x_slabs = jnp.take(x_padded, row_idx, axis=1)    # (N, n_tiles, slab_rows, Wp, Cin)

    # Conservative VMEM budget: v7x has 64 MiB physical per core -> leave headroom.
    vmem_limit = int(min(48 * 1024 * 1024,
                         max(32 * 1024 * 1024, 4 * _block_bytes(tqh))))

    def _call(lane_dense):
        if lane_dense:
            out_shape = (s, s, n, qh_pad, qw_pad * cout)
            out_block = (s, s, 1, tqh, qw_pad * cout)
            out_map = lambda b, t: (0, 0, b, t, 0)
        else:
            out_shape = (s, s, n, qh_pad, qw_pad, cout)
            out_block = (s, s, 1, tqh, qw_pad, cout)
            out_map = lambda b, t: (0, 0, b, t, 0, 0)
        kernel = functools.partial(
            _conv_transpose_kernel, s=s, kh_sub=kh_sub, kw_sub=kw_sub,
            tqh=tqh, qw=qw_pad, cout=cout, scale=scale, lane_dense=lane_dense)
        out = pl.pallas_call(
            kernel,
            out_shape=jax.ShapeDtypeStruct(out_shape, x.dtype),
            grid_spec=pltpu.PrefetchScalarGridSpec(
                num_scalar_prefetch=0,
                grid=(n, n_tiles),
                in_specs=[
                    # Bounded input row slab (with halo) for this (batch, row-tile).
                    pl.BlockSpec((1, 1, slab_rows, wp_pad, cin),
                                 lambda b, t: (b, t, 0, 0, 0)),
                    # Packed sub-kernels: resident (block index never changes).
                    pl.BlockSpec((s * s * kh_sub, kw_sub * cin, cout),
                                 lambda b, t: (0, 0, 0)),
                    pl.BlockSpec((1, cout), lambda b, t: (0, 0)),
                ],
                out_specs=pl.BlockSpec(out_block, out_map),
            ),
            compiler_params=pltpu.CompilerParams(
                dimension_semantics=("parallel", "parallel"),
                vmem_limit_bytes=vmem_limit),
        )(x_slabs, w_packed, b2)
        out = jax.block_until_ready(out)             # surface compile errors here
        if lane_dense:
            out = out.reshape(s, s, n, qh_pad, qw_pad, cout)
        return out

    try:
        out6 = _call(lane_dense=True)
    except Exception:
        # Fallback if this Mosaic build rejects the minor-dim-merging relayout that the
        # lane-dense store layout requires; same math, (TQH, Qw, Cout)-shaped stores.
        out6 = _call(lane_dense=False)

    # Interleave the s*s residues and convert to NCHW in one fused transpose, then crop
    # the transposed-conv padding (and the wrapper-side row/width alignment padding).
    out_full = jnp.transpose(out6, (2, 5, 3, 0, 4, 1)).reshape(
        n, cout, qh_pad * s, qw_pad * s)
    return out_full[:, :, p:p + ho, p:p + wo]


def equal_conv_transpose2d_ref(x, weight, bias, *, stride=1, padding=0):
    """Direct numpy (float64) transcription of the PyTorch ConvTranspose2d definition."""
    x = np.asarray(x, np.float64)
    w = np.asarray(weight, np.float64)
    b = np.asarray(bias, np.float64)
    n, cin, h, ww = x.shape
    _, cout, kh, kw = w.shape
    w = w * math.sqrt(2.0 / (cout * kh * kw))        # equal-lr scaling
    s, p = stride, padding
    ho, wo = (h - 1) * s - 2 * p + kh, (ww - 1) * s - 2 * p + kw
    out = np.zeros((n, cout, ho, wo), np.float64)
    for ih in range(h):
        for iw in range(ww):
            contrib = np.einsum("nc,cdab->ndab", x[:, :, ih, iw], w)   # (N, Cout, kH, kW)
            for a in range(kh):
                oh = ih * s - p + a
                if oh < 0 or oh >= ho:
                    continue
                for bb in range(kw):
                    ow = iw * s - p + bb
                    if ow < 0 or ow >= wo:
                        continue
                    out[:, :, oh, ow] += contrib[:, :, a, bb]
    return out + b[None, :, None, None]


if __name__ == "__main__":
    key = jax.random.PRNGKey(0)
    kx, kwt, kb = jax.random.split(key, 3)

    N, CIN, H, W = 2, 4, 16, 16
    COUT, K, STRIDE, PAD = 8, 4, 2, 1                # classic 2x-upsampling transposed conv

    x = jax.random.normal(kx, (N, CIN, H, W), jnp.float32)
    weight = jax.random.normal(kwt, (CIN, COUT, K, K), jnp.float32)   # conv.weight.data.normal_()
    # The module zero-inits the bias; a small random bias exercises the bias-add path
    # while keeping the same forward semantics (out = conv_transpose(x, W*scale) + b).
    bias = 0.1 * jax.random.normal(kb, (COUT,), jnp.float32)

    out = equal_conv_transpose2d(x, weight, bias, stride=STRIDE, padding=PAD)
    out = jax.block_until_ready(out)

    ref = equal_conv_transpose2d_ref(x, weight, bias, stride=STRIDE, padding=PAD)

    assert out.shape == ref.shape, (out.shape, ref.shape)
    assert out.dtype == x.dtype
    # bf16 MXU operands with f32 accumulation -> bf16-level tolerance vs float64 ref.
    np.testing.assert_allclose(np.asarray(out), ref, atol=2e-2, rtol=2e-2)
    print("KERNEL_OK")
</pallas_src>

<mosaic_0001>
module attributes {stable_mosaic.version = 11 : i64} {
  func.func @_conv_transpose_kernel(%arg0: i32, %arg1: i32, %arg2: memref<1x1x25x25x4xf32, #tpu.memory_space<vmem>>, %arg3: memref<8x8x8xbf16, #tpu.memory_space<vmem>>, %arg4: memref<1x8xf32, #tpu.memory_space<vmem>>, %arg5: memref<2x2x1x24x192xf32, #tpu.memory_space<vmem>>) attributes {dimension_semantics = [#tpu.dimension_semantics<parallel>, #tpu.dimension_semantics<parallel>], iteration_bounds = array<i64: 2, 1>, scalar_prefetch = 0 : i64, scratch_operands = 0 : i64, tpu.core_type = #tpu.core_type<tc>, window_params = [{transform_indices = @transform_0, window_bounds = array<i64: 1, 1, 25, 25, 4>}, {pipeline_mode = #tpu.pipeline_mode<synchronous>, transform_indices = @transform_1, window_bounds = array<i64: 8, 8, 8>}, {pipeline_mode = #tpu.pipeline_mode<synchronous>, transform_indices = @transform_2, window_bounds = array<i64: 1, 8>}, {transform_indices = @transform_3, window_bounds = array<i64: 2, 2, 1, 24, 192>}]} {
    %c0 = arith.constant 0 : index
    %c0_0 = arith.constant 0 : index
    %c0_1 = arith.constant 0 : index
    %c0_2 = arith.constant 0 : index
    %c0_3 = arith.constant 0 : index
    %0 = vector.load %arg2[%c0, %c0_0, %c0_1, %c0_2, %c0_3] : memref<1x1x25x25x4xf32, #tpu.memory_space<vmem>>, vector<1x1x25x25x4xf32>
    %1 = vector.shape_cast %0 : vector<1x1x25x25x4xf32> to vector<25x25x4xf32>
    %2 = vector.extract_strided_slice %1 {offsets = [0, 0, 0], sizes = [25, 24, 4], strides = [1, 1, 1]} : vector<25x25x4xf32> to vector<25x24x4xf32>
    %3 = vector.extract_strided_slice %1 {offsets = [0, 1, 0], sizes = [25, 24, 4], strides = [1, 1, 1]} : vector<25x25x4xf32> to vector<25x24x4xf32>
    %4 = tpu.concatenate %2, %3 in 2 : vector<25x24x4xf32>, vector<25x24x4xf32> -> vector<25x24x8xf32>
    %5 = arith.truncf %4 : vector<25x24x8xf32> to vector<25x24x8xbf16>
    %6 = vector.extract_strided_slice %5 {offsets = [0, 0, 0], sizes = [24, 24, 8], strides = [1, 1, 1]} : vector<25x24x8xbf16> to vector<24x24x8xbf16>
    %7 = vector.shape_cast %6 : vector<24x24x8xbf16> to vector<576x8xbf16>
    %8 = vector.extract_strided_slice %5 {offsets = [1, 0, 0], sizes = [24, 24, 8], strides = [1, 1, 1]} : vector<25x24x8xbf16> to vector<24x24x8xbf16>
    %9 = vector.shape_cast %8 : vector<24x24x8xbf16> to vector<576x8xbf16>
    %c0_4 = arith.constant 0 : index
    %c0_5 = arith.constant 0 : index
    %c0_6 = arith.constant 0 : index
    %10 = vector.load %arg3[%c0_4, %c0_5, %c0_6] : memref<8x8x8xbf16, #tpu.memory_space<vmem>>, vector<8x8x8xbf16>
    %c0_7 = arith.constant 0 : index
    %c0_8 = arith.constant 0 : index
    %11 = vector.load %arg4[%c0_7, %c0_8] : memref<1x8xf32, #tpu.memory_space<vmem>>, vector<1x8xf32>
    %cst = arith.constant 0.000000e+00 : f32
    %12 = vector.broadcast %cst : f32 to vector<576x8xf32>
    %13 = vector.extract_strided_slice %10 {offsets = [0, 0, 0], sizes = [1, 8, 8], strides = [1, 1, 1]} : vector<8x8x8xbf16> to vector<1x8x8xbf16>
    %14 = vector.shape_cast %13 : vector<1x8x8xbf16> to vector<8x8xbf16>
    %cst_9 = arith.constant dense<0.000000e+00> : vector<576x8xf32>
    %15 = tpu.matmul %7, %14, %cst_9 {dimension_numbers = #tpu.dot_dimension_numbers<[1], [0], [0], [1], [0, 0, 1, 1], [], []>} : vector<576x8xbf16>, vector<8x8xbf16>, vector<576x8xf32> -> vector<576x8xf32>
    %16 = arith.addf %12, %15 : vector<576x8xf32>
    %17 = vector.extract_strided_slice %10 {offsets = [1, 0, 0], sizes = [1, 8, 8], strides = [1, 1, 1]} : vector<8x8x8xbf16> to vector<1x8x8xbf16>
    %18 = vector.shape_cast %17 : vector<1x8x8xbf16> to vector<8x8xbf16>
    %cst_10 = arith.constant dense<0.000000e+00> : vector<576x8xf32>
    %19 = tpu.matmul %9, %18, %cst_10 {dimension_numbers = #tpu.dot_dimension_numbers<[1], [0], [0], [1], [0, 0, 1, 1], [], []>} : vector<576x8xbf16>, vector<8x8xbf16>, vector<576x8xf32> -> vector<576x8xf32>
    %20 = arith.addf %16, %19 : vector<576x8xf32>
    %cst_11 = arith.constant 1.250000e-01 : f32
    %21 = vector.broadcast %cst_11 : f32 to vector<576x8xf32>
    %22 = arith.mulf %20, %21 : vector<576x8xf32>
    %23 = vector.broadcast %11 : vector<1x8xf32> to vector<576x8xf32>
    %24 = arith.addf %22, %23 : vector<576x8xf32>
    %25 = vector.shape_cast %24 : vector<576x8xf32> to vector<24x24x8xf32>
    %26 = vector.shape_cast %25 : vector<24x24x8xf32> to vector<24x192xf32>
    %c0_12 = arith.constant 0 : index
    %c0_13 = arith.constant 0 : index
    %c0_14 = arith.constant 0 : index
    %c0_15 = arith.constant 0 : index
    %c0_16 = arith.constant 0 : index
    %27 = vector.load %arg5[%c0_12, %c0_13, %c0_14, %c0_15, %c0_16] : memref<2x2x1x24x192xf32, #tpu.memory_space<vmem>>, vector<1x1x1x24x192xf32>
    %28 = vector.shape_cast %27 : vector<1x1x1x24x192xf32> to vector<24x192xf32>
    %29 = vector.shape_cast %26 : vector<24x192xf32> to vector<1x1x1x24x192xf32>
    tpu.vector_store %arg5[%c0_12, %c0_13, %c0_14, %c0_15, %c0_16], %29 {strides = array<i32>} : memref<2x2x1x24x192xf32, #tpu.memory_space<vmem>>, vector<1x1x1x24x192xf32>,
    %cst_17 = arith.constant 0.000000e+00 : f32
    %30 = vector.broadcast %cst_17 : f32 to vector<576x8xf32>
    %31 = vector.extract_strided_slice %10 {offsets = [2, 0, 0], sizes = [1, 8, 8], strides = [1, 1, 1]} : vector<8x8x8xbf16> to vector<1x8x8xbf16>
    %32 = vector.shape_cast %31 : vector<1x8x8xbf16> to vector<8x8xbf16>
    %cst_18 = arith.constant dense<0.000000e+00> : vector<576x8xf32>
    %33 = tpu.matmul %7, %32, %cst_18 {dimension_numbers = #tpu.dot_dimension_numbers<[1], [0], [0], [1], [0, 0, 1, 1], [], []>} : vector<576x8xbf16>, vector<8x8xbf16>, vector<576x8xf32> -> vector<576x8xf32>
    %34 = arith.addf %30, %33 : vector<576x8xf32>
    %35 = vector.extract_strided_slice %10 {offsets = [3, 0, 0], sizes = [1, 8, 8], strides = [1, 1, 1]} : vector<8x8x8xbf16> to vector<1x8x8xbf16>
    %36 = vector.shape_cast %35 : vector<1x8x8xbf16> to vector<8x8xbf16>
    %cst_19 = arith.constant dense<0.000000e+00> : vector<576x8xf32>
    %37 = tpu.matmul %9, %36, %cst_19 {dimension_numbers = #tpu.dot_dimension_numbers<[1], [0], [0], [1], [0, 0, 1, 1], [], []>} : vector<576x8xbf16>, vector<8x8xbf16>, vector<576x8xf32> -> vector<576x8xf32>
    %38 = arith.addf %34, %37 : vector<576x8xf32>
    %cst_20 = arith.constant 1.250000e-01 : f32
    %39 = vector.broadcast %cst_20 : f32 to vector<576x8xf32>
    %40 = arith.mulf %38, %39 : vector<576x8xf32>
    %41 = vector.broadcast %11 : vector<1x8xf32> to vector<576x8xf32>
    %42 = arith.addf %40, %41 : vector<576x8xf32>
    %43 = vector.shape_cast %42 : vector<576x8xf32> to vector<24x24x8xf32>
    %44 = vector.shape_cast %43 : vector<24x24x8xf32> to vector<24x192xf32>
    %c0_21 = arith.constant 0 : index
    %c1 = arith.constant 1 : index
    %c0_22 = arith.constant 0 : index
    %c0_23 = arith.constant 0 : index
    %c0_24 = arith.constant 0 : index
    %45 = vector.load %arg5[%c0_21, %c1, %c0_22, %c0_23, %c0_24] : memref<2x2x1x24x192xf32, #tpu.memory_space<vmem>>, vector<1x1x1x24x192xf32>
    %46 = vector.shape_cast %45 : vector<1x1x1x24x192xf32> to vector<24x192xf32>
    %47 = vector.shape_cast %44 : vector<24x192xf32> to vector<1x1x1x24x192xf32>
    tpu.vector_store %arg5[%c0_21, %c1, %c0_22, %c0_23, %c0_24], %47 {strides = array<i32>} : memref<2x2x1x24x192xf32, #tpu.memory_space<vmem>>, vector<1x1x1x24x192xf32>,
    %cst_25 = arith.constant 0.000000e+00 : f32
    %48 = vector.broadcast %cst_25 : f32 to vector<576x8xf32>
    %49 = vector.extract_strided_slice %10 {offsets = [4, 0, 0], sizes = [1, 8, 8], strides = [1, 1, 1]} : vector<8x8x8xbf16> to vector<1x8x8xbf16>
    %50 = vector.shape_cast %49 : vector<1x8x8xbf16> to vector<8x8xbf16>
    %cst_26 = arith.constant dense<0.000000e+00> : vector<576x8xf32>
    %51 = tpu.matmul %7, %50, %cst_26 {dimension_numbers = #tpu.dot_dimension_numbers<[1], [0], [0], [1], [0, 0, 1, 1], [], []>} : vector<576x8xbf16>, vector<8x8xbf16>, vector<576x8xf32> -> vector<576x8xf32>
    %52 = arith.addf %48, %51 : vector<576x8xf32>
    %53 = vector.extract_strided_slice %10 {offsets = [5, 0, 0], sizes = [1, 8, 8], strides = [1, 1, 1]} : vector<8x8x8xbf16> to vector<1x8x8xbf16>
    %54 = vector.shape_cast %53 : vector<1x8x8xbf16> to vector<8x8xbf16>
    %cst_27 = arith.constant dense<0.000000e+00> : vector<576x8xf32>
    %55 = tpu.matmul %9, %54, %cst_27 {dimension_numbers = #tpu.dot_dimension_numbers<[1], [0], [0], [1], [0, 0, 1, 1], [], []>} : vector<576x8xbf16>, vector<8x8xbf16>, vector<576x8xf32> -> vector<576x8xf32>
    %56 = arith.addf %52, %55 : vector<576x8xf32>
    %cst_28 = arith.constant 1.250000e-01 : f32
    %57 = vector.broadcast %cst_28 : f32 to vector<576x8xf32>
    %58 = arith.mulf %56, %57 : vector<576x8xf32>
    %59 = vector.broadcast %11 : vector<1x8xf32> to vector<576x8xf32>
    %60 = arith.addf %58, %59 : vector<576x8xf32>
    %61 = vector.shape_cast %60 : vector<576x8xf32> to vector<24x24x8xf32>
    %62 = vector.shape_cast %61 : vector<24x24x8xf32> to vector<24x192xf32>
    %c1_29 = arith.constant 1 : index
    %c0_30 = arith.constant 0 : index
    %c0_31 = arith.constant 0 : index
    %c0_32 = arith.constant 0 : index
    %c0_33 = arith.constant 0 : index
    %63 = vector.load %arg5[%c1_29, %c0_30, %c0_31, %c0_32, %c0_33] : memref<2x2x1x24x192xf32, #tpu.memory_space<vmem>>, vector<1x1x1x24x192xf32>
    %64 = vector.shape_cast %63 : vector<1x1x1x24x192xf32> to vector<24x192xf32>
    %65 = vector.shape_cast %62 : vector<24x192xf32> to vector<1x1x1x24x192xf32>
    tpu.vector_store %arg5[%c1_29, %c0_30, %c0_31, %c0_32, %c0_33], %65 {strides = array<i32>} : memref<2x2x1x24x192xf32, #tpu.memory_space<vmem>>, vector<1x1x1x24x192xf32>,
    %cst_34 = arith.constant 0.000000e+00 : f32
    %66 = vector.broadcast %cst_34 : f32 to vector<576x8xf32>
    %67 = vector.extract_strided_slice %10 {offsets = [6, 0, 0], sizes = [1, 8, 8], strides = [1, 1, 1]} : vector<8x8x8xbf16> to vector<1x8x8xbf16>
    %68 = vector.shape_cast %67 : vector<1x8x8xbf16> to vector<8x8xbf16>
    %cst_35 = arith.constant dense<0.000000e+00> : vector<576x8xf32>
    %69 = tpu.matmul %7, %68, %cst_35 {dimension_numbers = #tpu.dot_dimension_numbers<[1], [0], [0], [1], [0, 0, 1, 1], [], []>} : vector<576x8xbf16>, vector<8x8xbf16>, vector<576x8xf32> -> vector<576x8xf32>
    %70 = arith.addf %66, %69 : vector<576x8xf32>
    %71 = vector.extract_strided_slice %10 {offsets = [7, 0, 0], sizes = [1, 8, 8], strides = [1, 1, 1]} : vector<8x8x8xbf16> to vector<1x8x8xbf16>
    %72 = vector.shape_cast %71 : vector<1x8x8xbf16> to vector<8x8xbf16>
    %cst_36 = arith.constant dense<0.000000e+00> : vector<576x8xf32>
    %73 = tpu.matmul %9, %72, %cst_36 {dimension_numbers = #tpu.dot_dimension_numbers<[1], [0], [0], [1], [0, 0, 1, 1], [], []>} : vector<576x8xbf16>, vector<8x8xbf16>, vector<576x8xf32> -> vector<576x8xf32>
    %74 = arith.addf %70, %73 : vector<576x8xf32>
    %cst_37 = arith.constant 1.250000e-01 : f32
    %75 = vector.broadcast %cst_37 : f32 to vector<576x8xf32>
    %76 = arith.mulf %74, %75 : vector<576x8xf32>
    %77 = vector.broadcast %11 : vector<1x8xf32> to vector<576x8xf32>
    %78 = arith.addf %76, %77 : vector<576x8xf32>
    %79 = vector.shape_cast %78 : vector<576x8xf32> to vector<24x24x8xf32>
    %80 = vector.shape_cast %79 : vector<24x24x8xf32> to vector<24x192xf32>
    %c1_38 = arith.constant 1 : index
    %c1_39 = arith.constant 1 : index
    %c0_40 = arith.constant 0 : index
    %c0_41 = arith.constant 0 : index
    %c0_42 = arith.constant 0 : index
    %81 = vector.load %arg5[%c1_38, %c1_39, %c0_40, %c0_41, %c0_42] : memref<2x2x1x24x192xf32, #tpu.memory_space<vmem>>, vector<1x1x1x24x192xf32>
    %82 = vector.shape_cast %81 : vector<1x1x1x24x192xf32> to vector<24x192xf32>
    %83 = vector.shape_cast %80 : vector<24x192xf32> to vector<1x1x1x24x192xf32>
    tpu.vector_store %arg5[%c1_38, %c1_39, %c0_40, %c0_41, %c0_42], %83 {strides = array<i32>} : memref<2x2x1x24x192xf32, #tpu.memory_space<vmem>>, vector<1x1x1x24x192xf32>,
    return
  }
  func.func @transform_0(%arg0: i32, %arg1: i32) -> (i32, i32, i32, i32, i32) {
    %c0_i32 = arith.constant 0 : i32
    %c0_i32_0 = arith.constant 0 : i32
    %c0_i32_1 = arith.constant 0 : i32
    %c0_i32_2 = arith.constant 0 : i32
    return %arg0, %arg1, %c0_i32, %c0_i32_0, %c0_i32_1 : i32, i32, i32, i32, i32
  }
  func.func @transform_1(%arg0: i32, %arg1: i32) -> (i32, i32, i32) {
    %c0_i32 = arith.constant 0 : i32
    %c0_i32_0 = arith.constant 0 : i32
    %c0_i32_1 = arith.constant 0 : i32
    %c0_i32_2 = arith.constant 0 : i32
    return %c0_i32, %c0_i32_0, %c0_i32_1 : i32, i32, i32
  }
  func.func @transform_2(%arg0: i32, %arg1: i32) -> (i32, i32) {
    %c0_i32 = arith.constant 0 : i32
    %c0_i32_0 = arith.constant 0 : i32
    %c0_i32_1 = arith.constant 0 : i32
    return %c0_i32, %c0_i32_0 : i32, i32
  }
  func.func @transform_3(%arg0: i32, %arg1: i32) -> (i32, i32, i32, i32, i32) {
    %c0_i32 = arith.constant 0 : i32
    %c0_i32_0 = arith.constant 0 : i32
    %c0_i32_1 = arith.constant 0 : i32
    %c0_i32_2 = arith.constant 0 : i32
    return %c0_i32, %c0_i32_0, %arg0, %arg1, %c0_i32_1 : i32, i32, i32, i32, i32
  }
}

module attributes {stable_mosaic.version = 11 : i64} {
  func.func @_conv_transpose_kernel(%arg0: i32, %arg1: i32, %arg2: memref<1x1x25x25x4xf32, #tpu.memory_space<vmem>>, %arg3: memref<8x8x8xbf16, #tpu.memory_space<vmem>>, %arg4: memref<1x8xf32, #tpu.memory_space<vmem>>, %arg5: memref<2x2x1x24x24x8xf32, #tpu.memory_space<vmem>>) attributes {dimension_semantics = [#tpu.dimension_semantics<parallel>, #tpu.dimension_semantics<parallel>], iteration_bounds = array<i64: 2, 1>, scalar_prefetch = 0 : i64, scratch_operands = 0 : i64, tpu.core_type = #tpu.core_type<tc>, window_params = [{transform_indices = @transform_0, window_bounds = array<i64: 1, 1, 25, 25, 4>}, {pipeline_mode = #tpu.pipeline_mode<synchronous>, transform_indices = @transform_1, window_bounds = array<i64: 8, 8, 8>}, {pipeline_mode = #tpu.pipeline_mode<synchronous>, transform_indices = @transform_2, window_bounds = array<i64: 1, 8>}, {transform_indices = @transform_3, window_bounds = array<i64: 2, 2, 1, 24, 24, 8>}]} {
    %c0 = arith.constant 0 : index
    %c0_0 = arith.constant 0 : index
    %c0_1 = arith.constant 0 : index
    %c0_2 = arith.constant 0 : index
    %c0_3 = arith.constant 0 : index
    %0 = vector.load %arg2[%c0, %c0_0, %c0_1, %c0_2, %c0_3] : memref<1x1x25x25x4xf32, #tpu.memory_space<vmem>>, vector<1x1x25x25x4xf32>
    %1 = vector.shape_cast %0 : vector<1x1x25x25x4xf32> to vector<25x25x4xf32>
    %2 = vector.extract_strided_slice %1 {offsets = [0, 0, 0], sizes = [25, 24, 4], strides = [1, 1, 1]} : vector<25x25x4xf32> to vector<25x24x4xf32>
    %3 = vector.extract_strided_slice %1 {offsets = [0, 1, 0], sizes = [25, 24, 4], strides = [1, 1, 1]} : vector<25x25x4xf32> to vector<25x24x4xf32>
    %4 = tpu.concatenate %2, %3 in 2 : vector<25x24x4xf32>, vector<25x24x4xf32> -> vector<25x24x8xf32>
    %5 = arith.truncf %4 : vector<25x24x8xf32> to vector<25x24x8xbf16>
    %6 = vector.extract_strided_slice %5 {offsets = [0, 0, 0], sizes = [24, 24, 8], strides = [1, 1, 1]} : vector<25x24x8xbf16> to vector<24x24x8xbf16>
    %7 = vector.shape_cast %6 : vector<24x24x8xbf16> to vector<576x8xbf16>
    %8 = vector.extract_strided_slice %5 {offsets = [1, 0, 0], sizes = [24, 24, 8], strides = [1, 1, 1]} : vector<25x24x8xbf16> to vector<24x24x8xbf16>
    %9 = vector.shape_cast %8 : vector<24x24x8xbf16> to vector<576x8xbf16>
    %c0_4 = arith.constant 0 : index
    %c0_5 = arith.constant 0 : index
    %c0_6 = arith.constant 0 : index
    %10 = vector.load %arg3[%c0_4, %c0_5, %c0_6] : memref<8x8x8xbf16, #tpu.memory_space<vmem>>, vector<8x8x8xbf16>
    %c0_7 = arith.constant 0 : index
    %c0_8 = arith.constant 0 : index
    %11 = vector.load %arg4[%c0_7, %c0_8] : memref<1x8xf32, #tpu.memory_space<vmem>>, vector<1x8xf32>
    %cst = arith.constant 0.000000e+00 : f32
    %12 = vector.broadcast %cst : f32 to vector<576x8xf32>
    %13 = vector.extract_strided_slice %10 {offsets = [0, 0, 0], sizes = [1, 8, 8], strides = [1, 1, 1]} : vector<8x8x8xbf16> to vector<1x8x8xbf16>
    %14 = vector.shape_cast %13 : vector<1x8x8xbf16> to vector<8x8xbf16>
    %cst_9 = arith.constant dense<0.000000e+00> : vector<576x8xf32>
    %15 = tpu.matmul %7, %14, %cst_9 {dimension_numbers = #tpu.dot_dimension_numbers<[1], [0], [0], [1], [0, 0, 1, 1], [], []>} : vector<576x8xbf16>, vector<8x8xbf16>, vector<576x8xf32> -> vector<576x8xf32>
    %16 = arith.addf %12, %15 : vector<576x8xf32>
    %17 = vector.extract_strided_slice %10 {offsets = [1, 0, 0], sizes = [1, 8, 8], strides = [1, 1, 1]} : vector<8x8x8xbf16> to vector<1x8x8xbf16>
    %18 = vector.shape_cast %17 : vector<1x8x8xbf16> to vector<8x8xbf16>
    %cst_10 = arith.constant dense<0.000000e+00> : vector<576x8xf32>
    %19 = tpu.matmul %9, %18, %cst_10 {dimension_numbers = #tpu.dot_dimension_numbers<[1], [0], [0], [1], [0, 0, 1, 1], [], []>} : vector<576x8xbf16>, vector<8x8xbf16>, vector<576x8xf32> -> vector<576x8xf32>
    %20 = arith.addf %16, %19 : vector<576x8xf32>
    %cst_11 = arith.constant 1.250000e-01 : f32
    %21 = vector.broadcast %cst_11 : f32 to vector<576x8xf32>
    %22 = arith.mulf %20, %21 : vector<576x8xf32>
    %23 = vector.broadcast %11 : vector<1x8xf32> to vector<576x8xf32>
    %24 = arith.addf %22, %23 : vector<576x8xf32>
    %25 = vector.shape_cast %24 : vector<576x8xf32> to vector<24x24x8xf32>
    %c0_12 = arith.constant 0 : index
    %c0_13 = arith.constant 0 : index
    %c0_14 = arith.constant 0 : index
    %c0_15 = arith.constant 0 : index
    %c0_16 = arith.constant 0 : index
    %c0_17 = arith.constant 0 : index
    %26 = vector.load %arg5[%c0_12, %c0_13, %c0_14, %c0_15, %c0_16, %c0_17] : memref<2x2x1x24x24x8xf32, #tpu.memory_space<vmem>>, vector<1x1x1x24x24x8xf32>
    %27 = vector.shape_cast %26 : vector<1x1x1x24x24x8xf32> to vector<24x24x8xf32>
    %28 = vector.shape_cast %25 : vector<24x24x8xf32> to vector<1x1x1x24x24x8xf32>
    tpu.vector_store %arg5[%c0_12, %c0_13, %c0_14, %c0_15, %c0_16, %c0_17], %28 {strides = array<i32>} : memref<2x2x1x24x24x8xf32, #tpu.memory_space<vmem>>, vector<1x1x1x24x24x8xf32>,
    %cst_18 = arith.constant 0.000000e+00 : f32
    %29 = vector.broadcast %cst_18 : f32 to vector<576x8xf32>
    %30 = vector.extract_strided_slice %10 {offsets = [2, 0, 0], sizes = [1, 8, 8], strides = [1, 1, 1]} : vector<8x8x8xbf16> to vector<1x8x8xbf16>
    %31 = vector.shape_cast %30 : vector<1x8x8xbf16> to vector<8x8xbf16>
    %cst_19 = arith.constant dense<0.000000e+00> : vector<576x8xf32>
    %32 = tpu.matmul %7, %31, %cst_19 {dimension_numbers = #tpu.dot_dimension_numbers<[1], [0], [0], [1], [0, 0, 1, 1], [], []>} : vector<576x8xbf16>, vector<8x8xbf16>, vector<576x8xf32> -> vector<576x8xf32>
    %33 = arith.addf %29, %32 : vector<576x8xf32>
    %34 = vector.extract_strided_slice %10 {offsets = [3, 0, 0], sizes = [1, 8, 8], strides = [1, 1, 1]} : vector<8x8x8xbf16> to vector<1x8x8xbf16>
    %35 = vector.shape_cast %34 : vector<1x8x8xbf16> to vector<8x8xbf16>
    %cst_20 = arith.constant dense<0.000000e+00> : vector<576x8xf32>
    %36 = tpu.matmul %9, %35, %cst_20 {dimension_numbers = #tpu.dot_dimension_numbers<[1], [0], [0], [1], [0, 0, 1, 1], [], []>} : vector<576x8xbf16>, vector<8x8xbf16>, vector<576x8xf32> -> vector<576x8xf32>
    %37 = arith.addf %33, %36 : vector<576x8xf32>
    %cst_21 = arith.constant 1.250000e-01 : f32
    %38 = vector.broadcast %cst_21 : f32 to vector<576x8xf32>
    %39 = arith.mulf %37, %38 : vector<576x8xf32>
    %40 = vector.broadcast %11 : vector<1x8xf32> to vector<576x8xf32>
    %41 = arith.addf %39, %40 : vector<576x8xf32>
    %42 = vector.shape_cast %41 : vector<576x8xf32> to vector<24x24x8xf32>
    %c0_22 = arith.constant 0 : index
    %c1 = arith.constant 1 : index
    %c0_23 = arith.constant 0 : index
    %c0_24 = arith.constant 0 : index
    %c0_25 = arith.constant 0 : index
    %c0_26 = arith.constant 0 : index
    %43 = vector.load %arg5[%c0_22, %c1, %c0_23, %c0_24, %c0_25, %c0_26] : memref<2x2x1x24x24x8xf32, #tpu.memory_space<vmem>>, vector<1x1x1x24x24x8xf32>
    %44 = vector.shape_cast %43 : vector<1x1x1x24x24x8xf32> to vector<24x24x8xf32>
    %45 = vector.shape_cast %42 : vector<24x24x8xf32> to vector<1x1x1x24x24x8xf32>
    tpu.vector_store %arg5[%c0_22, %c1, %c0_23, %c0_24, %c0_25, %c0_26], %45 {strides = array<i32>} : memref<2x2x1x24x24x8xf32, #tpu.memory_space<vmem>>, vector<1x1x1x24x24x8xf32>,
    %cst_27 = arith.constant 0.000000e+00 : f32
    %46 = vector.broadcast %cst_27 : f32 to vector<576x8xf32>
    %47 = vector.extract_strided_slice %10 {offsets = [4, 0, 0], sizes = [1, 8, 8], strides = [1, 1, 1]} : vector<8x8x8xbf16> to vector<1x8x8xbf16>
    %48 = vector.shape_cast %47 : vector<1x8x8xbf16> to vector<8x8xbf16>
    %cst_28 = arith.constant dense<0.000000e+00> : vector<576x8xf32>
    %49 = tpu.matmul %7, %48, %cst_28 {dimension_numbers = #tpu.dot_dimension_numbers<[1], [0], [0], [1], [0, 0, 1, 1], [], []>} : vector<576x8xbf16>, vector<8x8xbf16>, vector<576x8xf32> -> vector<576x8xf32>
    %50 = arith.addf %46, %49 : vector<576x8xf32>
    %51 = vector.extract_strided_slice %10 {offsets = [5, 0, 0], sizes = [1, 8, 8], strides = [1, 1, 1]} : vector<8x8x8xbf16> to vector<1x8x8xbf16>
    %52 = vector.shape_cast %51 : vector<1x8x8xbf16> to vector<8x8xbf16>
    %cst_29 = arith.constant dense<0.000000e+00> : vector<576x8xf32>
    %53 = tpu.matmul %9, %52, %cst_29 {dimension_numbers = #tpu.dot_dimension_numbers<[1], [0], [0], [1], [0, 0, 1, 1], [], []>} : vector<576x8xbf16>, vector<8x8xbf16>, vector<576x8xf32> -> vector<576x8xf32>
    %54 = arith.addf %50, %53 : vector<576x8xf32>
    %cst_30 = arith.constant 1.250000e-01 : f32
    %55 = vector.broadcast %cst_30 : f32 to vector<576x8xf32>
    %56 = arith.mulf %54, %55 : vector<576x8xf32>
    %57 = vector.broadcast %11 : vector<1x8xf32> to vector<576x8xf32>
    %58 = arith.addf %56, %57 : vector<576x8xf32>
    %59 = vector.shape_cast %58 : vector<576x8xf32> to vector<24x24x8xf32>
    %c1_31 = arith.constant 1 : index
    %c0_32 = arith.constant 0 : index
    %c0_33 = arith.constant 0 : index
    %c0_34 = arith.constant 0 : index
    %c0_35 = arith.constant 0 : index
    %c0_36 = arith.constant 0 : index
    %60 = vector.load %arg5[%c1_31, %c0_32, %c0_33, %c0_34, %c0_35, %c0_36] : memref<2x2x1x24x24x8xf32, #tpu.memory_space<vmem>>, vector<1x1x1x24x24x8xf32>
    %61 = vector.shape_cast %60 : vector<1x1x1x24x24x8xf32> to vector<24x24x8xf32>
    %62 = vector.shape_cast %59 : vector<24x24x8xf32> to vector<1x1x1x24x24x8xf32>
    tpu.vector_store %arg5[%c1_31, %c0_32, %c0_33, %c0_34, %c0_35, %c0_36], %62 {strides = array<i32>} : memref<2x2x1x24x24x8xf32, #tpu.memory_space<vmem>>, vector<1x1x1x24x24x8xf32>,
    %cst_37 = arith.constant 0.000000e+00 : f32
    %63 = vector.broadcast %cst_37 : f32 to vector<576x8xf32>
    %64 = vector.extract_strided_slice %10 {offsets = [6, 0, 0], sizes = [1, 8, 8], strides = [1, 1, 1]} : vector<8x8x8xbf16> to vector<1x8x8xbf16>
    %65 = vector.shape_cast %64 : vector<1x8x8xbf16> to vector<8x8xbf16>
    %cst_38 = arith.constant dense<0.000000e+00> : vector<576x8xf32>
    %66 = tpu.matmul %7, %65, %cst_38 {dimension_numbers = #tpu.dot_dimension_numbers<[1], [0], [0], [1], [0, 0, 1, 1], [], []>} : vector<576x8xbf16>, vector<8x8xbf16>, vector<576x8xf32> -> vector<576x8xf32>
    %67 = arith.addf %63, %66 : vector<576x8xf32>
    %68 = vector.extract_strided_slice %10 {offsets = [7, 0, 0], sizes = [1, 8, 8], strides = [1, 1, 1]} : vector<8x8x8xbf16> to vector<1x8x8xbf16>
    %69 = vector.shape_cast %68 : vector<1x8x8xbf16> to vector<8x8xbf16>
    %cst_39 = arith.constant dense<0.000000e+00> : vector<576x8xf32>
    %70 = tpu.matmul %9, %69, %cst_39 {dimension_numbers = #tpu.dot_dimension_numbers<[1], [0], [0], [1], [0, 0, 1, 1], [], []>} : vector<576x8xbf16>, vector<8x8xbf16>, vector<576x8xf32> -> vector<576x8xf32>
    %71 = arith.addf %67, %70 : vector<576x8xf32>
    %cst_40 = arith.constant 1.250000e-01 : f32
    %72 = vector.broadcast %cst_40 : f32 to vector<576x8xf32>
    %73 = arith.mulf %71, %72 : vector<576x8xf32>
    %74 = vector.broadcast %11 : vector<1x8xf32> to vector<576x8xf32>
    %75 = arith.addf %73, %74 : vector<576x8xf32>
    %76 = vector.shape_cast %75 : vector<576x8xf32> to vector<24x24x8xf32>
    %c1_41 = arith.constant 1 : index
    %c1_42 = arith.constant 1 : index
    %c0_43 = arith.constant 0 : index
    %c0_44 = arith.constant 0 : index
    %c0_45 = arith.constant 0 : index
    %c0_46 = arith.constant 0 : index
    %77 = vector.load %arg5[%c1_41, %c1_42, %c0_43, %c0_44, %c0_45, %c0_46] : memref<2x2x1x24x24x8xf32, #tpu.memory_space<vmem>>, vector<1x1x1x24x24x8xf32>
    %78 = vector.shape_cast %77 : vector<1x1x1x24x24x8xf32> to vector<24x24x8xf32>
    %79 = vector.shape_cast %76 : vector<24x24x8xf32> to vector<1x1x1x24x24x8xf32>
    tpu.vector_store %arg5[%c1_41, %c1_42, %c0_43, %c0_44, %c0_45, %c0_46], %79 {strides = array<i32>} : memref<2x2x1x24x24x8xf32, #tpu.memory_space<vmem>>, vector<1x1x1x24x24x8xf32>,
    return
  }
  func.func @transform_0(%arg0: i32, %arg1: i32) -> (i32, i32, i32, i32, i32) {
    %c0_i32 = arith.constant 0 : i32
    %c0_i32_0 = arith.constant 0 : i32
    %c0_i32_1 = arith.constant 0 : i32
    %c0_i32_2 = arith.constant 0 : i32
    return %arg0, %arg1, %c0_i32, %c0_i32_0, %c0_i32_1 : i32, i32, i32, i32, i32
  }
  func.func @transform_1(%arg0: i32, %arg1: i32) -> (i32, i32, i32) {
    %c0_i32 = arith.constant 0 : i32
    %c0_i32_0 = arith.constant 0 : i32
    %c0_i32_1 = arith.constant 0 : i32
    %c0_i32_2 = arith.constant 0 : i32
    return %c0_i32, %c0_i32_0, %c0_i32_1 : i32, i32, i32
  }
  func.func @transform_2(%arg0: i32, %arg1: i32) -> (i32, i32) {
    %c0_i32 = arith.constant 0 : i32
    %c0_i32_0 = arith.constant 0 : i32
    %c0_i32_1 = arith.constant 0 : i32
    return %c0_i32, %c0_i32_0 : i32, i32
  }
  func.func @transform_3(%arg0: i32, %arg1: i32) -> (i32, i32, i32, i32, i32, i32) {
    %c0_i32 = arith.constant 0 : i32
    %c0_i32_0 = arith.constant 0 : i32
    %c0_i32_1 = arith.constant 0 : i32
    %c0_i32_2 = arith.constant 0 : i32
    %c0_i32_3 = arith.constant 0 : i32
    return %c0_i32, %c0_i32_0, %arg0, %arg1, %c0_i32_1, %c0_i32_2 : i32, i32, i32, i32, i32, i32
  }
}

</mosaic_0001>

<llo_original>
// kernel: tpu_custom_call.1
$region0: #{tpu_custom_call.1}
  #allocation0 [shape = 'u32[]', space=smem, size = 0x4, offset = 0x4, fixed_abs, tag = 'smem constant byte address 0x4 - core index']
  #allocation1 [shape = 'u32[144,128]{1,0:T(1,128)}', space=vmem, size = 0x12000, scoped, tag = 'internal scratch']
  %s0 = inlined_call_operand.vmem [shape: f32[2,1,25,25,4], index: 0, kind: input, shape index: {}]
  %s1 = inlined_call_operand.hbm [shape: bf16[8,8,8], index: 1, kind: input, shape index: {}]
  %s2 = inlined_call_operand.hbm [shape: f32[1,8], index: 2, kind: input, shape index: {}]
  %s3 = inlined_call_operand.vmem [shape: f32[2,2,2,24,24,8], index: 3, kind: output, shape index: {}]
  %s4 = sld [smem:[#allocation0]]
  $region87: #{tpu_custom_call.1} parent=0
    _
  %s6 = ssub.s32 1, %s4
  %s7 = scalar_select 0, %s6, %s4
  $region1: #{tpu_custom_call.1} parent=0
    #allocation2 [shape = 'u8[16384]{0}', space=vmem, size = 0x4000, scoped, tag = 'input window, operand 1, single buffered']
    #allocation3 [shape = 's32[2]{0}', space=sflag, size = 0x8, scoped, tag = 'scoped memory for tpu_custom_call.1']
    #allocation4 [shape = 'u8[512]{0}', space=vmem, size = 0x400, scoped, tag = 'input window, operand 2, single buffered']
    #allocation5 [shape = 's32[1]{0}', space=sflag, size = 0x4, scoped, tag = 'scoped memory for tpu_custom_call.1']
    #allocation6 [shape = 'u8[2359296]{0}', space=vmem, size = 0x240000, scoped, tag = 'output window, operand 0']
    %8 = vsyncpa [#allocation3], 0
    %9 = vsyncpa [#allocation5], 0
    loop: start=0, step=1, limit=4
    $region2: #{tpu_custom_call.1} parent=1 // loop_pre_header
      _
    $region3: #{tpu_custom_call.1} parent=1 // loop_header
      %s11 = sphi 0, %s15
      %p12 = scmp.ge.s32.totalorder %s11, 4
      %s18 = sphi 0, %s30
      %s19 = sphi 0, %s26
      %s20 = sphi 0, %s18
      %s21 = sphi 0, %s19
      %s22 = sphi 0, %s20
      %s23 = sphi 0, %s21
      %s35 = sphi 0, %s37
      %s38 = sphi 0, %s35
      %s39 = sphi 0, %s38
      %s55 = sphi 0, %s39
      %s59 = sphi 0, %s59
      %s61 = sphi 0, %s59
      %s62 = sphi 0, %s61
      %s76 = sphi 0, %s62
      %s80 = sphi 0, %s80
      %s82 = sphi 0, %s80
      %s83 = sphi 0, %s82
      %s97 = sphi 0, %s83
      %s105 = sphi 0, %s107
      %s108 = sphi 0, %s105
      %s109 = sphi 0, %s108
      %s125 = sphi 0, %s109
    $region4: #{tpu_custom_call.1} parent=1 // loop_header_branch
      %14 = sbr.rel (%p12) target = $region8
    $region5: #{tpu_custom_call.1} parent=1 // loop_body
      %s16 = ssub.s32 %s11, 1
      %s17 = ssub.s32 %s11, 2
      %s24 = sadd.s32 1, %s19
      %p25 = scmp.ge.s32.totalorder %s24, 1
      %s26 = scalar_select %p25, 0, %s24
      %s27 = sadd.s32 1, %s18
      %s28 = scalar_select %p25, %s27, %s18
      %p29 = scmp.ge.s32.totalorder %s28, 2
      %s30 = scalar_select %p29, 0, %s28
      %s31 = ssub.s32 %s18, %s30
      %s32 = ssub.s32 %s19, %s26
      %s33 = sor.u32 %s31, %s32
      %p34 = scmp.eq.s32.totalorder %s33, 0
      %s36 = sadd.s32 %s35, 1
      %s37 = scalar_select %p34, %s35, %s36
      %p40 = pneg %p34
      %p41 = scmp.eq.s32.totalorder %s11, 1
      %p42 = por %p40, %p41
      %p43 = scmp.ne.s32.totalorder %s35, %s38
      %p44 = scmp.eq.s32.totalorder %s11, 0
      %p45 = por %p43, %p44
      %p46 = scmp.ne.s32.totalorder %s35, %s38
      %p47 = scmp.eq.s32.totalorder %s16, 1
      %p48 = por %p46, %p47
      %p49 = scmp.ne.s32.totalorder %s38, %s39
      %p50 = scmp.eq.s32.totalorder %s16, 0
      %p51 = por %p49, %p50
      %p52 = scmp.ne.s32.totalorder %s38, %s39
      %p53 = scmp.eq.s32.totalorder %s17, 1
      %p54 = por %p52, %p53
      %p56 = scmp.ne.s32.totalorder %s39, %s55
      %p57 = scmp.eq.s32.totalorder %s17, 0
      %p58 = por %p56, %p57
      %s60 = sadd.s32 %s59, 1
      %p63 = scmp.eq.s32.totalorder %s11, 1
      %p64 = scmp.ne.s32.totalorder %s59, %s61
      %p65 = scmp.eq.s32.totalorder %s11, 0
      %p66 = por %p64, %p65
      %p67 = scmp.ne.s32.totalorder %s59, %s61
      %p68 = scmp.eq.s32.totalorder %s16, 1
      %p69 = por %p67, %p68
      %p70 = scmp.ne.s32.totalorder %s61, %s62
      %p71 = scmp.eq.s32.totalorder %s16, 0
      %p72 = por %p70, %p71
      %p73 = scmp.ne.s32.totalorder %s61, %s62
      %p74 = scmp.eq.s32.totalorder %s17, 1
      %p75 = por %p73, %p74
      %p77 = scmp.ne.s32.totalorder %s62, %s76
      %p78 = scmp.eq.s32.totalorder %s17, 0
      %p79 = por %p77, %p78
      %s81 = sadd.s32 %s80, 1
      %p84 = scmp.eq.s32.totalorder %s11, 1
      %p85 = scmp.ne.s32.totalorder %s80, %s82
      %p86 = scmp.eq.s32.totalorder %s11, 0
      %p87 = por %p85, %p86
      %p88 = scmp.ne.s32.totalorder %s80, %s82
      %p89 = scmp.eq.s32.totalorder %s16, 1
      %p90 = por %p88, %p89
      %p91 = scmp.ne.s32.totalorder %s82, %s83
      %p92 = scmp.eq.s32.totalorder %s16, 0
      %p93 = por %p91, %p92
      %p94 = scmp.ne.s32.totalorder %s82, %s83
      %p95 = scmp.eq.s32.totalorder %s17, 1
      %p96 = por %p94, %p95
      %p98 = scmp.ne.s32.totalorder %s83, %s97
      %p99 = scmp.eq.s32.totalorder %s17, 0
      %p100 = por %p98, %p99
      %s101 = ssub.s32 %s18, %s30
      %s102 = ssub.s32 %s19, %s26
      %s103 = sor.u32 %s101, %s102
      %p104 = scmp.eq.s32.totalorder %s103, 0
      %s106 = sadd.s32 %s105, 1
      %s107 = scalar_select %p104, %s105, %s106
      %p110 = pneg %p104
      %p111 = scmp.eq.s32.totalorder %s11, 1
      %p112 = por %p110, %p111
      %p113 = scmp.ne.s32.totalorder %s105, %s108
      %p114 = scmp.eq.s32.totalorder %s11, 0
      %p115 = por %p113, %p114
      %p116 = scmp.ne.s32.totalorder %s105, %s108
      %p117 = scmp.eq.s32.totalorder %s16, 1
      %p118 = por %p116, %p117
      %p119 = scmp.ne.s32.totalorder %s108, %s109
      %p120 = scmp.eq.s32.totalorder %s16, 0
      %p121 = por %p119, %p120
      %p122 = scmp.ne.s32.totalorder %s108, %s109
      %p123 = scmp.eq.s32.totalorder %s17, 1
      %p124 = por %p122, %p123
      %p126 = scmp.ne.s32.totalorder %s109, %s125
      %p127 = scmp.eq.s32.totalorder %s17, 0
      %p128 = por %p126, %p127
      %p129 = scmp.le.s32.totalorder 1, %s11
      %p130 = scmp.lt.s32.totalorder %s11, 3
      %p131 = pnand %p129, %p130
      %p132 = pneg %p131
      // Predicated region
      $region9: #{tpu_custom_call.1} parent=5 // pred_check
        _
      $region10: #{tpu_custom_call.1} parent=5 // pred_check_branch
        %134 = sbr.rel (%p131) target = $region12
      $region11: #{tpu_custom_call.1} parent=5 // pred_region
        %s135 = ssub.s32 %s11, 1
        // Predicated region
        $region13: #{tpu_custom_call.1} parent=11 // pred_check
          %p136 = pneg %p72
        $region14: #{tpu_custom_call.1} parent=11 // pred_check_branch
          %138 = sbr.rel (%p136) target = $region16
        $region15: #{tpu_custom_call.1} parent=11 // pred_region
          %s140 = ssub.s32 512, 512
          %141 = vsyncadd [#allocation3], %s140
          %s142 = sshll.u32 [#allocation2], 4
          %s143 = int_to_ptr.vmem [resolvable:$true] %s142
          %148 = dma.hbm_to_vmem [thread:$0]  %s1, 512, %s143, [#allocation3], 64, 64, 4
        $region16: #{tpu_custom_call.1} parent=11 // pred_fallthru
          _
        // Predicated region
        $region17: #{tpu_custom_call.1} parent=11 // pred_check
          %p149 = pneg %p93
        $region18: #{tpu_custom_call.1} parent=11 // pred_check_branch
          %151 = sbr.rel (%p149) target = $region20
        $region19: #{tpu_custom_call.1} parent=11 // pred_region
          %s153 = ssub.s32 16, 16
          %154 = vsyncadd [#allocation5], %s153
          %s156 = sshll.u32 [#allocation4], 4
          %s157 = int_to_ptr.vmem [resolvable:$true] %s156
          %159 = dma.hbm_to_vmem [thread:$0]  %s2, 16, %s157, [#allocation5]
        $region20: #{tpu_custom_call.1} parent=11 // pred_fallthru
          _
      $region12: #{tpu_custom_call.1} parent=5 // pred_fallthru
        _
      %p160 = scmp.lt.s32.totalorder %s11, 2
      // Predicated region
      $region21: #{tpu_custom_call.1} parent=5 // pred_check
        %p161 = pneg %p160
      $region22: #{tpu_custom_call.1} parent=5 // pred_check_branch
        %163 = sbr.rel (%p161) target = $region24
      $region23: #{tpu_custom_call.1} parent=5 // pred_region
        // Predicated region
        $region25: #{tpu_custom_call.1} parent=23 // pred_check
          %p164 = pneg %p45
        $region26: #{tpu_custom_call.1} parent=23 // pred_check_branch
          %166 = sbr.rel (%p164) target = $region28
        $region27: #{tpu_custom_call.1} parent=23 // pred_region
          %p167 = scmp.lt.s32.totalorder %s18, 1
          %s168 = scalar_select %p167, %s18, 1
          %p169 = scmp.lt.s32.totalorder %s19, 0
          %s170 = scalar_select %p169, %s19, 0
          %s171 = smul.addr %s170, 100
          %s172 = smul.addr %s168, 100
          %s173 = sadd.s32 %s171, %s172
          %s174 = smul.addr %s173, 8
          %s175 = scalar_lea.vmem %s0, %s174
        $region28: #{tpu_custom_call.1} parent=23 // pred_fallthru
          _
      $region24: #{tpu_custom_call.1} parent=5 // pred_fallthru
        _
      %p176 = scmp.le.s32.totalorder 1, %s11
      %p177 = scmp.lt.s32.totalorder %s11, 3
      %p178 = pnand %p176, %p177
      %p179 = pneg %p178
      // Predicated region
      $region29: #{tpu_custom_call.1} parent=5 // pred_check
        _
      $region30: #{tpu_custom_call.1} parent=5 // pred_check_branch
        %181 = sbr.rel (%p178) target = $region32
      $region31: #{tpu_custom_call.1} parent=5 // pred_region
        %s182 = ssub.s32 %s11, 1
        // Predicated region
        $region33: #{tpu_custom_call.1} parent=31 // pred_check
          %p183 = pneg %p72
        $region34: #{tpu_custom_call.1} parent=31 // pred_check_branch
          %185 = sbr.rel (%p183) target = $region36
        $region35: #{tpu_custom_call.1} parent=31 // pred_region
          %186 = dma.done [#allocation3], 512
        $region36: #{tpu_custom_call.1} parent=31 // pred_fallthru
          _
        // Predicated region
        $region37: #{tpu_custom_call.1} parent=31 // pred_check
          %p187 = pneg %p93
        $region38: #{tpu_custom_call.1} parent=31 // pred_check_branch
          %189 = sbr.rel (%p187) target = $region40
        $region39: #{tpu_custom_call.1} parent=31 // pred_region
          %190 = dma.done [#allocation5], 16
        $region40: #{tpu_custom_call.1} parent=31 // pred_fallthru
          _
        %p191 = scmp.lt.s32.totalorder %s20, 1
        %s192 = scalar_select %p191, %s20, 1
        %p193 = scmp.lt.s32.totalorder %s21, 0
        %s194 = scalar_select %p193, %s21, 0
        %s195 = smul.addr %s194, 100
        %s196 = smul.addr %s192, 100
        %s197 = sadd.s32 %s195, %s196
        %s198 = smul.addr %s197, 8
        %s199 = scalar_lea.vmem %s0, %s198
        %p200 = pneg %p51
        %p201 = pneg %p48
        %p202 = pneg %p72
        %p203 = pneg %p69
        %p204 = pneg %p93
        %p205 = pneg %p90
        %p206 = pneg %p121
        %p207 = pneg %p118
        %s208 = sand.u32 %s108, 1
        %s209 = sand.u32 %s108, 1
        %s210 = smul.addr %s209, 2304
        %s211 = scalar_lea.vmem [#allocation6], %s210
        %p212 = scmp.lt.s32.totalorder %s20, 1
        %s213 = scalar_select %p212, %s20, 1
        %p214 = scmp.lt.s32.totalorder %s21, 0
        %s215 = scalar_select %p214, %s21, 0
        %s216 = smul.addr %s215, 100
        %s217 = smul.addr %s213, 100
        %s218 = sadd.s32 %s216, %s217
        %s219 = smul.addr %s218, 8
        %s220 = scalar_lea.vmem %s0, %s219
        %s221 = smul.u32 24, %s21
        %v223 = vld [vmem:[%s220] sm:$0xff]
        %v224 = vld [vmem:[%s220 + $0x8] sm:$0xff]
        %v225 = vld [vmem:[%s220 + $0x10] sm:$0xff]
        %v226 = vld [vmem:[%s220 + $0x18] sm:$0x1]
        %v227 = vld [vmem:[%s220 + $0x20] sm:$0xff]
        %v228 = vld [vmem:[%s220 + $0x28] sm:$0xff]
        %v229 = vld [vmem:[%s220 + $0x30] sm:$0xff]
        %v230 = vld [vmem:[%s220 + $0x38] sm:$0x1]
        %v231 = vld [vmem:[%s220 + $0x40] sm:$0xff]
        %v232 = vld [vmem:[%s220 + $0x48] sm:$0xff]
        %v233 = vld [vmem:[%s220 + $0x50] sm:$0xff]
        %v234 = vld [vmem:[%s220 + $0x58] sm:$0x1]
        %v235 = vld [vmem:[%s220 + $0x60] sm:$0xff]
        %v236 = vld [vmem:[%s220 + $0x68] sm:$0xff]
        %v237 = vld [vmem:[%s220 + $0x70] sm:$0xff]
        %v238 = vld [vmem:[%s220 + $0x78] sm:$0x1]
        %v239 = vld [vmem:[%s220 + $0x80] sm:$0xff]
        %v240 = vld [vmem:[%s220 + $0x88] sm:$0xff]
        %v241 = vld [vmem:[%s220 + $0x90] sm:$0xff]
        %v242 = vld [vmem:[%s220 + $0x98] sm:$0x1]
        %v243 = vld [vmem:[%s220 + $0xa0] sm:$0xff]
        %v244 = vld [vmem:[%s220 + $0xa8] sm:$0xff]
        %v245 = vld [vmem:[%s220 + $0xb0] sm:$0xff]
        %v246 = vld [vmem:[%s220 + $0xb8] sm:$0x1]
        %v247 = vld [vmem:[%s220 + $0xc0] sm:$0xff]
        %v248 = vld [vmem:[%s220 + $0xc8] sm:$0xff]
        %v249 = vld [vmem:[%s220 + $0xd0] sm:$0xff]
        %v250 = vld [vmem:[%s220 + $0xd8] sm:$0x1]
        %v251 = vld [vmem:[%s220 + $0xe0] sm:$0xff]
        %v252 = vld [vmem:[%s220 + $0xe8] sm:$0xff]
        %v253 = vld [vmem:[%s220 + $0xf0] sm:$0xff]
        %v254 = vld [vmem:[%s220 + $0xf8] sm:$0x1]
        %v255 = vld [vmem:[%s220 + $0x100] sm:$0xff]
        %v256 = vld [vmem:[%s220 + $0x108] sm:$0xff]
        %v257 = vld [vmem:[%s220 + $0x110] sm:$0xff]
        %v258 = vld [vmem:[%s220 + $0x118] sm:$0x1]
        %v259 = vld [vmem:[%s220 + $0x120] sm:$0xff]
        %v260 = vld [vmem:[%s220 + $0x128] sm:$0xff]
        %v261 = vld [vmem:[%s220 + $0x130] sm:$0xff]
        %v262 = vld [vmem:[%s220 + $0x138] sm:$0x1]
        %v263 = vld [vmem:[%s220 + $0x140] sm:$0xff]
        %v264 = vld [vmem:[%s220 + $0x148] sm:$0xff]
        %v265 = vld [vmem:[%s220 + $0x150] sm:$0xff]
        %v266 = vld [vmem:[%s220 + $0x158] sm:$0x1]
        %v267 = vld [vmem:[%s220 + $0x160] sm:$0xff]
        %v268 = vld [vmem:[%s220 + $0x168] sm:$0xff]
        %v269 = vld [vmem:[%s220 + $0x170] sm:$0xff]
        %v270 = vld [vmem:[%s220 + $0x178] sm:$0x1]
        %v271 = vld [vmem:[%s220 + $0x180] sm:$0xff]
        %v272 = vld [vmem:[%s220 + $0x188] sm:$0xff]
        %v273 = vld [vmem:[%s220 + $0x190] sm:$0xff]
        %v274 = vld [vmem:[%s220 + $0x198] sm:$0x1]
        %v275 = vld [vmem:[%s220 + $0x1a0] sm:$0xff]
        %v276 = vld [vmem:[%s220 + $0x1a8] sm:$0xff]
        %v277 = vld [vmem:[%s220 + $0x1b0] sm:$0xff]
        %v278 = vld [vmem:[%s220 + $0x1b8] sm:$0x1]
        %v279 = vld [vmem:[%s220 + $0x1c0] sm:$0xff]
        %v280 = vld [vmem:[%s220 + $0x1c8] sm:$0xff]
        %v281 = vld [vmem:[%s220 + $0x1d0] sm:$0xff]
        %v282 = vld [vmem:[%s220 + $0x1d8] sm:$0x1]
        %v283 = vld [vmem:[%s220 + $0x1e0] sm:$0xff]
        %v284 = vld [vmem:[%s220 + $0x1e8] sm:$0xff]
        %v285 = vld [vmem:[%s220 + $0x1f0] sm:$0xff]
        %v286 = vld [vmem:[%s220 + $0x1f8] sm:$0x1]
        %v287 = vld [vmem:[%s220 + $0x200] sm:$0xff]
        %v288 = vld [vmem:[%s220 + $0x208] sm:$0xff]
        %v289 = vld [vmem:[%s220 + $0x210] sm:$0xff]
        %v290 = vld [vmem:[%s220 + $0x218] sm:$0x1]
        %v291 = vld [vmem:[%s220 + $0x220] sm:$0xff]
        %v292 = vld [vmem:[%s220 + $0x228] sm:$0xff]
        %v293 = vld [vmem:[%s220 + $0x230] sm:$0xff]
        %v294 = vld [vmem:[%s220 + $0x238] sm:$0x1]
        %v295 = vld [vmem:[%s220 + $0x240] sm:$0xff]
        %v296 = vld [vmem:[%s220 + $0x248] sm:$0xff]
        %v297 = vld [vmem:[%s220 + $0x250] sm:$0xff]
        %v298 = vld [vmem:[%s220 + $0x258] sm:$0x1]
        %v299 = vld [vmem:[%s220 + $0x260] sm:$0xff]
        %v300 = vld [vmem:[%s220 + $0x268] sm:$0xff]
        %v301 = vld [vmem:[%s220 + $0x270] sm:$0xff]
        %v302 = vld [vmem:[%s220 + $0x278] sm:$0x1]
        %v303 = vld [vmem:[%s220 + $0x280] sm:$0xff]
        %v304 = vld [vmem:[%s220 + $0x288] sm:$0xff]
        %v305 = vld [vmem:[%s220 + $0x290] sm:$0xff]
        %v306 = vld [vmem:[%s220 + $0x298] sm:$0x1]
        %v307 = vld [vmem:[%s220 + $0x2a0] sm:$0xff]
        %v308 = vld [vmem:[%s220 + $0x2a8] sm:$0xff]
        %v309 = vld [vmem:[%s220 + $0x2b0] sm:$0xff]
        %v310 = vld [vmem:[%s220 + $0x2b8] sm:$0x1]
        %v311 = vld [vmem:[%s220 + $0x2c0] sm:$0xff]
        %v312 = vld [vmem:[%s220 + $0x2c8] sm:$0xff]
        %v313 = vld [vmem:[%s220 + $0x2d0] sm:$0xff]
        %v314 = vld [vmem:[%s220 + $0x2d8] sm:$0x1]
        %v315 = vld [vmem:[%s220 + $0x2e0] sm:$0xff]
        %v316 = vld [vmem:[%s220 + $0x2e8] sm:$0xff]
        %v317 = vld [vmem:[%s220 + $0x2f0] sm:$0xff]
        %v318 = vld [vmem:[%s220 + $0x2f8] sm:$0x1]
        %v319 = vld [vmem:[%s220 + $0x300] sm:$0xff]
        %v320 = vld [vmem:[%s220 + $0x308] sm:$0xff]
        %v321 = vld [vmem:[%s220 + $0x310] sm:$0xff]
        %v322 = vld [vmem:[%s220 + $0x318] sm:$0x1]
        %vm423 = vcmask 1046528
        %v424 = vrot.slane %v223, 1
        %v425 = vrot.slane %v224, 1
        %v426 = vsel %vm423, %v424, %v425
        %v427 = vrot.slane %v225, 1
        %v428 = vsel %vm423, %v425, %v427
        %v429 = vrot.slane %v226, 1
        %v430 = vsel %vm423, %v427, %v429
        %v431 = vrot.slane %v227, 1
        %v432 = vrot.slane %v228, 1
        %v433 = vsel %vm423, %v431, %v432
        %v434 = vrot.slane %v229, 1
        %v435 = vsel %vm423, %v432, %v434
        %v436 = vrot.slane %v230, 1
        %v437 = vsel %vm423, %v434, %v436
        %v438 = vrot.slane %v231, 1
        %v439 = vrot.slane %v232, 1
        %v440 = vsel %vm423, %v438, %v439
        %v441 = vrot.slane %v233, 1
        %v442 = vsel %vm423, %v439, %v441
        %v443 = vrot.slane %v234, 1
        %v444 = vsel %vm423, %v441, %v443
        %v445 = vrot.slane %v235, 1
        %v446 = vrot.slane %v236, 1
        %v447 = vsel %vm423, %v445, %v446
        %v448 = vrot.slane %v237, 1
        %v449 = vsel %vm423, %v446, %v448
        %v450 = vrot.slane %v238, 1
        %v451 = vsel %vm423, %v448, %v450
        %v452 = vrot.slane %v239, 1
        %v453 = vrot.slane %v240, 1
        %v454 = vsel %vm423, %v452, %v453
        %v455 = vrot.slane %v241, 1
        %v456 = vsel %vm423, %v453, %v455
        %v457 = vrot.slane %v242, 1
        %v458 = vsel %vm423, %v455, %v457
        %v459 = vrot.slane %v243, 1
        %v460 = vrot.slane %v244, 1
        %v461 = vsel %vm423, %v459, %v460
        %v462 = vrot.slane %v245, 1
        %v463 = vsel %vm423, %v460, %v462
        %v464 = vrot.slane %v246, 1
        %v465 = vsel %vm423, %v462, %v464
        %v466 = vrot.slane %v247, 1
        %v467 = vrot.slane %v248, 1
        %v468 = vsel %vm423, %v466, %v467
        %v469 = vrot.slane %v249, 1
        %v470 = vsel %vm423, %v467, %v469
        %v471 = vrot.slane %v250, 1
        %v472 = vsel %vm423, %v469, %v471
        %v473 = vrot.slane %v251, 1
        %v474 = vrot.slane %v252, 1
        %v475 = vsel %vm423, %v473, %v474
        %v476 = vrot.slane %v253, 1
        %v477 = vsel %vm423, %v474, %v476
        %v478 = vrot.slane %v254, 1
        %v479 = vsel %vm423, %v476, %v478
        %v480 = vrot.slane %v255, 1
        %v481 = vrot.slane %v256, 1
        %v482 = vsel %vm423, %v480, %v481
        %v483 = vrot.slane %v257, 1
        %v484 = vsel %vm423, %v481, %v483
        %v485 = vrot.slane %v258, 1
        %v486 = vsel %vm423, %v483, %v485
        %v487 = vrot.slane %v259, 1
        %v488 = vrot.slane %v260, 1
        %v489 = vsel %vm423, %v487, %v488
        %v490 = vrot.slane %v261, 1
        %v491 = vsel %vm423, %v488, %v490
        %v492 = vrot.slane %v262, 1
        %v493 = vsel %vm423, %v490, %v492
        %v494 = vrot.slane %v263, 1
        %v495 = vrot.slane %v264, 1
        %v496 = vsel %vm423, %v494, %v495
        %v497 = vrot.slane %v265, 1
        %v498 = vsel %vm423, %v495, %v497
        %v499 = vrot.slane %v266, 1
        %v500 = vsel %vm423, %v497, %v499
        %v501 = vrot.slane %v267, 1
        %v502 = vrot.slane %v268, 1
        %v503 = vsel %vm423, %v501, %v502
        %v504 = vrot.slane %v269, 1
        %v505 = vsel %vm423, %v502, %v504
        %v506 = vrot.slane %v270, 1
        %v507 = vsel %vm423, %v504, %v506
        %v508 = vrot.slane %v271, 1
        %v509 = vrot.slane %v272, 1
        %v510 = vsel %vm423, %v508, %v509
        %v511 = vrot.slane %v273, 1
        %v512 = vsel %vm423, %v509, %v511
        %v513 = vrot.slane %v274, 1
        %v514 = vsel %vm423, %v511, %v513
        %v515 = vrot.slane %v275, 1
        %v516 = vrot.slane %v276, 1
        %v517 = vsel %vm423, %v515, %v516
        %v518 = vrot.slane %v277, 1
        %v519 = vsel %vm423, %v516, %v518
        %v520 = vrot.slane %v278, 1
        %v521 = vsel %vm423, %v518, %v520
        %v522 = vrot.slane %v279, 1
        %v523 = vrot.slane %v280, 1
        %v524 = vsel %vm423, %v522, %v523
        %v525 = vrot.slane %v281, 1
        %v526 = vsel %vm423, %v523, %v525
        %v527 = vrot.slane %v282, 1
        %v528 = vsel %vm423, %v525, %v527
        %v529 = vrot.slane %v283, 1
        %v530 = vrot.slane %v284, 1
        %v531 = vsel %vm423, %v529, %v530
        %v532 = vrot.slane %v285, 1
        %v533 = vsel %vm423, %v530, %v532
        %v534 = vrot.slane %v286, 1
        %v535 = vsel %vm423, %v532, %v534
        %v536 = vrot.slane %v287, 1
        %v537 = vrot.slane %v288, 1
        %v538 = vsel %vm423, %v536, %v537
        %v539 = vrot.slane %v289, 1
        %v540 = vsel %vm423, %v537, %v539
        %v541 = vrot.slane %v290, 1
        %v542 = vsel %vm423, %v539, %v541
        %v543 = vrot.slane %v291, 1
        %v544 = vrot.slane %v292, 1
        %v545 = vsel %vm423, %v543, %v544
        %v546 = vrot.slane %v293, 1
        %v547 = vsel %vm423, %v544, %v546
        %v548 = vrot.slane %v294, 1
        %v549 = vsel %vm423, %v546, %v548
        %v550 = vrot.slane %v295, 1
        %v551 = vrot.slane %v296, 1
        %v552 = vsel %vm423, %v550, %v551
        %v553 = vrot.slane %v297, 1
        %v554 = vsel %vm423, %v551, %v553
        %v555 = vrot.slane %v298, 1
        %v556 = vsel %vm423, %v553, %v555
        %v557 = vrot.slane %v299, 1
        %v558 = vrot.slane %v300, 1
        %v559 = vsel %vm423, %v557, %v558
        %v560 = vrot.slane %v301, 1
        %v561 = vsel %vm423, %v558, %v560
        %v562 = vrot.slane %v302, 1
        %v563 = vsel %vm423, %v560, %v562
        %v564 = vrot.slane %v303, 1
        %v565 = vrot.slane %v304, 1
        %v566 = vsel %vm423, %v564, %v565
        %v567 = vrot.slane %v305, 1
        %v568 = vsel %vm423, %v565, %v567
        %v569 = vrot.slane %v306, 1
        %v570 = vsel %vm423, %v567, %v569
        %v571 = vrot.slane %v307, 1
        %v572 = vrot.slane %v308, 1
        %v573 = vsel %vm423, %v571, %v572
        %v574 = vrot.slane %v309, 1
        %v575 = vsel %vm423, %v572, %v574
        %v576 = vrot.slane %v310, 1
        %v577 = vsel %vm423, %v574, %v576
        %v578 = vrot.slane %v311, 1
        %v579 = vrot.slane %v312, 1
        %v580 = vsel %vm423, %v578, %v579
        %v581 = vrot.slane %v313, 1
        %v582 = vsel %vm423, %v579, %v581
        %v583 = vrot.slane %v314, 1
        %v584 = vsel %vm423, %v581, %v583
        %v585 = vrot.slane %v315, 1
        %v586 = vrot.slane %v316, 1
        %v587 = vsel %vm423, %v585, %v586
        %v588 = vrot.slane %v317, 1
        %v589 = vsel %vm423, %v586, %v588
        %v590 = vrot.slane %v318, 1
        %v591 = vsel %vm423, %v588, %v590
        %v592 = vrot.slane %v319, 1
        %v593 = vrot.slane %v320, 1
        %v594 = vsel %vm423, %v592, %v593
        %v595 = vrot.slane %v321, 1
        %v596 = vsel %vm423, %v593, %v595
        %v597 = vrot.slane %v322, 1
        %v598 = vsel %vm423, %v595, %v597
        %599 = vrot.lane.b32.xlu0 %v426, 4
        %v600 = vpop.permute.xlu0 %599
        %601 = vrot.lane.b32.xlu0 %v428, 4
        %v602 = vpop.permute.xlu0 %601
        %603 = vrot.lane.b32.xlu0 %v430, 4
        %v604 = vpop.permute.xlu0 %603
        %605 = vrot.lane.b32.xlu0 %v433, 4
        %v606 = vpop.permute.xlu0 %605
        %607 = vrot.lane.b32.xlu0 %v435, 4
        %v608 = vpop.permute.xlu0 %607
        %609 = vrot.lane.b32.xlu0 %v437, 4
        %v610 = vpop.permute.xlu0 %609
        %611 = vrot.lane.b32.xlu0 %v440, 4
        %v612 = vpop.permute.xlu0 %611
        %613 = vrot.lane.b32.xlu0 %v442, 4
        %v614 = vpop.permute.xlu0 %613
        %615 = vrot.lane.b32.xlu0 %v444, 4
        %v616 = vpop.permute.xlu0 %615
        %617 = vrot.lane.b32.xlu0 %v447, 4
        %v618 = vpop.permute.xlu0 %617
        %619 = vrot.lane.b32.xlu0 %v449, 4
        %v620 = vpop.permute.xlu0 %619
        %621 = vrot.lane.b32.xlu0 %v451, 4
        %v622 = vpop.permute.xlu0 %621
        %623 = vrot.lane.b32.xlu0 %v454, 4
        %v624 = vpop.permute.xlu0 %623
        %625 = vrot.lane.b32.xlu0 %v456, 4
        %v626 = vpop.permute.xlu0 %625
        %627 = vrot.lane.b32.xlu0 %v458, 4
        %v628 = vpop.permute.xlu0 %627
        %629 = vrot.lane.b32.xlu0 %v461, 4
        %v630 = vpop.permute.xlu0 %629
        %631 = vrot.lane.b32.xlu0 %v463, 4
        %v632 = vpop.permute.xlu0 %631
        %633 = vrot.lane.b32.xlu0 %v465, 4
        %v634 = vpop.permute.xlu0 %633
        %635 = vrot.lane.b32.xlu0 %v468, 4
        %v636 = vpop.permute.xlu0 %635
        %637 = vrot.lane.b32.xlu0 %v470, 4
        %v638 = vpop.permute.xlu0 %637
        %639 = vrot.lane.b32.xlu0 %v472, 4
        %v640 = vpop.permute.xlu0 %639
        %641 = vrot.lane.b32.xlu0 %v475, 4
        %v642 = vpop.permute.xlu0 %641
        %643 = vrot.lane.b32.xlu0 %v477, 4
        %v644 = vpop.permute.xlu0 %643
        %645 = vrot.lane.b32.xlu0 %v479, 4
        %v646 = vpop.permute.xlu0 %645
        %647 = vrot.lane.b32.xlu0 %v482, 4
        %v648 = vpop.permute.xlu0 %647
        %649 = vrot.lane.b32.xlu0 %v484, 4
        %v650 = vpop.permute.xlu0 %649
        %651 = vrot.lane.b32.xlu0 %v486, 4
        %v652 = vpop.permute.xlu0 %651
        %653 = vrot.lane.b32.xlu0 %v489, 4
        %v654 = vpop.permute.xlu0 %653
        %655 = vrot.lane.b32.xlu0 %v491, 4
        %v656 = vpop.permute.xlu0 %655
        %657 = vrot.lane.b32.xlu0 %v493, 4
        %v658 = vpop.permute.xlu0 %657
        %659 = vrot.lane.b32.xlu0 %v496, 4
        %v660 = vpop.permute.xlu0 %659
        %661 = vrot.lane.b32.xlu0 %v498, 4
        %v662 = vpop.permute.xlu0 %661
        %663 = vrot.lane.b32.xlu0 %v500, 4
        %v664 = vpop.permute.xlu0 %663
        %665 = vrot.lane.b32.xlu0 %v503, 4
        %v666 = vpop.permute.xlu0 %665
        %667 = vrot.lane.b32.xlu0 %v505, 4
        %v668 = vpop.permute.xlu0 %667
        %669 = vrot.lane.b32.xlu0 %v507, 4
        %v670 = vpop.permute.xlu0 %669
        %671 = vrot.lane.b32.xlu0 %v510, 4
        %v672 = vpop.permute.xlu0 %671
        %673 = vrot.lane.b32.xlu0 %v512, 4
        %v674 = vpop.permute.xlu0 %673
        %675 = vrot.lane.b32.xlu0 %v514, 4
        %v676 = vpop.permute.xlu0 %675
        %677 = vrot.lane.b32.xlu0 %v517, 4
        %v678 = vpop.permute.xlu0 %677
        %679 = vrot.lane.b32.xlu0 %v519, 4
        %v680 = vpop.permute.xlu0 %679
        %681 = vrot.lane.b32.xlu0 %v521, 4
        %v682 = vpop.permute.xlu0 %681
        %683 = vrot.lane.b32.xlu0 %v524, 4
        %v684 = vpop.permute.xlu0 %683
        %685 = vrot.lane.b32.xlu0 %v526, 4
        %v686 = vpop.permute.xlu0 %685
        %687 = vrot.lane.b32.xlu0 %v528, 4
        %v688 = vpop.permute.xlu0 %687
        %689 = vrot.lane.b32.xlu0 %v531, 4
        %v690 = vpop.permute.xlu0 %689
        %691 = vrot.lane.b32.xlu0 %v533, 4
        %v692 = vpop.permute.xlu0 %691
        %693 = vrot.lane.b32.xlu0 %v535, 4
        %v694 = vpop.permute.xlu0 %693
        %695 = vrot.lane.b32.xlu0 %v538, 4
        %v696 = vpop.permute.xlu0 %695
        %697 = vrot.lane.b32.xlu0 %v540, 4
        %v698 = vpop.permute.xlu0 %697
        %699 = vrot.lane.b32.xlu0 %v542, 4
        %v700 = vpop.permute.xlu0 %699
        %701 = vrot.lane.b32.xlu0 %v545, 4
        %v702 = vpop.permute.xlu0 %701
        %703 = vrot.lane.b32.xlu0 %v547, 4
        %v704 = vpop.permute.xlu0 %703
        %705 = vrot.lane.b32.xlu0 %v549, 4
        %v706 = vpop.permute.xlu0 %705
        %707 = vrot.lane.b32.xlu0 %v552, 4
        %v708 = vpop.permute.xlu0 %707
        %709 = vrot.lane.b32.xlu0 %v554, 4
        %v710 = vpop.permute.xlu0 %709
        %711 = vrot.lane.b32.xlu0 %v556, 4
        %v712 = vpop.permute.xlu0 %711
        %713 = vrot.lane.b32.xlu0 %v559, 4
        %v714 = vpop.permute.xlu0 %713
        %715 = vrot.lane.b32.xlu0 %v561, 4
        %v716 = vpop.permute.xlu0 %715
        %717 = vrot.lane.b32.xlu0 %v563, 4
        %v718 = vpop.permute.xlu0 %717
        %719 = vrot.lane.b32.xlu0 %v566, 4
        %v720 = vpop.permute.xlu0 %719
        %721 = vrot.lane.b32.xlu0 %v568, 4
        %v722 = vpop.permute.xlu0 %721
        %723 = vrot.lane.b32.xlu0 %v570, 4
        %v724 = vpop.permute.xlu0 %723
        %725 = vrot.lane.b32.xlu0 %v573, 4
        %v726 = vpop.permute.xlu0 %725
        %727 = vrot.lane.b32.xlu0 %v575, 4
        %v728 = vpop.permute.xlu0 %727
        %729 = vrot.lane.b32.xlu0 %v577, 4
        %v730 = vpop.permute.xlu0 %729
        %731 = vrot.lane.b32.xlu0 %v580, 4
        %v732 = vpop.permute.xlu0 %731
        %733 = vrot.lane.b32.xlu0 %v582, 4
        %v734 = vpop.permute.xlu0 %733
        %735 = vrot.lane.b32.xlu0 %v584, 4
        %v736 = vpop.permute.xlu0 %735
        %737 = vrot.lane.b32.xlu0 %v587, 4
        %v738 = vpop.permute.xlu0 %737
        %739 = vrot.lane.b32.xlu0 %v589, 4
        %v740 = vpop.permute.xlu0 %739
        %741 = vrot.lane.b32.xlu0 %v591, 4
        %v742 = vpop.permute.xlu0 %741
        %743 = vrot.lane.b32.xlu0 %v594, 4
        %v744 = vpop.permute.xlu0 %743
        %745 = vrot.lane.b32.xlu0 %v596, 4
        %v746 = vpop.permute.xlu0 %745
        %747 = vrot.lane.b32.xlu0 %v598, 4
        %v748 = vpop.permute.xlu0 %747
        %vm824 = vcmask 31744
        %v825 = vsel %vm824, %v223, %v600
        %v826 = vsel %vm824, %v224, %v602
        %v827 = vsel %vm824, %v225, %v604
        %v828 = vsel %vm824, %v227, %v606
        %v829 = vsel %vm824, %v228, %v608
        %v830 = vsel %vm824, %v229, %v610
        %v831 = vsel %vm824, %v231, %v612
        %v832 = vsel %vm824, %v232, %v614
        %v833 = vsel %vm824, %v233, %v616
        %v834 = vsel %vm824, %v235, %v618
        %v835 = vsel %vm824, %v236, %v620
        %v836 = vsel %vm824, %v237, %v622
        %v837 = vsel %vm824, %v239, %v624
        %v838 = vsel %vm824, %v240, %v626
        %v839 = vsel %vm824, %v241, %v628
        %v840 = vsel %vm824, %v243, %v630
        %v841 = vsel %vm824, %v244, %v632
        %v842 = vsel %vm824, %v245, %v634
        %v843 = vsel %vm824, %v247, %v636
        %v844 = vsel %vm824, %v248, %v638
        %v845 = vsel %vm824, %v249, %v640
        %v846 = vsel %vm824, %v251, %v642
        %v847 = vsel %vm824, %v252, %v644
        %v848 = vsel %vm824, %v253, %v646
        %v849 = vsel %vm824, %v255, %v648
        %v850 = vsel %vm824, %v256, %v650
        %v851 = vsel %vm824, %v257, %v652
        %v852 = vsel %vm824, %v259, %v654
        %v853 = vsel %vm824, %v260, %v656
        %v854 = vsel %vm824, %v261, %v658
        %v855 = vsel %vm824, %v263, %v660
        %v856 = vsel %vm824, %v264, %v662
        %v857 = vsel %vm824, %v265, %v664
        %v858 = vsel %vm824, %v267, %v666
        %v859 = vsel %vm824, %v268, %v668
        %v860 = vsel %vm824, %v269, %v670
        %v861 = vsel %vm824, %v271, %v672
        %v862 = vsel %vm824, %v272, %v674
        %v863 = vsel %vm824, %v273, %v676
        %v864 = vsel %vm824, %v275, %v678
        %v865 = vsel %vm824, %v276, %v680
        %v866 = vsel %vm824, %v277, %v682
        %v867 = vsel %vm824, %v279, %v684
        %v868 = vsel %vm824, %v280, %v686
        %v869 = vsel %vm824, %v281, %v688
        %v870 = vsel %vm824, %v283, %v690
        %v871 = vsel %vm824, %v284, %v692
        %v872 = vsel %vm824, %v285, %v694
        %v873 = vsel %vm824, %v287, %v696
        %v874 = vsel %vm824, %v288, %v698
        %v875 = vsel %vm824, %v289, %v700
        %v876 = vsel %vm824, %v291, %v702
        %v877 = vsel %vm824, %v292, %v704
        %v878 = vsel %vm824, %v293, %v706
        %v879 = vsel %vm824, %v295, %v708
        %v880 = vsel %vm824, %v296, %v710
        %v881 = vsel %vm824, %v297, %v712
        %v882 = vsel %vm824, %v299, %v714
        %v883 = vsel %vm824, %v300, %v716
        %v884 = vsel %vm824, %v301, %v718
        %v885 = vsel %vm824, %v303, %v720
        %v886 = vsel %vm824, %v304, %v722
        %v887 = vsel %vm824, %v305, %v724
        %v888 = vsel %vm824, %v307, %v726
        %v889 = vsel %vm824, %v308, %v728
        %v890 = vsel %vm824, %v309, %v730
        %v891 = vsel %vm824, %v311, %v732
        %v892 = vsel %vm824, %v312, %v734
        %v893 = vsel %vm824, %v313, %v736
        %v894 = vsel %vm824, %v315, %v738
        %v895 = vsel %vm824, %v316, %v740
        %v896 = vsel %vm824, %v317, %v742
        %v897 = vsel %vm824, %v319, %v744
        %v898 = vsel %vm824, %v320, %v746
        %v899 = vsel %vm824, %v321, %v748
        %v900 = vpack.c.bf16 %v826, %v825
        %v901 = vpack.c.bf16 %v827, %v827
        %v902 = vpack.c.bf16 %v829, %v828
        %v903 = vpack.c.bf16 %v830, %v830
        %v904 = vpack.c.bf16 %v832, %v831
        %v905 = vpack.c.bf16 %v833, %v833
        %v906 = vpack.c.bf16 %v835, %v834
        %v907 = vpack.c.bf16 %v836, %v836
        %v908 = vpack.c.bf16 %v838, %v837
        %v909 = vpack.c.bf16 %v839, %v839
        %v910 = vpack.c.bf16 %v841, %v840
        %v911 = vpack.c.bf16 %v842, %v842
        %v912 = vpack.c.bf16 %v844, %v843
        %v913 = vpack.c.bf16 %v845, %v845
        %v914 = vpack.c.bf16 %v847, %v846
        %v915 = vpack.c.bf16 %v848, %v848
        %v916 = vpack.c.bf16 %v850, %v849
        %v917 = vpack.c.bf16 %v851, %v851
        %v918 = vpack.c.bf16 %v853, %v852
        %v919 = vpack.c.bf16 %v854, %v854
        %v920 = vpack.c.bf16 %v856, %v855
        %v921 = vpack.c.bf16 %v857, %v857
        %v922 = vpack.c.bf16 %v859, %v858
        %v923 = vpack.c.bf16 %v860, %v860
        %v924 = vpack.c.bf16 %v862, %v861
        %v925 = vpack.c.bf16 %v863, %v863
        %v926 = vpack.c.bf16 %v865, %v864
        %v927 = vpack.c.bf16 %v866, %v866
        %v928 = vpack.c.bf16 %v868, %v867
        %v929 = vpack.c.bf16 %v869, %v869
        %v930 = vpack.c.bf16 %v871, %v870
        %v931 = vpack.c.bf16 %v872, %v872
        %v932 = vpack.c.bf16 %v874, %v873
        %v933 = vpack.c.bf16 %v875, %v875
        %v934 = vpack.c.bf16 %v877, %v876
        %v935 = vpack.c.bf16 %v878, %v878
        %v936 = vpack.c.bf16 %v880, %v879
        %v937 = vpack.c.bf16 %v881, %v881
        %v938 = vpack.c.bf16 %v883, %v882
        %v939 = vpack.c.bf16 %v884, %v884
        %v940 = vpack.c.bf16 %v886, %v885
        %v941 = vpack.c.bf16 %v887, %v887
        %v942 = vpack.c.bf16 %v889, %v888
        %v943 = vpack.c.bf16 %v890, %v890
        %v944 = vpack.c.bf16 %v892, %v891
        %v945 = vpack.c.bf16 %v893, %v893
        %v946 = vpack.c.bf16 %v895, %v894
        %v947 = vpack.c.bf16 %v896, %v896
        %v948 = vpack.c.bf16 %v898, %v897
        %v949 = vpack.c.bf16 %v899, %v899
        %v998 = vunpack.c.l.b16 %v900
        %v999 = vunpack.c.h.b16 %v900
        %v1000 = vunpack.c.l.b16 %v901
        %v1001 = vunpack.c.l.b16 %v902
        %v1002 = vunpack.c.h.b16 %v902
        %v1003 = vunpack.c.l.b16 %v903
        %v1004 = vunpack.c.l.b16 %v904
        %v1005 = vunpack.c.h.b16 %v904
        %v1006 = vunpack.c.l.b16 %v905
        %v1007 = vunpack.c.l.b16 %v906
        %v1008 = vunpack.c.h.b16 %v906
        %v1009 = vunpack.c.l.b16 %v907
        %v1010 = vunpack.c.l.b16 %v908
        %v1011 = vunpack.c.h.b16 %v908
        %v1012 = vunpack.c.l.b16 %v909
        %v1013 = vunpack.c.l.b16 %v910
        %v1014 = vunpack.c.h.b16 %v910
        %v1015 = vunpack.c.l.b16 %v911
        %v1016 = vunpack.c.l.b16 %v912
        %v1017 = vunpack.c.h.b16 %v912
        %v1018 = vunpack.c.l.b16 %v913
        %v1019 = vunpack.c.l.b16 %v914
        %v1020 = vunpack.c.h.b16 %v914
        %v1021 = vunpack.c.l.b16 %v915
        %v1022 = vunpack.c.l.b16 %v916
        %v1023 = vunpack.c.h.b16 %v916
        %v1024 = vunpack.c.l.b16 %v917
        %v1025 = vunpack.c.l.b16 %v918
        %v1026 = vunpack.c.h.b16 %v918
        %v1027 = vunpack.c.l.b16 %v919
        %v1028 = vunpack.c.l.b16 %v920
        %v1029 = vunpack.c.h.b16 %v920
        %v1030 = vunpack.c.l.b16 %v921
        %v1031 = vunpack.c.l.b16 %v922
        %v1032 = vunpack.c.h.b16 %v922
        %v1033 = vunpack.c.l.b16 %v923
        %v1034 = vunpack.c.l.b16 %v924
        %v1035 = vunpack.c.h.b16 %v924
        %v1036 = vunpack.c.l.b16 %v925
        %v1037 = vunpack.c.l.b16 %v926
        %v1038 = vunpack.c.h.b16 %v926
        %v1039 = vunpack.c.l.b16 %v927
        %v1040 = vunpack.c.l.b16 %v928
        %v1041 = vunpack.c.h.b16 %v928
        %v1042 = vunpack.c.l.b16 %v929
        %v1043 = vunpack.c.l.b16 %v930
        %v1044 = vunpack.c.h.b16 %v930
        %v1045 = vunpack.c.l.b16 %v931
        %v1046 = vunpack.c.l.b16 %v932
        %v1047 = vunpack.c.h.b16 %v932
        %v1048 = vunpack.c.l.b16 %v933
        %v1049 = vunpack.c.l.b16 %v934
        %v1050 = vunpack.c.h.b16 %v934
        %v1051 = vunpack.c.l.b16 %v935
        %v1052 = vunpack.c.l.b16 %v936
        %v1053 = vunpack.c.h.b16 %v936
        %v1054 = vunpack.c.l.b16 %v937
        %v1055 = vunpack.c.l.b16 %v938
        %v1056 = vunpack.c.h.b16 %v938
        %v1057 = vunpack.c.l.b16 %v939
        %v1058 = vunpack.c.l.b16 %v940
        %v1059 = vunpack.c.h.b16 %v940
        %v1060 = vunpack.c.l.b16 %v941
        %v1061 = vunpack.c.l.b16 %v942
        %v1062 = vunpack.c.h.b16 %v942
        %v1063 = vunpack.c.l.b16 %v943
        %v1064 = vunpack.c.l.b16 %v944
        %v1065 = vunpack.c.h.b16 %v944
        %v1066 = vunpack.c.l.b16 %v945
        %v1067 = vunpack.c.l.b16 %v946
        %v1068 = vunpack.c.h.b16 %v946
        %v1069 = vunpack.c.l.b16 %v947
        %v1072 = vunpack.c.l.b16 %v948
        %v1073 = vunpack.c.h.b16 %v948
        %v1074 = vunpack.c.l.b16 %v949
        %v1075 = vld [vmem:[#allocation2] sm:$0xf]
        %v1076 = vld [vmem:[#allocation2 + $0x4] sm:$0xf]
        %v1077 = vld [vmem:[#allocation2 + $0x8] sm:$0xf]
        %v1078 = vld [vmem:[#allocation2 + $0xc] sm:$0xf]
        %v1079 = vld [vmem:[#allocation2 + $0x10] sm:$0xf]
        %v1080 = vld [vmem:[#allocation2 + $0x14] sm:$0xf]
        %v1081 = vld [vmem:[#allocation2 + $0x18] sm:$0xf]
        %v1082 = vld [vmem:[#allocation2 + $0x1c] sm:$0xf]
        %v1083 = vld [vmem:[#allocation4] sm:$0x1]
        %v1084 = vpack.c.b16 %v1002, %v1001
        %v1085 = vpack.c.b16 %v1004, %v1003
        %v1086 = vpack.c.b16 %v1006, %v1005
        %v1087 = vpack.c.b16 %v1008, %v1007
        %v1088 = vpack.c.b16 %v1010, %v1009
        %v1089 = vpack.c.b16 %v1012, %v1011
        %v1090 = vpack.c.b16 %v1014, %v1013
        %v1091 = vpack.c.b16 %v1016, %v1015
        %v1092 = vpack.c.b16 %v1018, %v1017
        %v1093 = vpack.c.b16 %v1020, %v1019
        %v1094 = vpack.c.b16 %v1022, %v1021
        %v1095 = vpack.c.b16 %v1024, %v1023
        %v1096 = vpack.c.b16 %v1026, %v1025
        %v1097 = vpack.c.b16 %v1028, %v1027
        %v1098 = vpack.c.b16 %v1030, %v1029
        %v1099 = vpack.c.b16 %v1032, %v1031
        %v1100 = vpack.c.b16 %v1034, %v1033
        %v1101 = vpack.c.b16 %v1036, %v1035
        %v1102 = vpack.c.b16 %v1038, %v1037
        %v1103 = vpack.c.b16 %v1040, %v1039
        %v1104 = vpack.c.b16 %v1042, %v1041
        %v1105 = vpack.c.b16 %v1044, %v1043
        %v1106 = vpack.c.b16 %v1046, %v1045
        %v1107 = vpack.c.b16 %v1048, %v1047
        %v1108 = vpack.c.b16 %v1050, %v1049
        %v1109 = vpack.c.b16 %v1052, %v1051
        %v1110 = vpack.c.b16 %v1054, %v1053
        %v1111 = vpack.c.b16 %v1056, %v1055
        %v1112 = vpack.c.b16 %v1058, %v1057
        %v1113 = vpack.c.b16 %v1060, %v1059
        %v1114 = vpack.c.b16 %v1062, %v1061
        %v1115 = vpack.c.b16 %v1064, %v1063
        %v1116 = vpack.c.b16 %v1066, %v1065
        %v1117 = vpack.c.b16 %v1068, %v1067
        %v1118 = vpack.c.b16 %v1072, %v1069
        %v1119 = vpack.c.b16 %v1074, %v1073
        %vm1120 = vcmask 64512
        %v1122 = vsel %vm1120, %v1084, 0
        %v1125 = vsel %vm1120, %v1085, 0
        %v1128 = vsel %vm1120, %v1086, 0
        %v1131 = vsel %vm1120, %v1087, 0
        %v1134 = vsel %vm1120, %v1088, 0
        %v1137 = vsel %vm1120, %v1089, 0
        %v1140 = vsel %vm1120, %v1090, 0
        %v1143 = vsel %vm1120, %v1091, 0
        %v1146 = vsel %vm1120, %v1092, 0
        %v1149 = vsel %vm1120, %v1093, 0
        %v1152 = vsel %vm1120, %v1094, 0
        %v1155 = vsel %vm1120, %v1095, 0
        %v1158 = vsel %vm1120, %v1096, 0
        %v1161 = vsel %vm1120, %v1097, 0
        %v1164 = vsel %vm1120, %v1098, 0
        %v1167 = vsel %vm1120, %v1099, 0
        %v1170 = vsel %vm1120, %v1100, 0
        %v1173 = vsel %vm1120, %v1101, 0
        %v1176 = vsel %vm1120, %v1102, 0
        %v1179 = vsel %vm1120, %v1103, 0
        %v1182 = vsel %vm1120, %v1104, 0
        %v1185 = vsel %vm1120, %v1105, 0
        %v1188 = vsel %vm1120, %v1106, 0
        %v1191 = vsel %vm1120, %v1107, 0
        %v1194 = vsel %vm1120, %v1108, 0
        %v1197 = vsel %vm1120, %v1109, 0
        %v1200 = vsel %vm1120, %v1110, 0
        %v1203 = vsel %vm1120, %v1111, 0
        %v1206 = vsel %vm1120, %v1112, 0
        %v1209 = vsel %vm1120, %v1113, 0
        %v1212 = vsel %vm1120, %v1114, 0
        %v1215 = vsel %vm1120, %v1115, 0
        %v1218 = vsel %vm1120, %v1116, 0
        %v1221 = vsel %vm1120, %v1117, 0
        %v1224 = vsel %vm1120, %v1118, 0
        %v1227 = vsel %vm1120, %v1119, 0
        %vm1229 = vcmask 1043456
        %v1231 = vsel %vm1229, %v1076, 0
        %1233 = vmatprep.subr.bf16.mxu0 0
        %1234 = vmatpush1.bf16.msra.mxu0 0
        %1235 = vmatprep.subr.bf16.mxu0 0
        %1236 = vmatpush1.bf16.msra.mxu0 0
        %1237 = vmatprep.subr.bf16.mxu0 0
        %1238 = vmatpush1.bf16.msra.mxu0 0
        %1239 = vmatprep.subr.bf16.mxu0 0
        %1240 = vmatpush1.bf16.msra.mxu0 0
        %1241 = vmatprep.subr.bf16.mxu0 0
        %1242 = vmatpush1.bf16.msra.mxu0 0
        %1243 = vmatprep.subr.bf16.mxu0 0
        %1244 = vmatpush1.bf16.msra.mxu0 0
        %1245 = vmatprep.subr.bf16.mxu0 0
        %1246 = vmatpush1.bf16.msra.mxu0 0
        %1247 = vmatprep.subr.bf16.mxu0 0
        %1248 = vmatpush1.bf16.msra.mxu0 %v1231
        %1249 = vmatprep.subr.bf16.mxu0 0
        %1250 = vmatpush2.bf16.msra.mxu0 0
        %1251 = vmatprep.subr.bf16.mxu0 0
        %1252 = vmatpush2.bf16.msra.mxu0 0
        %1253 = vmatprep.subr.bf16.mxu0 0
        %1254 = vmatpush2.bf16.msra.mxu0 0
        %1255 = vmatprep.subr.bf16.mxu0 0
        %1256 = vmatpush2.bf16.msra.mxu0 0
        %1257 = vmatprep.subr.bf16.mxu0 0
        %1258 = vmatpush2.bf16.msra.mxu0 0
        %1259 = vmatprep.subr.bf16.mxu0 0
        %1260 = vmatpush2.bf16.msra.mxu0 0
        %1261 = vmatprep.subr.bf16.mxu0 0
        %1262 = vmatpush2.bf16.msra.mxu0 0
        %1263 = vmatprep.subr.bf16.mxu0 0
        %1264 = vmatpush2.bf16.msra.mxu0 0
        %1265 = vmatprep.mubr.bf16.mxu0 0
        %1266 = vmatmul.mubr.bf16.gmra.mxu0 %v1122
        %v1267 = vpop.f32.mrf.mxu0
        %v1268 = vadd.f32 0.0, %v1267
        %v1269 = vpop.f32.mrf.mxu0
        %v1270 = vpop.f32.mrf.mxu0
        %v1271 = vadd.f32 0.0, %v1270
        %v1272 = vpop.f32.mrf.mxu0
        %1273 = vmatprep.mubr.bf16.mxu0 0
        %1274 = vmatmul.mubr.bf16.gmra.mxu0 %v1125
        %v1275 = vpop.f32.mrf.mxu0
        %v1276 = vadd.f32 0.0, %v1275
        %v1277 = vpop.f32.mrf.mxu0
        %v1278 = vpop.f32.mrf.mxu0
        %v1279 = vadd.f32 0.0, %v1278
        %v1280 = vpop.f32.mrf.mxu0
        %1281 = vmatprep.mubr.bf16.mxu0 0
        %1282 = vmatmul.mubr.bf16.gmra.mxu0 %v1128
        %v1283 = vpop.f32.mrf.mxu0
        %v1284 = vadd.f32 0.0, %v1283
        %v1285 = vpop.f32.mrf.mxu0
        %v1286 = vpop.f32.mrf.mxu0
        %v1287 = vadd.f32 0.0, %v1286
        %v1288 = vpop.f32.mrf.mxu0
        %1289 = vmatprep.mubr.bf16.mxu0 0
        %1290 = vmatmul.mubr.bf16.gmra.mxu0 %v1131
        %v1291 = vpop.f32.mrf.mxu0
        %v1292 = vadd.f32 0.0, %v1291
        %v1293 = vpop.f32.mrf.mxu0
        %v1294 = vpop.f32.mrf.mxu0
        %v1295 = vadd.f32 0.0, %v1294
        %v1296 = vpop.f32.mrf.mxu0
        %1297 = vmatprep.mubr.bf16.mxu0 0
        %1298 = vmatmul.mubr.bf16.gmra.mxu0 %v1134
        %v1299 = vpop.f32.mrf.mxu0
        %v1300 = vadd.f32 0.0, %v1299
        %v1301 = vpop.f32.mrf.mxu0
        %v1302 = vpop.f32.mrf.mxu0
        %v1303 = vadd.f32 0.0, %v1302
        %v1304 = vpop.f32.mrf.mxu0
        %1305 = vmatprep.mubr.bf16.mxu0 0
        %1306 = vmatmul.mubr.bf16.gmra.mxu0 %v1137
        %v1307 = vpop.f32.mrf.mxu0
        %v1308 = vadd.f32 0.0, %v1307
        %v1309 = vpop.f32.mrf.mxu0
        %v1310 = vpop.f32.mrf.mxu0
        %v1311 = vadd.f32 0.0, %v1310
        %v1312 = vpop.f32.mrf.mxu0
        %1313 = vmatprep.mubr.bf16.mxu0 0
        %1314 = vmatmul.mubr.bf16.gmra.mxu0 %v1140
        %v1315 = vpop.f32.mrf.mxu0
        %v1316 = vadd.f32 0.0, %v1315
        %v1317 = vpop.f32.mrf.mxu0
        %v1318 = vpop.f32.mrf.mxu0
        %v1319 = vadd.f32 0.0, %v1318
        %v1320 = vpop.f32.mrf.mxu0
        %1321 = vmatprep.mubr.bf16.mxu0 0
        %1322 = vmatmul.mubr.bf16.gmra.mxu0 %v1143
        %v1323 = vpop.f32.mrf.mxu0
        %v1324 = vadd.f32 0.0, %v1323
        %v1325 = vpop.f32.mrf.mxu0
        %v1326 = vpop.f32.mrf.mxu0
        %v1327 = vadd.f32 0.0, %v1326
        %v1328 = vpop.f32.mrf.mxu0
        %1329 = vmatprep.mubr.bf16.mxu0 0
        %1330 = vmatmul.mubr.bf16.gmra.mxu0 %v1146
        %v1331 = vpop.f32.mrf.mxu0
        %v1332 = vadd.f32 0.0, %v1331
        %v1333 = vpop.f32.mrf.mxu0
        %v1334 = vpop.f32.mrf.mxu0
        %v1335 = vadd.f32 0.0, %v1334
        %v1336 = vpop.f32.mrf.mxu0
        %1337 = vmatprep.mubr.bf16.mxu0 0
        %1338 = vmatmul.mubr.bf16.gmra.mxu0 %v1149
        %v1339 = vpop.f32.mrf.mxu0
        %v1340 = vadd.f32 0.0, %v1339
        %v1341 = vpop.f32.mrf.mxu0
        %v1342 = vpop.f32.mrf.mxu0
        %v1343 = vadd.f32 0.0, %v1342
        %v1344 = vpop.f32.mrf.mxu0
        %1345 = vmatprep.mubr.bf16.mxu0 0
        %1346 = vmatmul.mubr.bf16.gmra.mxu0 %v1152
        %v1347 = vpop.f32.mrf.mxu0
        %v1348 = vadd.f32 0.0, %v1347
        %v1349 = vpop.f32.mrf.mxu0
        %v1350 = vpop.f32.mrf.mxu0
        %v1351 = vadd.f32 0.0, %v1350
        %v1352 = vpop.f32.mrf.mxu0
        %1353 = vmatprep.mubr.bf16.mxu0 0
        %1354 = vmatmul.mubr.bf16.gmra.mxu0 %v1155
        %v1355 = vpop.f32.mrf.mxu0
        %v1356 = vadd.f32 0.0, %v1355
        %v1357 = vpop.f32.mrf.mxu0
        %v1358 = vpop.f32.mrf.mxu0
        %v1359 = vadd.f32 0.0, %v1358
        %v1360 = vpop.f32.mrf.mxu0
        %1361 = vmatprep.mubr.bf16.mxu0 0
        %1362 = vmatmul.mubr.bf16.gmra.mxu0 %v1158
        %v1363 = vpop.f32.mrf.mxu0
        %v1364 = vadd.f32 0.0, %v1363
        %v1365 = vpop.f32.mrf.mxu0
        %v1366 = vpop.f32.mrf.mxu0
        %v1367 = vadd.f32 0.0, %v1366
        %v1368 = vpop.f32.mrf.mxu0
        %1369 = vmatprep.mubr.bf16.mxu0 0
        %1370 = vmatmul.mubr.bf16.gmra.mxu0 %v1161
        %v1371 = vpop.f32.mrf.mxu0
        %v1372 = vadd.f32 0.0, %v1371
        %v1373 = vpop.f32.mrf.mxu0
        %v1374 = vpop.f32.mrf.mxu0
        %v1375 = vadd.f32 0.0, %v1374
        %v1376 = vpop.f32.mrf.mxu0
        %1377 = vmatprep.mubr.bf16.mxu0 0
        %1378 = vmatmul.mubr.bf16.gmra.mxu0 %v1164
        %v1379 = vpop.f32.mrf.mxu0
        %v1380 = vadd.f32 0.0, %v1379
        %v1381 = vpop.f32.mrf.mxu0
        %v1382 = vpop.f32.mrf.mxu0
        %v1383 = vadd.f32 0.0, %v1382
        %v1384 = vpop.f32.mrf.mxu0
        %1385 = vmatprep.mubr.bf16.mxu0 0
        %1386 = vmatmul.mubr.bf16.gmra.mxu0 %v1167
        %v1387 = vpop.f32.mrf.mxu0
        %v1388 = vadd.f32 0.0, %v1387
        %v1389 = vpop.f32.mrf.mxu0
        %v1390 = vpop.f32.mrf.mxu0
        %v1391 = vadd.f32 0.0, %v1390
        %v1392 = vpop.f32.mrf.mxu0
        %1393 = vmatprep.mubr.bf16.mxu0 0
        %1394 = vmatmul.mubr.bf16.gmra.mxu0 %v1170
        %v1395 = vpop.f32.mrf.mxu0
        %v1396 = vadd.f32 0.0, %v1395
        %v1397 = vpop.f32.mrf.mxu0
        %v1398 = vpop.f32.mrf.mxu0
        %v1399 = vadd.f32 0.0, %v1398
        %v1400 = vpop.f32.mrf.mxu0
        %1401 = vmatprep.mubr.bf16.mxu0 0
        %1402 = vmatmul.mubr.bf16.gmra.mxu0 %v1173
        %v1403 = vpop.f32.mrf.mxu0
        %v1404 = vadd.f32 0.0, %v1403
        %v1405 = vpop.f32.mrf.mxu0
        %v1406 = vpop.f32.mrf.mxu0
        %v1407 = vadd.f32 0.0, %v1406
        %v1408 = vpop.f32.mrf.mxu0
        %1409 = vmatprep.mubr.bf16.mxu0 0
        %1410 = vmatmul.mubr.bf16.gmra.mxu0 %v1176
        %v1411 = vpop.f32.mrf.mxu0
        %v1412 = vadd.f32 0.0, %v1411
        %v1413 = vpop.f32.mrf.mxu0
        %v1414 = vpop.f32.mrf.mxu0
        %v1415 = vadd.f32 0.0, %v1414
        %v1416 = vpop.f32.mrf.mxu0
        %1417 = vmatprep.mubr.bf16.mxu0 0
        %1418 = vmatmul.mubr.bf16.gmra.mxu0 %v1179
        %v1419 = vpop.f32.mrf.mxu0
        %v1420 = vadd.f32 0.0, %v1419
        %v1421 = vpop.f32.mrf.mxu0
        %v1422 = vpop.f32.mrf.mxu0
        %v1423 = vadd.f32 0.0, %v1422
        %v1424 = vpop.f32.mrf.mxu0
        %1425 = vmatprep.mubr.bf16.mxu0 0
        %1426 = vmatmul.mubr.bf16.gmra.mxu0 %v1182
        %v1427 = vpop.f32.mrf.mxu0
        %v1428 = vadd.f32 0.0, %v1427
        %v1429 = vpop.f32.mrf.mxu0
        %v1430 = vpop.f32.mrf.mxu0
        %v1431 = vadd.f32 0.0, %v1430
        %v1432 = vpop.f32.mrf.mxu0
        %1433 = vmatprep.mubr.bf16.mxu0 0
        %1434 = vmatmul.mubr.bf16.gmra.mxu0 %v1185
        %v1435 = vpop.f32.mrf.mxu0
        %v1436 = vadd.f32 0.0, %v1435
        %v1437 = vpop.f32.mrf.mxu0
        %v1438 = vpop.f32.mrf.mxu0
        %v1439 = vadd.f32 0.0, %v1438
        %v1440 = vpop.f32.mrf.mxu0
        %1441 = vmatprep.mubr.bf16.mxu0 0
        %1442 = vmatmul.mubr.bf16.gmra.mxu0 %v1188
        %v1443 = vpop.f32.mrf.mxu0
        %v1444 = vadd.f32 0.0, %v1443
        %v1445 = vpop.f32.mrf.mxu0
        %v1446 = vpop.f32.mrf.mxu0
        %v1447 = vadd.f32 0.0, %v1446
        %v1448 = vpop.f32.mrf.mxu0
        %1449 = vmatprep.mubr.bf16.mxu0 0
        %1450 = vmatmul.mubr.bf16.gmra.mxu0 %v1191
        %v1451 = vpop.f32.mrf.mxu0
        %v1452 = vadd.f32 0.0, %v1451
        %v1453 = vpop.f32.mrf.mxu0
        %v1454 = vpop.f32.mrf.mxu0
        %v1455 = vadd.f32 0.0, %v1454
        %v1456 = vpop.f32.mrf.mxu0
        %1457 = vmatprep.mubr.bf16.mxu0 0
        %1458 = vmatmul.mubr.bf16.gmra.mxu0 %v1194
        %v1459 = vpop.f32.mrf.mxu0
        %v1460 = vadd.f32 0.0, %v1459
        %v1461 = vpop.f32.mrf.mxu0
        %v1462 = vpop.f32.mrf.mxu0
        %v1463 = vadd.f32 0.0, %v1462
        %v1464 = vpop.f32.mrf.mxu0
        %1465 = vmatprep.mubr.bf16.mxu0 0
        %1466 = vmatmul.mubr.bf16.gmra.mxu0 %v1197
        %v1467 = vpop.f32.mrf.mxu0
        %v1468 = vadd.f32 0.0, %v1467
        %v1469 = vpop.f32.mrf.mxu0
        %v1470 = vpop.f32.mrf.mxu0
        %v1471 = vadd.f32 0.0, %v1470
        %v1472 = vpop.f32.mrf.mxu0
        %1473 = vmatprep.mubr.bf16.mxu0 0
        %1474 = vmatmul.mubr.bf16.gmra.mxu0 %v1200
        %v1475 = vpop.f32.mrf.mxu0
        %v1476 = vadd.f32 0.0, %v1475
        %v1477 = vpop.f32.mrf.mxu0
        %v1478 = vpop.f32.mrf.mxu0
        %v1479 = vadd.f32 0.0, %v1478
        %v1480 = vpop.f32.mrf.mxu0
        %1481 = vmatprep.mubr.bf16.mxu0 0
        %1482 = vmatmul.mubr.bf16.gmra.mxu0 %v1203
        %v1483 = vpop.f32.mrf.mxu0
        %v1484 = vadd.f32 0.0, %v1483
        %v1485 = vpop.f32.mrf.mxu0
        %v1486 = vpop.f32.mrf.mxu0
        %v1487 = vadd.f32 0.0, %v1486
        %v1488 = vpop.f32.mrf.mxu0
        %1489 = vmatprep.mubr.bf16.mxu0 0
        %1490 = vmatmul.mubr.bf16.gmra.mxu0 %v1206
        %v1491 = vpop.f32.mrf.mxu0
        %v1492 = vadd.f32 0.0, %v1491
        %v1493 = vpop.f32.mrf.mxu0
        %v1494 = vpop.f32.mrf.mxu0
        %v1495 = vadd.f32 0.0, %v1494
        %v1496 = vpop.f32.mrf.mxu0
        %1497 = vmatprep.mubr.bf16.mxu0 0
        %1498 = vmatmul.mubr.bf16.gmra.mxu0 %v1209
        %v1499 = vpop.f32.mrf.mxu0
        %v1500 = vadd.f32 0.0, %v1499
        %v1501 = vpop.f32.mrf.mxu0
        %v1502 = vpop.f32.mrf.mxu0
        %v1503 = vadd.f32 0.0, %v1502
        %v1504 = vpop.f32.mrf.mxu0
        %1505 = vmatprep.mubr.bf16.mxu0 0
        %1506 = vmatmul.mubr.bf16.gmra.mxu0 %v1212
        %v1507 = vpop.f32.mrf.mxu0
        %v1508 = vadd.f32 0.0, %v1507
        %v1509 = vpop.f32.mrf.mxu0
        %v1510 = vpop.f32.mrf.mxu0
        %v1511 = vadd.f32 0.0, %v1510
        %v1512 = vpop.f32.mrf.mxu0
        %1513 = vmatprep.mubr.bf16.mxu0 0
        %1514 = vmatmul.mubr.bf16.gmra.mxu0 %v1215
        %v1515 = vpop.f32.mrf.mxu0
        %v1516 = vadd.f32 0.0, %v1515
        %v1517 = vpop.f32.mrf.mxu0
        %v1518 = vpop.f32.mrf.mxu0
        %v1519 = vadd.f32 0.0, %v1518
        %v1520 = vpop.f32.mrf.mxu0
        %1521 = vmatprep.mubr.bf16.mxu0 0
        %1522 = vmatmul.mubr.bf16.gmra.mxu0 %v1218
        %v1523 = vpop.f32.mrf.mxu0
        %v1524 = vadd.f32 0.0, %v1523
        %v1525 = vpop.f32.mrf.mxu0
        %v1526 = vpop.f32.mrf.mxu0
        %v1527 = vadd.f32 0.0, %v1526
        %v1528 = vpop.f32.mrf.mxu0
        %1529 = vmatprep.mubr.bf16.mxu0 0
        %1530 = vmatmul.mubr.bf16.gmra.mxu0 %v1221
        %v1531 = vpop.f32.mrf.mxu0
        %v1532 = vadd.f32 0.0, %v1531
        %v1533 = vpop.f32.mrf.mxu0
        %v1534 = vpop.f32.mrf.mxu0
        %v1535 = vadd.f32 0.0, %v1534
        %v1536 = vpop.f32.mrf.mxu0
        %1537 = vmatprep.mubr.bf16.mxu0 0
        %1538 = vmatmul.mubr.bf16.gmra.mxu0 %v1224
        %v1539 = vpop.f32.mrf.mxu0
        %v1540 = vadd.f32 0.0, %v1539
        %v1541 = vpop.f32.mrf.mxu0
        %v1542 = vpop.f32.mrf.mxu0
        %v1543 = vadd.f32 0.0, %v1542
        %v1544 = vpop.f32.mrf.mxu0
        %1545 = vmatprep.mubr.bf16.mxu0 0
        %1546 = vmatmul.mubr.bf16.gmra.mxu0 %v1227
        %v1547 = vpop.f32.mrf.mxu0
        %v1548 = vadd.f32 0.0, %v1547
        %v1549 = vpop.f32.mrf.mxu0
        %v1550 = vpop.f32.mrf.mxu0
        %v1551 = vadd.f32 0.0, %v1550
        %v1552 = vpop.f32.mrf.mxu0
        %1553 = vdwg.mxu0
        %v1554 = vpack.c.b16 %v999, %v998
        %v1555 = vpack.c.b16 %v1001, %v1000
        %v1556 = vpack.c.b16 %v1003, %v1002
        %v1557 = vpack.c.b16 %v1005, %v1004
        %v1558 = vpack.c.b16 %v1007, %v1006
        %v1559 = vpack.c.b16 %v1009, %v1008
        %v1560 = vpack.c.b16 %v1011, %v1010
        %v1561 = vpack.c.b16 %v1013, %v1012
        %v1562 = vpack.c.b16 %v1015, %v1014
        %v1563 = vpack.c.b16 %v1017, %v1016
        %v1564 = vpack.c.b16 %v1019, %v1018
        %v1565 = vpack.c.b16 %v1021, %v1020
        %v1566 = vpack.c.b16 %v1023, %v1022
        %v1567 = vpack.c.b16 %v1025, %v1024
        %v1568 = vpack.c.b16 %v1027, %v1026
        %v1569 = vpack.c.b16 %v1029, %v1028
        %v1570 = vpack.c.b16 %v1031, %v1030
        %v1571 = vpack.c.b16 %v1033, %v1032
        %v1572 = vpack.c.b16 %v1035, %v1034
        %v1573 = vpack.c.b16 %v1037, %v1036
        %v1574 = vpack.c.b16 %v1039, %v1038
        %v1575 = vpack.c.b16 %v1041, %v1040
        %v1576 = vpack.c.b16 %v1043, %v1042
        %v1577 = vpack.c.b16 %v1045, %v1044
        %v1578 = vpack.c.b16 %v1047, %v1046
        %v1579 = vpack.c.b16 %v1049, %v1048
        %v1580 = vpack.c.b16 %v1051, %v1050
        %v1581 = vpack.c.b16 %v1053, %v1052
        %v1582 = vpack.c.b16 %v1055, %v1054
        %v1583 = vpack.c.b16 %v1057, %v1056
        %v1584 = vpack.c.b16 %v1059, %v1058
        %v1585 = vpack.c.b16 %v1061, %v1060
        %v1586 = vpack.c.b16 %v1063, %v1062
        %v1587 = vpack.c.b16 %v1065, %v1064
        %v1588 = vpack.c.b16 %v1067, %v1066
        %v1589 = vpack.c.b16 %v1069, %v1068
        %v1591 = vsel %vm1120, %v1554, 0
        %v1594 = vsel %vm1120, %v1555, 0
        %v1597 = vsel %vm1120, %v1556, 0
        %v1600 = vsel %vm1120, %v1557, 0
        %v1603 = vsel %vm1120, %v1558, 0
        %v1606 = vsel %vm1120, %v1559, 0
        %v1609 = vsel %vm1120, %v1560, 0
        %v1612 = vsel %vm1120, %v1561, 0
        %v1615 = vsel %vm1120, %v1562, 0
        %v1618 = vsel %vm1120, %v1563, 0
        %v1621 = vsel %vm1120, %v1564, 0
        %v1624 = vsel %vm1120, %v1565, 0
        %v1627 = vsel %vm1120, %v1566, 0
        %v1630 = vsel %vm1120, %v1567, 0
        %v1633 = vsel %vm1120, %v1568, 0
        %v1636 = vsel %vm1120, %v1569, 0
        %v1639 = vsel %vm1120, %v1570, 0
        %v1642 = vsel %vm1120, %v1571, 0
        %v1645 = vsel %vm1120, %v1572, 0
        %v1648 = vsel %vm1120, %v1573, 0
        %v1651 = vsel %vm1120, %v1574, 0
        %v1654 = vsel %vm1120, %v1575, 0
        %v1657 = vsel %vm1120, %v1576, 0
        %v1660 = vsel %vm1120, %v1577, 0
        %v1663 = vsel %vm1120, %v1578, 0
        %v1666 = vsel %vm1120, %v1579, 0
        %v1669 = vsel %vm1120, %v1580, 0
        %v1672 = vsel %vm1120, %v1581, 0
        %v1675 = vsel %vm1120, %v1582, 0
        %v1678 = vsel %vm1120, %v1583, 0
        %v1681 = vsel %vm1120, %v1584, 0
        %v1684 = vsel %vm1120, %v1585, 0
        %v1687 = vsel %vm1120, %v1586, 0
        %v1690 = vsel %vm1120, %v1587, 0
        %v1693 = vsel %vm1120, %v1588, 0
        %v1696 = vsel %vm1120, %v1589, 0
        %v1699 = vsel %vm1229, %v1075, 0
        %1701 = vmatprep.subr.bf16.mxu0 0
        %1702 = vmatpush1.bf16.msra.mxu0 0
        %1703 = vmatprep.subr.bf16.mxu0 0
        %1704 = vmatpush1.bf16.msra.mxu0 0
        %1705 = vmatprep.subr.bf16.mxu0 0
        %1706 = vmatpush1.bf16.msra.mxu0 0
        %1707 = vmatprep.subr.bf16.mxu0 0
        %1708 = vmatpush1.bf16.msra.mxu0 0
        %1709 = vmatprep.subr.bf16.mxu0 0
        %1710 = vmatpush1.bf16.msra.mxu0 0
        %1711 = vmatprep.subr.bf16.mxu0 0
        %1712 = vmatpush1.bf16.msra.mxu0 0
        %1713 = vmatprep.subr.bf16.mxu0 0
        %1714 = vmatpush1.bf16.msra.mxu0 0
        %1715 = vmatprep.subr.bf16.mxu0 0
        %1716 = vmatpush1.bf16.msra.mxu0 %v1699
        %1717 = vmatprep.subr.bf16.mxu0 0
        %1718 = vmatpush2.bf16.msra.mxu0 0
        %1719 = vmatprep.subr.bf16.mxu0 0
        %1720 = vmatpush2.bf16.msra.mxu0 0
        %1721 = vmatprep.subr.bf16.mxu0 0
        %1722 = vmatpush2.bf16.msra.mxu0 0
        %1723 = vmatprep.subr.bf16.mxu0 0
        %1724 = vmatpush2.bf16.msra.mxu0 0
        %1725 = vmatprep.subr.bf16.mxu0 0
        %1726 = vmatpush2.bf16.msra.mxu0 0
        %1727 = vmatprep.subr.bf16.mxu0 0
        %1728 = vmatpush2.bf16.msra.mxu0 0
        %1729 = vmatprep.subr.bf16.mxu0 0
        %1730 = vmatpush2.bf16.msra.mxu0 0
        %1731 = vmatprep.subr.bf16.mxu0 0
        %1732 = vmatpush2.bf16.msra.mxu0 0
        %1733 = vmatprep.mubr.bf16.mxu0 0
        %1734 = vmatmul.mubr.bf16.gmra.mxu0 %v1591
        %v1735 = vpop.f32.mrf.mxu0
        %v1736 = vadd.f32 %v1268, %v1735
        %v1737 = vpop.f32.mrf.mxu0
        %v1738 = vpop.f32.mrf.mxu0
        %v1739 = vadd.f32 %v1271, %v1738
        %v1740 = vpop.f32.mrf.mxu0
        %1741 = vmatprep.mubr.bf16.mxu0 0
        %1742 = vmatmul.mubr.bf16.gmra.mxu0 %v1594
        %v1743 = vpop.f32.mrf.mxu0
        %v1744 = vadd.f32 %v1276, %v1743
        %v1745 = vpop.f32.mrf.mxu0
        %v1746 = vpop.f32.mrf.mxu0
        %v1747 = vadd.f32 %v1279, %v1746
        %v1748 = vpop.f32.mrf.mxu0
        %1749 = vmatprep.mubr.bf16.mxu0 0
        %1750 = vmatmul.mubr.bf16.gmra.mxu0 %v1597
        %v1751 = vpop.f32.mrf.mxu0
        %v1752 = vadd.f32 %v1284, %v1751
        %v1753 = vpop.f32.mrf.mxu0
        %v1754 = vpop.f32.mrf.mxu0
        %v1755 = vadd.f32 %v1287, %v1754
        %v1756 = vpop.f32.mrf.mxu0
        %1757 = vmatprep.mubr.bf16.mxu0 0
        %1758 = vmatmul.mubr.bf16.gmra.mxu0 %v1600
        %v1759 = vpop.f32.mrf.mxu0
        %v1760 = vadd.f32 %v1292, %v1759
        %v1761 = vpop.f32.mrf.mxu0
        %v1762 = vpop.f32.mrf.mxu0
        %v1763 = vadd.f32 %v1295, %v1762
        %v1764 = vpop.f32.mrf.mxu0
        %1765 = vmatprep.mubr.bf16.mxu0 0
        %1766 = vmatmul.mubr.bf16.gmra.mxu0 %v1603
        %v1767 = vpop.f32.mrf.mxu0
        %v1768 = vadd.f32 %v1300, %v1767
        %v1769 = vpop.f32.mrf.mxu0
        %v1770 = vpop.f32.mrf.mxu0
        %v1771 = vadd.f32 %v1303, %v1770
        %v1772 = vpop.f32.mrf.mxu0
        %1773 = vmatprep.mubr.bf16.mxu0 0
        %1774 = vmatmul.mubr.bf16.gmra.mxu0 %v1606
        %v1775 = vpop.f32.mrf.mxu0
        %v1776 = vadd.f32 %v1308, %v1775
        %v1777 = vpop.f32.mrf.mxu0
        %v1778 = vpop.f32.mrf.mxu0
        %v1779 = vadd.f32 %v1311, %v1778
        %v1780 = vpop.f32.mrf.mxu0
        %1781 = vmatprep.mubr.bf16.mxu0 0
        %1782 = vmatmul.mubr.bf16.gmra.mxu0 %v1609
        %v1783 = vpop.f32.mrf.mxu0
        %v1784 = vadd.f32 %v1316, %v1783
        %v1785 = vpop.f32.mrf.mxu0
        %v1786 = vpop.f32.mrf.mxu0
        %v1787 = vadd.f32 %v1319, %v1786
        %v1788 = vpop.f32.mrf.mxu0
        %1789 = vmatprep.mubr.bf16.mxu0 0
        %1790 = vmatmul.mubr.bf16.gmra.mxu0 %v1612
        %v1791 = vpop.f32.mrf.mxu0
        %v1792 = vadd.f32 %v1324, %v1791
        %v1793 = vpop.f32.mrf.mxu0
        %v1794 = vpop.f32.mrf.mxu0
        %v1795 = vadd.f32 %v1327, %v1794
        %v1796 = vpop.f32.mrf.mxu0
        %1797 = vmatprep.mubr.bf16.mxu0 0
        %1798 = vmatmul.mubr.bf16.gmra.mxu0 %v1615
        %v1799 = vpop.f32.mrf.mxu0
        %v1800 = vadd.f32 %v1332, %v1799
        %v1801 = vpop.f32.mrf.mxu0
        %v1802 = vpop.f32.mrf.mxu0
        %v1803 = vadd.f32 %v1335, %v1802
        %v1804 = vpop.f32.mrf.mxu0
        %1805 = vmatprep.mubr.bf16.mxu0 0
        %1806 = vmatmul.mubr.bf16.gmra.mxu0 %v1618
        %v1807 = vpop.f32.mrf.mxu0
        %v1808 = vadd.f32 %v1340, %v1807
        %v1809 = vpop.f32.mrf.mxu0
        %v1810 = vpop.f32.mrf.mxu0
        %v1811 = vadd.f32 %v1343, %v1810
        %v1812 = vpop.f32.mrf.mxu0
        %1813 = vmatprep.mubr.bf16.mxu0 0
        %1814 = vmatmul.mubr.bf16.gmra.mxu0 %v1621
        %v1815 = vpop.f32.mrf.mxu0
        %v1816 = vadd.f32 %v1348, %v1815
        %v1817 = vpop.f32.mrf.mxu0
        %v1818 = vpop.f32.mrf.mxu0
        %v1819 = vadd.f32 %v1351, %v1818
        %v1820 = vpop.f32.mrf.mxu0
        %1821 = vmatprep.mubr.bf16.mxu0 0
        %1822 = vmatmul.mubr.bf16.gmra.mxu0 %v1624
        %v1823 = vpop.f32.mrf.mxu0
        %v1824 = vadd.f32 %v1356, %v1823
        %v1825 = vpop.f32.mrf.mxu0
        %v1826 = vpop.f32.mrf.mxu0
        %v1827 = vadd.f32 %v1359, %v1826
        %v1828 = vpop.f32.mrf.mxu0
        %1829 = vmatprep.mubr.bf16.mxu0 0
        %1830 = vmatmul.mubr.bf16.gmra.mxu0 %v1627
        %v1831 = vpop.f32.mrf.mxu0
        %v1832 = vadd.f32 %v1364, %v1831
        %v1833 = vpop.f32.mrf.mxu0
        %v1834 = vpop.f32.mrf.mxu0
        %v1835 = vadd.f32 %v1367, %v1834
        %v1836 = vpop.f32.mrf.mxu0
        %1837 = vmatprep.mubr.bf16.mxu0 0
        %1838 = vmatmul.mubr.bf16.gmra.mxu0 %v1630
        %v1839 = vpop.f32.mrf.mxu0
        %v1840 = vadd.f32 %v1372, %v1839
        %v1841 = vpop.f32.mrf.mxu0
        %v1842 = vpop.f32.mrf.mxu0
        %v1843 = vadd.f32 %v1375, %v1842
        %v1844 = vpop.f32.mrf.mxu0
        %1845 = vmatprep.mubr.bf16.mxu0 0
        %1846 = vmatmul.mubr.bf16.gmra.mxu0 %v1633
        %v1847 = vpop.f32.mrf.mxu0
        %v1848 = vadd.f32 %v1380, %v1847
        %v1849 = vpop.f32.mrf.mxu0
        %v1850 = vpop.f32.mrf.mxu0
        %v1851 = vadd.f32 %v1383, %v1850
        %v1852 = vpop.f32.mrf.mxu0
        %1853 = vmatprep.mubr.bf16.mxu0 0
        %1854 = vmatmul.mubr.bf16.gmra.mxu0 %v1636
        %v1855 = vpop.f32.mrf.mxu0
        %v1856 = vadd.f32 %v1388, %v1855
        %v1857 = vpop.f32.mrf.mxu0
        %v1858 = vpop.f32.mrf.mxu0
        %v1859 = vadd.f32 %v1391, %v1858
        %v1860 = vpop.f32.mrf.mxu0
        %1861 = vmatprep.mubr.bf16.mxu0 0
        %1862 = vmatmul.mubr.bf16.gmra.mxu0 %v1639
        %v1863 = vpop.f32.mrf.mxu0
        %v1864 = vadd.f32 %v1396, %v1863
        %v1865 = vpop.f32.mrf.mxu0
        %v1866 = vpop.f32.mrf.mxu0
        %v1867 = vadd.f32 %v1399, %v1866
        %v1868 = vpop.f32.mrf.mxu0
        %1869 = vmatprep.mubr.bf16.mxu0 0
        %1870 = vmatmul.mubr.bf16.gmra.mxu0 %v1642
        %v1871 = vpop.f32.mrf.mxu0
        %v1872 = vadd.f32 %v1404, %v1871
        %v1873 = vpop.f32.mrf.mxu0
        %v1874 = vpop.f32.mrf.mxu0
        %v1875 = vadd.f32 %v1407, %v1874
        %v1876 = vpop.f32.mrf.mxu0
        %1877 = vmatprep.mubr.bf16.mxu0 0
        %1878 = vmatmul.mubr.bf16.gmra.mxu0 %v1645
        %v1879 = vpop.f32.mrf.mxu0
        %v1880 = vadd.f32 %v1412, %v1879
        %v1881 = vpop.f32.mrf.mxu0
        %v1882 = vpop.f32.mrf.mxu0
        %v1883 = vadd.f32 %v1415, %v1882
        %v1884 = vpop.f32.mrf.mxu0
        %1885 = vmatprep.mubr.bf16.mxu0 0
        %1886 = vmatmul.mubr.bf16.gmra.mxu0 %v1648
        %v1887 = vpop.f32.mrf.mxu0
        %v1888 = vadd.f32 %v1420, %v1887
        %v1889 = vpop.f32.mrf.mxu0
        %v1890 = vpop.f32.mrf.mxu0
        %v1891 = vadd.f32 %v1423, %v1890
        %v1892 = vpop.f32.mrf.mxu0
        %1893 = vmatprep.mubr.bf16.mxu0 0
        %1894 = vmatmul.mubr.bf16.gmra.mxu0 %v1651
        %v1895 = vpop.f32.mrf.mxu0
        %v1896 = vadd.f32 %v1428, %v1895
        %v1897 = vpop.f32.mrf.mxu0
        %v1898 = vpop.f32.mrf.mxu0
        %v1899 = vadd.f32 %v1431, %v1898
        %v1900 = vpop.f32.mrf.mxu0
        %1901 = vmatprep.mubr.bf16.mxu0 0
        %1902 = vmatmul.mubr.bf16.gmra.mxu0 %v1654
        %v1903 = vpop.f32.mrf.mxu0
        %v1904 = vadd.f32 %v1436, %v1903
        %v1905 = vpop.f32.mrf.mxu0
        %v1906 = vpop.f32.mrf.mxu0
        %v1907 = vadd.f32 %v1439, %v1906
        %v1908 = vpop.f32.mrf.mxu0
        %1909 = vmatprep.mubr.bf16.mxu0 0
        %1910 = vmatmul.mubr.bf16.gmra.mxu0 %v1657
        %v1911 = vpop.f32.mrf.mxu0
        %v1912 = vadd.f32 %v1444, %v1911
        %v1913 = vpop.f32.mrf.mxu0
        %v1914 = vpop.f32.mrf.mxu0
        %v1915 = vadd.f32 %v1447, %v1914
        %v1916 = vpop.f32.mrf.mxu0
        %1917 = vmatprep.mubr.bf16.mxu0 0
        %1918 = vmatmul.mubr.bf16.gmra.mxu0 %v1660
        %v1919 = vpop.f32.mrf.mxu0
        %v1920 = vadd.f32 %v1452, %v1919
        %v1921 = vpop.f32.mrf.mxu0
        %v1922 = vpop.f32.mrf.mxu0
        %v1923 = vadd.f32 %v1455, %v1922
        %v1924 = vpop.f32.mrf.mxu0
        %1925 = vmatprep.mubr.bf16.mxu0 0
        %1926 = vmatmul.mubr.bf16.gmra.mxu0 %v1663
        %v1927 = vpop.f32.mrf.mxu0
        %v1928 = vadd.f32 %v1460, %v1927
        %v1929 = vpop.f32.mrf.mxu0
        %v1930 = vpop.f32.mrf.mxu0
        %v1931 = vadd.f32 %v1463, %v1930
        %v1932 = vpop.f32.mrf.mxu0
        %1933 = vmatprep.mubr.bf16.mxu0 0
        %1934 = vmatmul.mubr.bf16.gmra.mxu0 %v1666
        %v1935 = vpop.f32.mrf.mxu0
        %v1936 = vadd.f32 %v1468, %v1935
        %v1937 = vpop.f32.mrf.mxu0
        %v1938 = vpop.f32.mrf.mxu0
        %v1939 = vadd.f32 %v1471, %v1938
        %v1940 = vpop.f32.mrf.mxu0
        %1941 = vmatprep.mubr.bf16.mxu0 0
        %1942 = vmatmul.mubr.bf16.gmra.mxu0 %v1669
        %v1943 = vpop.f32.mrf.mxu0
        %v1944 = vadd.f32 %v1476, %v1943
        %v1945 = vpop.f32.mrf.mxu0
        %v1946 = vpop.f32.mrf.mxu0
        %v1947 = vadd.f32 %v1479, %v1946
        %v1948 = vpop.f32.mrf.mxu0
        %1949 = vmatprep.mubr.bf16.mxu0 0
        %1950 = vmatmul.mubr.bf16.gmra.mxu0 %v1672
        %v1951 = vpop.f32.mrf.mxu0
        %v1952 = vadd.f32 %v1484, %v1951
        %v1953 = vpop.f32.mrf.mxu0
        %v1954 = vpop.f32.mrf.mxu0
        %v1955 = vadd.f32 %v1487, %v1954
        %v1956 = vpop.f32.mrf.mxu0
        %1957 = vmatprep.mubr.bf16.mxu0 0
        %1958 = vmatmul.mubr.bf16.gmra.mxu0 %v1675
        %v1959 = vpop.f32.mrf.mxu0
        %v1960 = vadd.f32 %v1492, %v1959
        %v1961 = vpop.f32.mrf.mxu0
        %v1962 = vpop.f32.mrf.mxu0
        %v1963 = vadd.f32 %v1495, %v1962
        %v1964 = vpop.f32.mrf.mxu0
        %1965 = vmatprep.mubr.bf16.mxu0 0
        %1966 = vmatmul.mubr.bf16.gmra.mxu0 %v1678
        %v1967 = vpop.f32.mrf.mxu0
        %v1968 = vadd.f32 %v1500, %v1967
        %v1969 = vpop.f32.mrf.mxu0
        %v1970 = vpop.f32.mrf.mxu0
        %v1971 = vadd.f32 %v1503, %v1970
        %v1972 = vpop.f32.mrf.mxu0
        %1973 = vmatprep.mubr.bf16.mxu0 0
        %1974 = vmatmul.mubr.bf16.gmra.mxu0 %v1681
        %v1975 = vpop.f32.mrf.mxu0
        %v1976 = vadd.f32 %v1508, %v1975
        %v1977 = vpop.f32.mrf.mxu0
        %v1978 = vpop.f32.mrf.mxu0
        %v1979 = vadd.f32 %v1511, %v1978
        %v1980 = vpop.f32.mrf.mxu0
        %1981 = vmatprep.mubr.bf16.mxu0 0
        %1982 = vmatmul.mubr.bf16.gmra.mxu0 %v1684
        %v1983 = vpop.f32.mrf.mxu0
        %v1984 = vadd.f32 %v1516, %v1983
        %v1985 = vpop.f32.mrf.mxu0
        %v1986 = vpop.f32.mrf.mxu0
        %v1987 = vadd.f32 %v1519, %v1986
        %v1988 = vpop.f32.mrf.mxu0
        %1989 = vmatprep.mubr.bf16.mxu0 0
        %1990 = vmatmul.mubr.bf16.gmra.mxu0 %v1687
        %v1991 = vpop.f32.mrf.mxu0
        %v1992 = vadd.f32 %v1524, %v1991
        %v1993 = vpop.f32.mrf.mxu0
        %v1994 = vpop.f32.mrf.mxu0
        %v1995 = vadd.f32 %v1527, %v1994
        %v1996 = vpop.f32.mrf.mxu0
        %1997 = vmatprep.mubr.bf16.mxu0 0
        %1998 = vmatmul.mubr.bf16.gmra.mxu0 %v1690
        %v1999 = vpop.f32.mrf.mxu0
        %v2000 = vadd.f32 %v1532, %v1999
        %v2001 = vpop.f32.mrf.mxu0
        %v2002 = vpop.f32.mrf.mxu0
        %v2003 = vadd.f32 %v1535, %v2002
        %v2004 = vpop.f32.mrf.mxu0
        %2005 = vmatprep.mubr.bf16.mxu0 0
        %2006 = vmatmul.mubr.bf16.gmra.mxu0 %v1693
        %v2007 = vpop.f32.mrf.mxu0
        %v2008 = vadd.f32 %v1540, %v2007
        %v2009 = vpop.f32.mrf.mxu0
        %v2010 = vpop.f32.mrf.mxu0
        %v2011 = vadd.f32 %v1543, %v2010
        %v2012 = vpop.f32.mrf.mxu0
        %2013 = vmatprep.mubr.bf16.mxu0 0
        %2014 = vmatmul.mubr.bf16.gmra.mxu0 %v1696
        %v2015 = vpop.f32.mrf.mxu0
        %v2016 = vadd.f32 %v1548, %v2015
        %v2017 = vpop.f32.mrf.mxu0
        %v2018 = vpop.f32.mrf.mxu0
        %v2019 = vadd.f32 %v1551, %v2018
        %v2020 = vpop.f32.mrf.mxu0
        %2021 = vdwg.mxu0
        %v2022 = vmul.f32 %v1736, 0.125
        %v2023 = vmul.f32 %v1739, 0.125
        %v2024 = vmul.f32 %v1744, 0.125
        %v2025 = vmul.f32 %v1747, 0.125
        %v2026 = vmul.f32 %v1752, 0.125
        %v2027 = vmul.f32 %v1755, 0.125
        %v2028 = vmul.f32 %v1760, 0.125
        %v2029 = vmul.f32 %v1763, 0.125
        %v2030 = vmul.f32 %v1768, 0.125
        %v2031 = vmul.f32 %v1771, 0.125
        %v2032 = vmul.f32 %v1776, 0.125
        %v2033 = vmul.f32 %v1779, 0.125
        %v2034 = vmul.f32 %v1784, 0.125
        %v2035 = vmul.f32 %v1787, 0.125
        %v2036 = vmul.f32 %v1792, 0.125
        %v2037 = vmul.f32 %v1795, 0.125
        %v2038 = vmul.f32 %v1800, 0.125
        %v2039 = vmul.f32 %v1803, 0.125
        %v2040 = vmul.f32 %v1808, 0.125
        %v2041 = vmul.f32 %v1811, 0.125
        %v2042 = vmul.f32 %v1816, 0.125
        %v2043 = vmul.f32 %v1819, 0.125
        %v2044 = vmul.f32 %v1824, 0.125
        %v2045 = vmul.f32 %v1827, 0.125
        %v2046 = vmul.f32 %v1832, 0.125
        %v2047 = vmul.f32 %v1835, 0.125
        %v2048 = vmul.f32 %v1840, 0.125
        %v2049 = vmul.f32 %v1843, 0.125
        %v2050 = vmul.f32 %v1848, 0.125
        %v2051 = vmul.f32 %v1851, 0.125
        %v2052 = vmul.f32 %v1856, 0.125
        %v2053 = vmul.f32 %v1859, 0.125
        %v2054 = vmul.f32 %v1864, 0.125
        %v2055 = vmul.f32 %v1867, 0.125
        %v2056 = vmul.f32 %v1872, 0.125
        %v2057 = vmul.f32 %v1875, 0.125
        %v2058 = vmul.f32 %v1880, 0.125
        %v2059 = vmul.f32 %v1883, 0.125
        %v2060 = vmul.f32 %v1888, 0.125
        %v2061 = vmul.f32 %v1891, 0.125
        %v2062 = vmul.f32 %v1896, 0.125
        %v2063 = vmul.f32 %v1899, 0.125
        %v2064 = vmul.f32 %v1904, 0.125
        %v2065 = vmul.f32 %v1907, 0.125
        %v2066 = vmul.f32 %v1912, 0.125
        %v2067 = vmul.f32 %v1915, 0.125
        %v2068 = vmul.f32 %v1920, 0.125
        %v2069 = vmul.f32 %v1923, 0.125
        %v2070 = vmul.f32 %v1928, 0.125
        %v2071 = vmul.f32 %v1931, 0.125
        %v2072 = vmul.f32 %v1936, 0.125
        %v2073 = vmul.f32 %v1939, 0.125
        %v2074 = vmul.f32 %v1944, 0.125
        %v2075 = vmul.f32 %v1947, 0.125
        %v2076 = vmul.f32 %v1952, 0.125
        %v2077 = vmul.f32 %v1955, 0.125
        %v2078 = vmul.f32 %v1960, 0.125
        %v2079 = vmul.f32 %v1963, 0.125
        %v2080 = vmul.f32 %v1968, 0.125
        %v2081 = vmul.f32 %v1971, 0.125
        %v2082 = vmul.f32 %v1976, 0.125
        %v2083 = vmul.f32 %v1979, 0.125
        %v2084 = vmul.f32 %v1984, 0.125
        %v2085 = vmul.f32 %v1987, 0.125
        %v2086 = vmul.f32 %v1992, 0.125
        %v2087 = vmul.f32 %v1995, 0.125
        %v2088 = vmul.f32 %v2000, 0.125
        %v2089 = vmul.f32 %v2003, 0.125
        %v2090 = vmul.f32 %v2008, 0.125
        %v2091 = vmul.f32 %v2011, 0.125
        %v2092 = vmul.f32 %v2016, 0.125
        %v2093 = vmul.f32 %v2019, 0.125
        %v2095 = vlaneseq
        %v2096 = vshrl.u32 %v2095, 7
        %v2097 = vsub.s32 0, %v2096
        %v2098 = vrot.slane %v1083, %v2097
        %v2100 = vadd.f32 %v2022, %v2098
        %v2101 = vadd.f32 %v2023, %v2098
        %v2102 = vadd.f32 %v2024, %v2098
        %v2103 = vadd.f32 %v2025, %v2098
        %v2104 = vadd.f32 %v2026, %v2098
        %v2105 = vadd.f32 %v2027, %v2098
        %v2106 = vadd.f32 %v2028, %v2098
        %v2107 = vadd.f32 %v2029, %v2098
        %v2108 = vadd.f32 %v2030, %v2098
        %v2109 = vadd.f32 %v2031, %v2098
        %v2110 = vadd.f32 %v2032, %v2098
        %v2111 = vadd.f32 %v2033, %v2098
        %v2112 = vadd.f32 %v2034, %v2098
        %v2113 = vadd.f32 %v2035, %v2098
        %v2114 = vadd.f32 %v2036, %v2098
        %v2115 = vadd.f32 %v2037, %v2098
        %v2116 = vadd.f32 %v2038, %v2098
        %v2117 = vadd.f32 %v2039, %v2098
        %v2118 = vadd.f32 %v2040, %v2098
        %v2119 = vadd.f32 %v2041, %v2098
        %v2120 = vadd.f32 %v2042, %v2098
        %v2121 = vadd.f32 %v2043, %v2098
        %v2122 = vadd.f32 %v2044, %v2098
        %v2123 = vadd.f32 %v2045, %v2098
        %v2124 = vadd.f32 %v2046, %v2098
        %v2125 = vadd.f32 %v2047, %v2098
        %v2126 = vadd.f32 %v2048, %v2098
        %v2127 = vadd.f32 %v2049, %v2098
        %v2128 = vadd.f32 %v2050, %v2098
        %v2129 = vadd.f32 %v2051, %v2098
        %v2130 = vadd.f32 %v2052, %v2098
        %v2131 = vadd.f32 %v2053, %v2098
        %v2132 = vadd.f32 %v2054, %v2098
        %v2133 = vadd.f32 %v2055, %v2098
        %v2134 = vadd.f32 %v2056, %v2098
        %v2135 = vadd.f32 %v2057, %v2098
        %v2136 = vadd.f32 %v2058, %v2098
        %v2137 = vadd.f32 %v2059, %v2098
        %v2138 = vadd.f32 %v2060, %v2098
        %v2139 = vadd.f32 %v2061, %v2098
        %v2140 = vadd.f32 %v2062, %v2098
        %v2141 = vadd.f32 %v2063, %v2098
        %v2142 = vadd.f32 %v2064, %v2098
        %v2143 = vadd.f32 %v2065, %v2098
        %v2144 = vadd.f32 %v2066, %v2098
        %v2145 = vadd.f32 %v2067, %v2098
        %v2146 = vadd.f32 %v2068, %v2098
        %v2147 = vadd.f32 %v2069, %v2098
        %v2148 = vadd.f32 %v2070, %v2098
        %v2149 = vadd.f32 %v2071, %v2098
        %v2150 = vadd.f32 %v2072, %v2098
        %v2151 = vadd.f32 %v2073, %v2098
        %v2152 = vadd.f32 %v2074, %v2098
        %v2153 = vadd.f32 %v2075, %v2098
        %v2154 = vadd.f32 %v2076, %v2098
        %v2155 = vadd.f32 %v2077, %v2098
        %v2156 = vadd.f32 %v2078, %v2098
        %v2157 = vadd.f32 %v2079, %v2098
        %v2158 = vadd.f32 %v2080, %v2098
        %v2159 = vadd.f32 %v2081, %v2098
        %v2160 = vadd.f32 %v2082, %v2098
        %v2161 = vadd.f32 %v2083, %v2098
        %v2162 = vadd.f32 %v2084, %v2098
        %v2163 = vadd.f32 %v2085, %v2098
        %v2164 = vadd.f32 %v2086, %v2098
        %v2165 = vadd.f32 %v2087, %v2098
        %v2166 = vadd.f32 %v2088, %v2098
        %v2167 = vadd.f32 %v2089, %v2098
        %v2168 = vadd.f32 %v2090, %v2098
        %v2169 = vadd.f32 %v2091, %v2098
        %v2170 = vadd.f32 %v2092, %v2098
        %v2171 = vadd.f32 %v2093, %v2098
        %2172 = vst.msk [vmem:[%s211] sm:$0xff] %vm1120, %v2100
        %2173 = vst.msk [vmem:[%s211 + $0x8] sm:$0xff] %vm1120, %v2101
        %2174 = vst.msk [vmem:[%s211 + $0x10] sm:$0xff] %vm1120, %v2102
        %2175 = vst.msk [vmem:[%s211 + $0x18] sm:$0xff] %vm1120, %v2103
        %2176 = vst.msk [vmem:[%s211 + $0x20] sm:$0xff] %vm1120, %v2104
        %2177 = vst.msk [vmem:[%s211 + $0x28] sm:$0xff] %vm1120, %v2105
        %2178 = vst.msk [vmem:[%s211 + $0x30] sm:$0xff] %vm1120, %v2106
        %2179 = vst.msk [vmem:[%s211 + $0x38] sm:$0xff] %vm1120, %v2107
        %2180 = vst.msk [vmem:[%s211 + $0x40] sm:$0xff] %vm1120, %v2108
        %2181 = vst.msk [vmem:[%s211 + $0x48] sm:$0xff] %vm1120, %v2109
        %2182 = vst.msk [vmem:[%s211 + $0x50] sm:$0xff] %vm1120, %v2110
        %2183 = vst.msk [vmem:[%s211 + $0x58] sm:$0xff] %vm1120, %v2111
        %2184 = vst.msk [vmem:[%s211 + $0x60] sm:$0xff] %vm1120, %v2112
        %2185 = vst.msk [vmem:[%s211 + $0x68] sm:$0xff] %vm1120, %v2113
        %2186 = vst.msk [vmem:[%s211 + $0x70] sm:$0xff] %vm1120, %v2114
        %2187 = vst.msk [vmem:[%s211 + $0x78] sm:$0xff] %vm1120, %v2115
        %2188 = vst.msk [vmem:[%s211 + $0x80] sm:$0xff] %vm1120, %v2116
        %2189 = vst.msk [vmem:[%s211 + $0x88] sm:$0xff] %vm1120, %v2117
        %2190 = vst.msk [vmem:[%s211 + $0x90] sm:$0xff] %vm1120, %v2118
        %2191 = vst.msk [vmem:[%s211 + $0x98] sm:$0xff] %vm1120, %v2119
        %2192 = vst.msk [vmem:[%s211 + $0xa0] sm:$0xff] %vm1120, %v2120
        %2193 = vst.msk [vmem:[%s211 + $0xa8] sm:$0xff] %vm1120, %v2121
        %2194 = vst.msk [vmem:[%s211 + $0xb0] sm:$0xff] %vm1120, %v2122
        %2195 = vst.msk [vmem:[%s211 + $0xb8] sm:$0xff] %vm1120, %v2123
        %2196 = vst.msk [vmem:[%s211 + $0xc0] sm:$0xff] %vm1120, %v2124
        %2197 = vst.msk [vmem:[%s211 + $0xc8] sm:$0xff] %vm1120, %v2125
        %2198 = vst.msk [vmem:[%s211 + $0xd0] sm:$0xff] %vm1120, %v2126
        %2199 = vst.msk [vmem:[%s211 + $0xd8] sm:$0xff] %vm1120, %v2127
        %2200 = vst.msk [vmem:[%s211 + $0xe0] sm:$0xff] %vm1120, %v2128
        %2201 = vst.msk [vmem:[%s211 + $0xe8] sm:$0xff] %vm1120, %v2129
        %2202 = vst.msk [vmem:[%s211 + $0xf0] sm:$0xff] %vm1120, %v2130
        %2203 = vst.msk [vmem:[%s211 + $0xf8] sm:$0xff] %vm1120, %v2131
        %2204 = vst.msk [vmem:[%s211 + $0x100] sm:$0xff] %vm1120, %v2132
        %2205 = vst.msk [vmem:[%s211 + $0x108] sm:$0xff] %vm1120, %v2133
        %2206 = vst.msk [vmem:[%s211 + $0x110] sm:$0xff] %vm1120, %v2134
        %2207 = vst.msk [vmem:[%s211 + $0x118] sm:$0xff] %vm1120, %v2135
        %2208 = vst.msk [vmem:[%s211 + $0x120] sm:$0xff] %vm1120, %v2136
        %2209 = vst.msk [vmem:[%s211 + $0x128] sm:$0xff] %vm1120, %v2137
        %2210 = vst.msk [vmem:[%s211 + $0x130] sm:$0xff] %vm1120, %v2138
        %2211 = vst.msk [vmem:[%s211 + $0x138] sm:$0xff] %vm1120, %v2139
        %2212 = vst.msk [vmem:[%s211 + $0x140] sm:$0xff] %vm1120, %v2140
        %2213 = vst.msk [vmem:[%s211 + $0x148] sm:$0xff] %vm1120, %v2141
        %2214 = vst.msk [vmem:[%s211 + $0x150] sm:$0xff] %vm1120, %v2142
        %2215 = vst.msk [vmem:[%s211 + $0x158] sm:$0xff] %vm1120, %v2143
        %2216 = vst.msk [vmem:[%s211 + $0x160] sm:$0xff] %vm1120, %v2144
        %2217 = vst.msk [vmem:[%s211 + $0x168] sm:$0xff] %vm1120, %v2145
        %2218 = vst.msk [vmem:[%s211 + $0x170] sm:$0xff] %vm1120, %v2146
        %2219 = vst.msk [vmem:[%s211 + $0x178] sm:$0xff] %vm1120, %v2147
        %2220 = vst.msk [vmem:[%s211 + $0x180] sm:$0xff] %vm1120, %v2148
        %2221 = vst.msk [vmem:[%s211 + $0x188] sm:$0xff] %vm1120, %v2149
        %2222 = vst.msk [vmem:[%s211 + $0x190] sm:$0xff] %vm1120, %v2150
        %2223 = vst.msk [vmem:[%s211 + $0x198] sm:$0xff] %vm1120, %v2151
        %2224 = vst.msk [vmem:[%s211 + $0x1a0] sm:$0xff] %vm1120, %v2152
        %2225 = vst.msk [vmem:[%s211 + $0x1a8] sm:$0xff] %vm1120, %v2153
        %2226 = vst.msk [vmem:[%s211 + $0x1b0] sm:$0xff] %vm1120, %v2154
        %2227 = vst.msk [vmem:[%s211 + $0x1b8] sm:$0xff] %vm1120, %v2155
        %2228 = vst.msk [vmem:[%s211 + $0x1c0] sm:$0xff] %vm1120, %v2156
        %2229 = vst.msk [vmem:[%s211 + $0x1c8] sm:$0xff] %vm1120, %v2157
        %2230 = vst.msk [vmem:[%s211 + $0x1d0] sm:$0xff] %vm1120, %v2158
        %2231 = vst.msk [vmem:[%s211 + $0x1d8] sm:$0xff] %vm1120, %v2159
        %2232 = vst.msk [vmem:[%s211 + $0x1e0] sm:$0xff] %vm1120, %v2160
        %2233 = vst.msk [vmem:[%s211 + $0x1e8] sm:$0xff] %vm1120, %v2161
        %2234 = vst.msk [vmem:[%s211 + $0x1f0] sm:$0xff] %vm1120, %v2162
        %2235 = vst.msk [vmem:[%s211 + $0x1f8] sm:$0xff] %vm1120, %v2163
        %2236 = vst.msk [vmem:[%s211 + $0x200] sm:$0xff] %vm1120, %v2164
        %2237 = vst.msk [vmem:[%s211 + $0x208] sm:$0xff] %vm1120, %v2165
        %2238 = vst.msk [vmem:[%s211 + $0x210] sm:$0xff] %vm1120, %v2166
        %2239 = vst.msk [vmem:[%s211 + $0x218] sm:$0xff] %vm1120, %v2167
        %2240 = vst.msk [vmem:[%s211 + $0x220] sm:$0xff] %vm1120, %v2168
        %2241 = vst.msk [vmem:[%s211 + $0x228] sm:$0xff] %vm1120, %v2169
        %2242 = vst.msk [vmem:[%s211 + $0x230] sm:$0xff] %vm1120, %v2170
        %2243 = vst.msk [vmem:[%s211 + $0x238] sm:$0xff] %vm1120, %v2171
        %v2245 = vsel %vm1229, %v1078, 0
        %2247 = vmatprep.subr.bf16.mxu0 0
        %2248 = vmatpush1.bf16.msra.mxu0 0
        %2249 = vmatprep.subr.bf16.mxu0 0
        %2250 = vmatpush1.bf16.msra.mxu0 0
        %2251 = vmatprep.subr.bf16.mxu0 0
        %2252 = vmatpush1.bf16.msra.mxu0 0
        %2253 = vmatprep.subr.bf16.mxu0 0
        %2254 = vmatpush1.bf16.msra.mxu0 0
        %2255 = vmatprep.subr.bf16.mxu0 0
        %2256 = vmatpush1.bf16.msra.mxu0 0
        %2257 = vmatprep.subr.bf16.mxu0 0
        %2258 = vmatpush1.bf16.msra.mxu0 0
        %2259 = vmatprep.subr.bf16.mxu0 0
        %2260 = vmatpush1.bf16.msra.mxu0 0
        %2261 = vmatprep.subr.bf16.mxu0 0
        %2262 = vmatpush1.bf16.msra.mxu0 %v2245
        %2263 = vmatprep.subr.bf16.mxu0 0
        %2264 = vmatpush2.bf16.msra.mxu0 0
        %2265 = vmatprep.subr.bf16.mxu0 0
        %2266 = vmatpush2.bf16.msra.mxu0 0
        %2267 = vmatprep.subr.bf16.mxu0 0
        %2268 = vmatpush2.bf16.msra.mxu0 0
        %2269 = vmatprep.subr.bf16.mxu0 0
        %2270 = vmatpush2.bf16.msra.mxu0 0
        %2271 = vmatprep.subr.bf16.mxu0 0
        %2272 = vmatpush2.bf16.msra.mxu0 0
        %2273 = vmatprep.subr.bf16.mxu0 0
        %2274 = vmatpush2.bf16.msra.mxu0 0
        %2275 = vmatprep.subr.bf16.mxu0 0
        %2276 = vmatpush2.bf16.msra.mxu0 0
        %2277 = vmatprep.subr.bf16.mxu0 0
        %2278 = vmatpush2.bf16.msra.mxu0 0
        %2279 = vmatprep.mubr.bf16.mxu0 0
        %2280 = vmatmul.mubr.bf16.gmra.mxu0 %v1122
        %v2281 = vpop.f32.mrf.mxu0
        %v2282 = vadd.f32 0.0, %v2281
        %v2283 = vpop.f32.mrf.mxu0
        %v2284 = vpop.f32.mrf.mxu0
        %v2285 = vadd.f32 0.0, %v2284
        %v2286 = vpop.f32.mrf.mxu0
        %2287 = vmatprep.mubr.bf16.mxu0 0
        %2288 = vmatmul.mubr.bf16.gmra.mxu0 %v1125
        %v2289 = vpop.f32.mrf.mxu0
        %v2290 = vadd.f32 0.0, %v2289
        %v2291 = vpop.f32.mrf.mxu0
        %v2292 = vpop.f32.mrf.mxu0
        %v2293 = vadd.f32 0.0, %v2292
        %v2294 = vpop.f32.mrf.mxu0
        %2295 = vmatprep.mubr.bf16.mxu0 0
        %2296 = vmatmul.mubr.bf16.gmra.mxu0 %v1128
        %v2297 = vpop.f32.mrf.mxu0
        %v2298 = vadd.f32 0.0, %v2297
        %v2299 = vpop.f32.mrf.mxu0
        %v2300 = vpop.f32.mrf.mxu0
        %v2301 = vadd.f32 0.0, %v2300
        %v2302 = vpop.f32.mrf.mxu0
        %2303 = vmatprep.mubr.bf16.mxu0 0
        %2304 = vmatmul.mubr.bf16.gmra.mxu0 %v1131
        %v2305 = vpop.f32.mrf.mxu0
        %v2306 = vadd.f32 0.0, %v2305
        %v2307 = vpop.f32.mrf.mxu0
        %v2308 = vpop.f32.mrf.mxu0
        %v2309 = vadd.f32 0.0, %v2308
        %v2310 = vpop.f32.mrf.mxu0
        %2311 = vmatprep.mubr.bf16.mxu0 0
        %2312 = vmatmul.mubr.bf16.gmra.mxu0 %v1134
        %v2313 = vpop.f32.mrf.mxu0
        %v2314 = vadd.f32 0.0, %v2313
        %v2315 = vpop.f32.mrf.mxu0
        %v2316 = vpop.f32.mrf.mxu0
        %v2317 = vadd.f32 0.0, %v2316
        %v2318 = vpop.f32.mrf.mxu0
        %2319 = vmatprep.mubr.bf16.mxu0 0
        %2320 = vmatmul.mubr.bf16.gmra.mxu0 %v1137
        %v2321 = vpop.f32.mrf.mxu0
        %v2322 = vadd.f32 0.0, %v2321
        %v2323 = vpop.f32.mrf.mxu0
        %v2324 = vpop.f32.mrf.mxu0
        %v2325 = vadd.f32 0.0, %v2324
        %v2326 = vpop.f32.mrf.mxu0
        %2327 = vmatprep.mubr.bf16.mxu0 0
        %2328 = vmatmul.mubr.bf16.gmra.mxu0 %v1140
        %v2329 = vpop.f32.mrf.mxu0
        %v2330 = vadd.f32 0.0, %v2329
        %v2331 = vpop.f32.mrf.mxu0
        %v2332 = vpop.f32.mrf.mxu0
        %v2333 = vadd.f32 0.0, %v2332
        %v2334 = vpop.f32.mrf.mxu0
        %2335 = vmatprep.mubr.bf16.mxu0 0
        %2336 = vmatmul.mubr.bf16.gmra.mxu0 %v1143
        %v2337 = vpop.f32.mrf.mxu0
        %v2338 = vadd.f32 0.0, %v2337
        %v2339 = vpop.f32.mrf.mxu0
        %v2340 = vpop.f32.mrf.mxu0
        %v2341 = vadd.f32 0.0, %v2340
        %v2342 = vpop.f32.mrf.mxu0
        %2343 = vmatprep.mubr.bf16.mxu0 0
        %2344 = vmatmul.mubr.bf16.gmra.mxu0 %v1146
        %v2345 = vpop.f32.mrf.mxu0
        %v2346 = vadd.f32 0.0, %v2345
        %v2347 = vpop.f32.mrf.mxu0
        %v2348 = vpop.f32.mrf.mxu0
        %v2349 = vadd.f32 0.0, %v2348
        %v2350 = vpop.f32.mrf.mxu0
        %2351 = vmatprep.mubr.bf16.mxu0 0
        %2352 = vmatmul.mubr.bf16.gmra.mxu0 %v1149
        %v2353 = vpop.f32.mrf.mxu0
        %v2354 = vadd.f32 0.0, %v2353
        %v2355 = vpop.f32.mrf.mxu0
        %v2356 = vpop.f32.mrf.mxu0
        %v2357 = vadd.f32 0.0, %v2356
        %v2358 = vpop.f32.mrf.mxu0
        %2359 = vmatprep.mubr.bf16.mxu0 0
        %2360 = vmatmul.mubr.bf16.gmra.mxu0 %v1152
        %v2361 = vpop.f32.mrf.mxu0
        %v2362 = vadd.f32 0.0, %v2361
        %v2363 = vpop.f32.mrf.mxu0
        %v2364 = vpop.f32.mrf.mxu0
        %v2365 = vadd.f32 0.0, %v2364
        %v2366 = vpop.f32.mrf.mxu0
        %2367 = vmatprep.mubr.bf16.mxu0 0
        %2368 = vmatmul.mubr.bf16.gmra.mxu0 %v1155
        %v2369 = vpop.f32.mrf.mxu0
        %v2370 = vadd.f32 0.0, %v2369
        %v2371 = vpop.f32.mrf.mxu0
        %v2372 = vpop.f32.mrf.mxu0
        %v2373 = vadd.f32 0.0, %v2372
        %v2374 = vpop.f32.mrf.mxu0
        %2375 = vmatprep.mubr.bf16.mxu0 0
        %2376 = vmatmul.mubr.bf16.gmra.mxu0 %v1158
        %v2377 = vpop.f32.mrf.mxu0
        %v2378 = vadd.f32 0.0, %v2377
        %v2379 = vpop.f32.mrf.mxu0
        %v2380 = vpop.f32.mrf.mxu0
        %v2381 = vadd.f32 0.0, %v2380
        %v2382 = vpop.f32.mrf.mxu0
        %2383 = vmatprep.mubr.bf16.mxu0 0
        %2384 = vmatmul.mubr.bf16.gmra.mxu0 %v1161
        %v2385 = vpop.f32.mrf.mxu0
        %v2386 = vadd.f32 0.0, %v2385
        %v2387 = vpop.f32.mrf.mxu0
        %v2388 = vpop.f32.mrf.mxu0
        %v2389 = vadd.f32 0.0, %v2388
        %v2390 = vpop.f32.mrf.mxu0
        %2391 = vmatprep.mubr.bf16.mxu0 0
        %2392 = vmatmul.mubr.bf16.gmra.mxu0 %v1164
        %v2393 = vpop.f32.mrf.mxu0
        %v2394 = vadd.f32 0.0, %v2393
        %v2395 = vpop.f32.mrf.mxu0
        %v2396 = vpop.f32.mrf.mxu0
        %v2397 = vadd.f32 0.0, %v2396
        %v2398 = vpop.f32.mrf.mxu0
        %2399 = vmatprep.mubr.bf16.mxu0 0
        %2400 = vmatmul.mubr.bf16.gmra.mxu0 %v1167
        %v2401 = vpop.f32.mrf.mxu0
        %v2402 = vadd.f32 0.0, %v2401
        %v2403 = vpop.f32.mrf.mxu0
        %v2404 = vpop.f32.mrf.mxu0
        %v2405 = vadd.f32 0.0, %v2404
        %v2406 = vpop.f32.mrf.mxu0
        %2407 = vmatprep.mubr.bf16.mxu0 0
        %2408 = vmatmul.mubr.bf16.gmra.mxu0 %v1170
        %v2409 = vpop.f32.mrf.mxu0
        %v2410 = vadd.f32 0.0, %v2409
        %v2411 = vpop.f32.mrf.mxu0
        %v2412 = vpop.f32.mrf.mxu0
        %v2413 = vadd.f32 0.0, %v2412
        %v2414 = vpop.f32.mrf.mxu0
        %2415 = vmatprep.mubr.bf16.mxu0 0
        %2416 = vmatmul.mubr.bf16.gmra.mxu0 %v1173
        %v2417 = vpop.f32.mrf.mxu0
        %v2418 = vadd.f32 0.0, %v2417
        %v2419 = vpop.f32.mrf.mxu0
        %v2420 = vpop.f32.mrf.mxu0
        %v2421 = vadd.f32 0.0, %v2420
        %v2422 = vpop.f32.mrf.mxu0
        %2423 = vmatprep.mubr.bf16.mxu0 0
        %2424 = vmatmul.mubr.bf16.gmra.mxu0 %v1176
        %v2425 = vpop.f32.mrf.mxu0
        %v2426 = vadd.f32 0.0, %v2425
        %v2427 = vpop.f32.mrf.mxu0
        %v2428 = vpop.f32.mrf.mxu0
        %v2429 = vadd.f32 0.0, %v2428
        %v2430 = vpop.f32.mrf.mxu0
        %2431 = vmatprep.mubr.bf16.mxu0 0
        %2432 = vmatmul.mubr.bf16.gmra.mxu0 %v1179
        %v2433 = vpop.f32.mrf.mxu0
        %v2434 = vadd.f32 0.0, %v2433
        %v2435 = vpop.f32.mrf.mxu0
        %v2436 = vpop.f32.mrf.mxu0
        %v2437 = vadd.f32 0.0, %v2436
        %v2438 = vpop.f32.mrf.mxu0
        %2439 = vmatprep.mubr.bf16.mxu0 0
        %2440 = vmatmul.mubr.bf16.gmra.mxu0 %v1182
        %v2441 = vpop.f32.mrf.mxu0
        %v2442 = vadd.f32 0.0, %v2441
        %v2443 = vpop.f32.mrf.mxu0
        %v2444 = vpop.f32.mrf.mxu0
        %v2445 = vadd.f32 0.0, %v2444
        %v2446 = vpop.f32.mrf.mxu0
        %2447 = vmatprep.mubr.bf16.mxu0 0
        %2448 = vmatmul.mubr.bf16.gmra.mxu0 %v1185
        %v2449 = vpop.f32.mrf.mxu0
        %v2450 = vadd.f32 0.0, %v2449
        %v2451 = vpop.f32.mrf.mxu0
        %v2452 = vpop.f32.mrf.mxu0
        %v2453 = vadd.f32 0.0, %v2452
        %v2454 = vpop.f32.mrf.mxu0
        %2455 = vmatprep.mubr.bf16.mxu0 0
        %2456 = vmatmul.mubr.bf16.gmra.mxu0 %v1188
        %v2457 = vpop.f32.mrf.mxu0
        %v2458 = vadd.f32 0.0, %v2457
        %v2459 = vpop.f32.mrf.mxu0
        %v2460 = vpop.f32.mrf.mxu0
        %v2461 = vadd.f32 0.0, %v2460
        %v2462 = vpop.f32.mrf.mxu0
        %2463 = vmatprep.mubr.bf16.mxu0 0
        %2464 = vmatmul.mubr.bf16.gmra.mxu0 %v1191
        %v2465 = vpop.f32.mrf.mxu0
        %v2466 = vadd.f32 0.0, %v2465
        %v2467 = vpop.f32.mrf.mxu0
        %v2468 = vpop.f32.mrf.mxu0
        %v2469 = vadd.f32 0.0, %v2468
        %v2470 = vpop.f32.mrf.mxu0
        %2471 = vmatprep.mubr.bf16.mxu0 0
        %2472 = vmatmul.mubr.bf16.gmra.mxu0 %v1194
        %v2473 = vpop.f32.mrf.mxu0
        %v2474 = vadd.f32 0.0, %v2473
        %v2475 = vpop.f32.mrf.mxu0
        %v2476 = vpop.f32.mrf.mxu0
        %v2477 = vadd.f32 0.0, %v2476
        %v2478 = vpop.f32.mrf.mxu0
        %2479 = vmatprep.mubr.bf16.mxu0 0
        %2480 = vmatmul.mubr.bf16.gmra.mxu0 %v1197
        %v2481 = vpop.f32.mrf.mxu0
        %v2482 = vadd.f32 0.0, %v2481
        %v2483 = vpop.f32.mrf.mxu0
        %v2484 = vpop.f32.mrf.mxu0
        %v2485 = vadd.f32 0.0, %v2484
        %v2486 = vpop.f32.mrf.mxu0
        %2487 = vmatprep.mubr.bf16.mxu0 0
        %2488 = vmatmul.mubr.bf16.gmra.mxu0 %v1200
        %v2489 = vpop.f32.mrf.mxu0
        %v2490 = vadd.f32 0.0, %v2489
        %v2491 = vpop.f32.mrf.mxu0
        %v2492 = vpop.f32.mrf.mxu0
        %v2493 = vadd.f32 0.0, %v2492
        %v2494 = vpop.f32.mrf.mxu0
        %2495 = vmatprep.mubr.bf16.mxu0 0
        %2496 = vmatmul.mubr.bf16.gmra.mxu0 %v1203
        %v2497 = vpop.f32.mrf.mxu0
        %v2498 = vadd.f32 0.0, %v2497
        %v2499 = vpop.f32.mrf.mxu0
        %v2500 = vpop.f32.mrf.mxu0
        %v2501 = vadd.f32 0.0, %v2500
        %v2502 = vpop.f32.mrf.mxu0
        %2503 = vmatprep.mubr.bf16.mxu0 0
        %2504 = vmatmul.mubr.bf16.gmra.mxu0 %v1206
        %v2505 = vpop.f32.mrf.mxu0
        %v2506 = vadd.f32 0.0, %v2505
        %v2507 = vpop.f32.mrf.mxu0
        %v2508 = vpop.f32.mrf.mxu0
        %v2509 = vadd.f32 0.0, %v2508
        %v2510 = vpop.f32.mrf.mxu0
        %2511 = vmatprep.mubr.bf16.mxu0 0
        %2512 = vmatmul.mubr.bf16.gmra.mxu0 %v1209
        %v2513 = vpop.f32.mrf.mxu0
        %v2514 = vadd.f32 0.0, %v2513
        %v2515 = vpop.f32.mrf.mxu0
        %v2516 = vpop.f32.mrf.mxu0
        %v2517 = vadd.f32 0.0, %v2516
        %v2518 = vpop.f32.mrf.mxu0
        %2519 = vmatprep.mubr.bf16.mxu0 0
        %2520 = vmatmul.mubr.bf16.gmra.mxu0 %v1212
        %v2521 = vpop.f32.mrf.mxu0
        %v2522 = vadd.f32 0.0, %v2521
        %v2523 = vpop.f32.mrf.mxu0
        %v2524 = vpop.f32.mrf.mxu0
        %v2525 = vadd.f32 0.0, %v2524
        %v2526 = vpop.f32.mrf.mxu0
        %2527 = vmatprep.mubr.bf16.mxu0 0
        %2528 = vmatmul.mubr.bf16.gmra.mxu0 %v1215
        %v2529 = vpop.f32.mrf.mxu0
        %v2530 = vadd.f32 0.0, %v2529
        %v2531 = vpop.f32.mrf.mxu0
        %v2532 = vpop.f32.mrf.mxu0
        %v2533 = vadd.f32 0.0, %v2532
        %v2534 = vpop.f32.mrf.mxu0
        %2535 = vmatprep.mubr.bf16.mxu0 0
        %2536 = vmatmul.mubr.bf16.gmra.mxu0 %v1218
        %v2537 = vpop.f32.mrf.mxu0
        %v2538 = vadd.f32 0.0, %v2537
        %v2539 = vpop.f32.mrf.mxu0
        %v2540 = vpop.f32.mrf.mxu0
        %v2541 = vadd.f32 0.0, %v2540
        %v2542 = vpop.f32.mrf.mxu0
        %2543 = vmatprep.mubr.bf16.mxu0 0
        %2544 = vmatmul.mubr.bf16.gmra.mxu0 %v1221
        %v2545 = vpop.f32.mrf.mxu0
        %v2546 = vadd.f32 0.0, %v2545
        %v2547 = vpop.f32.mrf.mxu0
        %v2548 = vpop.f32.mrf.mxu0
        %v2549 = vadd.f32 0.0, %v2548
        %v2550 = vpop.f32.mrf.mxu0
        %2551 = vmatprep.mubr.bf16.mxu0 0
        %2552 = vmatmul.mubr.bf16.gmra.mxu0 %v1224
        %v2553 = vpop.f32.mrf.mxu0
        %v2554 = vadd.f32 0.0, %v2553
        %v2555 = vpop.f32.mrf.mxu0
        %v2556 = vpop.f32.mrf.mxu0
        %v2557 = vadd.f32 0.0, %v2556
        %v2558 = vpop.f32.mrf.mxu0
        %2559 = vmatprep.mubr.bf16.mxu0 0
        %2560 = vmatmul.mubr.bf16.gmra.mxu0 %v1227
        %v2561 = vpop.f32.mrf.mxu0
        %v2562 = vadd.f32 0.0, %v2561
        %v2563 = vpop.f32.mrf.mxu0
        %v2564 = vpop.f32.mrf.mxu0
        %v2565 = vadd.f32 0.0, %v2564
        %v2566 = vpop.f32.mrf.mxu0
        %2567 = vdwg.mxu0
        %v2569 = vsel %vm1229, %v1077, 0
        %2571 = vmatprep.subr.bf16.mxu0 0
        %2572 = vmatpush1.bf16.msra.mxu0 0
        %2573 = vmatprep.subr.bf16.mxu0 0
        %2574 = vmatpush1.bf16.msra.mxu0 0
        %2575 = vmatprep.subr.bf16.mxu0 0
        %2576 = vmatpush1.bf16.msra.mxu0 0
        %2577 = vmatprep.subr.bf16.mxu0 0
        %2578 = vmatpush1.bf16.msra.mxu0 0
        %2579 = vmatprep.subr.bf16.mxu0 0
        %2580 = vmatpush1.bf16.msra.mxu0 0
        %2581 = vmatprep.subr.bf16.mxu0 0
        %2582 = vmatpush1.bf16.msra.mxu0 0
        %2583 = vmatprep.subr.bf16.mxu0 0
        %2584 = vmatpush1.bf16.msra.mxu0 0
        %2585 = vmatprep.subr.bf16.mxu0 0
        %2586 = vmatpush1.bf16.msra.mxu0 %v2569
        %2587 = vmatprep.subr.bf16.mxu0 0
        %2588 = vmatpush2.bf16.msra.mxu0 0
        %2589 = vmatprep.subr.bf16.mxu0 0
        %2590 = vmatpush2.bf16.msra.mxu0 0
        %2591 = vmatprep.subr.bf16.mxu0 0
        %2592 = vmatpush2.bf16.msra.mxu0 0
        %2593 = vmatprep.subr.bf16.mxu0 0
        %2594 = vmatpush2.bf16.msra.mxu0 0
        %2595 = vmatprep.subr.bf16.mxu0 0
        %2596 = vmatpush2.bf16.msra.mxu0 0
        %2597 = vmatprep.subr.bf16.mxu0 0
        %2598 = vmatpush2.bf16.msra.mxu0 0
        %2599 = vmatprep.subr.bf16.mxu0 0
        %2600 = vmatpush2.bf16.msra.mxu0 0
        %2601 = vmatprep.subr.bf16.mxu0 0
        %2602 = vmatpush2.bf16.msra.mxu0 0
        %2603 = vmatprep.mubr.bf16.mxu0 0
        %2604 = vmatmul.mubr.bf16.gmra.mxu0 %v1591
        %v2605 = vpop.f32.mrf.mxu0
        %v2606 = vadd.f32 %v2282, %v2605
        %v2607 = vpop.f32.mrf.mxu0
        %v2608 = vpop.f32.mrf.mxu0
        %v2609 = vadd.f32 %v2285, %v2608
        %v2610 = vpop.f32.mrf.mxu0
        %2611 = vmatprep.mubr.bf16.mxu0 0
        %2612 = vmatmul.mubr.bf16.gmra.mxu0 %v1594
        %v2613 = vpop.f32.mrf.mxu0
        %v2614 = vadd.f32 %v2290, %v2613
        %v2615 = vpop.f32.mrf.mxu0
        %v2616 = vpop.f32.mrf.mxu0
        %v2617 = vadd.f32 %v2293, %v2616
        %v2618 = vpop.f32.mrf.mxu0
        %2619 = vmatprep.mubr.bf16.mxu0 0
        %2620 = vmatmul.mubr.bf16.gmra.mxu0 %v1597
        %v2621 = vpop.f32.mrf.mxu0
        %v2622 = vadd.f32 %v2298, %v2621
        %v2623 = vpop.f32.mrf.mxu0
        %v2624 = vpop.f32.mrf.mxu0
        %v2625 = vadd.f32 %v2301, %v2624
        %v2626 = vpop.f32.mrf.mxu0
        %2627 = vmatprep.mubr.bf16.mxu0 0
        %2628 = vmatmul.mubr.bf16.gmra.mxu0 %v1600
        %v2629 = vpop.f32.mrf.mxu0
        %v2630 = vadd.f32 %v2306, %v2629
        %v2631 = vpop.f32.mrf.mxu0
        %v2632 = vpop.f32.mrf.mxu0
        %v2633 = vadd.f32 %v2309, %v2632
        %v2634 = vpop.f32.mrf.mxu0
        %2635 = vmatprep.mubr.bf16.mxu0 0
        %2636 = vmatmul.mubr.bf16.gmra.mxu0 %v1603
        %v2637 = vpop.f32.mrf.mxu0
        %v2638 = vadd.f32 %v2314, %v2637
        %v2639 = vpop.f32.mrf.mxu0
        %v2640 = vpop.f32.mrf.mxu0
        %v2641 = vadd.f32 %v2317, %v2640
        %v2642 = vpop.f32.mrf.mxu0
        %2643 = vmatprep.mubr.bf16.mxu0 0
        %2644 = vmatmul.mubr.bf16.gmra.mxu0 %v1606
        %v2645 = vpop.f32.mrf.mxu0
        %v2646 = vadd.f32 %v2322, %v2645
        %v2647 = vpop.f32.mrf.mxu0
        %v2648 = vpop.f32.mrf.mxu0
        %v2649 = vadd.f32 %v2325, %v2648
        %v2650 = vpop.f32.mrf.mxu0
        %2651 = vmatprep.mubr.bf16.mxu0 0
        %2652 = vmatmul.mubr.bf16.gmra.mxu0 %v1609
        %v2653 = vpop.f32.mrf.mxu0
        %v2654 = vadd.f32 %v2330, %v2653
        %v2655 = vpop.f32.mrf.mxu0
        %v2656 = vpop.f32.mrf.mxu0
        %v2657 = vadd.f32 %v2333, %v2656
        %v2658 = vpop.f32.mrf.mxu0
        %2659 = vmatprep.mubr.bf16.mxu0 0
        %2660 = vmatmul.mubr.bf16.gmra.mxu0 %v1612
        %v2661 = vpop.f32.mrf.mxu0
        %v2662 = vadd.f32 %v2338, %v2661
        %v2663 = vpop.f32.mrf.mxu0
        %v2664 = vpop.f32.mrf.mxu0
        %v2665 = vadd.f32 %v2341, %v2664
        %v2666 = vpop.f32.mrf.mxu0
        %2667 = vmatprep.mubr.bf16.mxu0 0
        %2668 = vmatmul.mubr.bf16.gmra.mxu0 %v1615
        %v2669 = vpop.f32.mrf.mxu0
        %v2670 = vadd.f32 %v2346, %v2669
        %v2671 = vpop.f32.mrf.mxu0
        %v2672 = vpop.f32.mrf.mxu0
        %v2673 = vadd.f32 %v2349, %v2672
        %v2674 = vpop.f32.mrf.mxu0
        %2675 = vmatprep.mubr.bf16.mxu0 0
        %2676 = vmatmul.mubr.bf16.gmra.mxu0 %v1618
        %v2677 = vpop.f32.mrf.mxu0
        %v2678 = vadd.f32 %v2354, %v2677
        %v2679 = vpop.f32.mrf.mxu0
        %v2680 = vpop.f32.mrf.mxu0
        %v2681 = vadd.f32 %v2357, %v2680
        %v2682 = vpop.f32.mrf.mxu0
        %2683 = vmatprep.mubr.bf16.mxu0 0
        %2684 = vmatmul.mubr.bf16.gmra.mxu0 %v1621
        %v2685 = vpop.f32.mrf.mxu0
        %v2686 = vadd.f32 %v2362, %v2685
        %v2687 = vpop.f32.mrf.mxu0
        %v2688 = vpop.f32.mrf.mxu0
        %v2689 = vadd.f32 %v2365, %v2688
        %v2690 = vpop.f32.mrf.mxu0
        %2691 = vmatprep.mubr.bf16.mxu0 0
        %2692 = vmatmul.mubr.bf16.gmra.mxu0 %v1624
        %v2693 = vpop.f32.mrf.mxu0
        %v2694 = vadd.f32 %v2370, %v2693
        %v2695 = vpop.f32.mrf.mxu0
        %v2696 = vpop.f32.mrf.mxu0
        %v2697 = vadd.f32 %v2373, %v2696
        %v2698 = vpop.f32.mrf.mxu0
        %2699 = vmatprep.mubr.bf16.mxu0 0
        %2700 = vmatmul.mubr.bf16.gmra.mxu0 %v1627
        %v2701 = vpop.f32.mrf.mxu0
        %v2702 = vadd.f32 %v2378, %v2701
        %v2703 = vpop.f32.mrf.mxu0
        %v2704 = vpop.f32.mrf.mxu0
        %v2705 = vadd.f32 %v2381, %v2704
        %v2706 = vpop.f32.mrf.mxu0
        %2707 = vmatprep.mubr.bf16.mxu0 0
        %2708 = vmatmul.mubr.bf16.gmra.mxu0 %v1630
        %v2709 = vpop.f32.mrf.mxu0
        %v2710 = vadd.f32 %v2386, %v2709
        %v2711 = vpop.f32.mrf.mxu0
        %v2712 = vpop.f32.mrf.mxu0
        %v2713 = vadd.f32 %v2389, %v2712
        %v2714 = vpop.f32.mrf.mxu0
        %2715 = vmatprep.mubr.bf16.mxu0 0
        %2716 = vmatmul.mubr.bf16.gmra.mxu0 %v1633
        %v2717 = vpop.f32.mrf.mxu0
        %v2718 = vadd.f32 %v2394, %v2717
        %v2719 = vpop.f32.mrf.mxu0
        %v2720 = vpop.f32.mrf.mxu0
        %v2721 = vadd.f32 %v2397, %v2720
        %v2722 = vpop.f32.mrf.mxu0
        %2723 = vmatprep.mubr.bf16.mxu0 0
        %2724 = vmatmul.mubr.bf16.gmra.mxu0 %v1636
        %v2725 = vpop.f32.mrf.mxu0
        %v2726 = vadd.f32 %v2402, %v2725
        %v2727 = vpop.f32.mrf.mxu0
        %v2728 = vpop.f32.mrf.mxu0
        %v2729 = vadd.f32 %v2405, %v2728
        %v2730 = vpop.f32.mrf.mxu0
        %2731 = vmatprep.mubr.bf16.mxu0 0
        %2732 = vmatmul.mubr.bf16.gmra.mxu0 %v1639
        %v2733 = vpop.f32.mrf.mxu0
        %v2734 = vadd.f32 %v2410, %v2733
        %v2735 = vpop.f32.mrf.mxu0
        %v2736 = vpop.f32.mrf.mxu0
        %v2737 = vadd.f32 %v2413, %v2736
        %v2738 = vpop.f32.mrf.mxu0
        %2739 = vmatprep.mubr.bf16.mxu0 0
        %2740 = vmatmul.mubr.bf16.gmra.mxu0 %v1642
        %v2741 = vpop.f32.mrf.mxu0
        %v2742 = vadd.f32 %v2418, %v2741
        %v2743 = vpop.f32.mrf.mxu0
        %v2744 = vpop.f32.mrf.mxu0
        %v2745 = vadd.f32 %v2421, %v2744
        %v2746 = vpop.f32.mrf.mxu0
        %2747 = vmatprep.mubr.bf16.mxu0 0
        %2748 = vmatmul.mubr.bf16.gmra.mxu0 %v1645
        %v2749 = vpop.f32.mrf.mxu0
        %v2750 = vadd.f32 %v2426, %v2749
        %v2751 = vpop.f32.mrf.mxu0
        %v2752 = vpop.f32.mrf.mxu0
        %v2753 = vadd.f32 %v2429, %v2752
        %v2754 = vpop.f32.mrf.mxu0
        %2755 = vmatprep.mubr.bf16.mxu0 0
        %2756 = vmatmul.mubr.bf16.gmra.mxu0 %v1648
        %v2757 = vpop.f32.mrf.mxu0
        %v2758 = vadd.f32 %v2434, %v2757
        %v2759 = vpop.f32.mrf.mxu0
        %v2760 = vpop.f32.mrf.mxu0
        %v2761 = vadd.f32 %v2437, %v2760
        %v2762 = vpop.f32.mrf.mxu0
        %2763 = vmatprep.mubr.bf16.mxu0 0
        %2764 = vmatmul.mubr.bf16.gmra.mxu0 %v1651
        %v2765 = vpop.f32.mrf.mxu0
        %v2766 = vadd.f32 %v2442, %v2765
        %v2767 = vpop.f32.mrf.mxu0
        %v2768 = vpop.f32.mrf.mxu0
        %v2769 = vadd.f32 %v2445, %v2768
        %v2770 = vpop.f32.mrf.mxu0
        %2771 = vmatprep.mubr.bf16.mxu0 0
        %2772 = vmatmul.mubr.bf16.gmra.mxu0 %v1654
        %v2773 = vpop.f32.mrf.mxu0
        %v2774 = vadd.f32 %v2450, %v2773
        %v2775 = vpop.f32.mrf.mxu0
        %v2776 = vpop.f32.mrf.mxu0
        %v2777 = vadd.f32 %v2453, %v2776
        %v2778 = vpop.f32.mrf.mxu0
        %2779 = vmatprep.mubr.bf16.mxu0 0
        %2780 = vmatmul.mubr.bf16.gmra.mxu0 %v1657
        %v2781 = vpop.f32.mrf.mxu0
        %v2782 = vadd.f32 %v2458, %v2781
        %v2783 = vpop.f32.mrf.mxu0
        %v2784 = vpop.f32.mrf.mxu0
        %v2785 = vadd.f32 %v2461, %v2784
        %v2786 = vpop.f32.mrf.mxu0
        %2787 = vmatprep.mubr.bf16.mxu0 0
        %2788 = vmatmul.mubr.bf16.gmra.mxu0 %v1660
        %v2789 = vpop.f32.mrf.mxu0
        %v2790 = vadd.f32 %v2466, %v2789
        %v2791 = vpop.f32.mrf.mxu0
        %v2792 = vpop.f32.mrf.mxu0
        %v2793 = vadd.f32 %v2469, %v2792
        %v2794 = vpop.f32.mrf.mxu0
        %2795 = vmatprep.mubr.bf16.mxu0 0
        %2796 = vmatmul.mubr.bf16.gmra.mxu0 %v1663
        %v2797 = vpop.f32.mrf.mxu0
        %v2798 = vadd.f32 %v2474, %v2797
        %v2799 = vpop.f32.mrf.mxu0
        %v2800 = vpop.f32.mrf.mxu0
        %v2801 = vadd.f32 %v2477, %v2800
        %v2802 = vpop.f32.mrf.mxu0
        %2803 = vmatprep.mubr.bf16.mxu0 0
        %2804 = vmatmul.mubr.bf16.gmra.mxu0 %v1666
        %v2805 = vpop.f32.mrf.mxu0
        %v2806 = vadd.f32 %v2482, %v2805
        %v2807 = vpop.f32.mrf.mxu0
        %v2808 = vpop.f32.mrf.mxu0
        %v2809 = vadd.f32 %v2485, %v2808
        %v2810 = vpop.f32.mrf.mxu0
        %2811 = vmatprep.mubr.bf16.mxu0 0
        %2812 = vmatmul.mubr.bf16.gmra.mxu0 %v1669
        %v2813 = vpop.f32.mrf.mxu0
        %v2814 = vadd.f32 %v2490, %v2813
        %v2815 = vpop.f32.mrf.mxu0
        %v2816 = vpop.f32.mrf.mxu0
        %v2817 = vadd.f32 %v2493, %v2816
        %v2818 = vpop.f32.mrf.mxu0
        %2819 = vmatprep.mubr.bf16.mxu0 0
        %2820 = vmatmul.mubr.bf16.gmra.mxu0 %v1672
        %v2821 = vpop.f32.mrf.mxu0
        %v2822 = vadd.f32 %v2498, %v2821
        %v2823 = vpop.f32.mrf.mxu0
        %v2824 = vpop.f32.mrf.mxu0
        %v2825 = vadd.f32 %v2501, %v2824
        %v2826 = vpop.f32.mrf.mxu0
        %2827 = vmatprep.mubr.bf16.mxu0 0
        %2828 = vmatmul.mubr.bf16.gmra.mxu0 %v1675
        %v2829 = vpop.f32.mrf.mxu0
        %v2830 = vadd.f32 %v2506, %v2829
        %v2831 = vpop.f32.mrf.mxu0
        %v2832 = vpop.f32.mrf.mxu0
        %v2833 = vadd.f32 %v2509, %v2832
        %v2834 = vpop.f32.mrf.mxu0
        %2835 = vmatprep.mubr.bf16.mxu0 0
        %2836 = vmatmul.mubr.bf16.gmra.mxu0 %v1678
        %v2837 = vpop.f32.mrf.mxu0
        %v2838 = vadd.f32 %v2514, %v2837
        %v2839 = vpop.f32.mrf.mxu0
        %v2840 = vpop.f32.mrf.mxu0
        %v2841 = vadd.f32 %v2517, %v2840
        %v2842 = vpop.f32.mrf.mxu0
        %2843 = vmatprep.mubr.bf16.mxu0 0
        %2844 = vmatmul.mubr.bf16.gmra.mxu0 %v1681
        %v2845 = vpop.f32.mrf.mxu0
        %v2846 = vadd.f32 %v2522, %v2845
        %v2847 = vpop.f32.mrf.mxu0
        %v2848 = vpop.f32.mrf.mxu0
        %v2849 = vadd.f32 %v2525, %v2848
        %v2850 = vpop.f32.mrf.mxu0
        %2851 = vmatprep.mubr.bf16.mxu0 0
        %2852 = vmatmul.mubr.bf16.gmra.mxu0 %v1684
        %v2853 = vpop.f32.mrf.mxu0
        %v2854 = vadd.f32 %v2530, %v2853
        %v2855 = vpop.f32.mrf.mxu0
        %v2856 = vpop.f32.mrf.mxu0
        %v2857 = vadd.f32 %v2533, %v2856
        %v2858 = vpop.f32.mrf.mxu0
        %2859 = vmatprep.mubr.bf16.mxu0 0
        %2860 = vmatmul.mubr.bf16.gmra.mxu0 %v1687
        %v2861 = vpop.f32.mrf.mxu0
        %v2862 = vadd.f32 %v2538, %v2861
        %v2863 = vpop.f32.mrf.mxu0
        %v2864 = vpop.f32.mrf.mxu0
        %v2865 = vadd.f32 %v2541, %v2864
        %v2866 = vpop.f32.mrf.mxu0
        %2867 = vmatprep.mubr.bf16.mxu0 0
        %2868 = vmatmul.mubr.bf16.gmra.mxu0 %v1690
        %v2869 = vpop.f32.mrf.mxu0
        %v2870 = vadd.f32 %v2546, %v2869
        %v2871 = vpop.f32.mrf.mxu0
        %v2872 = vpop.f32.mrf.mxu0
        %v2873 = vadd.f32 %v2549, %v2872
        %v2874 = vpop.f32.mrf.mxu0
        %2875 = vmatprep.mubr.bf16.mxu0 0
        %2876 = vmatmul.mubr.bf16.gmra.mxu0 %v1693
        %v2877 = vpop.f32.mrf.mxu0
        %v2878 = vadd.f32 %v2554, %v2877
        %v2879 = vpop.f32.mrf.mxu0
        %v2880 = vpop.f32.mrf.mxu0
        %v2881 = vadd.f32 %v2557, %v2880
        %v2882 = vpop.f32.mrf.mxu0
        %2883 = vmatprep.mubr.bf16.mxu0 0
        %2884 = vmatmul.mubr.bf16.gmra.mxu0 %v1696
        %v2885 = vpop.f32.mrf.mxu0
        %v2886 = vadd.f32 %v2562, %v2885
        %v2887 = vpop.f32.mrf.mxu0
        %v2888 = vpop.f32.mrf.mxu0
        %v2889 = vadd.f32 %v2565, %v2888
        %v2890 = vpop.f32.mrf.mxu0
        %2891 = vdwg.mxu0
        %v2892 = vmul.f32 %v2606, 0.125
        %v2893 = vmul.f32 %v2609, 0.125
        %v2894 = vmul.f32 %v2614, 0.125
        %v2895 = vmul.f32 %v2617, 0.125
        %v2896 = vmul.f32 %v2622, 0.125
        %v2897 = vmul.f32 %v2625, 0.125
        %v2898 = vmul.f32 %v2630, 0.125
        %v2899 = vmul.f32 %v2633, 0.125
        %v2900 = vmul.f32 %v2638, 0.125
        %v2901 = vmul.f32 %v2641, 0.125
        %v2902 = vmul.f32 %v2646, 0.125
        %v2903 = vmul.f32 %v2649, 0.125
        %v2904 = vmul.f32 %v2654, 0.125
        %v2905 = vmul.f32 %v2657, 0.125
        %v2906 = vmul.f32 %v2662, 0.125
        %v2907 = vmul.f32 %v2665, 0.125
        %v2908 = vmul.f32 %v2670, 0.125
        %v2909 = vmul.f32 %v2673, 0.125
        %v2910 = vmul.f32 %v2678, 0.125
        %v2911 = vmul.f32 %v2681, 0.125
        %v2912 = vmul.f32 %v2686, 0.125
        %v2913 = vmul.f32 %v2689, 0.125
        %v2914 = vmul.f32 %v2694, 0.125
        %v2915 = vmul.f32 %v2697, 0.125
        %v2916 = vmul.f32 %v2702, 0.125
        %v2917 = vmul.f32 %v2705, 0.125
        %v2918 = vmul.f32 %v2710, 0.125
        %v2919 = vmul.f32 %v2713, 0.125
        %v2920 = vmul.f32 %v2718, 0.125
        %v2921 = vmul.f32 %v2721, 0.125
        %v2922 = vmul.f32 %v2726, 0.125
        %v2923 = vmul.f32 %v2729, 0.125
        %v2924 = vmul.f32 %v2734, 0.125
        %v2925 = vmul.f32 %v2737, 0.125
        %v2926 = vmul.f32 %v2742, 0.125
        %v2927 = vmul.f32 %v2745, 0.125
        %v2928 = vmul.f32 %v2750, 0.125
        %v2929 = vmul.f32 %v2753, 0.125
        %v2930 = vmul.f32 %v2758, 0.125
        %v2931 = vmul.f32 %v2761, 0.125
        %v2932 = vmul.f32 %v2766, 0.125
        %v2933 = vmul.f32 %v2769, 0.125
        %v2934 = vmul.f32 %v2774, 0.125
        %v2935 = vmul.f32 %v2777, 0.125
        %v2936 = vmul.f32 %v2782, 0.125
        %v2937 = vmul.f32 %v2785, 0.125
        %v2938 = vmul.f32 %v2790, 0.125
        %v2939 = vmul.f32 %v2793, 0.125
        %v2940 = vmul.f32 %v2798, 0.125
        %v2941 = vmul.f32 %v2801, 0.125
        %v2942 = vmul.f32 %v2806, 0.125
        %v2943 = vmul.f32 %v2809, 0.125
        %v2944 = vmul.f32 %v2814, 0.125
        %v2945 = vmul.f32 %v2817, 0.125
        %v2946 = vmul.f32 %v2822, 0.125
        %v2947 = vmul.f32 %v2825, 0.125
        %v2948 = vmul.f32 %v2830, 0.125
        %v2949 = vmul.f32 %v2833, 0.125
        %v2950 = vmul.f32 %v2838, 0.125
        %v2951 = vmul.f32 %v2841, 0.125
        %v2952 = vmul.f32 %v2846, 0.125
        %v2953 = vmul.f32 %v2849, 0.125
        %v2954 = vmul.f32 %v2854, 0.125
        %v2955 = vmul.f32 %v2857, 0.125
        %v2956 = vmul.f32 %v2862, 0.125
        %v2957 = vmul.f32 %v2865, 0.125
        %v2958 = vmul.f32 %v2870, 0.125
        %v2959 = vmul.f32 %v2873, 0.125
        %v2960 = vmul.f32 %v2878, 0.125
        %v2961 = vmul.f32 %v2881, 0.125
        %v2962 = vmul.f32 %v2886, 0.125
        %v2963 = vmul.f32 %v2889, 0.125
        %v2964 = vadd.f32 %v2892, %v2098
        %v2965 = vadd.f32 %v2893, %v2098
        %v2966 = vadd.f32 %v2894, %v2098
        %v2967 = vadd.f32 %v2895, %v2098
        %v2968 = vadd.f32 %v2896, %v2098
        %v2969 = vadd.f32 %v2897, %v2098
        %v2970 = vadd.f32 %v2898, %v2098
        %v2971 = vadd.f32 %v2899, %v2098
        %v2972 = vadd.f32 %v2900, %v2098
        %v2973 = vadd.f32 %v2901, %v2098
        %v2974 = vadd.f32 %v2902, %v2098
        %v2975 = vadd.f32 %v2903, %v2098
        %v2976 = vadd.f32 %v2904, %v2098
        %v2977 = vadd.f32 %v2905, %v2098
        %v2978 = vadd.f32 %v2906, %v2098
        %v2979 = vadd.f32 %v2907, %v2098
        %v2980 = vadd.f32 %v2908, %v2098
        %v2981 = vadd.f32 %v2909, %v2098
        %v2982 = vadd.f32 %v2910, %v2098
        %v2983 = vadd.f32 %v2911, %v2098
        %v2984 = vadd.f32 %v2912, %v2098
        %v2985 = vadd.f32 %v2913, %v2098
        %v2986 = vadd.f32 %v2914, %v2098
        %v2987 = vadd.f32 %v2915, %v2098
        %v2988 = vadd.f32 %v2916, %v2098
        %v2989 = vadd.f32 %v2917, %v2098
        %v2990 = vadd.f32 %v2918, %v2098
        %v2991 = vadd.f32 %v2919, %v2098
        %v2992 = vadd.f32 %v2920, %v2098
        %v2993 = vadd.f32 %v2921, %v2098
        %v2994 = vadd.f32 %v2922, %v2098
        %v2995 = vadd.f32 %v2923, %v2098
        %v2996 = vadd.f32 %v2924, %v2098
        %v2997 = vadd.f32 %v2925, %v2098
        %v2998 = vadd.f32 %v2926, %v2098
        %v2999 = vadd.f32 %v2927, %v2098
        %v3000 = vadd.f32 %v2928, %v2098
        %v3001 = vadd.f32 %v2929, %v2098
        %v3002 = vadd.f32 %v2930, %v2098
        %v3003 = vadd.f32 %v2931, %v2098
        %v3004 = vadd.f32 %v2932, %v2098
        %v3005 = vadd.f32 %v2933, %v2098
        %v3006 = vadd.f32 %v2934, %v2098
        %v3007 = vadd.f32 %v2935, %v2098
        %v3008 = vadd.f32 %v2936, %v2098
        %v3009 = vadd.f32 %v2937, %v2098
        %v3010 = vadd.f32 %v2938, %v2098
        %v3011 = vadd.f32 %v2939, %v2098
        %v3012 = vadd.f32 %v2940, %v2098
        %v3013 = vadd.f32 %v2941, %v2098
        %v3014 = vadd.f32 %v2942, %v2098
        %v3015 = vadd.f32 %v2943, %v2098
        %v3016 = vadd.f32 %v2944, %v2098
        %v3017 = vadd.f32 %v2945, %v2098
        %v3018 = vadd.f32 %v2946, %v2098
        %v3019 = vadd.f32 %v2947, %v2098
        %v3020 = vadd.f32 %v2948, %v2098
        %v3021 = vadd.f32 %v2949, %v2098
        %v3022 = vadd.f32 %v2950, %v2098
        %v3023 = vadd.f32 %v2951, %v2098
        %v3024 = vadd.f32 %v2952, %v2098
        %v3025 = vadd.f32 %v2953, %v2098
        %v3026 = vadd.f32 %v2954, %v2098
        %v3027 = vadd.f32 %v2955, %v2098
        %v3028 = vadd.f32 %v2956, %v2098
        %v3029 = vadd.f32 %v2957, %v2098
        %v3030 = vadd.f32 %v2958, %v2098
        %v3031 = vadd.f32 %v2959, %v2098
        %v3032 = vadd.f32 %v2960, %v2098
        %v3033 = vadd.f32 %v2961, %v2098
        %v3034 = vadd.f32 %v2962, %v2098
        %v3035 = vadd.f32 %v2963, %v2098
        %s3036 = scalar_lea.vmem %s211, 576 [#allocation6]
        %3037 = vst.msk [vmem:[%s3036] sm:$0xff] %vm1120, %v2964
        %3038 = vst.msk [vmem:[%s3036 + $0x8] sm:$0xff] %vm1120, %v2965
        %3039 = vst.msk [vmem:[%s3036 + $0x10] sm:$0xff] %vm1120, %v2966
        %3040 = vst.msk [vmem:[%s3036 + $0x18] sm:$0xff] %vm1120, %v2967
        %3041 = vst.msk [vmem:[%s3036 + $0x20] sm:$0xff] %vm1120, %v2968
        %3042 = vst.msk [vmem:[%s3036 + $0x28] sm:$0xff] %vm1120, %v2969
        %3043 = vst.msk [vmem:[%s3036 + $0x30] sm:$0xff] %vm1120, %v2970
        %3044 = vst.msk [vmem:[%s3036 + $0x38] sm:$0xff] %vm1120, %v2971
        %3045 = vst.msk [vmem:[%s3036 + $0x40] sm:$0xff] %vm1120, %v2972
        %3046 = vst.msk [vmem:[%s3036 + $0x48] sm:$0xff] %vm1120, %v2973
        %3047 = vst.msk [vmem:[%s3036 + $0x50] sm:$0xff] %vm1120, %v2974
        %3048 = vst.msk [vmem:[%s3036 + $0x58] sm:$0xff] %vm1120, %v2975
        %3049 = vst.msk [vmem:[%s3036 + $0x60] sm:$0xff] %vm1120, %v2976
        %3050 = vst.msk [vmem:[%s3036 + $0x68] sm:$0xff] %vm1120, %v2977
        %3051 = vst.msk [vmem:[%s3036 + $0x70] sm:$0xff] %vm1120, %v2978
        %3052 = vst.msk [vmem:[%s3036 + $0x78] sm:$0xff] %vm1120, %v2979
        %3053 = vst.msk [vmem:[%s3036 + $0x80] sm:$0xff] %vm1120, %v2980
        %3054 = vst.msk [vmem:[%s3036 + $0x88] sm:$0xff] %vm1120, %v2981
        %3055 = vst.msk [vmem:[%s3036 + $0x90] sm:$0xff] %vm1120, %v2982
        %3056 = vst.msk [vmem:[%s3036 + $0x98] sm:$0xff] %vm1120, %v2983
        %3057 = vst.msk [vmem:[%s3036 + $0xa0] sm:$0xff] %vm1120, %v2984
        %3058 = vst.msk [vmem:[%s3036 + $0xa8] sm:$0xff] %vm1120, %v2985
        %3059 = vst.msk [vmem:[%s3036 + $0xb0] sm:$0xff] %vm1120, %v2986
        %3060 = vst.msk [vmem:[%s3036 + $0xb8] sm:$0xff] %vm1120, %v2987
        %3061 = vst.msk [vmem:[%s3036 + $0xc0] sm:$0xff] %vm1120, %v2988
        %3062 = vst.msk [vmem:[%s3036 + $0xc8] sm:$0xff] %vm1120, %v2989
        %3063 = vst.msk [vmem:[%s3036 + $0xd0] sm:$0xff] %vm1120, %v2990
        %3064 = vst.msk [vmem:[%s3036 + $0xd8] sm:$0xff] %vm1120, %v2991
        %3065 = vst.msk [vmem:[%s3036 + $0xe0] sm:$0xff] %vm1120, %v2992
        %3066 = vst.msk [vmem:[%s3036 + $0xe8] sm:$0xff] %vm1120, %v2993
        %3067 = vst.msk [vmem:[%s3036 + $0xf0] sm:$0xff] %vm1120, %v2994
        %3068 = vst.msk [vmem:[%s3036 + $0xf8] sm:$0xff] %vm1120, %v2995
        %3069 = vst.msk [vmem:[%s3036 + $0x100] sm:$0xff] %vm1120, %v2996
        %3070 = vst.msk [vmem:[%s3036 + $0x108] sm:$0xff] %vm1120, %v2997
        %3071 = vst.msk [vmem:[%s3036 + $0x110] sm:$0xff] %vm1120, %v2998
        %3072 = vst.msk [vmem:[%s3036 + $0x118] sm:$0xff] %vm1120, %v2999
        %3073 = vst.msk [vmem:[%s3036 + $0x120] sm:$0xff] %vm1120, %v3000
        %3074 = vst.msk [vmem:[%s3036 + $0x128] sm:$0xff] %vm1120, %v3001
        %3075 = vst.msk [vmem:[%s3036 + $0x130] sm:$0xff] %vm1120, %v3002
        %3076 = vst.msk [vmem:[%s3036 + $0x138] sm:$0xff] %vm1120, %v3003
        %3077 = vst.msk [vmem:[%s3036 + $0x140] sm:$0xff] %vm1120, %v3004
        %3078 = vst.msk [vmem:[%s3036 + $0x148] sm:$0xff] %vm1120, %v3005
        %3079 = vst.msk [vmem:[%s3036 + $0x150] sm:$0xff] %vm1120, %v3006
        %3080 = vst.msk [vmem:[%s3036 + $0x158] sm:$0xff] %vm1120, %v3007
        %3081 = vst.msk [vmem:[%s3036 + $0x160] sm:$0xff] %vm1120, %v3008
        %3082 = vst.msk [vmem:[%s3036 + $0x168] sm:$0xff] %vm1120, %v3009
        %3083 = vst.msk [vmem:[%s3036 + $0x170] sm:$0xff] %vm1120, %v3010
        %3084 = vst.msk [vmem:[%s3036 + $0x178] sm:$0xff] %vm1120, %v3011
        %3085 = vst.msk [vmem:[%s3036 + $0x180] sm:$0xff] %vm1120, %v3012
        %3086 = vst.msk [vmem:[%s3036 + $0x188] sm:$0xff] %vm1120, %v3013
        %3087 = vst.msk [vmem:[%s3036 + $0x190] sm:$0xff] %vm1120, %v3014
        %3088 = vst.msk [vmem:[%s3036 + $0x198] sm:$0xff] %vm1120, %v3015
        %3089 = vst.msk [vmem:[%s3036 + $0x1a0] sm:$0xff] %vm1120, %v3016
        %3090 = vst.msk [vmem:[%s3036 + $0x1a8] sm:$0xff] %vm1120, %v3017
        %3091 = vst.msk [vmem:[%s3036 + $0x1b0] sm:$0xff] %vm1120, %v3018
        %3092 = vst.msk [vmem:[%s3036 + $0x1b8] sm:$0xff] %vm1120, %v3019
        %3093 = vst.msk [vmem:[%s3036 + $0x1c0] sm:$0xff] %vm1120, %v3020
        %3094 = vst.msk [vmem:[%s3036 + $0x1c8] sm:$0xff] %vm1120, %v3021
        %3095 = vst.msk [vmem:[%s3036 + $0x1d0] sm:$0xff] %vm1120, %v3022
        %3096 = vst.msk [vmem:[%s3036 + $0x1d8] sm:$0xff] %vm1120, %v3023
        %3097 = vst.msk [vmem:[%s3036 + $0x1e0] sm:$0xff] %vm1120, %v3024
        %3098 = vst.msk [vmem:[%s3036 + $0x1e8] sm:$0xff] %vm1120, %v3025
        %3099 = vst.msk [vmem:[%s3036 + $0x1f0] sm:$0xff] %vm1120, %v3026
        %3100 = vst.msk [vmem:[%s3036 + $0x1f8] sm:$0xff] %vm1120, %v3027
        %3101 = vst.msk [vmem:[%s3036 + $0x200] sm:$0xff] %vm1120, %v3028
        %3102 = vst.msk [vmem:[%s3036 + $0x208] sm:$0xff] %vm1120, %v3029
        %3103 = vst.msk [vmem:[%s3036 + $0x210] sm:$0xff] %vm1120, %v3030
        %3104 = vst.msk [vmem:[%s3036 + $0x218] sm:$0xff] %vm1120, %v3031
        %3105 = vst.msk [vmem:[%s3036 + $0x220] sm:$0xff] %vm1120, %v3032
        %3106 = vst.msk [vmem:[%s3036 + $0x228] sm:$0xff] %vm1120, %v3033
        %3107 = vst.msk [vmem:[%s3036 + $0x230] sm:$0xff] %vm1120, %v3034
        %3108 = vst.msk [vmem:[%s3036 + $0x238] sm:$0xff] %vm1120, %v3035
        %v3110 = vsel %vm1229, %v1080, 0
        %3112 = vmatprep.subr.bf16.mxu0 0
        %3113 = vmatpush1.bf16.msra.mxu0 0
        %3114 = vmatprep.subr.bf16.mxu0 0
        %3115 = vmatpush1.bf16.msra.mxu0 0
        %3116 = vmatprep.subr.bf16.mxu0 0
        %3117 = vmatpush1.bf16.msra.mxu0 0
        %3118 = vmatprep.subr.bf16.mxu0 0
        %3119 = vmatpush1.bf16.msra.mxu0 0
        %3120 = vmatprep.subr.bf16.mxu0 0
        %3121 = vmatpush1.bf16.msra.mxu0 0
        %3122 = vmatprep.subr.bf16.mxu0 0
        %3123 = vmatpush1.bf16.msra.mxu0 0
        %3124 = vmatprep.subr.bf16.mxu0 0
        %3125 = vmatpush1.bf16.msra.mxu0 0
        %3126 = vmatprep.subr.bf16.mxu0 0
        %3127 = vmatpush1.bf16.msra.mxu0 %v3110
        %3128 = vmatprep.subr.bf16.mxu0 0
        %3129 = vmatpush2.bf16.msra.mxu0 0
        %3130 = vmatprep.subr.bf16.mxu0 0
        %3131 = vmatpush2.bf16.msra.mxu0 0
        %3132 = vmatprep.subr.bf16.mxu0 0
        %3133 = vmatpush2.bf16.msra.mxu0 0
        %3134 = vmatprep.subr.bf16.mxu0 0
        %3135 = vmatpush2.bf16.msra.mxu0 0
        %3136 = vmatprep.subr.bf16.mxu0 0
        %3137 = vmatpush2.bf16.msra.mxu0 0
        %3138 = vmatprep.subr.bf16.mxu0 0
        %3139 = vmatpush2.bf16.msra.mxu0 0
        %3140 = vmatprep.subr.bf16.mxu0 0
        %3141 = vmatpush2.bf16.msra.mxu0 0
        %3142 = vmatprep.subr.bf16.mxu0 0
        %3143 = vmatpush2.bf16.msra.mxu0 0
        %3144 = vmatprep.mubr.bf16.mxu0 0
        %3145 = vmatmul.mubr.bf16.gmra.mxu0 %v1122
        %v3146 = vpop.f32.mrf.mxu0
        %v3147 = vadd.f32 0.0, %v3146
        %v3148 = vpop.f32.mrf.mxu0
        %v3149 = vpop.f32.mrf.mxu0
        %v3150 = vadd.f32 0.0, %v3149
        %v3151 = vpop.f32.mrf.mxu0
        %3152 = vmatprep.mubr.bf16.mxu0 0
        %3153 = vmatmul.mubr.bf16.gmra.mxu0 %v1125
        %v3154 = vpop.f32.mrf.mxu0
        %v3155 = vadd.f32 0.0, %v3154
        %v3156 = vpop.f32.mrf.mxu0
        %v3157 = vpop.f32.mrf.mxu0
        %v3158 = vadd.f32 0.0, %v3157
        %v3159 = vpop.f32.mrf.mxu0
        %3160 = vmatprep.mubr.bf16.mxu0 0
        %3161 = vmatmul.mubr.bf16.gmra.mxu0 %v1128
        %v3162 = vpop.f32.mrf.mxu0
        %v3163 = vadd.f32 0.0, %v3162
        %v3164 = vpop.f32.mrf.mxu0
        %v3165 = vpop.f32.mrf.mxu0
        %v3166 = vadd.f32 0.0, %v3165
        %v3167 = vpop.f32.mrf.mxu0
        %3168 = vmatprep.mubr.bf16.mxu0 0
        %3169 = vmatmul.mubr.bf16.gmra.mxu0 %v1131
        %v3170 = vpop.f32.mrf.mxu0
        %v3171 = vadd.f32 0.0, %v3170
        %v3172 = vpop.f32.mrf.mxu0
        %v3173 = vpop.f32.mrf.mxu0
        %v3174 = vadd.f32 0.0, %v3173
        %v3175 = vpop.f32.mrf.mxu0
        %3176 = vmatprep.mubr.bf16.mxu0 0
        %3177 = vmatmul.mubr.bf16.gmra.mxu0 %v1134
        %v3178 = vpop.f32.mrf.mxu0
        %v3179 = vadd.f32 0.0, %v3178
        %v3180 = vpop.f32.mrf.mxu0
        %v3181 = vpop.f32.mrf.mxu0
        %v3182 = vadd.f32 0.0, %v3181
        %v3183 = vpop.f32.mrf.mxu0
        %3184 = vmatprep.mubr.bf16.mxu0 0
        %3185 = vmatmul.mubr.bf16.gmra.mxu0 %v1137
        %v3186 = vpop.f32.mrf.mxu0
        %v3187 = vadd.f32 0.0, %v3186
        %v3188 = vpop.f32.mrf.mxu0
        %v3189 = vpop.f32.mrf.mxu0
        %v3190 = vadd.f32 0.0, %v3189
        %v3191 = vpop.f32.mrf.mxu0
        %3192 = vmatprep.mubr.bf16.mxu0 0
        %3193 = vmatmul.mubr.bf16.gmra.mxu0 %v1140
        %v3194 = vpop.f32.mrf.mxu0
        %v3195 = vadd.f32 0.0, %v3194
        %v3196 = vpop.f32.mrf.mxu0
        %v3197 = vpop.f32.mrf.mxu0
        %v3198 = vadd.f32 0.0, %v3197
        %v3199 = vpop.f32.mrf.mxu0
        %3200 = vmatprep.mubr.bf16.mxu0 0
        %3201 = vmatmul.mubr.bf16.gmra.mxu0 %v1143
        %v3202 = vpop.f32.mrf.mxu0
        %v3203 = vadd.f32 0.0, %v3202
        %v3204 = vpop.f32.mrf.mxu0
        %v3205 = vpop.f32.mrf.mxu0
        %v3206 = vadd.f32 0.0, %v3205
        %v3207 = vpop.f32.mrf.mxu0
        %3208 = vmatprep.mubr.bf16.mxu0 0
        %3209 = vmatmul.mubr.bf16.gmra.mxu0 %v1146
        %v3210 = vpop.f32.mrf.mxu0
        %v3211 = vadd.f32 0.0, %v3210
        %v3212 = vpop.f32.mrf.mxu0
        %v3213 = vpop.f32.mrf.mxu0
        %v3214 = vadd.f32 0.0, %v3213
        %v3215 = vpop.f32.mrf.mxu0
        %3216 = vmatprep.mubr.bf16.mxu0 0
        %3217 = vmatmul.mubr.bf16.gmra.mxu0 %v1149
        %v3218 = vpop.f32.mrf.mxu0
        %v3219 = vadd.f32 0.0, %v3218
        %v3220 = vpop.f32.mrf.mxu0
        %v3221 = vpop.f32.mrf.mxu0
        %v3222 = vadd.f32 0.0, %v3221
        %v3223 = vpop.f32.mrf.mxu0
        %3224 = vmatprep.mubr.bf16.mxu0 0
        %3225 = vmatmul.mubr.bf16.gmra.mxu0 %v1152
        %v3226 = vpop.f32.mrf.mxu0
        %v3227 = vadd.f32 0.0, %v3226
        %v3228 = vpop.f32.mrf.mxu0
        %v3229 = vpop.f32.mrf.mxu0
        %v3230 = vadd.f32 0.0, %v3229
        %v3231 = vpop.f32.mrf.mxu0
        %3232 = vmatprep.mubr.bf16.mxu0 0
        %3233 = vmatmul.mubr.bf16.gmra.mxu0 %v1155
        %v3234 = vpop.f32.mrf.mxu0
        %v3235 = vadd.f32 0.0, %v3234
        %v3236 = vpop.f32.mrf.mxu0
        %v3237 = vpop.f32.mrf.mxu0
        %v3238 = vadd.f32 0.0, %v3237
        %v3239 = vpop.f32.mrf.mxu0
        %3240 = vmatprep.mubr.bf16.mxu0 0
        %3241 = vmatmul.mubr.bf16.gmra.mxu0 %v1158
        %v3242 = vpop.f32.mrf.mxu0
        %v3243 = vadd.f32 0.0, %v3242
        %v3244 = vpop.f32.mrf.mxu0
        %v3245 = vpop.f32.mrf.mxu0
        %v3246 = vadd.f32 0.0, %v3245
        %v3247 = vpop.f32.mrf.mxu0
        %3248 = vmatprep.mubr.bf16.mxu0 0
        %3249 = vmatmul.mubr.bf16.gmra.mxu0 %v1161
        %v3250 = vpop.f32.mrf.mxu0
        %v3251 = vadd.f32 0.0, %v3250
        %v3252 = vpop.f32.mrf.mxu0
        %v3253 = vpop.f32.mrf.mxu0
        %v3254 = vadd.f32 0.0, %v3253
        %v3255 = vpop.f32.mrf.mxu0
        %3256 = vmatprep.mubr.bf16.mxu0 0
        %3257 = vmatmul.mubr.bf16.gmra.mxu0 %v1164
        %v3258 = vpop.f32.mrf.mxu0
        %v3259 = vadd.f32 0.0, %v3258
        %v3260 = vpop.f32.mrf.mxu0
        %v3261 = vpop.f32.mrf.mxu0
        %v3262 = vadd.f32 0.0, %v3261
        %v3263 = vpop.f32.mrf.mxu0
        %3264 = vmatprep.mubr.bf16.mxu0 0
        %3265 = vmatmul.mubr.bf16.gmra.mxu0 %v1167
        %v3266 = vpop.f32.mrf.mxu0
        %v3267 = vadd.f32 0.0, %v3266
        %v3268 = vpop.f32.mrf.mxu0
        %v3269 = vpop.f32.mrf.mxu0
        %v3270 = vadd.f32 0.0, %v3269
        %v3271 = vpop.f32.mrf.mxu0
        %3272 = vmatprep.mubr.bf16.mxu0 0
        %3273 = vmatmul.mubr.bf16.gmra.mxu0 %v1170
        %v3274 = vpop.f32.mrf.mxu0
        %v3275 = vadd.f32 0.0, %v3274
        %v3276 = vpop.f32.mrf.mxu0
        %v3277 = vpop.f32.mrf.mxu0
        %v3278 = vadd.f32 0.0, %v3277
        %v3279 = vpop.f32.mrf.mxu0
        %3280 = vmatprep.mubr.bf16.mxu0 0
        %3281 = vmatmul.mubr.bf16.gmra.mxu0 %v1173
        %v3282 = vpop.f32.mrf.mxu0
        %v3283 = vadd.f32 0.0, %v3282
        %v3284 = vpop.f32.mrf.mxu0
        %v3285 = vpop.f32.mrf.mxu0
        %v3286 = vadd.f32 0.0, %v3285
        %v3287 = vpop.f32.mrf.mxu0
        %3288 = vmatprep.mubr.bf16.mxu0 0
        %3289 = vmatmul.mubr.bf16.gmra.mxu0 %v1176
        %v3290 = vpop.f32.mrf.mxu0
        %v3291 = vadd.f32 0.0, %v3290
        %v3292 = vpop.f32.mrf.mxu0
        %v3293 = vpop.f32.mrf.mxu0
        %v3294 = vadd.f32 0.0, %v3293
        %v3295 = vpop.f32.mrf.mxu0
        %3296 = vmatprep.mubr.bf16.mxu0 0
        %3297 = vmatmul.mubr.bf16.gmra.mxu0 %v1179
        %v3298 = vpop.f32.mrf.mxu0
        %v3299 = vadd.f32 0.0, %v3298
        %v3300 = vpop.f32.mrf.mxu0
        %v3301 = vpop.f32.mrf.mxu0
        %v3302 = vadd.f32 0.0, %v3301
        %v3303 = vpop.f32.mrf.mxu0
        %3304 = vmatprep.mubr.bf16.mxu0 0
        %3305 = vmatmul.mubr.bf16.gmra.mxu0 %v1182
        %v3306 = vpop.f32.mrf.mxu0
        %v3307 = vadd.f32 0.0, %v3306
        %v3308 = vpop.f32.mrf.mxu0
        %v3309 = vpop.f32.mrf.mxu0
        %v3310 = vadd.f32 0.0, %v3309
        %v3311 = vpop.f32.mrf.mxu0
        %3312 = vmatprep.mubr.bf16.mxu0 0
        %3313 = vmatmul.mubr.bf16.gmra.mxu0 %v1185
        %v3314 = vpop.f32.mrf.mxu0
        %v3315 = vadd.f32 0.0, %v3314
        %v3316 = vpop.f32.mrf.mxu0
        %v3317 = vpop.f32.mrf.mxu0
        %v3318 = vadd.f32 0.0, %v3317
        %v3319 = vpop.f32.mrf.mxu0
        %3320 = vmatprep.mubr.bf16.mxu0 0
        %3321 = vmatmul.mubr.bf16.gmra.mxu0 %v1188
        %v3322 = vpop.f32.mrf.mxu0
        %v3323 = vadd.f32 0.0, %v3322
        %v3324 = vpop.f32.mrf.mxu0
        %v3325 = vpop.f32.mrf.mxu0
        %v3326 = vadd.f32 0.0, %v3325
        %v3327 = vpop.f32.mrf.mxu0
        %3328 = vmatprep.mubr.bf16.mxu0 0
        %3329 = vmatmul.mubr.bf16.gmra.mxu0 %v1191
        %v3330 = vpop.f32.mrf.mxu0
        %v3331 = vadd.f32 0.0, %v3330
        %v3332 = vpop.f32.mrf.mxu0
        %v3333 = vpop.f32.mrf.mxu0
        %v3334 = vadd.f32 0.0, %v3333
        %v3335 = vpop.f32.mrf.mxu0
        %3336 = vmatprep.mubr.bf16.mxu0 0
        %3337 = vmatmul.mubr.bf16.gmra.mxu0 %v1194
        %v3338 = vpop.f32.mrf.mxu0
        %v3339 = vadd.f32 0.0, %v3338
        %v3340 = vpop.f32.mrf.mxu0
        %v3341 = vpop.f32.mrf.mxu0
        %v3342 = vadd.f32 0.0, %v3341
        %v3343 = vpop.f32.mrf.mxu0
        %3344 = vmatprep.mubr.bf16.mxu0 0
        %3345 = vmatmul.mubr.bf16.gmra.mxu0 %v1197
        %v3346 = vpop.f32.mrf.mxu0
        %v3347 = vadd.f32 0.0, %v3346
        %v3348 = vpop.f32.mrf.mxu0
        %v3349 = vpop.f32.mrf.mxu0
        %v3350 = vadd.f32 0.0, %v3349
        %v3351 = vpop.f32.mrf.mxu0
        %3352 = vmatprep.mubr.bf16.mxu0 0
        %3353 = vmatmul.mubr.bf16.gmra.mxu0 %v1200
        %v3354 = vpop.f32.mrf.mxu0
        %v3355 = vadd.f32 0.0, %v3354
        %v3356 = vpop.f32.mrf.mxu0
        %v3357 = vpop.f32.mrf.mxu0
        %v3358 = vadd.f32 0.0, %v3357
        %v3359 = vpop.f32.mrf.mxu0
        %3360 = vmatprep.mubr.bf16.mxu0 0
        %3361 = vmatmul.mubr.bf16.gmra.mxu0 %v1203
        %v3362 = vpop.f32.mrf.mxu0
        %v3363 = vadd.f32 0.0, %v3362
        %v3364 = vpop.f32.mrf.mxu0
        %v3365 = vpop.f32.mrf.mxu0
        %v3366 = vadd.f32 0.0, %v3365
        %v3367 = vpop.f32.mrf.mxu0
        %3368 = vmatprep.mubr.bf16.mxu0 0
        %3369 = vmatmul.mubr.bf16.gmra.mxu0 %v1206
        %v3370 = vpop.f32.mrf.mxu0
        %v3371 = vadd.f32 0.0, %v3370
        %v3372 = vpop.f32.mrf.mxu0
        %v3373 = vpop.f32.mrf.mxu0
        %v3374 = vadd.f32 0.0, %v3373
        %v3375 = vpop.f32.mrf.mxu0
        %3376 = vmatprep.mubr.bf16.mxu0 0
        %3377 = vmatmul.mubr.bf16.gmra.mxu0 %v1209
        %v3378 = vpop.f32.mrf.mxu0
        %v3379 = vadd.f32 0.0, %v3378
        %v3380 = vpop.f32.mrf.mxu0
        %v3381 = vpop.f32.mrf.mxu0
        %v3382 = vadd.f32 0.0, %v3381
        %v3383 = vpop.f32.mrf.mxu0
        %3384 = vmatprep.mubr.bf16.mxu0 0
        %3385 = vmatmul.mubr.bf16.gmra.mxu0 %v1212
        %v3386 = vpop.f32.mrf.mxu0
        %v3387 = vadd.f32 0.0, %v3386
        %v3388 = vpop.f32.mrf.mxu0
        %v3389 = vpop.f32.mrf.mxu0
        %v3390 = vadd.f32 0.0, %v3389
        %v3391 = vpop.f32.mrf.mxu0
        %3392 = vmatprep.mubr.bf16.mxu0 0
        %3393 = vmatmul.mubr.bf16.gmra.mxu0 %v1215
        %v3394 = vpop.f32.mrf.mxu0
        %v3395 = vadd.f32 0.0, %v3394
        %v3396 = vpop.f32.mrf.mxu0
        %v3397 = vpop.f32.mrf.mxu0
        %v3398 = vadd.f32 0.0, %v3397
        %v3399 = vpop.f32.mrf.mxu0
        %3400 = vmatprep.mubr.bf16.mxu0 0
        %3401 = vmatmul.mubr.bf16.gmra.mxu0 %v1218
        %v3402 = vpop.f32.mrf.mxu0
        %v3403 = vadd.f32 0.0, %v3402
        %v3404 = vpop.f32.mrf.mxu0
        %v3405 = vpop.f32.mrf.mxu0
        %v3406 = vadd.f32 0.0, %v3405
        %v3407 = vpop.f32.mrf.mxu0
        %3408 = vmatprep.mubr.bf16.mxu0 0
        %3409 = vmatmul.mubr.bf16.gmra.mxu0 %v1221
        %v3410 = vpop.f32.mrf.mxu0
        %v3411 = vadd.f32 0.0, %v3410
        %v3412 = vpop.f32.mrf.mxu0
        %v3413 = vpop.f32.mrf.mxu0
        %v3414 = vadd.f32 0.0, %v3413
        %v3415 = vpop.f32.mrf.mxu0
        %3416 = vmatprep.mubr.bf16.mxu0 0
        %3417 = vmatmul.mubr.bf16.gmra.mxu0 %v1224
        %v3418 = vpop.f32.mrf.mxu0
        %v3419 = vadd.f32 0.0, %v3418
        %v3420 = vpop.f32.mrf.mxu0
        %v3421 = vpop.f32.mrf.mxu0
        %v3422 = vadd.f32 0.0, %v3421
        %v3423 = vpop.f32.mrf.mxu0
        %3424 = vmatprep.mubr.bf16.mxu0 0
        %3425 = vmatmul.mubr.bf16.gmra.mxu0 %v1227
        %v3426 = vpop.f32.mrf.mxu0
        %v3427 = vadd.f32 0.0, %v3426
        %v3428 = vpop.f32.mrf.mxu0
        %v3429 = vpop.f32.mrf.mxu0
        %v3430 = vadd.f32 0.0, %v3429
        %v3431 = vpop.f32.mrf.mxu0
        %3432 = vdwg.mxu0
        %v3434 = vsel %vm1229, %v1079, 0
        %3436 = vmatprep.subr.bf16.mxu0 0
        %3437 = vmatpush1.bf16.msra.mxu0 0
        %3438 = vmatprep.subr.bf16.mxu0 0
        %3439 = vmatpush1.bf16.msra.mxu0 0
        %3440 = vmatprep.subr.bf16.mxu0 0
        %3441 = vmatpush1.bf16.msra.mxu0 0
        %3442 = vmatprep.subr.bf16.mxu0 0
        %3443 = vmatpush1.bf16.msra.mxu0 0
        %3444 = vmatprep.subr.bf16.mxu0 0
        %3445 = vmatpush1.bf16.msra.mxu0 0
        %3446 = vmatprep.subr.bf16.mxu0 0
        %3447 = vmatpush1.bf16.msra.mxu0 0
        %3448 = vmatprep.subr.bf16.mxu0 0
        %3449 = vmatpush1.bf16.msra.mxu0 0
        %3450 = vmatprep.subr.bf16.mxu0 0
        %3451 = vmatpush1.bf16.msra.mxu0 %v3434
        %3452 = vmatprep.subr.bf16.mxu0 0
        %3453 = vmatpush2.bf16.msra.mxu0 0
        %3454 = vmatprep.subr.bf16.mxu0 0
        %3455 = vmatpush2.bf16.msra.mxu0 0
        %3456 = vmatprep.subr.bf16.mxu0 0
        %3457 = vmatpush2.bf16.msra.mxu0 0
        %3458 = vmatprep.subr.bf16.mxu0 0
        %3459 = vmatpush2.bf16.msra.mxu0 0
        %3460 = vmatprep.subr.bf16.mxu0 0
        %3461 = vmatpush2.bf16.msra.mxu0 0
        %3462 = vmatprep.subr.bf16.mxu0 0
        %3463 = vmatpush2.bf16.msra.mxu0 0
        %3464 = vmatprep.subr.bf16.mxu0 0
        %3465 = vmatpush2.bf16.msra.mxu0 0
        %3466 = vmatprep.subr.bf16.mxu0 0
        %3467 = vmatpush2.bf16.msra.mxu0 0
        %3468 = vmatprep.mubr.bf16.mxu0 0
        %3469 = vmatmul.mubr.bf16.gmra.mxu0 %v1591
        %v3470 = vpop.f32.mrf.mxu0
        %v3471 = vadd.f32 %v3147, %v3470
        %v3472 = vpop.f32.mrf.mxu0
        %v3473 = vpop.f32.mrf.mxu0
        %v3474 = vadd.f32 %v3150, %v3473
        %v3475 = vpop.f32.mrf.mxu0
        %3476 = vmatprep.mubr.bf16.mxu0 0
        %3477 = vmatmul.mubr.bf16.gmra.mxu0 %v1594
        %v3478 = vpop.f32.mrf.mxu0
        %v3479 = vadd.f32 %v3155, %v3478
        %v3480 = vpop.f32.mrf.mxu0
        %v3481 = vpop.f32.mrf.mxu0
        %v3482 = vadd.f32 %v3158, %v3481
        %v3483 = vpop.f32.mrf.mxu0
        %3484 = vmatprep.mubr.bf16.mxu0 0
        %3485 = vmatmul.mubr.bf16.gmra.mxu0 %v1597
        %v3486 = vpop.f32.mrf.mxu0
        %v3487 = vadd.f32 %v3163, %v3486
        %v3488 = vpop.f32.mrf.mxu0
        %v3489 = vpop.f32.mrf.mxu0
        %v3490 = vadd.f32 %v3166, %v3489
        %v3491 = vpop.f32.mrf.mxu0
        %3492 = vmatprep.mubr.bf16.mxu0 0
        %3493 = vmatmul.mubr.bf16.gmra.mxu0 %v1600
        %v3494 = vpop.f32.mrf.mxu0
        %v3495 = vadd.f32 %v3171, %v3494
        %v3496 = vpop.f32.mrf.mxu0
        %v3497 = vpop.f32.mrf.mxu0
        %v3498 = vadd.f32 %v3174, %v3497
        %v3499 = vpop.f32.mrf.mxu0
        %3500 = vmatprep.mubr.bf16.mxu0 0
        %3501 = vmatmul.mubr.bf16.gmra.mxu0 %v1603
        %v3502 = vpop.f32.mrf.mxu0
        %v3503 = vadd.f32 %v3179, %v3502
        %v3504 = vpop.f32.mrf.mxu0
        %v3505 = vpop.f32.mrf.mxu0
        %v3506 = vadd.f32 %v3182, %v3505
        %v3507 = vpop.f32.mrf.mxu0
        %3508 = vmatprep.mubr.bf16.mxu0 0
        %3509 = vmatmul.mubr.bf16.gmra.mxu0 %v1606
        %v3510 = vpop.f32.mrf.mxu0
        %v3511 = vadd.f32 %v3187, %v3510
        %v3512 = vpop.f32.mrf.mxu0
        %v3513 = vpop.f32.mrf.mxu0
        %v3514 = vadd.f32 %v3190, %v3513
        %v3515 = vpop.f32.mrf.mxu0
        %3516 = vmatprep.mubr.bf16.mxu0 0
        %3517 = vmatmul.mubr.bf16.gmra.mxu0 %v1609
        %v3518 = vpop.f32.mrf.mxu0
        %v3519 = vadd.f32 %v3195, %v3518
        %v3520 = vpop.f32.mrf.mxu0
        %v3521 = vpop.f32.mrf.mxu0
        %v3522 = vadd.f32 %v3198, %v3521
        %v3523 = vpop.f32.mrf.mxu0
        %3524 = vmatprep.mubr.bf16.mxu0 0
        %3525 = vmatmul.mubr.bf16.gmra.mxu0 %v1612
        %v3526 = vpop.f32.mrf.mxu0
        %v3527 = vadd.f32 %v3203, %v3526
        %v3528 = vpop.f32.mrf.mxu0
        %v3529 = vpop.f32.mrf.mxu0
        %v3530 = vadd.f32 %v3206, %v3529
        %v3531 = vpop.f32.mrf.mxu0
        %3532 = vmatprep.mubr.bf16.mxu0 0
        %3533 = vmatmul.mubr.bf16.gmra.mxu0 %v1615
        %v3534 = vpop.f32.mrf.mxu0
        %v3535 = vadd.f32 %v3211, %v3534
        %v3536 = vpop.f32.mrf.mxu0
        %v3537 = vpop.f32.mrf.mxu0
        %v3538 = vadd.f32 %v3214, %v3537
        %v3539 = vpop.f32.mrf.mxu0
        %3540 = vmatprep.mubr.bf16.mxu0 0
        %3541 = vmatmul.mubr.bf16.gmra.mxu0 %v1618
        %v3542 = vpop.f32.mrf.mxu0
        %v3543 = vadd.f32 %v3219, %v3542
        %v3544 = vpop.f32.mrf.mxu0
        %v3545 = vpop.f32.mrf.mxu0
        %v3546 = vadd.f32 %v3222, %v3545
        %v3547 = vpop.f32.mrf.mxu0
        %3548 = vmatprep.mubr.bf16.mxu0 0
        %3549 = vmatmul.mubr.bf16.gmra.mxu0 %v1621
        %v3550 = vpop.f32.mrf.mxu0
        %v3551 = vadd.f32 %v3227, %v3550
        %v3552 = vpop.f32.mrf.mxu0
        %v3553 = vpop.f32.mrf.mxu0
        %v3554 = vadd.f32 %v3230, %v3553
        %v3555 = vpop.f32.mrf.mxu0
        %3556 = vmatprep.mubr.bf16.mxu0 0
        %3557 = vmatmul.mubr.bf16.gmra.mxu0 %v1624
        %v3558 = vpop.f32.mrf.mxu0
        %v3559 = vadd.f32 %v3235, %v3558
        %v3560 = vpop.f32.mrf.mxu0
        %v3561 = vpop.f32.mrf.mxu0
        %v3562 = vadd.f32 %v3238, %v3561
        %v3563 = vpop.f32.mrf.mxu0
        %3564 = vmatprep.mubr.bf16.mxu0 0
        %3565 = vmatmul.mubr.bf16.gmra.mxu0 %v1627
        %v3566 = vpop.f32.mrf.mxu0
        %v3567 = vadd.f32 %v3243, %v3566
        %v3568 = vpop.f32.mrf.mxu0
        %v3569 = vpop.f32.mrf.mxu0
        %v3570 = vadd.f32 %v3246, %v3569
        %v3571 = vpop.f32.mrf.mxu0
        %3572 = vmatprep.mubr.bf16.mxu0 0
        %3573 = vmatmul.mubr.bf16.gmra.mxu0 %v1630
        %v3574 = vpop.f32.mrf.mxu0
        %v3575 = vadd.f32 %v3251, %v3574
        %v3576 = vpop.f32.mrf.mxu0
        %v3577 = vpop.f32.mrf.mxu0
        %v3578 = vadd.f32 %v3254, %v3577
        %v3579 = vpop.f32.mrf.mxu0
        %3580 = vmatprep.mubr.bf16.mxu0 0
        %3581 = vmatmul.mubr.bf16.gmra.mxu0 %v1633
        %v3582 = vpop.f32.mrf.mxu0
        %v3583 = vadd.f32 %v3259, %v3582
        %v3584 = vpop.f32.mrf.mxu0
        %v3585 = vpop.f32.mrf.mxu0
        %v3586 = vadd.f32 %v3262, %v3585
        %v3587 = vpop.f32.mrf.mxu0
        %3588 = vmatprep.mubr.bf16.mxu0 0
        %3589 = vmatmul.mubr.bf16.gmra.mxu0 %v1636
        %v3590 = vpop.f32.mrf.mxu0
        %v3591 = vadd.f32 %v3267, %v3590
        %v3592 = vpop.f32.mrf.mxu0
        %v3593 = vpop.f32.mrf.mxu0
        %v3594 = vadd.f32 %v3270, %v3593
        %v3595 = vpop.f32.mrf.mxu0
        %3596 = vmatprep.mubr.bf16.mxu0 0
        %3597 = vmatmul.mubr.bf16.gmra.mxu0 %v1639
        %v3598 = vpop.f32.mrf.mxu0
        %v3599 = vadd.f32 %v3275, %v3598
        %v3600 = vpop.f32.mrf.mxu0
        %v3601 = vpop.f32.mrf.mxu0
        %v3602 = vadd.f32 %v3278, %v3601
        %v3603 = vpop.f32.mrf.mxu0
        %3604 = vmatprep.mubr.bf16.mxu0 0
        %3605 = vmatmul.mubr.bf16.gmra.mxu0 %v1642
        %v3606 = vpop.f32.mrf.mxu0
        %v3607 = vadd.f32 %v3283, %v3606
        %v3608 = vpop.f32.mrf.mxu0
        %v3609 = vpop.f32.mrf.mxu0
        %v3610 = vadd.f32 %v3286, %v3609
        %v3611 = vpop.f32.mrf.mxu0
        %3612 = vmatprep.mubr.bf16.mxu0 0
        %3613 = vmatmul.mubr.bf16.gmra.mxu0 %v1645
        %v3614 = vpop.f32.mrf.mxu0
        %v3615 = vadd.f32 %v3291, %v3614
        %v3616 = vpop.f32.mrf.mxu0
        %v3617 = vpop.f32.mrf.mxu0
        %v3618 = vadd.f32 %v3294, %v3617
        %v3619 = vpop.f32.mrf.mxu0
        %3620 = vmatprep.mubr.bf16.mxu0 0
        %3621 = vmatmul.mubr.bf16.gmra.mxu0 %v1648
        %v3622 = vpop.f32.mrf.mxu0
        %v3623 = vadd.f32 %v3299, %v3622
        %v3624 = vpop.f32.mrf.mxu0
        %v3625 = vpop.f32.mrf.mxu0
        %v3626 = vadd.f32 %v3302, %v3625
        %v3627 = vpop.f32.mrf.mxu0
        %3628 = vmatprep.mubr.bf16.mxu0 0
        %3629 = vmatmul.mubr.bf16.gmra.mxu0 %v1651
        %v3630 = vpop.f32.mrf.mxu0
        %v3631 = vadd.f32 %v3307, %v3630
        %v3632 = vpop.f32.mrf.mxu0
        %v3633 = vpop.f32.mrf.mxu0
        %v3634 = vadd.f32 %v3310, %v3633
        %v3635 = vpop.f32.mrf.mxu0
        %3636 = vmatprep.mubr.bf16.mxu0 0
        %3637 = vmatmul.mubr.bf16.gmra.mxu0 %v1654
        %v3638 = vpop.f32.mrf.mxu0
        %v3639 = vadd.f32 %v3315, %v3638
        %v3640 = vpop.f32.mrf.mxu0
        %v3641 = vpop.f32.mrf.mxu0
        %v3642 = vadd.f32 %v3318, %v3641
        %v3643 = vpop.f32.mrf.mxu0
        %3644 = vmatprep.mubr.bf16.mxu0 0
        %3645 = vmatmul.mubr.bf16.gmra.mxu0 %v1657
        %v3646 = vpop.f32.mrf.mxu0
        %v3647 = vadd.f32 %v3323, %v3646
        %v3648 = vpop.f32.mrf.mxu0
        %v3649 = vpop.f32.mrf.mxu0
        %v3650 = vadd.f32 %v3326, %v3649
        %v3651 = vpop.f32.mrf.mxu0
        %3652 = vmatprep.mubr.bf16.mxu0 0
        %3653 = vmatmul.mubr.bf16.gmra.mxu0 %v1660
        %v3654 = vpop.f32.mrf.mxu0
        %v3655 = vadd.f32 %v3331, %v3654
        %v3656 = vpop.f32.mrf.mxu0
        %v3657 = vpop.f32.mrf.mxu0
        %v3658 = vadd.f32 %v3334, %v3657
        %v3659 = vpop.f32.mrf.mxu0
        %3660 = vmatprep.mubr.bf16.mxu0 0
        %3661 = vmatmul.mubr.bf16.gmra.mxu0 %v1663
        %v3662 = vpop.f32.mrf.mxu0
        %v3663 = vadd.f32 %v3339, %v3662
        %v3664 = vpop.f32.mrf.mxu0
        %v3665 = vpop.f32.mrf.mxu0
        %v3666 = vadd.f32 %v3342, %v3665
        %v3667 = vpop.f32.mrf.mxu0
        %3668 = vmatprep.mubr.bf16.mxu0 0
        %3669 = vmatmul.mubr.bf16.gmra.mxu0 %v1666
        %v3670 = vpop.f32.mrf.mxu0
        %v3671 = vadd.f32 %v3347, %v3670
        %v3672 = vpop.f32.mrf.mxu0
        %v3673 = vpop.f32.mrf.mxu0
        %v3674 = vadd.f32 %v3350, %v3673
        %v3675 = vpop.f32.mrf.mxu0
        %3676 = vmatprep.mubr.bf16.mxu0 0
        %3677 = vmatmul.mubr.bf16.gmra.mxu0 %v1669
        %v3678 = vpop.f32.mrf.mxu0
        %v3679 = vadd.f32 %v3355, %v3678
        %v3680 = vpop.f32.mrf.mxu0
        %v3681 = vpop.f32.mrf.mxu0
        %v3682 = vadd.f32 %v3358, %v3681
        %v3683 = vpop.f32.mrf.mxu0
        %3684 = vmatprep.mubr.bf16.mxu0 0
        %3685 = vmatmul.mubr.bf16.gmra.mxu0 %v1672
        %v3686 = vpop.f32.mrf.mxu0
        %v3687 = vadd.f32 %v3363, %v3686
        %v3688 = vpop.f32.mrf.mxu0
        %v3689 = vpop.f32.mrf.mxu0
        %v3690 = vadd.f32 %v3366, %v3689
        %v3691 = vpop.f32.mrf.mxu0
        %3692 = vmatprep.mubr.bf16.mxu0 0
        %3693 = vmatmul.mubr.bf16.gmra.mxu0 %v1675
        %v3694 = vpop.f32.mrf.mxu0
        %v3695 = vadd.f32 %v3371, %v3694
        %v3696 = vpop.f32.mrf.mxu0
        %v3697 = vpop.f32.mrf.mxu0
        %v3698 = vadd.f32 %v3374, %v3697
        %v3699 = vpop.f32.mrf.mxu0
        %3700 = vmatprep.mubr.bf16.mxu0 0
        %3701 = vmatmul.mubr.bf16.gmra.mxu0 %v1678
        %v3702 = vpop.f32.mrf.mxu0
        %v3703 = vadd.f32 %v3379, %v3702
        %v3704 = vpop.f32.mrf.mxu0
        %v3705 = vpop.f32.mrf.mxu0
        %v3706 = vadd.f32 %v3382, %v3705
        %v3707 = vpop.f32.mrf.mxu0
        %3708 = vmatprep.mubr.bf16.mxu0 0
        %3709 = vmatmul.mubr.bf16.gmra.mxu0 %v1681
        %v3710 = vpop.f32.mrf.mxu0
        %v3711 = vadd.f32 %v3387, %v3710
        %v3712 = vpop.f32.mrf.mxu0
        %v3713 = vpop.f32.mrf.mxu0
        %v3714 = vadd.f32 %v3390, %v3713
        %v3715 = vpop.f32.mrf.mxu0
        %3716 = vmatprep.mubr.bf16.mxu0 0
        %3717 = vmatmul.mubr.bf16.gmra.mxu0 %v1684
        %v3718 = vpop.f32.mrf.mxu0
        %v3719 = vadd.f32 %v3395, %v3718
        %v3720 = vpop.f32.mrf.mxu0
        %v3721 = vpop.f32.mrf.mxu0
        %v3722 = vadd.f32 %v3398, %v3721
        %v3723 = vpop.f32.mrf.mxu0
        %3724 = vmatprep.mubr.bf16.mxu0 0
        %3725 = vmatmul.mubr.bf16.gmra.mxu0 %v1687
        %v3726 = vpop.f32.mrf.mxu0
        %v3727 = vadd.f32 %v3403, %v3726
        %v3728 = vpop.f32.mrf.mxu0
        %v3729 = vpop.f32.mrf.mxu0
        %v3730 = vadd.f32 %v3406, %v3729
        %v3731 = vpop.f32.mrf.mxu0
        %3732 = vmatprep.mubr.bf16.mxu0 0
        %3733 = vmatmul.mubr.bf16.gmra.mxu0 %v1690
        %v3734 = vpop.f32.mrf.mxu0
        %v3735 = vadd.f32 %v3411, %v3734
        %v3736 = vpop.f32.mrf.mxu0
        %v3737 = vpop.f32.mrf.mxu0
        %v3738 = vadd.f32 %v3414, %v3737
        %v3739 = vpop.f32.mrf.mxu0
        %3740 = vmatprep.mubr.bf16.mxu0 0
        %3741 = vmatmul.mubr.bf16.gmra.mxu0 %v1693
        %v3742 = vpop.f32.mrf.mxu0
        %v3743 = vadd.f32 %v3419, %v3742
        %v3744 = vpop.f32.mrf.mxu0
        %v3745 = vpop.f32.mrf.mxu0
        %v3746 = vadd.f32 %v3422, %v3745
        %v3747 = vpop.f32.mrf.mxu0
        %3748 = vmatprep.mubr.bf16.mxu0 0
        %3749 = vmatmul.mubr.bf16.gmra.mxu0 %v1696
        %v3750 = vpop.f32.mrf.mxu0
        %v3751 = vadd.f32 %v3427, %v3750
        %v3752 = vpop.f32.mrf.mxu0
        %v3753 = vpop.f32.mrf.mxu0
        %v3754 = vadd.f32 %v3430, %v3753
        %v3755 = vpop.f32.mrf.mxu0
        %3756 = vdwg.mxu0
        %v3757 = vmul.f32 %v3471, 0.125
        %v3758 = vmul.f32 %v3474, 0.125
        %v3759 = vmul.f32 %v3479, 0.125
        %v3760 = vmul.f32 %v3482, 0.125
        %v3761 = vmul.f32 %v3487, 0.125
        %v3762 = vmul.f32 %v3490, 0.125
        %v3763 = vmul.f32 %v3495, 0.125
        %v3764 = vmul.f32 %v3498, 0.125
        %v3765 = vmul.f32 %v3503, 0.125
        %v3766 = vmul.f32 %v3506, 0.125
        %v3767 = vmul.f32 %v3511, 0.125
        %v3768 = vmul.f32 %v3514, 0.125
        %v3769 = vmul.f32 %v3519, 0.125
        %v3770 = vmul.f32 %v3522, 0.125
        %v3771 = vmul.f32 %v3527, 0.125
        %v3772 = vmul.f32 %v3530, 0.125
        %v3773 = vmul.f32 %v3535, 0.125
        %v3774 = vmul.f32 %v3538, 0.125
        %v3775 = vmul.f32 %v3543, 0.125
        %v3776 = vmul.f32 %v3546, 0.125
        %v3777 = vmul.f32 %v3551, 0.125
        %v3778 = vmul.f32 %v3554, 0.125
        %v3779 = vmul.f32 %v3559, 0.125
        %v3780 = vmul.f32 %v3562, 0.125
        %v3781 = vmul.f32 %v3567, 0.125
        %v3782 = vmul.f32 %v3570, 0.125
        %v3783 = vmul.f32 %v3575, 0.125
        %v3784 = vmul.f32 %v3578, 0.125
        %v3785 = vmul.f32 %v3583, 0.125
        %v3786 = vmul.f32 %v3586, 0.125
        %v3787 = vmul.f32 %v3591, 0.125
        %v3788 = vmul.f32 %v3594, 0.125
        %v3789 = vmul.f32 %v3599, 0.125
        %v3790 = vmul.f32 %v3602, 0.125
        %v3791 = vmul.f32 %v3607, 0.125
        %v3792 = vmul.f32 %v3610, 0.125
        %v3793 = vmul.f32 %v3615, 0.125
        %v3794 = vmul.f32 %v3618, 0.125
        %v3795 = vmul.f32 %v3623, 0.125
        %v3796 = vmul.f32 %v3626, 0.125
        %v3797 = vmul.f32 %v3631, 0.125
        %v3798 = vmul.f32 %v3634, 0.125
        %v3799 = vmul.f32 %v3639, 0.125
        %v3800 = vmul.f32 %v3642, 0.125
        %v3801 = vmul.f32 %v3647, 0.125
        %v3802 = vmul.f32 %v3650, 0.125
        %v3803 = vmul.f32 %v3655, 0.125
        %v3804 = vmul.f32 %v3658, 0.125
        %v3805 = vmul.f32 %v3663, 0.125
        %v3806 = vmul.f32 %v3666, 0.125
        %v3807 = vmul.f32 %v3671, 0.125
        %v3808 = vmul.f32 %v3674, 0.125
        %v3809 = vmul.f32 %v3679, 0.125
        %v3810 = vmul.f32 %v3682, 0.125
        %v3811 = vmul.f32 %v3687, 0.125
        %v3812 = vmul.f32 %v3690, 0.125
        %v3813 = vmul.f32 %v3695, 0.125
        %v3814 = vmul.f32 %v3698, 0.125
        %v3815 = vmul.f32 %v3703, 0.125
        %v3816 = vmul.f32 %v3706, 0.125
        %v3817 = vmul.f32 %v3711, 0.125
        %v3818 = vmul.f32 %v3714, 0.125
        %v3819 = vmul.f32 %v3719, 0.125
        %v3820 = vmul.f32 %v3722, 0.125
        %v3821 = vmul.f32 %v3727, 0.125
        %v3822 = vmul.f32 %v3730, 0.125
        %v3823 = vmul.f32 %v3735, 0.125
        %v3824 = vmul.f32 %v3738, 0.125
        %v3825 = vmul.f32 %v3743, 0.125
        %v3826 = vmul.f32 %v3746, 0.125
        %v3827 = vmul.f32 %v3751, 0.125
        %v3828 = vmul.f32 %v3754, 0.125
        %v3829 = vadd.f32 %v3757, %v2098
        %v3830 = vadd.f32 %v3758, %v2098
        %v3831 = vadd.f32 %v3759, %v2098
        %v3832 = vadd.f32 %v3760, %v2098
        %v3833 = vadd.f32 %v3761, %v2098
        %v3834 = vadd.f32 %v3762, %v2098
        %v3835 = vadd.f32 %v3763, %v2098
        %v3836 = vadd.f32 %v3764, %v2098
        %v3837 = vadd.f32 %v3765, %v2098
        %v3838 = vadd.f32 %v3766, %v2098
        %v3839 = vadd.f32 %v3767, %v2098
        %v3840 = vadd.f32 %v3768, %v2098
        %v3841 = vadd.f32 %v3769, %v2098
        %v3842 = vadd.f32 %v3770, %v2098
        %v3843 = vadd.f32 %v3771, %v2098
        %v3844 = vadd.f32 %v3772, %v2098
        %v3845 = vadd.f32 %v3773, %v2098
        %v3846 = vadd.f32 %v3774, %v2098
        %v3847 = vadd.f32 %v3775, %v2098
        %v3848 = vadd.f32 %v3776, %v2098
        %v3849 = vadd.f32 %v3777, %v2098
        %v3850 = vadd.f32 %v3778, %v2098
        %v3851 = vadd.f32 %v3779, %v2098
        %v3852 = vadd.f32 %v3780, %v2098
        %v3853 = vadd.f32 %v3781, %v2098
        %v3854 = vadd.f32 %v3782, %v2098
        %v3855 = vadd.f32 %v3783, %v2098
        %v3856 = vadd.f32 %v3784, %v2098
        %v3857 = vadd.f32 %v3785, %v2098
        %v3858 = vadd.f32 %v3786, %v2098
        %v3859 = vadd.f32 %v3787, %v2098
        %v3860 = vadd.f32 %v3788, %v2098
        %v3861 = vadd.f32 %v3789, %v2098
        %v3862 = vadd.f32 %v3790, %v2098
        %v3863 = vadd.f32 %v3791, %v2098
        %v3864 = vadd.f32 %v3792, %v2098
        %v3865 = vadd.f32 %v3793, %v2098
        %v3866 = vadd.f32 %v3794, %v2098
        %v3867 = vadd.f32 %v3795, %v2098
        %v3868 = vadd.f32 %v3796, %v2098
        %v3869 = vadd.f32 %v3797, %v2098
        %v3870 = vadd.f32 %v3798, %v2098
        %v3871 = vadd.f32 %v3799, %v2098
        %v3872 = vadd.f32 %v3800, %v2098
        %v3873 = vadd.f32 %v3801, %v2098
        %v3874 = vadd.f32 %v3802, %v2098
        %v3875 = vadd.f32 %v3803, %v2098
        %v3876 = vadd.f32 %v3804, %v2098
        %v3877 = vadd.f32 %v3805, %v2098
        %v3878 = vadd.f32 %v3806, %v2098
        %v3879 = vadd.f32 %v3807, %v2098
        %v3880 = vadd.f32 %v3808, %v2098
        %v3881 = vadd.f32 %v3809, %v2098
        %v3882 = vadd.f32 %v3810, %v2098
        %v3883 = vadd.f32 %v3811, %v2098
        %v3884 = vadd.f32 %v3812, %v2098
        %v3885 = vadd.f32 %v3813, %v2098
        %v3886 = vadd.f32 %v3814, %v2098
        %v3887 = vadd.f32 %v3815, %v2098
        %v3888 = vadd.f32 %v3816, %v2098
        %v3889 = vadd.f32 %v3817, %v2098
        %v3890 = vadd.f32 %v3818, %v2098
        %v3891 = vadd.f32 %v3819, %v2098
        %v3892 = vadd.f32 %v3820, %v2098
        %v3893 = vadd.f32 %v3821, %v2098
        %v3894 = vadd.f32 %v3822, %v2098
        %v3895 = vadd.f32 %v3823, %v2098
        %v3896 = vadd.f32 %v3824, %v2098
        %v3897 = vadd.f32 %v3825, %v2098
        %v3898 = vadd.f32 %v3826, %v2098
        %v3899 = vadd.f32 %v3827, %v2098
        %v3900 = vadd.f32 %v3828, %v2098
        %s3901 = scalar_lea.vmem %s211, 1152 [#allocation6]
        %3902 = vst.msk [vmem:[%s3901] sm:$0xff] %vm1120, %v3829
        %3903 = vst.msk [vmem:[%s3901 + $0x8] sm:$0xff] %vm1120, %v3830
        %3904 = vst.msk [vmem:[%s3901 + $0x10] sm:$0xff] %vm1120, %v3831
        %3905 = vst.msk [vmem:[%s3901 + $0x18] sm:$0xff] %vm1120, %v3832
        %3906 = vst.msk [vmem:[%s3901 + $0x20] sm:$0xff] %vm1120, %v3833
        %3907 = vst.msk [vmem:[%s3901 + $0x28] sm:$0xff] %vm1120, %v3834
        %3908 = vst.msk [vmem:[%s3901 + $0x30] sm:$0xff] %vm1120, %v3835
        %3909 = vst.msk [vmem:[%s3901 + $0x38] sm:$0xff] %vm1120, %v3836
        %3910 = vst.msk [vmem:[%s3901 + $0x40] sm:$0xff] %vm1120, %v3837
        %3911 = vst.msk [vmem:[%s3901 + $0x48] sm:$0xff] %vm1120, %v3838
        %3912 = vst.msk [vmem:[%s3901 + $0x50] sm:$0xff] %vm1120, %v3839
        %3913 = vst.msk [vmem:[%s3901 + $0x58] sm:$0xff] %vm1120, %v3840
        %3914 = vst.msk [vmem:[%s3901 + $0x60] sm:$0xff] %vm1120, %v3841
        %3915 = vst.msk [vmem:[%s3901 + $0x68] sm:$0xff] %vm1120, %v3842
        %3916 = vst.msk [vmem:[%s3901 + $0x70] sm:$0xff] %vm1120, %v3843
        %3917 = vst.msk [vmem:[%s3901 + $0x78] sm:$0xff] %vm1120, %v3844
        %3918 = vst.msk [vmem:[%s3901 + $0x80] sm:$0xff] %vm1120, %v3845
        %3919 = vst.msk [vmem:[%s3901 + $0x88] sm:$0xff] %vm1120, %v3846
        %3920 = vst.msk [vmem:[%s3901 + $0x90] sm:$0xff] %vm1120, %v3847
        %3921 = vst.msk [vmem:[%s3901 + $0x98] sm:$0xff] %vm1120, %v3848
        %3922 = vst.msk [vmem:[%s3901 + $0xa0] sm:$0xff] %vm1120, %v3849
        %3923 = vst.msk [vmem:[%s3901 + $0xa8] sm:$0xff] %vm1120, %v3850
        %3924 = vst.msk [vmem:[%s3901 + $0xb0] sm:$0xff] %vm1120, %v3851
        %3925 = vst.msk [vmem:[%s3901 + $0xb8] sm:$0xff] %vm1120, %v3852
        %3926 = vst.msk [vmem:[%s3901 + $0xc0] sm:$0xff] %vm1120, %v3853
        %3927 = vst.msk [vmem:[%s3901 + $0xc8] sm:$0xff] %vm1120, %v3854
        %3928 = vst.msk [vmem:[%s3901 + $0xd0] sm:$0xff] %vm1120, %v3855
        %3929 = vst.msk [vmem:[%s3901 + $0xd8] sm:$0xff] %vm1120, %v3856
        %3930 = vst.msk [vmem:[%s3901 + $0xe0] sm:$0xff] %vm1120, %v3857
        %3931 = vst.msk [vmem:[%s3901 + $0xe8] sm:$0xff] %vm1120, %v3858
        %3932 = vst.msk [vmem:[%s3901 + $0xf0] sm:$0xff] %vm1120, %v3859
        %3933 = vst.msk [vmem:[%s3901 + $0xf8] sm:$0xff] %vm1120, %v3860
        %3934 = vst.msk [vmem:[%s3901 + $0x100] sm:$0xff] %vm1120, %v3861
        %3935 = vst.msk [vmem:[%s3901 + $0x108] sm:$0xff] %vm1120, %v3862
        %3936 = vst.msk [vmem:[%s3901 + $0x110] sm:$0xff] %vm1120, %v3863
        %3937 = vst.msk [vmem:[%s3901 + $0x118] sm:$0xff] %vm1120, %v3864
        %3938 = vst.msk [vmem:[%s3901 + $0x120] sm:$0xff] %vm1120, %v3865
        %3939 = vst.msk [vmem:[%s3901 + $0x128] sm:$0xff] %vm1120, %v3866
        %3940 = vst.msk [vmem:[%s3901 + $0x130] sm:$0xff] %vm1120, %v3867
        %3941 = vst.msk [vmem:[%s3901 + $0x138] sm:$0xff] %vm1120, %v3868
        %3942 = vst.msk [vmem:[%s3901 + $0x140] sm:$0xff] %vm1120, %v3869
        %3943 = vst.msk [vmem:[%s3901 + $0x148] sm:$0xff] %vm1120, %v3870
        %3944 = vst.msk [vmem:[%s3901 + $0x150] sm:$0xff] %vm1120, %v3871
        %3945 = vst.msk [vmem:[%s3901 + $0x158] sm:$0xff] %vm1120, %v3872
        %3946 = vst.msk [vmem:[%s3901 + $0x160] sm:$0xff] %vm1120, %v3873
        %3947 = vst.msk [vmem:[%s3901 + $0x168] sm:$0xff] %vm1120, %v3874
        %3948 = vst.msk [vmem:[%s3901 + $0x170] sm:$0xff] %vm1120, %v3875
        %3949 = vst.msk [vmem:[%s3901 + $0x178] sm:$0xff] %vm1120, %v3876
        %3950 = vst.msk [vmem:[%s3901 + $0x180] sm:$0xff] %vm1120, %v3877
        %3951 = vst.msk [vmem:[%s3901 + $0x188] sm:$0xff] %vm1120, %v3878
        %3952 = vst.msk [vmem:[%s3901 + $0x190] sm:$0xff] %vm1120, %v3879
        %3953 = vst.msk [vmem:[%s3901 + $0x198] sm:$0xff] %vm1120, %v3880
        %3954 = vst.msk [vmem:[%s3901 + $0x1a0] sm:$0xff] %vm1120, %v3881
        %3955 = vst.msk [vmem:[%s3901 + $0x1a8] sm:$0xff] %vm1120, %v3882
        %3956 = vst.msk [vmem:[%s3901 + $0x1b0] sm:$0xff] %vm1120, %v3883
        %3957 = vst.msk [vmem:[%s3901 + $0x1b8] sm:$0xff] %vm1120, %v3884
        %3958 = vst.msk [vmem:[%s3901 + $0x1c0] sm:$0xff] %vm1120, %v3885
        %3959 = vst.msk [vmem:[%s3901 + $0x1c8] sm:$0xff] %vm1120, %v3886
        %3960 = vst.msk [vmem:[%s3901 + $0x1d0] sm:$0xff] %vm1120, %v3887
        %3961 = vst.msk [vmem:[%s3901 + $0x1d8] sm:$0xff] %vm1120, %v3888
        %3962 = vst.msk [vmem:[%s3901 + $0x1e0] sm:$0xff] %vm1120, %v3889
        %3963 = vst.msk [vmem:[%s3901 + $0x1e8] sm:$0xff] %vm1120, %v3890
        %3964 = vst.msk [vmem:[%s3901 + $0x1f0] sm:$0xff] %vm1120, %v3891
        %3965 = vst.msk [vmem:[%s3901 + $0x1f8] sm:$0xff] %vm1120, %v3892
        %3966 = vst.msk [vmem:[%s3901 + $0x200] sm:$0xff] %vm1120, %v3893
        %3967 = vst.msk [vmem:[%s3901 + $0x208] sm:$0xff] %vm1120, %v3894
        %3968 = vst.msk [vmem:[%s3901 + $0x210] sm:$0xff] %vm1120, %v3895
        %3969 = vst.msk [vmem:[%s3901 + $0x218] sm:$0xff] %vm1120, %v3896
        %3970 = vst.msk [vmem:[%s3901 + $0x220] sm:$0xff] %vm1120, %v3897
        %3971 = vst.msk [vmem:[%s3901 + $0x228] sm:$0xff] %vm1120, %v3898
        %3972 = vst.msk [vmem:[%s3901 + $0x230] sm:$0xff] %vm1120, %v3899
        %3973 = vst.msk [vmem:[%s3901 + $0x238] sm:$0xff] %vm1120, %v3900
        %v3975 = vsel %vm1229, %v1082, 0
        %3977 = vmatprep.subr.bf16.mxu0 0
        %3978 = vmatpush1.bf16.msra.mxu0 0
        %3979 = vmatprep.subr.bf16.mxu0 0
        %3980 = vmatpush1.bf16.msra.mxu0 0
        %3981 = vmatprep.subr.bf16.mxu0 0
        %3982 = vmatpush1.bf16.msra.mxu0 0
        %3983 = vmatprep.subr.bf16.mxu0 0
        %3984 = vmatpush1.bf16.msra.mxu0 0
        %3985 = vmatprep.subr.bf16.mxu0 0
        %3986 = vmatpush1.bf16.msra.mxu0 0
        %3987 = vmatprep.subr.bf16.mxu0 0
        %3988 = vmatpush1.bf16.msra.mxu0 0
        %3989 = vmatprep.subr.bf16.mxu0 0
        %3990 = vmatpush1.bf16.msra.mxu0 0
        %3991 = vmatprep.subr.bf16.mxu0 0
        %3992 = vmatpush1.bf16.msra.mxu0 %v3975
        %3993 = vmatprep.subr.bf16.mxu0 0
        %3994 = vmatpush2.bf16.msra.mxu0 0
        %3995 = vmatprep.subr.bf16.mxu0 0
        %3996 = vmatpush2.bf16.msra.mxu0 0
        %3997 = vmatprep.subr.bf16.mxu0 0
        %3998 = vmatpush2.bf16.msra.mxu0 0
        %3999 = vmatprep.subr.bf16.mxu0 0
        %4000 = vmatpush2.bf16.msra.mxu0 0
        %4001 = vmatprep.subr.bf16.mxu0 0
        %4002 = vmatpush2.bf16.msra.mxu0 0
        %4003 = vmatprep.subr.bf16.mxu0 0
        %4004 = vmatpush2.bf16.msra.mxu0 0
        %4005 = vmatprep.subr.bf16.mxu0 0
        %4006 = vmatpush2.bf16.msra.mxu0 0
        %4007 = vmatprep.subr.bf16.mxu0 0
        %4008 = vmatpush2.bf16.msra.mxu0 0
        %4009 = vmatprep.mubr.bf16.mxu0 0
        %4010 = vmatmul.mubr.bf16.gmra.mxu0 %v1122
        %v4011 = vpop.f32.mrf.mxu0
        %v4012 = vadd.f32 0.0, %v4011
        %v4013 = vpop.f32.mrf.mxu0
        %v4014 = vpop.f32.mrf.mxu0
        %v4015 = vadd.f32 0.0, %v4014
        %v4016 = vpop.f32.mrf.mxu0
        %4017 = vmatprep.mubr.bf16.mxu0 0
        %4018 = vmatmul.mubr.bf16.gmra.mxu0 %v1125
        %v4019 = vpop.f32.mrf.mxu0
        %v4020 = vadd.f32 0.0, %v4019
        %v4021 = vpop.f32.mrf.mxu0
        %v4022 = vpop.f32.mrf.mxu0
        %v4023 = vadd.f32 0.0, %v4022
        %v4024 = vpop.f32.mrf.mxu0
        %4025 = vmatprep.mubr.bf16.mxu0 0
        %4026 = vmatmul.mubr.bf16.gmra.mxu0 %v1128
        %v4027 = vpop.f32.mrf.mxu0
        %v4028 = vadd.f32 0.0, %v4027
        %v4029 = vpop.f32.mrf.mxu0
        %v4030 = vpop.f32.mrf.mxu0
        %v4031 = vadd.f32 0.0, %v4030
        %v4032 = vpop.f32.mrf.mxu0
        %4033 = vmatprep.mubr.bf16.mxu0 0
        %4034 = vmatmul.mubr.bf16.gmra.mxu0 %v1131
        %v4035 = vpop.f32.mrf.mxu0
        %v4036 = vadd.f32 0.0, %v4035
        %v4037 = vpop.f32.mrf.mxu0
        %v4038 = vpop.f32.mrf.mxu0
        %v4039 = vadd.f32 0.0, %v4038
        %v4040 = vpop.f32.mrf.mxu0
        %4041 = vmatprep.mubr.bf16.mxu0 0
        %4042 = vmatmul.mubr.bf16.gmra.mxu0 %v1134
        %v4043 = vpop.f32.mrf.mxu0
        %v4044 = vadd.f32 0.0, %v4043
        %v4045 = vpop.f32.mrf.mxu0
        %v4046 = vpop.f32.mrf.mxu0
        %v4047 = vadd.f32 0.0, %v4046
        %v4048 = vpop.f32.mrf.mxu0
        %4049 = vmatprep.mubr.bf16.mxu0 0
        %4050 = vmatmul.mubr.bf16.gmra.mxu0 %v1137
        %v4051 = vpop.f32.mrf.mxu0
        %v4052 = vadd.f32 0.0, %v4051
        %v4053 = vpop.f32.mrf.mxu0
        %v4054 = vpop.f32.mrf.mxu0
        %v4055 = vadd.f32 0.0, %v4054
        %v4056 = vpop.f32.mrf.mxu0
        %4057 = vmatprep.mubr.bf16.mxu0 0
        %4058 = vmatmul.mubr.bf16.gmra.mxu0 %v1140
        %v4059 = vpop.f32.mrf.mxu0
        %v4060 = vadd.f32 0.0, %v4059
        %v4061 = vpop.f32.mrf.mxu0
        %v4062 = vpop.f32.mrf.mxu0
        %v4063 = vadd.f32 0.0, %v4062
        %v4064 = vpop.f32.mrf.mxu0
        %4065 = vmatprep.mubr.bf16.mxu0 0
        %4066 = vmatmul.mubr.bf16.gmra.mxu0 %v1143
        %v4067 = vpop.f32.mrf.mxu0
        %v4068 = vadd.f32 0.0, %v4067
        %v4069 = vpop.f32.mrf.mxu0
        %v4070 = vpop.f32.mrf.mxu0
        %v4071 = vadd.f32 0.0, %v4070
        %v4072 = vpop.f32.mrf.mxu0
        %4073 = vmatprep.mubr.bf16.mxu0 0
        %4074 = vmatmul.mubr.bf16.gmra.mxu0 %v1146
        %v4075 = vpop.f32.mrf.mxu0
        %v4076 = vadd.f32 0.0, %v4075
        %v4077 = vpop.f32.mrf.mxu0
        %v4078 = vpop.f32.mrf.mxu0
        %v4079 = vadd.f32 0.0, %v4078
        %v4080 = vpop.f32.mrf.mxu0
        %4081 = vmatprep.mubr.bf16.mxu0 0
        %4082 = vmatmul.mubr.bf16.gmra.mxu0 %v1149
        %v4083 = vpop.f32.mrf.mxu0
        %v4084 = vadd.f32 0.0, %v4083
        %v4085 = vpop.f32.mrf.mxu0
        %v4086 = vpop.f32.mrf.mxu0
        %v4087 = vadd.f32 0.0, %v4086
        %v4088 = vpop.f32.mrf.mxu0
        %4089 = vmatprep.mubr.bf16.mxu0 0
        %4090 = vmatmul.mubr.bf16.gmra.mxu0 %v1152
        %v4091 = vpop.f32.mrf.mxu0
        %v4092 = vadd.f32 0.0, %v4091
        %v4093 = vpop.f32.mrf.mxu0
        %v4094 = vpop.f32.mrf.mxu0
        %v4095 = vadd.f32 0.0, %v4094
        %v4096 = vpop.f32.mrf.mxu0
        %4097 = vmatprep.mubr.bf16.mxu0 0
        %4098 = vmatmul.mubr.bf16.gmra.mxu0 %v1155
        %v4099 = vpop.f32.mrf.mxu0
        %v4100 = vadd.f32 0.0, %v4099
        %v4101 = vpop.f32.mrf.mxu0
        %v4102 = vpop.f32.mrf.mxu0
        %v4103 = vadd.f32 0.0, %v4102
        %v4104 = vpop.f32.mrf.mxu0
        %4105 = vmatprep.mubr.bf16.mxu0 0
        %4106 = vmatmul.mubr.bf16.gmra.mxu0 %v1158
        %v4107 = vpop.f32.mrf.mxu0
        %v4108 = vadd.f32 0.0, %v4107
        %v4109 = vpop.f32.mrf.mxu0
        %v4110 = vpop.f32.mrf.mxu0
        %v4111 = vadd.f32 0.0, %v4110
        %v4112 = vpop.f32.mrf.mxu0
        %4113 = vmatprep.mubr.bf16.mxu0 0
        %4114 = vmatmul.mubr.bf16.gmra.mxu0 %v1161
        %v4115 = vpop.f32.mrf.mxu0
        %v4116 = vadd.f32 0.0, %v4115
        %v4117 = vpop.f32.mrf.mxu0
        %v4118 = vpop.f32.mrf.mxu0
        %v4119 = vadd.f32 0.0, %v4118
        %v4120 = vpop.f32.mrf.mxu0
        %4121 = vmatprep.mubr.bf16.mxu0 0
        %4122 = vmatmul.mubr.bf16.gmra.mxu0 %v1164
        %v4123 = vpop.f32.mrf.mxu0
        %v4124 = vadd.f32 0.0, %v4123
        %v4125 = vpop.f32.mrf.mxu0
        %v4126 = vpop.f32.mrf.mxu0
        %v4127 = vadd.f32 0.0, %v4126
        %v4128 = vpop.f32.mrf.mxu0
        %4129 = vmatprep.mubr.bf16.mxu0 0
        %4130 = vmatmul.mubr.bf16.gmra.mxu0 %v1167
        %v4131 = vpop.f32.mrf.mxu0
        %v4132 = vadd.f32 0.0, %v4131
        %v4133 = vpop.f32.mrf.mxu0
        %v4134 = vpop.f32.mrf.mxu0
        %v4135 = vadd.f32 0.0, %v4134
        %v4136 = vpop.f32.mrf.mxu0
        %4137 = vmatprep.mubr.bf16.mxu0 0
        %4138 = vmatmul.mubr.bf16.gmra.mxu0 %v1170
        %v4139 = vpop.f32.mrf.mxu0
        %v4140 = vadd.f32 0.0, %v4139
        %v4141 = vpop.f32.mrf.mxu0
        %v4142 = vpop.f32.mrf.mxu0
        %v4143 = vadd.f32 0.0, %v4142
        %v4144 = vpop.f32.mrf.mxu0
        %4145 = vmatprep.mubr.bf16.mxu0 0
        %4146 = vmatmul.mubr.bf16.gmra.mxu0 %v1173
        %v4147 = vpop.f32.mrf.mxu0
        %v4148 = vadd.f32 0.0, %v4147
        %v4149 = vpop.f32.mrf.mxu0
        %v4150 = vpop.f32.mrf.mxu0
        %v4151 = vadd.f32 0.0, %v4150
        %v4152 = vpop.f32.mrf.mxu0
        %4153 = vmatprep.mubr.bf16.mxu0 0
        %4154 = vmatmul.mubr.bf16.gmra.mxu0 %v1176
        %v4155 = vpop.f32.mrf.mxu0
        %v4156 = vadd.f32 0.0, %v4155
        %v4157 = vpop.f32.mrf.mxu0
        %v4158 = vpop.f32.mrf.mxu0
        %v4159 = vadd.f32 0.0, %v4158
        %v4160 = vpop.f32.mrf.mxu0
        %4161 = vmatprep.mubr.bf16.mxu0 0
        %4162 = vmatmul.mubr.bf16.gmra.mxu0 %v1179
        %v4163 = vpop.f32.mrf.mxu0
        %v4164 = vadd.f32 0.0, %v4163
        %v4165 = vpop.f32.mrf.mxu0
        %v4166 = vpop.f32.mrf.mxu0
        %v4167 = vadd.f32 0.0, %v4166
        %v4168 = vpop.f32.mrf.mxu0
        %4169 = vmatprep.mubr.bf16.mxu0 0
        %4170 = vmatmul.mubr.bf16.gmra.mxu0 %v1182
        %v4171 = vpop.f32.mrf.mxu0
        %v4172 = vadd.f32 0.0, %v4171
        %v4173 = vpop.f32.mrf.mxu0
        %v4174 = vpop.f32.mrf.mxu0
        %v4175 = vadd.f32 0.0, %v4174
        %v4176 = vpop.f32.mrf.mxu0
        %4177 = vmatprep.mubr.bf16.mxu0 0
        %4178 = vmatmul.mubr.bf16.gmra.mxu0 %v1185
        %v4179 = vpop.f32.mrf.mxu0
        %v4180 = vadd.f32 0.0, %v4179
        %v4181 = vpop.f32.mrf.mxu0
        %v4182 = vpop.f32.mrf.mxu0
        %v4183 = vadd.f32 0.0, %v4182
        %v4184 = vpop.f32.mrf.mxu0
        %4185 = vmatprep.mubr.bf16.mxu0 0
        %4186 = vmatmul.mubr.bf16.gmra.mxu0 %v1188
        %v4187 = vpop.f32.mrf.mxu0
        %v4188 = vadd.f32 0.0, %v4187
        %v4189 = vpop.f32.mrf.mxu0
        %v4190 = vpop.f32.mrf.mxu0
        %v4191 = vadd.f32 0.0, %v4190
        %v4192 = vpop.f32.mrf.mxu0
        %4193 = vmatprep.mubr.bf16.mxu0 0
        %4194 = vmatmul.mubr.bf16.gmra.mxu0 %v1191
        %v4195 = vpop.f32.mrf.mxu0
        %v4196 = vadd.f32 0.0, %v4195
        %v4197 = vpop.f32.mrf.mxu0
        %v4198 = vpop.f32.mrf.mxu0
        %v4199 = vadd.f32 0.0, %v4198
        %v4200 = vpop.f32.mrf.mxu0
        %4201 = vmatprep.mubr.bf16.mxu0 0
        %4202 = vmatmul.mubr.bf16.gmra.mxu0 %v1194
        %v4203 = vpop.f32.mrf.mxu0
        %v4204 = vadd.f32 0.0, %v4203
        %v4205 = vpop.f32.mrf.mxu0
        %v4206 = vpop.f32.mrf.mxu0
        %v4207 = vadd.f32 0.0, %v4206
        %v4208 = vpop.f32.mrf.mxu0
        %4209 = vmatprep.mubr.bf16.mxu0 0
        %4210 = vmatmul.mubr.bf16.gmra.mxu0 %v1197
        %v4211 = vpop.f32.mrf.mxu0
        %v4212 = vadd.f32 0.0, %v4211
        %v4213 = vpop.f32.mrf.mxu0
        %v4214 = vpop.f32.mrf.mxu0
        %v4215 = vadd.f32 0.0, %v4214
        %v4216 = vpop.f32.mrf.mxu0
        %4217 = vmatprep.mubr.bf16.mxu0 0
        %4218 = vmatmul.mubr.bf16.gmra.mxu0 %v1200
        %v4219 = vpop.f32.mrf.mxu0
        %v4220 = vadd.f32 0.0, %v4219
        %v4221 = vpop.f32.mrf.mxu0
        %v4222 = vpop.f32.mrf.mxu0
        %v4223 = vadd.f32 0.0, %v4222
        %v4224 = vpop.f32.mrf.mxu0
        %4225 = vmatprep.mubr.bf16.mxu0 0
        %4226 = vmatmul.mubr.bf16.gmra.mxu0 %v1203
        %v4227 = vpop.f32.mrf.mxu0
        %v4228 = vadd.f32 0.0, %v4227
        %v4229 = vpop.f32.mrf.mxu0
        %v4230 = vpop.f32.mrf.mxu0
        %v4231 = vadd.f32 0.0, %v4230
        %v4232 = vpop.f32.mrf.mxu0
        %4233 = vmatprep.mubr.bf16.mxu0 0
        %4234 = vmatmul.mubr.bf16.gmra.mxu0 %v1206
        %v4235 = vpop.f32.mrf.mxu0
        %v4236 = vadd.f32 0.0, %v4235
        %v4237 = vpop.f32.mrf.mxu0
        %v4238 = vpop.f32.mrf.mxu0
        %v4239 = vadd.f32 0.0, %v4238
        %v4240 = vpop.f32.mrf.mxu0
        %4241 = vmatprep.mubr.bf16.mxu0 0
        %4242 = vmatmul.mubr.bf16.gmra.mxu0 %v1209
        %v4243 = vpop.f32.mrf.mxu0
        %v4244 = vadd.f32 0.0, %v4243
        %v4245 = vpop.f32.mrf.mxu0
        %v4246 = vpop.f32.mrf.mxu0
        %v4247 = vadd.f32 0.0, %v4246
        %v4248 = vpop.f32.mrf.mxu0
        %4249 = vmatprep.mubr.bf16.mxu0 0
        %4250 = vmatmul.mubr.bf16.gmra.mxu0 %v1212
        %v4251 = vpop.f32.mrf.mxu0
        %v4252 = vadd.f32 0.0, %v4251
        %v4253 = vpop.f32.mrf.mxu0
        %v4254 = vpop.f32.mrf.mxu0
        %v4255 = vadd.f32 0.0, %v4254
        %v4256 = vpop.f32.mrf.mxu0
        %4257 = vmatprep.mubr.bf16.mxu0 0
        %4258 = vmatmul.mubr.bf16.gmra.mxu0 %v1215
        %v4259 = vpop.f32.mrf.mxu0
        %v4260 = vadd.f32 0.0, %v4259
        %v4261 = vpop.f32.mrf.mxu0
        %v4262 = vpop.f32.mrf.mxu0
        %v4263 = vadd.f32 0.0, %v4262
        %v4264 = vpop.f32.mrf.mxu0
        %4265 = vmatprep.mubr.bf16.mxu0 0
        %4266 = vmatmul.mubr.bf16.gmra.mxu0 %v1218
        %v4267 = vpop.f32.mrf.mxu0
        %v4268 = vadd.f32 0.0, %v4267
        %v4269 = vpop.f32.mrf.mxu0
        %v4270 = vpop.f32.mrf.mxu0
        %v4271 = vadd.f32 0.0, %v4270
        %v4272 = vpop.f32.mrf.mxu0
        %4273 = vmatprep.mubr.bf16.mxu0 0
        %4274 = vmatmul.mubr.bf16.gmra.mxu0 %v1221
        %v4275 = vpop.f32.mrf.mxu0
        %v4276 = vadd.f32 0.0, %v4275
        %v4277 = vpop.f32.mrf.mxu0
        %v4278 = vpop.f32.mrf.mxu0
        %v4279 = vadd.f32 0.0, %v4278
        %v4280 = vpop.f32.mrf.mxu0
        %4281 = vmatprep.mubr.bf16.mxu0 0
        %4282 = vmatmul.mubr.bf16.gmra.mxu0 %v1224
        %v4283 = vpop.f32.mrf.mxu0
        %v4284 = vadd.f32 0.0, %v4283
        %v4285 = vpop.f32.mrf.mxu0
        %v4286 = vpop.f32.mrf.mxu0
        %v4287 = vadd.f32 0.0, %v4286
        %v4288 = vpop.f32.mrf.mxu0
        %4289 = vmatprep.mubr.bf16.mxu0 0
        %4290 = vmatmul.mubr.bf16.gmra.mxu0 %v1227
        %v4291 = vpop.f32.mrf.mxu0
        %v4292 = vadd.f32 0.0, %v4291
        %v4293 = vpop.f32.mrf.mxu0
        %v4294 = vpop.f32.mrf.mxu0
        %v4295 = vadd.f32 0.0, %v4294
        %v4296 = vpop.f32.mrf.mxu0
        %4297 = vdwg.mxu0
        %v4299 = vsel %vm1229, %v1081, 0
        %4301 = vmatprep.subr.bf16.mxu0 0
        %4302 = vmatpush1.bf16.msra.mxu0 0
        %4303 = vmatprep.subr.bf16.mxu0 0
        %4304 = vmatpush1.bf16.msra.mxu0 0
        %4305 = vmatprep.subr.bf16.mxu0 0
        %4306 = vmatpush1.bf16.msra.mxu0 0
        %4307 = vmatprep.subr.bf16.mxu0 0
        %4308 = vmatpush1.bf16.msra.mxu0 0
        %4309 = vmatprep.subr.bf16.mxu0 0
        %4310 = vmatpush1.bf16.msra.mxu0 0
        %4311 = vmatprep.subr.bf16.mxu0 0
        %4312 = vmatpush1.bf16.msra.mxu0 0
        %4313 = vmatprep.subr.bf16.mxu0 0
        %4314 = vmatpush1.bf16.msra.mxu0 0
        %4315 = vmatprep.subr.bf16.mxu0 0
        %4316 = vmatpush1.bf16.msra.mxu0 %v4299
        %4317 = vmatprep.subr.bf16.mxu0 0
        %4318 = vmatpush2.bf16.msra.mxu0 0
        %4319 = vmatprep.subr.bf16.mxu0 0
        %4320 = vmatpush2.bf16.msra.mxu0 0
        %4321 = vmatprep.subr.bf16.mxu0 0
        %4322 = vmatpush2.bf16.msra.mxu0 0
        %4323 = vmatprep.subr.bf16.mxu0 0
        %4324 = vmatpush2.bf16.msra.mxu0 0
        %4325 = vmatprep.subr.bf16.mxu0 0
        %4326 = vmatpush2.bf16.msra.mxu0 0
        %4327 = vmatprep.subr.bf16.mxu0 0
        %4328 = vmatpush2.bf16.msra.mxu0 0
        %4329 = vmatprep.subr.bf16.mxu0 0
        %4330 = vmatpush2.bf16.msra.mxu0 0
        %4331 = vmatprep.subr.bf16.mxu0 0
        %4332 = vmatpush2.bf16.msra.mxu0 0
        %4333 = vmatprep.mubr.bf16.mxu0 0
        %4334 = vmatmul.mubr.bf16.gmra.mxu0 %v1591
        %v4335 = vpop.f32.mrf.mxu0
        %v4336 = vadd.f32 %v4012, %v4335
        %v4337 = vpop.f32.mrf.mxu0
        %v4338 = vpop.f32.mrf.mxu0
        %v4339 = vadd.f32 %v4015, %v4338
        %v4340 = vpop.f32.mrf.mxu0
        %4341 = vmatprep.mubr.bf16.mxu0 0
        %4342 = vmatmul.mubr.bf16.gmra.mxu0 %v1594
        %v4343 = vpop.f32.mrf.mxu0
        %v4344 = vadd.f32 %v4020, %v4343
        %v4345 = vpop.f32.mrf.mxu0
        %v4346 = vpop.f32.mrf.mxu0
        %v4347 = vadd.f32 %v4023, %v4346
        %v4348 = vpop.f32.mrf.mxu0
        %4349 = vmatprep.mubr.bf16.mxu0 0
        %4350 = vmatmul.mubr.bf16.gmra.mxu0 %v1597
        %v4351 = vpop.f32.mrf.mxu0
        %v4352 = vadd.f32 %v4028, %v4351
        %v4353 = vpop.f32.mrf.mxu0
        %v4354 = vpop.f32.mrf.mxu0
        %v4355 = vadd.f32 %v4031, %v4354
        %v4356 = vpop.f32.mrf.mxu0
        %4357 = vmatprep.mubr.bf16.mxu0 0
        %4358 = vmatmul.mubr.bf16.gmra.mxu0 %v1600
        %v4359 = vpop.f32.mrf.mxu0
        %v4360 = vadd.f32 %v4036, %v4359
        %v4361 = vpop.f32.mrf.mxu0
        %v4362 = vpop.f32.mrf.mxu0
        %v4363 = vadd.f32 %v4039, %v4362
        %v4364 = vpop.f32.mrf.mxu0
        %4365 = vmatprep.mubr.bf16.mxu0 0
        %4366 = vmatmul.mubr.bf16.gmra.mxu0 %v1603
        %v4367 = vpop.f32.mrf.mxu0
        %v4368 = vadd.f32 %v4044, %v4367
        %v4369 = vpop.f32.mrf.mxu0
        %v4370 = vpop.f32.mrf.mxu0
        %v4371 = vadd.f32 %v4047, %v4370
        %v4372 = vpop.f32.mrf.mxu0
        %4373 = vmatprep.mubr.bf16.mxu0 0
        %4374 = vmatmul.mubr.bf16.gmra.mxu0 %v1606
        %v4375 = vpop.f32.mrf.mxu0
        %v4376 = vadd.f32 %v4052, %v4375
        %v4377 = vpop.f32.mrf.mxu0
        %v4378 = vpop.f32.mrf.mxu0
        %v4379 = vadd.f32 %v4055, %v4378
        %v4380 = vpop.f32.mrf.mxu0
        %4381 = vmatprep.mubr.bf16.mxu0 0
        %4382 = vmatmul.mubr.bf16.gmra.mxu0 %v1609
        %v4383 = vpop.f32.mrf.mxu0
        %v4384 = vadd.f32 %v4060, %v4383
        %v4385 = vpop.f32.mrf.mxu0
        %v4386 = vpop.f32.mrf.mxu0
        %v4387 = vadd.f32 %v4063, %v4386
        %v4388 = vpop.f32.mrf.mxu0
        %4389 = vmatprep.mubr.bf16.mxu0 0
        %4390 = vmatmul.mubr.bf16.gmra.mxu0 %v1612
        %v4391 = vpop.f32.mrf.mxu0
        %v4392 = vadd.f32 %v4068, %v4391
        %v4393 = vpop.f32.mrf.mxu0
        %v4394 = vpop.f32.mrf.mxu0
        %v4395 = vadd.f32 %v4071, %v4394
        %v4396 = vpop.f32.mrf.mxu0
        %4397 = vmatprep.mubr.bf16.mxu0 0
        %4398 = vmatmul.mubr.bf16.gmra.mxu0 %v1615
        %v4399 = vpop.f32.mrf.mxu0
        %v4400 = vadd.f32 %v4076, %v4399
        %v4401 = vpop.f32.mrf.mxu0
        %v4402 = vpop.f32.mrf.mxu0
        %v4403 = vadd.f32 %v4079, %v4402
        %v4404 = vpop.f32.mrf.mxu0
        %4405 = vmatprep.mubr.bf16.mxu0 0
        %4406 = vmatmul.mubr.bf16.gmra.mxu0 %v1618
        %v4407 = vpop.f32.mrf.mxu0
        %v4408 = vadd.f32 %v4084, %v4407
        %v4409 = vpop.f32.mrf.mxu0
        %v4410 = vpop.f32.mrf.mxu0
        %v4411 = vadd.f32 %v4087, %v4410
        %v4412 = vpop.f32.mrf.mxu0
        %4413 = vmatprep.mubr.bf16.mxu0 0
        %4414 = vmatmul.mubr.bf16.gmra.mxu0 %v1621
        %v4415 = vpop.f32.mrf.mxu0
        %v4416 = vadd.f32 %v4092, %v4415
        %v4417 = vpop.f32.mrf.mxu0
        %v4418 = vpop.f32.mrf.mxu0
        %v4419 = vadd.f32 %v4095, %v4418
        %v4420 = vpop.f32.mrf.mxu0
        %4421 = vmatprep.mubr.bf16.mxu0 0
        %4422 = vmatmul.mubr.bf16.gmra.mxu0 %v1624
        %v4423 = vpop.f32.mrf.mxu0
        %v4424 = vadd.f32 %v4100, %v4423
        %v4425 = vpop.f32.mrf.mxu0
        %v4426 = vpop.f32.mrf.mxu0
        %v4427 = vadd.f32 %v4103, %v4426
        %v4428 = vpop.f32.mrf.mxu0
        %4429 = vmatprep.mubr.bf16.mxu0 0
        %4430 = vmatmul.mubr.bf16.gmra.mxu0 %v1627
        %v4431 = vpop.f32.mrf.mxu0
        %v4432 = vadd.f32 %v4108, %v4431
        %v4433 = vpop.f32.mrf.mxu0
        %v4434 = vpop.f32.mrf.mxu0
        %v4435 = vadd.f32 %v4111, %v4434
        %v4436 = vpop.f32.mrf.mxu0
        %4437 = vmatprep.mubr.bf16.mxu0 0
        %4438 = vmatmul.mubr.bf16.gmra.mxu0 %v1630
        %v4439 = vpop.f32.mrf.mxu0
        %v4440 = vadd.f32 %v4116, %v4439
        %v4441 = vpop.f32.mrf.mxu0
        %v4442 = vpop.f32.mrf.mxu0
        %v4443 = vadd.f32 %v4119, %v4442
        %v4444 = vpop.f32.mrf.mxu0
        %4445 = vmatprep.mubr.bf16.mxu0 0
        %4446 = vmatmul.mubr.bf16.gmra.mxu0 %v1633
        %v4447 = vpop.f32.mrf.mxu0
        %v4448 = vadd.f32 %v4124, %v4447
        %v4449 = vpop.f32.mrf.mxu0
        %v4450 = vpop.f32.mrf.mxu0
        %v4451 = vadd.f32 %v4127, %v4450
        %v4452 = vpop.f32.mrf.mxu0
        %4453 = vmatprep.mubr.bf16.mxu0 0
        %4454 = vmatmul.mubr.bf16.gmra.mxu0 %v1636
        %v4455 = vpop.f32.mrf.mxu0
        %v4456 = vadd.f32 %v4132, %v4455
        %v4457 = vpop.f32.mrf.mxu0
        %v4458 = vpop.f32.mrf.mxu0
        %v4459 = vadd.f32 %v4135, %v4458
        %v4460 = vpop.f32.mrf.mxu0
        %4461 = vmatprep.mubr.bf16.mxu0 0
        %4462 = vmatmul.mubr.bf16.gmra.mxu0 %v1639
        %v4463 = vpop.f32.mrf.mxu0
        %v4464 = vadd.f32 %v4140, %v4463
        %v4465 = vpop.f32.mrf.mxu0
        %v4466 = vpop.f32.mrf.mxu0
        %v4467 = vadd.f32 %v4143, %v4466
        %v4468 = vpop.f32.mrf.mxu0
        %4469 = vmatprep.mubr.bf16.mxu0 0
        %4470 = vmatmul.mubr.bf16.gmra.mxu0 %v1642
        %v4471 = vpop.f32.mrf.mxu0
        %v4472 = vadd.f32 %v4148, %v4471
        %v4473 = vpop.f32.mrf.mxu0
        %v4474 = vpop.f32.mrf.mxu0
        %v4475 = vadd.f32 %v4151, %v4474
        %v4476 = vpop.f32.mrf.mxu0
        %4477 = vmatprep.mubr.bf16.mxu0 0
        %4478 = vmatmul.mubr.bf16.gmra.mxu0 %v1645
        %v4479 = vpop.f32.mrf.mxu0
        %v4480 = vadd.f32 %v4156, %v4479
        %v4481 = vpop.f32.mrf.mxu0
        %v4482 = vpop.f32.mrf.mxu0
        %v4483 = vadd.f32 %v4159, %v4482
        %v4484 = vpop.f32.mrf.mxu0
        %4485 = vmatprep.mubr.bf16.mxu0 0
        %4486 = vmatmul.mubr.bf16.gmra.mxu0 %v1648
        %v4487 = vpop.f32.mrf.mxu0
        %v4488 = vadd.f32 %v4164, %v4487
        %v4489 = vpop.f32.mrf.mxu0
        %v4490 = vpop.f32.mrf.mxu0
        %v4491 = vadd.f32 %v4167, %v4490
        %v4492 = vpop.f32.mrf.mxu0
        %4493 = vmatprep.mubr.bf16.mxu0 0
        %4494 = vmatmul.mubr.bf16.gmra.mxu0 %v1651
        %v4495 = vpop.f32.mrf.mxu0
        %v4496 = vadd.f32 %v4172, %v4495
        %v4497 = vpop.f32.mrf.mxu0
        %v4498 = vpop.f32.mrf.mxu0
        %v4499 = vadd.f32 %v4175, %v4498
        %v4500 = vpop.f32.mrf.mxu0
        %4501 = vmatprep.mubr.bf16.mxu0 0
        %4502 = vmatmul.mubr.bf16.gmra.mxu0 %v1654
        %v4503 = vpop.f32.mrf.mxu0
        %v4504 = vadd.f32 %v4180, %v4503
        %v4505 = vpop.f32.mrf.mxu0
        %v4506 = vpop.f32.mrf.mxu0
        %v4507 = vadd.f32 %v4183, %v4506
        %v4508 = vpop.f32.mrf.mxu0
        %4509 = vmatprep.mubr.bf16.mxu0 0
        %4510 = vmatmul.mubr.bf16.gmra.mxu0 %v1657
        %v4511 = vpop.f32.mrf.mxu0
        %v4512 = vadd.f32 %v4188, %v4511
        %v4513 = vpop.f32.mrf.mxu0
        %v4514 = vpop.f32.mrf.mxu0
        %v4515 = vadd.f32 %v4191, %v4514
        %v4516 = vpop.f32.mrf.mxu0
        %4517 = vmatprep.mubr.bf16.mxu0 0
        %4518 = vmatmul.mubr.bf16.gmra.mxu0 %v1660
        %v4519 = vpop.f32.mrf.mxu0
        %v4520 = vadd.f32 %v4196, %v4519
        %v4521 = vpop.f32.mrf.mxu0
        %v4522 = vpop.f32.mrf.mxu0
        %v4523 = vadd.f32 %v4199, %v4522
        %v4524 = vpop.f32.mrf.mxu0
        %4525 = vmatprep.mubr.bf16.mxu0 0
        %4526 = vmatmul.mubr.bf16.gmra.mxu0 %v1663
        %v4527 = vpop.f32.mrf.mxu0
        %v4528 = vadd.f32 %v4204, %v4527
        %v4529 = vpop.f32.mrf.mxu0
        %v4530 = vpop.f32.mrf.mxu0
        %v4531 = vadd.f32 %v4207, %v4530
        %v4532 = vpop.f32.mrf.mxu0
        %4533 = vmatprep.mubr.bf16.mxu0 0
        %4534 = vmatmul.mubr.bf16.gmra.mxu0 %v1666
        %v4535 = vpop.f32.mrf.mxu0
        %v4536 = vadd.f32 %v4212, %v4535
        %v4537 = vpop.f32.mrf.mxu0
        %v4538 = vpop.f32.mrf.mxu0
        %v4539 = vadd.f32 %v4215, %v4538
        %v4540 = vpop.f32.mrf.mxu0
        %4541 = vmatprep.mubr.bf16.mxu0 0
        %4542 = vmatmul.mubr.bf16.gmra.mxu0 %v1669
        %v4543 = vpop.f32.mrf.mxu0
        %v4544 = vadd.f32 %v4220, %v4543
        %v4545 = vpop.f32.mrf.mxu0
        %v4546 = vpop.f32.mrf.mxu0
        %v4547 = vadd.f32 %v4223, %v4546
        %v4548 = vpop.f32.mrf.mxu0
        %4549 = vmatprep.mubr.bf16.mxu0 0
        %4550 = vmatmul.mubr.bf16.gmra.mxu0 %v1672
        %v4551 = vpop.f32.mrf.mxu0
        %v4552 = vadd.f32 %v4228, %v4551
        %v4553 = vpop.f32.mrf.mxu0
        %v4554 = vpop.f32.mrf.mxu0
        %v4555 = vadd.f32 %v4231, %v4554
        %v4556 = vpop.f32.mrf.mxu0
        %4557 = vmatprep.mubr.bf16.mxu0 0
        %4558 = vmatmul.mubr.bf16.gmra.mxu0 %v1675
        %v4559 = vpop.f32.mrf.mxu0
        %v4560 = vadd.f32 %v4236, %v4559
        %v4561 = vpop.f32.mrf.mxu0
        %v4562 = vpop.f32.mrf.mxu0
        %v4563 = vadd.f32 %v4239, %v4562
        %v4564 = vpop.f32.mrf.mxu0
        %4565 = vmatprep.mubr.bf16.mxu0 0
        %4566 = vmatmul.mubr.bf16.gmra.mxu0 %v1678
        %v4567 = vpop.f32.mrf.mxu0
        %v4568 = vadd.f32 %v4244, %v4567
        %v4569 = vpop.f32.mrf.mxu0
        %v4570 = vpop.f32.mrf.mxu0
        %v4571 = vadd.f32 %v4247, %v4570
        %v4572 = vpop.f32.mrf.mxu0
        %4573 = vmatprep.mubr.bf16.mxu0 0
        %4574 = vmatmul.mubr.bf16.gmra.mxu0 %v1681
        %v4575 = vpop.f32.mrf.mxu0
        %v4576 = vadd.f32 %v4252, %v4575
        %v4577 = vpop.f32.mrf.mxu0
        %v4578 = vpop.f32.mrf.mxu0
        %v4579 = vadd.f32 %v4255, %v4578
        %v4580 = vpop.f32.mrf.mxu0
        %4581 = vmatprep.mubr.bf16.mxu0 0
        %4582 = vmatmul.mubr.bf16.gmra.mxu0 %v1684
        %v4583 = vpop.f32.mrf.mxu0
        %v4584 = vadd.f32 %v4260, %v4583
        %v4585 = vpop.f32.mrf.mxu0
        %v4586 = vpop.f32.mrf.mxu0
        %v4587 = vadd.f32 %v4263, %v4586
        %v4588 = vpop.f32.mrf.mxu0
        %4589 = vmatprep.mubr.bf16.mxu0 0
        %4590 = vmatmul.mubr.bf16.gmra.mxu0 %v1687
        %v4591 = vpop.f32.mrf.mxu0
        %v4592 = vadd.f32 %v4268, %v4591
        %v4593 = vpop.f32.mrf.mxu0
        %v4594 = vpop.f32.mrf.mxu0
        %v4595 = vadd.f32 %v4271, %v4594
        %v4596 = vpop.f32.mrf.mxu0
        %4597 = vmatprep.mubr.bf16.mxu0 0
        %4598 = vmatmul.mubr.bf16.gmra.mxu0 %v1690
        %v4599 = vpop.f32.mrf.mxu0
        %v4600 = vadd.f32 %v4276, %v4599
        %v4601 = vpop.f32.mrf.mxu0
        %v4602 = vpop.f32.mrf.mxu0
        %v4603 = vadd.f32 %v4279, %v4602
        %v4604 = vpop.f32.mrf.mxu0
        %4605 = vmatprep.mubr.bf16.mxu0 0
        %4606 = vmatmul.mubr.bf16.gmra.mxu0 %v1693
        %v4607 = vpop.f32.mrf.mxu0
        %v4608 = vadd.f32 %v4284, %v4607
        %v4609 = vpop.f32.mrf.mxu0
        %v4610 = vpop.f32.mrf.mxu0
        %v4611 = vadd.f32 %v4287, %v4610
        %v4612 = vpop.f32.mrf.mxu0
        %4613 = vmatprep.mubr.bf16.mxu0 0
        %4614 = vmatmul.mubr.bf16.gmra.mxu0 %v1696
        %v4615 = vpop.f32.mrf.mxu0
        %v4616 = vadd.f32 %v4292, %v4615
        %v4617 = vpop.f32.mrf.mxu0
        %v4618 = vpop.f32.mrf.mxu0
        %v4619 = vadd.f32 %v4295, %v4618
        %v4620 = vpop.f32.mrf.mxu0
        %4621 = vdwg.mxu0
        %v4622 = vmul.f32 %v4336, 0.125
        %v4623 = vmul.f32 %v4339, 0.125
        %v4624 = vmul.f32 %v4344, 0.125
        %v4625 = vmul.f32 %v4347, 0.125
        %v4626 = vmul.f32 %v4352, 0.125
        %v4627 = vmul.f32 %v4355, 0.125
        %v4628 = vmul.f32 %v4360, 0.125
        %v4629 = vmul.f32 %v4363, 0.125
        %v4630 = vmul.f32 %v4368, 0.125
        %v4631 = vmul.f32 %v4371, 0.125
        %v4632 = vmul.f32 %v4376, 0.125
        %v4633 = vmul.f32 %v4379, 0.125
        %v4634 = vmul.f32 %v4384, 0.125
        %v4635 = vmul.f32 %v4387, 0.125
        %v4636 = vmul.f32 %v4392, 0.125
        %v4637 = vmul.f32 %v4395, 0.125
        %v4638 = vmul.f32 %v4400, 0.125
        %v4639 = vmul.f32 %v4403, 0.125
        %v4640 = vmul.f32 %v4408, 0.125
        %v4641 = vmul.f32 %v4411, 0.125
        %v4642 = vmul.f32 %v4416, 0.125
        %v4643 = vmul.f32 %v4419, 0.125
        %v4644 = vmul.f32 %v4424, 0.125
        %v4645 = vmul.f32 %v4427, 0.125
        %v4646 = vmul.f32 %v4432, 0.125
        %v4647 = vmul.f32 %v4435, 0.125
        %v4648 = vmul.f32 %v4440, 0.125
        %v4649 = vmul.f32 %v4443, 0.125
        %v4650 = vmul.f32 %v4448, 0.125
        %v4651 = vmul.f32 %v4451, 0.125
        %v4652 = vmul.f32 %v4456, 0.125
        %v4653 = vmul.f32 %v4459, 0.125
        %v4654 = vmul.f32 %v4464, 0.125
        %v4655 = vmul.f32 %v4467, 0.125
        %v4656 = vmul.f32 %v4472, 0.125
        %v4657 = vmul.f32 %v4475, 0.125
        %v4658 = vmul.f32 %v4480, 0.125
        %v4659 = vmul.f32 %v4483, 0.125
        %v4660 = vmul.f32 %v4488, 0.125
        %v4661 = vmul.f32 %v4491, 0.125
        %v4662 = vmul.f32 %v4496, 0.125
        %v4663 = vmul.f32 %v4499, 0.125
        %v4664 = vmul.f32 %v4504, 0.125
        %v4665 = vmul.f32 %v4507, 0.125
        %v4666 = vmul.f32 %v4512, 0.125
        %v4667 = vmul.f32 %v4515, 0.125
        %v4668 = vmul.f32 %v4520, 0.125
        %v4669 = vmul.f32 %v4523, 0.125
        %v4670 = vmul.f32 %v4528, 0.125
        %v4671 = vmul.f32 %v4531, 0.125
        %v4672 = vmul.f32 %v4536, 0.125
        %v4673 = vmul.f32 %v4539, 0.125
        %v4674 = vmul.f32 %v4544, 0.125
        %v4675 = vmul.f32 %v4547, 0.125
        %v4676 = vmul.f32 %v4552, 0.125
        %v4677 = vmul.f32 %v4555, 0.125
        %v4678 = vmul.f32 %v4560, 0.125
        %v4679 = vmul.f32 %v4563, 0.125
        %v4680 = vmul.f32 %v4568, 0.125
        %v4681 = vmul.f32 %v4571, 0.125
        %v4682 = vmul.f32 %v4576, 0.125
        %v4683 = vmul.f32 %v4579, 0.125
        %v4684 = vmul.f32 %v4584, 0.125
        %v4685 = vmul.f32 %v4587, 0.125
        %v4686 = vmul.f32 %v4592, 0.125
        %v4687 = vmul.f32 %v4595, 0.125
        %v4688 = vmul.f32 %v4600, 0.125
        %v4689 = vmul.f32 %v4603, 0.125
        %v4690 = vmul.f32 %v4608, 0.125
        %v4691 = vmul.f32 %v4611, 0.125
        %v4692 = vmul.f32 %v4616, 0.125
        %v4693 = vmul.f32 %v4619, 0.125
        %v4694 = vadd.f32 %v4622, %v2098
        %v4695 = vadd.f32 %v4623, %v2098
        %v4696 = vadd.f32 %v4624, %v2098
        %v4697 = vadd.f32 %v4625, %v2098
        %v4698 = vadd.f32 %v4626, %v2098
        %v4699 = vadd.f32 %v4627, %v2098
        %v4700 = vadd.f32 %v4628, %v2098
        %v4701 = vadd.f32 %v4629, %v2098
        %v4702 = vadd.f32 %v4630, %v2098
        %v4703 = vadd.f32 %v4631, %v2098
        %v4704 = vadd.f32 %v4632, %v2098
        %v4705 = vadd.f32 %v4633, %v2098
        %v4706 = vadd.f32 %v4634, %v2098
        %v4707 = vadd.f32 %v4635, %v2098
        %v4708 = vadd.f32 %v4636, %v2098
        %v4709 = vadd.f32 %v4637, %v2098
        %v4710 = vadd.f32 %v4638, %v2098
        %v4711 = vadd.f32 %v4639, %v2098
        %v4712 = vadd.f32 %v4640, %v2098
        %v4713 = vadd.f32 %v4641, %v2098
        %v4714 = vadd.f32 %v4642, %v2098
        %v4715 = vadd.f32 %v4643, %v2098
        %v4716 = vadd.f32 %v4644, %v2098
        %v4717 = vadd.f32 %v4645, %v2098
        %v4718 = vadd.f32 %v4646, %v2098
        %v4719 = vadd.f32 %v4647, %v2098
        %v4720 = vadd.f32 %v4648, %v2098
        %v4721 = vadd.f32 %v4649, %v2098
        %v4722 = vadd.f32 %v4650, %v2098
        %v4723 = vadd.f32 %v4651, %v2098
        %v4724 = vadd.f32 %v4652, %v2098
        %v4725 = vadd.f32 %v4653, %v2098
        %v4726 = vadd.f32 %v4654, %v2098
        %v4727 = vadd.f32 %v4655, %v2098
        %v4728 = vadd.f32 %v4656, %v2098
        %v4729 = vadd.f32 %v4657, %v2098
        %v4730 = vadd.f32 %v4658, %v2098
        %v4731 = vadd.f32 %v4659, %v2098
        %v4732 = vadd.f32 %v4660, %v2098
        %v4733 = vadd.f32 %v4661, %v2098
        %v4734 = vadd.f32 %v4662, %v2098
        %v4735 = vadd.f32 %v4663, %v2098
        %v4736 = vadd.f32 %v4664, %v2098
        %v4737 = vadd.f32 %v4665, %v2098
        %v4738 = vadd.f32 %v4666, %v2098
        %v4739 = vadd.f32 %v4667, %v2098
        %v4740 = vadd.f32 %v4668, %v2098
        %v4741 = vadd.f32 %v4669, %v2098
        %v4742 = vadd.f32 %v4670, %v2098
        %v4743 = vadd.f32 %v4671, %v2098
        %v4744 = vadd.f32 %v4672, %v2098
        %v4745 = vadd.f32 %v4673, %v2098
        %v4746 = vadd.f32 %v4674, %v2098
        %v4747 = vadd.f32 %v4675, %v2098
        %v4748 = vadd.f32 %v4676, %v2098
        %v4749 = vadd.f32 %v4677, %v2098
        %v4750 = vadd.f32 %v4678, %v2098
        %v4751 = vadd.f32 %v4679, %v2098
        %v4752 = vadd.f32 %v4680, %v2098
        %v4753 = vadd.f32 %v4681, %v2098
        %v4754 = vadd.f32 %v4682, %v2098
        %v4755 = vadd.f32 %v4683, %v2098
        %v4756 = vadd.f32 %v4684, %v2098
        %v4757 = vadd.f32 %v4685, %v2098
        %v4758 = vadd.f32 %v4686, %v2098
        %v4759 = vadd.f32 %v4687, %v2098
        %v4760 = vadd.f32 %v4688, %v2098
        %v4761 = vadd.f32 %v4689, %v2098
        %v4762 = vadd.f32 %v4690, %v2098
        %v4763 = vadd.f32 %v4691, %v2098
        %v4764 = vadd.f32 %v4692, %v2098
        %v4765 = vadd.f32 %v4693, %v2098
        %s4766 = scalar_lea.vmem %s211, 1728 [#allocation6]
        %4767 = vst.msk [vmem:[%s4766] sm:$0xff] %vm1120, %v4694
        %4768 = vst.msk [vmem:[%s4766 + $0x8] sm:$0xff] %vm1120, %v4695
        %4769 = vst.msk [vmem:[%s4766 + $0x10] sm:$0xff] %vm1120, %v4696
        %4770 = vst.msk [vmem:[%s4766 + $0x18] sm:$0xff] %vm1120, %v4697
        %4771 = vst.msk [vmem:[%s4766 + $0x20] sm:$0xff] %vm1120, %v4698
        %4772 = vst.msk [vmem:[%s4766 + $0x28] sm:$0xff] %vm1120, %v4699
        %4773 = vst.msk [vmem:[%s4766 + $0x30] sm:$0xff] %vm1120, %v4700
        %4774 = vst.msk [vmem:[%s4766 + $0x38] sm:$0xff] %vm1120, %v4701
        %4775 = vst.msk [vmem:[%s4766 + $0x40] sm:$0xff] %vm1120, %v4702
        %4776 = vst.msk [vmem:[%s4766 + $0x48] sm:$0xff] %vm1120, %v4703
        %4777 = vst.msk [vmem:[%s4766 + $0x50] sm:$0xff] %vm1120, %v4704
        %4778 = vst.msk [vmem:[%s4766 + $0x58] sm:$0xff] %vm1120, %v4705
        %4779 = vst.msk [vmem:[%s4766 + $0x60] sm:$0xff] %vm1120, %v4706
        %4780 = vst.msk [vmem:[%s4766 + $0x68] sm:$0xff] %vm1120, %v4707
        %4781 = vst.msk [vmem:[%s4766 + $0x70] sm:$0xff] %vm1120, %v4708
        %4782 = vst.msk [vmem:[%s4766 + $0x78] sm:$0xff] %vm1120, %v4709
        %4783 = vst.msk [vmem:[%s4766 + $0x80] sm:$0xff] %vm1120, %v4710
        %4784 = vst.msk [vmem:[%s4766 + $0x88] sm:$0xff] %vm1120, %v4711
        %4785 = vst.msk [vmem:[%s4766 + $0x90] sm:$0xff] %vm1120, %v4712
        %4786 = vst.msk [vmem:[%s4766 + $0x98] sm:$0xff] %vm1120, %v4713
        %4787 = vst.msk [vmem:[%s4766 + $0xa0] sm:$0xff] %vm1120, %v4714
        %4788 = vst.msk [vmem:[%s4766 + $0xa8] sm:$0xff] %vm1120, %v4715
        %4789 = vst.msk [vmem:[%s4766 + $0xb0] sm:$0xff] %vm1120, %v4716
        %4790 = vst.msk [vmem:[%s4766 + $0xb8] sm:$0xff] %vm1120, %v4717
        %4791 = vst.msk [vmem:[%s4766 + $0xc0] sm:$0xff] %vm1120, %v4718
        %4792 = vst.msk [vmem:[%s4766 + $0xc8] sm:$0xff] %vm1120, %v4719
        %4793 = vst.msk [vmem:[%s4766 + $0xd0] sm:$0xff] %vm1120, %v4720
        %4794 = vst.msk [vmem:[%s4766 + $0xd8] sm:$0xff] %vm1120, %v4721
        %4795 = vst.msk [vmem:[%s4766 + $0xe0] sm:$0xff] %vm1120, %v4722
        %4796 = vst.msk [vmem:[%s4766 + $0xe8] sm:$0xff] %vm1120, %v4723
        %4797 = vst.msk [vmem:[%s4766 + $0xf0] sm:$0xff] %vm1120, %v4724
        %4798 = vst.msk [vmem:[%s4766 + $0xf8] sm:$0xff] %vm1120, %v4725
        %4799 = vst.msk [vmem:[%s4766 + $0x100] sm:$0xff] %vm1120, %v4726
        %4800 = vst.msk [vmem:[%s4766 + $0x108] sm:$0xff] %vm1120, %v4727
        %4801 = vst.msk [vmem:[%s4766 + $0x110] sm:$0xff] %vm1120, %v4728
        %4802 = vst.msk [vmem:[%s4766 + $0x118] sm:$0xff] %vm1120, %v4729
        %4803 = vst.msk [vmem:[%s4766 + $0x120] sm:$0xff] %vm1120, %v4730
        %4804 = vst.msk [vmem:[%s4766 + $0x128] sm:$0xff] %vm1120, %v4731
        %4805 = vst.msk [vmem:[%s4766 + $0x130] sm:$0xff] %vm1120, %v4732
        %4806 = vst.msk [vmem:[%s4766 + $0x138] sm:$0xff] %vm1120, %v4733
        %4807 = vst.msk [vmem:[%s4766 + $0x140] sm:$0xff] %vm1120, %v4734
        %4808 = vst.msk [vmem:[%s4766 + $0x148] sm:$0xff] %vm1120, %v4735
        %4809 = vst.msk [vmem:[%s4766 + $0x150] sm:$0xff] %vm1120, %v4736
        %4810 = vst.msk [vmem:[%s4766 + $0x158] sm:$0xff] %vm1120, %v4737
        %4811 = vst.msk [vmem:[%s4766 + $0x160] sm:$0xff] %vm1120, %v4738
        %4812 = vst.msk [vmem:[%s4766 + $0x168] sm:$0xff] %vm1120, %v4739
        %4813 = vst.msk [vmem:[%s4766 + $0x170] sm:$0xff] %vm1120, %v4740
        %4814 = vst.msk [vmem:[%s4766 + $0x178] sm:$0xff] %vm1120, %v4741
        %4815 = vst.msk [vmem:[%s4766 + $0x180] sm:$0xff] %vm1120, %v4742
        %4816 = vst.msk [vmem:[%s4766 + $0x188] sm:$0xff] %vm1120, %v4743
        %4817 = vst.msk [vmem:[%s4766 + $0x190] sm:$0xff] %vm1120, %v4744
        %4818 = vst.msk [vmem:[%s4766 + $0x198] sm:$0xff] %vm1120, %v4745
        %4819 = vst.msk [vmem:[%s4766 + $0x1a0] sm:$0xff] %vm1120, %v4746
        %4820 = vst.msk [vmem:[%s4766 + $0x1a8] sm:$0xff] %vm1120, %v4747
        %4821 = vst.msk [vmem:[%s4766 + $0x1b0] sm:$0xff] %vm1120, %v4748
        %4822 = vst.msk [vmem:[%s4766 + $0x1b8] sm:$0xff] %vm1120, %v4749
        %4823 = vst.msk [vmem:[%s4766 + $0x1c0] sm:$0xff] %vm1120, %v4750
        %4824 = vst.msk [vmem:[%s4766 + $0x1c8] sm:$0xff] %vm1120, %v4751
        %4825 = vst.msk [vmem:[%s4766 + $0x1d0] sm:$0xff] %vm1120, %v4752
        %4826 = vst.msk [vmem:[%s4766 + $0x1d8] sm:$0xff] %vm1120, %v4753
        %4827 = vst.msk [vmem:[%s4766 + $0x1e0] sm:$0xff] %vm1120, %v4754
        %4828 = vst.msk [vmem:[%s4766 + $0x1e8] sm:$0xff] %vm1120, %v4755
        %4829 = vst.msk [vmem:[%s4766 + $0x1f0] sm:$0xff] %vm1120, %v4756
        %4830 = vst.msk [vmem:[%s4766 + $0x1f8] sm:$0xff] %vm1120, %v4757
        %4831 = vst.msk [vmem:[%s4766 + $0x200] sm:$0xff] %vm1120, %v4758
        %4832 = vst.msk [vmem:[%s4766 + $0x208] sm:$0xff] %vm1120, %v4759
        %4833 = vst.msk [vmem:[%s4766 + $0x210] sm:$0xff] %vm1120, %v4760
        %4834 = vst.msk [vmem:[%s4766 + $0x218] sm:$0xff] %vm1120, %v4761
        %4835 = vst.msk [vmem:[%s4766 + $0x220] sm:$0xff] %vm1120, %v4762
        %4836 = vst.msk [vmem:[%s4766 + $0x228] sm:$0xff] %vm1120, %v4763
        %4837 = vst.msk [vmem:[%s4766 + $0x230] sm:$0xff] %vm1120, %v4764
        %4838 = vst.msk [vmem:[%s4766 + $0x238] sm:$0xff] %vm1120, %v4765
        %s4839 = sand.u32 %s108, 1
        %s4840 = sand.u32 %s108, 1
        %s4841 = smul.addr %s4840, 2304
        %s4842 = scalar_lea.vmem [#allocation6], %s4841
        // Predicated region
        $region41: #{tpu_custom_call.1} parent=31 // pred_check
          %p4843 = pneg %p118
        $region42: #{tpu_custom_call.1} parent=31 // pred_check_branch
          %4845 = sbr.rel (%p4843) target = $region44
        $region43: #{tpu_custom_call.1} parent=31 // pred_region
          %s4846 = smul.u32 24, %s21
          %s4847 = smul.addr %s4846, 3
          %s4848 = smul.addr %s20, 72
          %s4849 = sadd.s32 %s4847, %s4848
          %s4850 = smul.addr %s4849, 8
          %s4851 = scalar_lea.vmem %s3, %s4850
          // Predicated region
          $region45: #{tpu_custom_call.1} parent=43 // pred_check
            _
          $region46: #{tpu_custom_call.1} parent=43 // pred_check_branch
            %4853 = sbr.rel (0) target = $region48
          $region47: #{tpu_custom_call.1} parent=43 // pred_region
            // Predicated region
            $region49: #{tpu_custom_call.1} parent=47 // pred_check
              _
            $region50: #{tpu_custom_call.1} parent=47 // pred_check_branch
              %4855 = sbr.rel (0) target = $region52
            $region51: #{tpu_custom_call.1} parent=47 // pred_region
              // Predicated region
              $region64: #{tpu_custom_call.1} parent=51 // pred_check
                _
              $region65: #{tpu_custom_call.1} parent=51 // pred_check_branch
                %5445 = sbr.rel (0) target = $region67
              $region66: #{tpu_custom_call.1} parent=51 // pred_region
                loop: start=0, step=1, limit=1
                $region68: #{tpu_custom_call.1} parent=66 // loop_pre_header
                  _
                $region69: #{tpu_custom_call.1} parent=66 // loop_header
                  %s5447 = sphi 0, %s5451
                  %p5448 = scmp.ge.s32.totalorder %s5447, 1
                  %s5452 = sphi %s4842, %s4842
                  %s5453 = sphi %s4851, %s4851
                $region70: #{tpu_custom_call.1} parent=66 // loop_header_branch
                  %5450 = sbr.rel (%p5448) target = $region74
                $region71: #{tpu_custom_call.1} parent=66 // loop_body
                  %v5454 = vld [vmem:[%s5452] sm:$0xff]
                  %5455 = vst [vmem:[%s5453] sm:$0xff] %v5454
                  %v5456 = vld [vmem:[%s5452 + $0x8] sm:$0xff]
                  %5457 = vst [vmem:[%s5453 + $0x8] sm:$0xff] %v5456
                  %v5458 = vld [vmem:[%s5452 + $0x10] sm:$0xff]
                  %5459 = vst [vmem:[%s5453 + $0x10] sm:$0xff] %v5458
                  %v5460 = vld [vmem:[%s5452 + $0x18] sm:$0xff]
                  %5461 = vst [vmem:[%s5453 + $0x18] sm:$0xff] %v5460
                  %v5462 = vld [vmem:[%s5452 + $0x20] sm:$0xff]
                  %5463 = vst [vmem:[%s5453 + $0x20] sm:$0xff] %v5462
                  %v5464 = vld [vmem:[%s5452 + $0x28] sm:$0xff]
                  %5465 = vst [vmem:[%s5453 + $0x28] sm:$0xff] %v5464
                  %v5466 = vld [vmem:[%s5452 + $0x30] sm:$0xff]
                  %5467 = vst [vmem:[%s5453 + $0x30] sm:$0xff] %v5466
                  %v5468 = vld [vmem:[%s5452 + $0x38] sm:$0xff]
                  %5469 = vst [vmem:[%s5453 + $0x38] sm:$0xff] %v5468
                  %v5470 = vld [vmem:[%s5452 + $0x40] sm:$0xff]
                  %5471 = vst [vmem:[%s5453 + $0x40] sm:$0xff] %v5470
                  %v5472 = vld [vmem:[%s5452 + $0x48] sm:$0xff]
                  %5473 = vst [vmem:[%s5453 + $0x48] sm:$0xff] %v5472
                  %v5474 = vld [vmem:[%s5452 + $0x50] sm:$0xff]
                  %5475 = vst [vmem:[%s5453 + $0x50] sm:$0xff] %v5474
                  %v5476 = vld [vmem:[%s5452 + $0x58] sm:$0xff]
                  %5477 = vst [vmem:[%s5453 + $0x58] sm:$0xff] %v5476
                  %v5478 = vld [vmem:[%s5452 + $0x60] sm:$0xff]
                  %5479 = vst [vmem:[%s5453 + $0x60] sm:$0xff] %v5478
                  %v5480 = vld [vmem:[%s5452 + $0x68] sm:$0xff]
                  %5481 = vst [vmem:[%s5453 + $0x68] sm:$0xff] %v5480
                  %v5482 = vld [vmem:[%s5452 + $0x70] sm:$0xff]
                  %5483 = vst [vmem:[%s5453 + $0x70] sm:$0xff] %v5482
                  %v5484 = vld [vmem:[%s5452 + $0x78] sm:$0xff]
                  %5485 = vst [vmem:[%s5453 + $0x78] sm:$0xff] %v5484
                  %v5486 = vld [vmem:[%s5452 + $0x80] sm:$0xff]
                  %5487 = vst [vmem:[%s5453 + $0x80] sm:$0xff] %v5486
                  %v5488 = vld [vmem:[%s5452 + $0x88] sm:$0xff]
                  %5489 = vst [vmem:[%s5453 + $0x88] sm:$0xff] %v5488
                  %v5490 = vld [vmem:[%s5452 + $0x90] sm:$0xff]
                  %5491 = vst [vmem:[%s5453 + $0x90] sm:$0xff] %v5490
                  %v5492 = vld [vmem:[%s5452 + $0x98] sm:$0xff]
                  %5493 = vst [vmem:[%s5453 + $0x98] sm:$0xff] %v5492
                  %v5494 = vld [vmem:[%s5452 + $0xa0] sm:$0xff]
                  %5495 = vst [vmem:[%s5453 + $0xa0] sm:$0xff] %v5494
                  %v5496 = vld [vmem:[%s5452 + $0xa8] sm:$0xff]
                  %5497 = vst [vmem:[%s5453 + $0xa8] sm:$0xff] %v5496
                  %v5498 = vld [vmem:[%s5452 + $0xb0] sm:$0xff]
                  %5499 = vst [vmem:[%s5453 + $0xb0] sm:$0xff] %v5498
                  %v5500 = vld [vmem:[%s5452 + $0xb8] sm:$0xff]
                  %5501 = vst [vmem:[%s5453 + $0xb8] sm:$0xff] %v5500
                  %v5502 = vld [vmem:[%s5452 + $0xc0] sm:$0xff]
                  %5503 = vst [vmem:[%s5453 + $0xc0] sm:$0xff] %v5502
                  %v5504 = vld [vmem:[%s5452 + $0xc8] sm:$0xff]
                  %5505 = vst [vmem:[%s5453 + $0xc8] sm:$0xff] %v5504
                  %v5506 = vld [vmem:[%s5452 + $0xd0] sm:$0xff]
                  %5507 = vst [vmem:[%s5453 + $0xd0] sm:$0xff] %v5506
                  %v5508 = vld [vmem:[%s5452 + $0xd8] sm:$0xff]
                  %5509 = vst [vmem:[%s5453 + $0xd8] sm:$0xff] %v5508
                  %v5510 = vld [vmem:[%s5452 + $0xe0] sm:$0xff]
                  %5511 = vst [vmem:[%s5453 + $0xe0] sm:$0xff] %v5510
                  %v5512 = vld [vmem:[%s5452 + $0xe8] sm:$0xff]
                  %5513 = vst [vmem:[%s5453 + $0xe8] sm:$0xff] %v5512
                  %v5514 = vld [vmem:[%s5452 + $0xf0] sm:$0xff]
                  %5515 = vst [vmem:[%s5453 + $0xf0] sm:$0xff] %v5514
                  %v5516 = vld [vmem:[%s5452 + $0xf8] sm:$0xff]
                  %5517 = vst [vmem:[%s5453 + $0xf8] sm:$0xff] %v5516
                  %v5518 = vld [vmem:[%s5452 + $0x100] sm:$0xff]
                  %5519 = vst [vmem:[%s5453 + $0x100] sm:$0xff] %v5518
                  %v5520 = vld [vmem:[%s5452 + $0x108] sm:$0xff]
                  %5521 = vst [vmem:[%s5453 + $0x108] sm:$0xff] %v5520
                  %v5522 = vld [vmem:[%s5452 + $0x110] sm:$0xff]
                  %5523 = vst [vmem:[%s5453 + $0x110] sm:$0xff] %v5522
                  %v5524 = vld [vmem:[%s5452 + $0x118] sm:$0xff]
                  %5525 = vst [vmem:[%s5453 + $0x118] sm:$0xff] %v5524
                  %v5526 = vld [vmem:[%s5452 + $0x120] sm:$0xff]
                  %5527 = vst [vmem:[%s5453 + $0x120] sm:$0xff] %v5526
                  %v5528 = vld [vmem:[%s5452 + $0x128] sm:$0xff]
                  %5529 = vst [vmem:[%s5453 + $0x128] sm:$0xff] %v5528
                  %v5530 = vld [vmem:[%s5452 + $0x130] sm:$0xff]
                  %5531 = vst [vmem:[%s5453 + $0x130] sm:$0xff] %v5530
                  %v5532 = vld [vmem:[%s5452 + $0x138] sm:$0xff]
                  %5533 = vst [vmem:[%s5453 + $0x138] sm:$0xff] %v5532
                  %v5534 = vld [vmem:[%s5452 + $0x140] sm:$0xff]
                  %5535 = vst [vmem:[%s5453 + $0x140] sm:$0xff] %v5534
                  %v5536 = vld [vmem:[%s5452 + $0x148] sm:$0xff]
                  %5537 = vst [vmem:[%s5453 + $0x148] sm:$0xff] %v5536
                  %v5538 = vld [vmem:[%s5452 + $0x150] sm:$0xff]
                  %5539 = vst [vmem:[%s5453 + $0x150] sm:$0xff] %v5538
                  %v5540 = vld [vmem:[%s5452 + $0x158] sm:$0xff]
                  %5541 = vst [vmem:[%s5453 + $0x158] sm:$0xff] %v5540
                  %v5542 = vld [vmem:[%s5452 + $0x160] sm:$0xff]
                  %5543 = vst [vmem:[%s5453 + $0x160] sm:$0xff] %v5542
                  %v5544 = vld [vmem:[%s5452 + $0x168] sm:$0xff]
                  %5545 = vst [vmem:[%s5453 + $0x168] sm:$0xff] %v5544
                  %v5546 = vld [vmem:[%s5452 + $0x170] sm:$0xff]
                  %5547 = vst [vmem:[%s5453 + $0x170] sm:$0xff] %v5546
                  %v5548 = vld [vmem:[%s5452 + $0x178] sm:$0xff]
                  %5549 = vst [vmem:[%s5453 + $0x178] sm:$0xff] %v5548
                  %v5550 = vld [vmem:[%s5452 + $0x180] sm:$0xff]
                  %5551 = vst [vmem:[%s5453 + $0x180] sm:$0xff] %v5550
                  %v5552 = vld [vmem:[%s5452 + $0x188] sm:$0xff]
                  %5553 = vst [vmem:[%s5453 + $0x188] sm:$0xff] %v5552
                  %v5554 = vld [vmem:[%s5452 + $0x190] sm:$0xff]
                  %5555 = vst [vmem:[%s5453 + $0x190] sm:$0xff] %v5554
                  %v5556 = vld [vmem:[%s5452 + $0x198] sm:$0xff]
                  %5557 = vst [vmem:[%s5453 + $0x198] sm:$0xff] %v5556
                  %v5558 = vld [vmem:[%s5452 + $0x1a0] sm:$0xff]
                  %5559 = vst [vmem:[%s5453 + $0x1a0] sm:$0xff] %v5558
                  %v5560 = vld [vmem:[%s5452 + $0x1a8] sm:$0xff]
                  %5561 = vst [vmem:[%s5453 + $0x1a8] sm:$0xff] %v5560
                  %v5562 = vld [vmem:[%s5452 + $0x1b0] sm:$0xff]
                  %5563 = vst [vmem:[%s5453 + $0x1b0] sm:$0xff] %v5562
                  %v5564 = vld [vmem:[%s5452 + $0x1b8] sm:$0xff]
                  %5565 = vst [vmem:[%s5453 + $0x1b8] sm:$0xff] %v5564
                  %v5566 = vld [vmem:[%s5452 + $0x1c0] sm:$0xff]
                  %5567 = vst [vmem:[%s5453 + $0x1c0] sm:$0xff] %v5566
                  %v5568 = vld [vmem:[%s5452 + $0x1c8] sm:$0xff]
                  %5569 = vst [vmem:[%s5453 + $0x1c8] sm:$0xff] %v5568
                  %v5570 = vld [vmem:[%s5452 + $0x1d0] sm:$0xff]
                  %5571 = vst [vmem:[%s5453 + $0x1d0] sm:$0xff] %v5570
                  %v5572 = vld [vmem:[%s5452 + $0x1d8] sm:$0xff]
                  %5573 = vst [vmem:[%s5453 + $0x1d8] sm:$0xff] %v5572
                  %v5574 = vld [vmem:[%s5452 + $0x1e0] sm:$0xff]
                  %5575 = vst [vmem:[%s5453 + $0x1e0] sm:$0xff] %v5574
                  %v5576 = vld [vmem:[%s5452 + $0x1e8] sm:$0xff]
                  %5577 = vst [vmem:[%s5453 + $0x1e8] sm:$0xff] %v5576
                  %v5578 = vld [vmem:[%s5452 + $0x1f0] sm:$0xff]
                  %5579 = vst [vmem:[%s5453 + $0x1f0] sm:$0xff] %v5578
                  %v5580 = vld [vmem:[%s5452 + $0x1f8] sm:$0xff]
                  %5581 = vst [vmem:[%s5453 + $0x1f8] sm:$0xff] %v5580
                  %v5582 = vld [vmem:[%s5452 + $0x200] sm:$0xff]
                  %5583 = vst [vmem:[%s5453 + $0x200] sm:$0xff] %v5582
                  %v5584 = vld [vmem:[%s5452 + $0x208] sm:$0xff]
                  %5585 = vst [vmem:[%s5453 + $0x208] sm:$0xff] %v5584
                  %v5586 = vld [vmem:[%s5452 + $0x210] sm:$0xff]
                  %5587 = vst [vmem:[%s5453 + $0x210] sm:$0xff] %v5586
                  %v5588 = vld [vmem:[%s5452 + $0x218] sm:$0xff]
                  %5589 = vst [vmem:[%s5453 + $0x218] sm:$0xff] %v5588
                  %v5590 = vld [vmem:[%s5452 + $0x220] sm:$0xff]
                  %5591 = vst [vmem:[%s5453 + $0x220] sm:$0xff] %v5590
                  %v5592 = vld [vmem:[%s5452 + $0x228] sm:$0xff]
                  %5593 = vst [vmem:[%s5453 + $0x228] sm:$0xff] %v5592
                  %v5594 = vld [vmem:[%s5452 + $0x230] sm:$0xff]
                  %5595 = vst [vmem:[%s5453 + $0x230] sm:$0xff] %v5594
                  %v5596 = vld [vmem:[%s5452 + $0x238] sm:$0xff]
                  %5597 = vst [vmem:[%s5453 + $0x238] sm:$0xff] %v5596
                  %v5598 = vld [vmem:[%s5452 + $0x240] sm:$0xff]
                  %5599 = vst [vmem:[%s5453 + $0x480] sm:$0xff] %v5598
                  %v5600 = vld [vmem:[%s5452 + $0x248] sm:$0xff]
                  %5601 = vst [vmem:[%s5453 + $0x488] sm:$0xff] %v5600
                  %v5602 = vld [vmem:[%s5452 + $0x250] sm:$0xff]
                  %5603 = vst [vmem:[%s5453 + $0x490] sm:$0xff] %v5602
                  %v5604 = vld [vmem:[%s5452 + $0x258] sm:$0xff]
                  %5605 = vst [vmem:[%s5453 + $0x498] sm:$0xff] %v5604
                  %v5606 = vld [vmem:[%s5452 + $0x260] sm:$0xff]
                  %5607 = vst [vmem:[%s5453 + $0x4a0] sm:$0xff] %v5606
                  %v5608 = vld [vmem:[%s5452 + $0x268] sm:$0xff]
                  %5609 = vst [vmem:[%s5453 + $0x4a8] sm:$0xff] %v5608
                  %v5610 = vld [vmem:[%s5452 + $0x270] sm:$0xff]
                  %5611 = vst [vmem:[%s5453 + $0x4b0] sm:$0xff] %v5610
                  %v5612 = vld [vmem:[%s5452 + $0x278] sm:$0xff]
                  %5613 = vst [vmem:[%s5453 + $0x4b8] sm:$0xff] %v5612
                  %v5614 = vld [vmem:[%s5452 + $0x280] sm:$0xff]
                  %5615 = vst [vmem:[%s5453 + $0x4c0] sm:$0xff] %v5614
                  %v5616 = vld [vmem:[%s5452 + $0x288] sm:$0xff]
                  %5617 = vst [vmem:[%s5453 + $0x4c8] sm:$0xff] %v5616
                  %v5618 = vld [vmem:[%s5452 + $0x290] sm:$0xff]
                  %5619 = vst [vmem:[%s5453 + $0x4d0] sm:$0xff] %v5618
                  %v5620 = vld [vmem:[%s5452 + $0x298] sm:$0xff]
                  %5621 = vst [vmem:[%s5453 + $0x4d8] sm:$0xff] %v5620
                  %v5622 = vld [vmem:[%s5452 + $0x2a0] sm:$0xff]
                  %5623 = vst [vmem:[%s5453 + $0x4e0] sm:$0xff] %v5622
                  %v5624 = vld [vmem:[%s5452 + $0x2a8] sm:$0xff]
                  %5625 = vst [vmem:[%s5453 + $0x4e8] sm:$0xff] %v5624
                  %v5626 = vld [vmem:[%s5452 + $0x2b0] sm:$0xff]
                  %5627 = vst [vmem:[%s5453 + $0x4f0] sm:$0xff] %v5626
                  %v5628 = vld [vmem:[%s5452 + $0x2b8] sm:$0xff]
                  %5629 = vst [vmem:[%s5453 + $0x4f8] sm:$0xff] %v5628
                  %v5630 = vld [vmem:[%s5452 + $0x2c0] sm:$0xff]
                  %5631 = vst [vmem:[%s5453 + $0x500] sm:$0xff] %v5630
                  %v5632 = vld [vmem:[%s5452 + $0x2c8] sm:$0xff]
                  %5633 = vst [vmem:[%s5453 + $0x508] sm:$0xff] %v5632
                  %v5634 = vld [vmem:[%s5452 + $0x2d0] sm:$0xff]
                  %5635 = vst [vmem:[%s5453 + $0x510] sm:$0xff] %v5634
                  %v5636 = vld [vmem:[%s5452 + $0x2d8] sm:$0xff]
                  %5637 = vst [vmem:[%s5453 + $0x518] sm:$0xff] %v5636
                  %v5638 = vld [vmem:[%s5452 + $0x2e0] sm:$0xff]
                  %5639 = vst [vmem:[%s5453 + $0x520] sm:$0xff] %v5638
                  %v5640 = vld [vmem:[%s5452 + $0x2e8] sm:$0xff]
                  %5641 = vst [vmem:[%s5453 + $0x528] sm:$0xff] %v5640
                  %v5642 = vld [vmem:[%s5452 + $0x2f0] sm:$0xff]
                  %5643 = vst [vmem:[%s5453 + $0x530] sm:$0xff] %v5642
                  %v5644 = vld [vmem:[%s5452 + $0x2f8] sm:$0xff]
                  %5645 = vst [vmem:[%s5453 + $0x538] sm:$0xff] %v5644
                  %v5646 = vld [vmem:[%s5452 + $0x300] sm:$0xff]
                  %5647 = vst [vmem:[%s5453 + $0x540] sm:$0xff] %v5646
                  %v5648 = vld [vmem:[%s5452 + $0x308] sm:$0xff]
                  %5649 = vst [vmem:[%s5453 + $0x548] sm:$0xff] %v5648
                  %v5650 = vld [vmem:[%s5452 + $0x310] sm:$0xff]
                  %5651 = vst [vmem:[%s5453 + $0x550] sm:$0xff] %v5650
                  %v5652 = vld [vmem:[%s5452 + $0x318] sm:$0xff]
                  %5653 = vst [vmem:[%s5453 + $0x558] sm:$0xff] %v5652
                  %v5654 = vld [vmem:[%s5452 + $0x320] sm:$0xff]
                  %5655 = vst [vmem:[%s5453 + $0x560] sm:$0xff] %v5654
                  %v5656 = vld [vmem:[%s5452 + $0x328] sm:$0xff]
                  %5657 = vst [vmem:[%s5453 + $0x568] sm:$0xff] %v5656
                  %v5658 = vld [vmem:[%s5452 + $0x330] sm:$0xff]
                  %5659 = vst [vmem:[%s5453 + $0x570] sm:$0xff] %v5658
                  %v5660 = vld [vmem:[%s5452 + $0x338] sm:$0xff]
                  %5661 = vst [vmem:[%s5453 + $0x578] sm:$0xff] %v5660
                  %v5662 = vld [vmem:[%s5452 + $0x340] sm:$0xff]
                  %5663 = vst [vmem:[%s5453 + $0x580] sm:$0xff] %v5662
                  %v5664 = vld [vmem:[%s5452 + $0x348] sm:$0xff]
                  %5665 = vst [vmem:[%s5453 + $0x588] sm:$0xff] %v5664
                  %v5666 = vld [vmem:[%s5452 + $0x350] sm:$0xff]
                  %5667 = vst [vmem:[%s5453 + $0x590] sm:$0xff] %v5666
                  %v5668 = vld [vmem:[%s5452 + $0x358] sm:$0xff]
                  %5669 = vst [vmem:[%s5453 + $0x598] sm:$0xff] %v5668
                  %v5670 = vld [vmem:[%s5452 + $0x360] sm:$0xff]
                  %5671 = vst [vmem:[%s5453 + $0x5a0] sm:$0xff] %v5670
                  %v5672 = vld [vmem:[%s5452 + $0x368] sm:$0xff]
                  %5673 = vst [vmem:[%s5453 + $0x5a8] sm:$0xff] %v5672
                  %v5674 = vld [vmem:[%s5452 + $0x370] sm:$0xff]
                  %5675 = vst [vmem:[%s5453 + $0x5b0] sm:$0xff] %v5674
                  %v5676 = vld [vmem:[%s5452 + $0x378] sm:$0xff]
                  %5677 = vst [vmem:[%s5453 + $0x5b8] sm:$0xff] %v5676
                  %v5678 = vld [vmem:[%s5452 + $0x380] sm:$0xff]
                  %5679 = vst [vmem:[%s5453 + $0x5c0] sm:$0xff] %v5678
                  %v5680 = vld [vmem:[%s5452 + $0x388] sm:$0xff]
                  %5681 = vst [vmem:[%s5453 + $0x5c8] sm:$0xff] %v5680
                  %v5682 = vld [vmem:[%s5452 + $0x390] sm:$0xff]
                  %5683 = vst [vmem:[%s5453 + $0x5d0] sm:$0xff] %v5682
                  %v5684 = vld [vmem:[%s5452 + $0x398] sm:$0xff]
                  %5685 = vst [vmem:[%s5453 + $0x5d8] sm:$0xff] %v5684
                  %v5686 = vld [vmem:[%s5452 + $0x3a0] sm:$0xff]
                  %5687 = vst [vmem:[%s5453 + $0x5e0] sm:$0xff] %v5686
                  %v5688 = vld [vmem:[%s5452 + $0x3a8] sm:$0xff]
                  %5689 = vst [vmem:[%s5453 + $0x5e8] sm:$0xff] %v5688
                  %v5690 = vld [vmem:[%s5452 + $0x3b0] sm:$0xff]
                  %5691 = vst [vmem:[%s5453 + $0x5f0] sm:$0xff] %v5690
                  %v5692 = vld [vmem:[%s5452 + $0x3b8] sm:$0xff]
                  %5693 = vst [vmem:[%s5453 + $0x5f8] sm:$0xff] %v5692
                  %v5694 = vld [vmem:[%s5452 + $0x3c0] sm:$0xff]
                  %5695 = vst [vmem:[%s5453 + $0x600] sm:$0xff] %v5694
                  %v5696 = vld [vmem:[%s5452 + $0x3c8] sm:$0xff]
                  %5697 = vst [vmem:[%s5453 + $0x608] sm:$0xff] %v5696
                  %v5698 = vld [vmem:[%s5452 + $0x3d0] sm:$0xff]
                  %5699 = vst [vmem:[%s5453 + $0x610] sm:$0xff] %v5698
                  %v5700 = vld [vmem:[%s5452 + $0x3d8] sm:$0xff]
                  %5701 = vst [vmem:[%s5453 + $0x618] sm:$0xff] %v5700
                  %v5702 = vld [vmem:[%s5452 + $0x3e0] sm:$0xff]
                  %5703 = vst [vmem:[%s5453 + $0x620] sm:$0xff] %v5702
                  %v5704 = vld [vmem:[%s5452 + $0x3e8] sm:$0xff]
                  %5705 = vst [vmem:[%s5453 + $0x628] sm:$0xff] %v5704
                  %v5706 = vld [vmem:[%s5452 + $0x3f0] sm:$0xff]
                  %5707 = vst [vmem:[%s5453 + $0x630] sm:$0xff] %v5706
                  %v5708 = vld [vmem:[%s5452 + $0x3f8] sm:$0xff]
                  %5709 = vst [vmem:[%s5453 + $0x638] sm:$0xff] %v5708
                  %v5710 = vld [vmem:[%s5452 + $0x400] sm:$0xff]
                  %5711 = vst [vmem:[%s5453 + $0x640] sm:$0xff] %v5710
                  %v5712 = vld [vmem:[%s5452 + $0x408] sm:$0xff]
                  %5713 = vst [vmem:[%s5453 + $0x648] sm:$0xff] %v5712
                  %v5714 = vld [vmem:[%s5452 + $0x410] sm:$0xff]
                  %5715 = vst [vmem:[%s5453 + $0x650] sm:$0xff] %v5714
                  %v5716 = vld [vmem:[%s5452 + $0x418] sm:$0xff]
                  %5717 = vst [vmem:[%s5453 + $0x658] sm:$0xff] %v5716
                  %v5718 = vld [vmem:[%s5452 + $0x420] sm:$0xff]
                  %5719 = vst [vmem:[%s5453 + $0x660] sm:$0xff] %v5718
                  %v5720 = vld [vmem:[%s5452 + $0x428] sm:$0xff]
                  %5721 = vst [vmem:[%s5453 + $0x668] sm:$0xff] %v5720
                  %v5722 = vld [vmem:[%s5452 + $0x430] sm:$0xff]
                  %5723 = vst [vmem:[%s5453 + $0x670] sm:$0xff] %v5722
                  %v5724 = vld [vmem:[%s5452 + $0x438] sm:$0xff]
                  %5725 = vst [vmem:[%s5453 + $0x678] sm:$0xff] %v5724
                  %v5726 = vld [vmem:[%s5452 + $0x440] sm:$0xff]
                  %5727 = vst [vmem:[%s5453 + $0x680] sm:$0xff] %v5726
                  %v5728 = vld [vmem:[%s5452 + $0x448] sm:$0xff]
                  %5729 = vst [vmem:[%s5453 + $0x688] sm:$0xff] %v5728
                  %v5730 = vld [vmem:[%s5452 + $0x450] sm:$0xff]
                  %5731 = vst [vmem:[%s5453 + $0x690] sm:$0xff] %v5730
                  %v5732 = vld [vmem:[%s5452 + $0x458] sm:$0xff]
                  %5733 = vst [vmem:[%s5453 + $0x698] sm:$0xff] %v5732
                  %v5734 = vld [vmem:[%s5452 + $0x460] sm:$0xff]
                  %5735 = vst [vmem:[%s5453 + $0x6a0] sm:$0xff] %v5734
                  %v5736 = vld [vmem:[%s5452 + $0x468] sm:$0xff]
                  %5737 = vst [vmem:[%s5453 + $0x6a8] sm:$0xff] %v5736
                  %v5738 = vld [vmem:[%s5452 + $0x470] sm:$0xff]
                  %5739 = vst [vmem:[%s5453 + $0x6b0] sm:$0xff] %v5738
                  %v5740 = vld [vmem:[%s5452 + $0x478] sm:$0xff]
                  %5741 = vst [vmem:[%s5453 + $0x6b8] sm:$0xff] %v5740
                  %v5742 = vld [vmem:[%s5452 + $0x480] sm:$0xff]
                  %5743 = vst [vmem:[%s5453 + $0x900] sm:$0xff] %v5742
                  %v5744 = vld [vmem:[%s5452 + $0x488] sm:$0xff]
                  %5745 = vst [vmem:[%s5453 + $0x908] sm:$0xff] %v5744
                  %v5746 = vld [vmem:[%s5452 + $0x490] sm:$0xff]
                  %5747 = vst [vmem:[%s5453 + $0x910] sm:$0xff] %v5746
                  %v5748 = vld [vmem:[%s5452 + $0x498] sm:$0xff]
                  %5749 = vst [vmem:[%s5453 + $0x918] sm:$0xff] %v5748
                  %v5750 = vld [vmem:[%s5452 + $0x4a0] sm:$0xff]
                  %5751 = vst [vmem:[%s5453 + $0x920] sm:$0xff] %v5750
                  %v5752 = vld [vmem:[%s5452 + $0x4a8] sm:$0xff]
                  %5753 = vst [vmem:[%s5453 + $0x928] sm:$0xff] %v5752
                  %v5754 = vld [vmem:[%s5452 + $0x4b0] sm:$0xff]
                  %5755 = vst [vmem:[%s5453 + $0x930] sm:$0xff] %v5754
                  %v5756 = vld [vmem:[%s5452 + $0x4b8] sm:$0xff]
                  %5757 = vst [vmem:[%s5453 + $0x938] sm:$0xff] %v5756
                  %v5758 = vld [vmem:[%s5452 + $0x4c0] sm:$0xff]
                  %5759 = vst [vmem:[%s5453 + $0x940] sm:$0xff] %v5758
                  %v5760 = vld [vmem:[%s5452 + $0x4c8] sm:$0xff]
                  %5761 = vst [vmem:[%s5453 + $0x948] sm:$0xff] %v5760
                  %v5762 = vld [vmem:[%s5452 + $0x4d0] sm:$0xff]
                  %5763 = vst [vmem:[%s5453 + $0x950] sm:$0xff] %v5762
                  %v5764 = vld [vmem:[%s5452 + $0x4d8] sm:$0xff]
                  %5765 = vst [vmem:[%s5453 + $0x958] sm:$0xff] %v5764
                  %v5766 = vld [vmem:[%s5452 + $0x4e0] sm:$0xff]
                  %5767 = vst [vmem:[%s5453 + $0x960] sm:$0xff] %v5766
                  %v5768 = vld [vmem:[%s5452 + $0x4e8] sm:$0xff]
                  %5769 = vst [vmem:[%s5453 + $0x968] sm:$0xff] %v5768
                  %v5770 = vld [vmem:[%s5452 + $0x4f0] sm:$0xff]
                  %5771 = vst [vmem:[%s5453 + $0x970] sm:$0xff] %v5770
                  %v5772 = vld [vmem:[%s5452 + $0x4f8] sm:$0xff]
                  %5773 = vst [vmem:[%s5453 + $0x978] sm:$0xff] %v5772
                  %v5774 = vld [vmem:[%s5452 + $0x500] sm:$0xff]
                  %5775 = vst [vmem:[%s5453 + $0x980] sm:$0xff] %v5774
                  %v5776 = vld [vmem:[%s5452 + $0x508] sm:$0xff]
                  %5777 = vst [vmem:[%s5453 + $0x988] sm:$0xff] %v5776
                  %v5778 = vld [vmem:[%s5452 + $0x510] sm:$0xff]
                  %5779 = vst [vmem:[%s5453 + $0x990] sm:$0xff] %v5778
                  %v5780 = vld [vmem:[%s5452 + $0x518] sm:$0xff]
                  %5781 = vst [vmem:[%s5453 + $0x998] sm:$0xff] %v5780
                  %v5782 = vld [vmem:[%s5452 + $0x520] sm:$0xff]
                  %5783 = vst [vmem:[%s5453 + $0x9a0] sm:$0xff] %v5782
                  %v5784 = vld [vmem:[%s5452 + $0x528] sm:$0xff]
                  %5785 = vst [vmem:[%s5453 + $0x9a8] sm:$0xff] %v5784
                  %v5786 = vld [vmem:[%s5452 + $0x530] sm:$0xff]
                  %5787 = vst [vmem:[%s5453 + $0x9b0] sm:$0xff] %v5786
                  %v5788 = vld [vmem:[%s5452 + $0x538] sm:$0xff]
                  %5789 = vst [vmem:[%s5453 + $0x9b8] sm:$0xff] %v5788
                  %v5790 = vld [vmem:[%s5452 + $0x540] sm:$0xff]
                  %5791 = vst [vmem:[%s5453 + $0x9c0] sm:$0xff] %v5790
                  %v5792 = vld [vmem:[%s5452 + $0x548] sm:$0xff]
                  %5793 = vst [vmem:[%s5453 + $0x9c8] sm:$0xff] %v5792
                  %v5794 = vld [vmem:[%s5452 + $0x550] sm:$0xff]
                  %5795 = vst [vmem:[%s5453 + $0x9d0] sm:$0xff] %v5794
                  %v5796 = vld [vmem:[%s5452 + $0x558] sm:$0xff]
                  %5797 = vst [vmem:[%s5453 + $0x9d8] sm:$0xff] %v5796
                  %v5798 = vld [vmem:[%s5452 + $0x560] sm:$0xff]
                  %5799 = vst [vmem:[%s5453 + $0x9e0] sm:$0xff] %v5798
                  %v5800 = vld [vmem:[%s5452 + $0x568] sm:$0xff]
                  %5801 = vst [vmem:[%s5453 + $0x9e8] sm:$0xff] %v5800
                  %v5802 = vld [vmem:[%s5452 + $0x570] sm:$0xff]
                  %5803 = vst [vmem:[%s5453 + $0x9f0] sm:$0xff] %v5802
                  %v5804 = vld [vmem:[%s5452 + $0x578] sm:$0xff]
                  %5805 = vst [vmem:[%s5453 + $0x9f8] sm:$0xff] %v5804
                  %v5806 = vld [vmem:[%s5452 + $0x580] sm:$0xff]
                  %5807 = vst [vmem:[%s5453 + $0xa00] sm:$0xff] %v5806
                  %v5808 = vld [vmem:[%s5452 + $0x588] sm:$0xff]
                  %5809 = vst [vmem:[%s5453 + $0xa08] sm:$0xff] %v5808
                  %v5810 = vld [vmem:[%s5452 + $0x590] sm:$0xff]
                  %5811 = vst [vmem:[%s5453 + $0xa10] sm:$0xff] %v5810
                  %v5812 = vld [vmem:[%s5452 + $0x598] sm:$0xff]
                  %5813 = vst [vmem:[%s5453 + $0xa18] sm:$0xff] %v5812
                  %v5814 = vld [vmem:[%s5452 + $0x5a0] sm:$0xff]
                  %5815 = vst [vmem:[%s5453 + $0xa20] sm:$0xff] %v5814
                  %v5816 = vld [vmem:[%s5452 + $0x5a8] sm:$0xff]
                  %5817 = vst [vmem:[%s5453 + $0xa28] sm:$0xff] %v5816
                  %v5818 = vld [vmem:[%s5452 + $0x5b0] sm:$0xff]
                  %5819 = vst [vmem:[%s5453 + $0xa30] sm:$0xff] %v5818
                  %v5820 = vld [vmem:[%s5452 + $0x5b8] sm:$0xff]
                  %5821 = vst [vmem:[%s5453 + $0xa38] sm:$0xff] %v5820
                  %v5822 = vld [vmem:[%s5452 + $0x5c0] sm:$0xff]
                  %5823 = vst [vmem:[%s5453 + $0xa40] sm:$0xff] %v5822
                  %v5824 = vld [vmem:[%s5452 + $0x5c8] sm:$0xff]
                  %5825 = vst [vmem:[%s5453 + $0xa48] sm:$0xff] %v5824
                  %v5826 = vld [vmem:[%s5452 + $0x5d0] sm:$0xff]
                  %5827 = vst [vmem:[%s5453 + $0xa50] sm:$0xff] %v5826
                  %v5828 = vld [vmem:[%s5452 + $0x5d8] sm:$0xff]
                  %5829 = vst [vmem:[%s5453 + $0xa58] sm:$0xff] %v5828
                  %v5830 = vld [vmem:[%s5452 + $0x5e0] sm:$0xff]
                  %5831 = vst [vmem:[%s5453 + $0xa60] sm:$0xff] %v5830
                  %v5832 = vld [vmem:[%s5452 + $0x5e8] sm:$0xff]
                  %5833 = vst [vmem:[%s5453 + $0xa68] sm:$0xff] %v5832
                  %v5834 = vld [vmem:[%s5452 + $0x5f0] sm:$0xff]
                  %5835 = vst [vmem:[%s5453 + $0xa70] sm:$0xff] %v5834
                  %v5836 = vld [vmem:[%s5452 + $0x5f8] sm:$0xff]
                  %5837 = vst [vmem:[%s5453 + $0xa78] sm:$0xff] %v5836
                  %v5838 = vld [vmem:[%s5452 + $0x600] sm:$0xff]
                  %5839 = vst [vmem:[%s5453 + $0xa80] sm:$0xff] %v5838
                  %v5840 = vld [vmem:[%s5452 + $0x608] sm:$0xff]
                  %5841 = vst [vmem:[%s5453 + $0xa88] sm:$0xff] %v5840
                  %v5842 = vld [vmem:[%s5452 + $0x610] sm:$0xff]
                  %5843 = vst [vmem:[%s5453 + $0xa90] sm:$0xff] %v5842
                  %v5844 = vld [vmem:[%s5452 + $0x618] sm:$0xff]
                  %5845 = vst [vmem:[%s5453 + $0xa98] sm:$0xff] %v5844
                  %v5846 = vld [vmem:[%s5452 + $0x620] sm:$0xff]
                  %5847 = vst [vmem:[%s5453 + $0xaa0] sm:$0xff] %v5846
                  %v5848 = vld [vmem:[%s5452 + $0x628] sm:$0xff]
                  %5849 = vst [vmem:[%s5453 + $0xaa8] sm:$0xff] %v5848
                  %v5850 = vld [vmem:[%s5452 + $0x630] sm:$0xff]
                  %5851 = vst [vmem:[%s5453 + $0xab0] sm:$0xff] %v5850
                  %v5852 = vld [vmem:[%s5452 + $0x638] sm:$0xff]
                  %5853 = vst [vmem:[%s5453 + $0xab8] sm:$0xff] %v5852
                  %v5854 = vld [vmem:[%s5452 + $0x640] sm:$0xff]
                  %5855 = vst [vmem:[%s5453 + $0xac0] sm:$0xff] %v5854
                  %v5856 = vld [vmem:[%s5452 + $0x648] sm:$0xff]
                  %5857 = vst [vmem:[%s5453 + $0xac8] sm:$0xff] %v5856
                  %v5858 = vld [vmem:[%s5452 + $0x650] sm:$0xff]
                  %5859 = vst [vmem:[%s5453 + $0xad0] sm:$0xff] %v5858
                  %v5860 = vld [vmem:[%s5452 + $0x658] sm:$0xff]
                  %5861 = vst [vmem:[%s5453 + $0xad8] sm:$0xff] %v5860
                  %v5862 = vld [vmem:[%s5452 + $0x660] sm:$0xff]
                  %5863 = vst [vmem:[%s5453 + $0xae0] sm:$0xff] %v5862
                  %v5864 = vld [vmem:[%s5452 + $0x668] sm:$0xff]
                  %5865 = vst [vmem:[%s5453 + $0xae8] sm:$0xff] %v5864
                  %v5866 = vld [vmem:[%s5452 + $0x670] sm:$0xff]
                  %5867 = vst [vmem:[%s5453 + $0xaf0] sm:$0xff] %v5866
                  %v5868 = vld [vmem:[%s5452 + $0x678] sm:$0xff]
                  %5869 = vst [vmem:[%s5453 + $0xaf8] sm:$0xff] %v5868
                  %v5870 = vld [vmem:[%s5452 + $0x680] sm:$0xff]
                  %5871 = vst [vmem:[%s5453 + $0xb00] sm:$0xff] %v5870
                  %v5872 = vld [vmem:[%s5452 + $0x688] sm:$0xff]
                  %5873 = vst [vmem:[%s5453 + $0xb08] sm:$0xff] %v5872
                  %v5874 = vld [vmem:[%s5452 + $0x690] sm:$0xff]
                  %5875 = vst [vmem:[%s5453 + $0xb10] sm:$0xff] %v5874
                  %v5876 = vld [vmem:[%s5452 + $0x698] sm:$0xff]
                  %5877 = vst [vmem:[%s5453 + $0xb18] sm:$0xff] %v5876
                  %v5878 = vld [vmem:[%s5452 + $0x6a0] sm:$0xff]
                  %5879 = vst [vmem:[%s5453 + $0xb20] sm:$0xff] %v5878
                  %v5880 = vld [vmem:[%s5452 + $0x6a8] sm:$0xff]
                  %5881 = vst [vmem:[%s5453 + $0xb28] sm:$0xff] %v5880
                  %v5882 = vld [vmem:[%s5452 + $0x6b0] sm:$0xff]
                  %5883 = vst [vmem:[%s5453 + $0xb30] sm:$0xff] %v5882
                  %v5884 = vld [vmem:[%s5452 + $0x6b8] sm:$0xff]
                  %5885 = vst [vmem:[%s5453 + $0xb38] sm:$0xff] %v5884
                  %v5886 = vld [vmem:[%s5452 + $0x6c0] sm:$0xff]
                  %5887 = vst [vmem:[%s5453 + $0xd80] sm:$0xff] %v5886
                  %v5888 = vld [vmem:[%s5452 + $0x6c8] sm:$0xff]
                  %5889 = vst [vmem:[%s5453 + $0xd88] sm:$0xff] %v5888
                  %v5890 = vld [vmem:[%s5452 + $0x6d0] sm:$0xff]
                  %5891 = vst [vmem:[%s5453 + $0xd90] sm:$0xff] %v5890
                  %v5892 = vld [vmem:[%s5452 + $0x6d8] sm:$0xff]
                  %5893 = vst [vmem:[%s5453 + $0xd98] sm:$0xff] %v5892
                  %v5894 = vld [vmem:[%s5452 + $0x6e0] sm:$0xff]
                  %5895 = vst [vmem:[%s5453 + $0xda0] sm:$0xff] %v5894
                  %v5896 = vld [vmem:[%s5452 + $0x6e8] sm:$0xff]
                  %5897 = vst [vmem:[%s5453 + $0xda8] sm:$0xff] %v5896
                  %v5898 = vld [vmem:[%s5452 + $0x6f0] sm:$0xff]
                  %5899 = vst [vmem:[%s5453 + $0xdb0] sm:$0xff] %v5898
                  %v5900 = vld [vmem:[%s5452 + $0x6f8] sm:$0xff]
                  %5901 = vst [vmem:[%s5453 + $0xdb8] sm:$0xff] %v5900
                  %v5902 = vld [vmem:[%s5452 + $0x700] sm:$0xff]
                  %5903 = vst [vmem:[%s5453 + $0xdc0] sm:$0xff] %v5902
                  %v5904 = vld [vmem:[%s5452 + $0x708] sm:$0xff]
                  %5905 = vst [vmem:[%s5453 + $0xdc8] sm:$0xff] %v5904
                  %v5906 = vld [vmem:[%s5452 + $0x710] sm:$0xff]
                  %5907 = vst [vmem:[%s5453 + $0xdd0] sm:$0xff] %v5906
                  %v5908 = vld [vmem:[%s5452 + $0x718] sm:$0xff]
                  %5909 = vst [vmem:[%s5453 + $0xdd8] sm:$0xff] %v5908
                  %v5910 = vld [vmem:[%s5452 + $0x720] sm:$0xff]
                  %5911 = vst [vmem:[%s5453 + $0xde0] sm:$0xff] %v5910
                  %v5912 = vld [vmem:[%s5452 + $0x728] sm:$0xff]
                  %5913 = vst [vmem:[%s5453 + $0xde8] sm:$0xff] %v5912
                  %v5914 = vld [vmem:[%s5452 + $0x730] sm:$0xff]
                  %5915 = vst [vmem:[%s5453 + $0xdf0] sm:$0xff] %v5914
                  %v5916 = vld [vmem:[%s5452 + $0x738] sm:$0xff]
                  %5917 = vst [vmem:[%s5453 + $0xdf8] sm:$0xff] %v5916
                  %v5918 = vld [vmem:[%s5452 + $0x740] sm:$0xff]
                  %5919 = vst [vmem:[%s5453 + $0xe00] sm:$0xff] %v5918
                  %v5920 = vld [vmem:[%s5452 + $0x748] sm:$0xff]
                  %5921 = vst [vmem:[%s5453 + $0xe08] sm:$0xff] %v5920
                  %v5922 = vld [vmem:[%s5452 + $0x750] sm:$0xff]
                  %5923 = vst [vmem:[%s5453 + $0xe10] sm:$0xff] %v5922
                  %v5924 = vld [vmem:[%s5452 + $0x758] sm:$0xff]
                  %5925 = vst [vmem:[%s5453 + $0xe18] sm:$0xff] %v5924
                  %v5926 = vld [vmem:[%s5452 + $0x760] sm:$0xff]
                  %5927 = vst [vmem:[%s5453 + $0xe20] sm:$0xff] %v5926
                  %v5928 = vld [vmem:[%s5452 + $0x768] sm:$0xff]
                  %5929 = vst [vmem:[%s5453 + $0xe28] sm:$0xff] %v5928
                  %v5930 = vld [vmem:[%s5452 + $0x770] sm:$0xff]
                  %5931 = vst [vmem:[%s5453 + $0xe30] sm:$0xff] %v5930
                  %v5932 = vld [vmem:[%s5452 + $0x778] sm:$0xff]
                  %5933 = vst [vmem:[%s5453 + $0xe38] sm:$0xff] %v5932
                  %v5934 = vld [vmem:[%s5452 + $0x780] sm:$0xff]
                  %5935 = vst [vmem:[%s5453 + $0xe40] sm:$0xff] %v5934
                  %v5936 = vld [vmem:[%s5452 + $0x788] sm:$0xff]
                  %5937 = vst [vmem:[%s5453 + $0xe48] sm:$0xff] %v5936
                  %v5938 = vld [vmem:[%s5452 + $0x790] sm:$0xff]
                  %5939 = vst [vmem:[%s5453 + $0xe50] sm:$0xff] %v5938
                  %v5940 = vld [vmem:[%s5452 + $0x798] sm:$0xff]
                  %5941 = vst [vmem:[%s5453 + $0xe58] sm:$0xff] %v5940
                  %v5942 = vld [vmem:[%s5452 + $0x7a0] sm:$0xff]
                  %5943 = vst [vmem:[%s5453 + $0xe60] sm:$0xff] %v5942
                  %v5944 = vld [vmem:[%s5452 + $0x7a8] sm:$0xff]
                  %5945 = vst [vmem:[%s5453 + $0xe68] sm:$0xff] %v5944
                  %v5946 = vld [vmem:[%s5452 + $0x7b0] sm:$0xff]
                  %5947 = vst [vmem:[%s5453 + $0xe70] sm:$0xff] %v5946
                  %v5948 = vld [vmem:[%s5452 + $0x7b8] sm:$0xff]
                  %5949 = vst [vmem:[%s5453 + $0xe78] sm:$0xff] %v5948
                  %v5950 = vld [vmem:[%s5452 + $0x7c0] sm:$0xff]
                  %5951 = vst [vmem:[%s5453 + $0xe80] sm:$0xff] %v5950
                  %v5952 = vld [vmem:[%s5452 + $0x7c8] sm:$0xff]
                  %5953 = vst [vmem:[%s5453 + $0xe88] sm:$0xff] %v5952
                  %v5954 = vld [vmem:[%s5452 + $0x7d0] sm:$0xff]
                  %5955 = vst [vmem:[%s5453 + $0xe90] sm:$0xff] %v5954
                  %v5956 = vld [vmem:[%s5452 + $0x7d8] sm:$0xff]
                  %5957 = vst [vmem:[%s5453 + $0xe98] sm:$0xff] %v5956
                  %v5958 = vld [vmem:[%s5452 + $0x7e0] sm:$0xff]
                  %5959 = vst [vmem:[%s5453 + $0xea0] sm:$0xff] %v5958
                  %v5960 = vld [vmem:[%s5452 + $0x7e8] sm:$0xff]
                  %5961 = vst [vmem:[%s5453 + $0xea8] sm:$0xff] %v5960
                  %v5962 = vld [vmem:[%s5452 + $0x7f0] sm:$0xff]
                  %5963 = vst [vmem:[%s5453 + $0xeb0] sm:$0xff] %v5962
                  %v5964 = vld [vmem:[%s5452 + $0x7f8] sm:$0xff]
                  %5965 = vst [vmem:[%s5453 + $0xeb8] sm:$0xff] %v5964
                  %v5966 = vld [vmem:[%s5452 + $0x800] sm:$0xff]
                  %5967 = vst [vmem:[%s5453 + $0xec0] sm:$0xff] %v5966
                  %v5968 = vld [vmem:[%s5452 + $0x808] sm:$0xff]
                  %5969 = vst [vmem:[%s5453 + $0xec8] sm:$0xff] %v5968
                  %v5970 = vld [vmem:[%s5452 + $0x810] sm:$0xff]
                  %5971 = vst [vmem:[%s5453 + $0xed0] sm:$0xff] %v5970
                  %v5972 = vld [vmem:[%s5452 + $0x818] sm:$0xff]
                  %5973 = vst [vmem:[%s5453 + $0xed8] sm:$0xff] %v5972
                  %v5974 = vld [vmem:[%s5452 + $0x820] sm:$0xff]
                  %5975 = vst [vmem:[%s5453 + $0xee0] sm:$0xff] %v5974
                  %v5976 = vld [vmem:[%s5452 + $0x828] sm:$0xff]
                  %5977 = vst [vmem:[%s5453 + $0xee8] sm:$0xff] %v5976
                  %v5978 = vld [vmem:[%s5452 + $0x830] sm:$0xff]
                  %5979 = vst [vmem:[%s5453 + $0xef0] sm:$0xff] %v5978
                  %v5980 = vld [vmem:[%s5452 + $0x838] sm:$0xff]
                  %5981 = vst [vmem:[%s5453 + $0xef8] sm:$0xff] %v5980
                  %v5982 = vld [vmem:[%s5452 + $0x840] sm:$0xff]
                  %5983 = vst [vmem:[%s5453 + $0xf00] sm:$0xff] %v5982
                  %v5984 = vld [vmem:[%s5452 + $0x848] sm:$0xff]
                  %5985 = vst [vmem:[%s5453 + $0xf08] sm:$0xff] %v5984
                  %v5986 = vld [vmem:[%s5452 + $0x850] sm:$0xff]
                  %5987 = vst [vmem:[%s5453 + $0xf10] sm:$0xff] %v5986
                  %v5988 = vld [vmem:[%s5452 + $0x858] sm:$0xff]
                  %5989 = vst [vmem:[%s5453 + $0xf18] sm:$0xff] %v5988
                  %v5990 = vld [vmem:[%s5452 + $0x860] sm:$0xff]
                  %5991 = vst [vmem:[%s5453 + $0xf20] sm:$0xff] %v5990
                  %v5992 = vld [vmem:[%s5452 + $0x868] sm:$0xff]
                  %5993 = vst [vmem:[%s5453 + $0xf28] sm:$0xff] %v5992
                  %v5994 = vld [vmem:[%s5452 + $0x870] sm:$0xff]
                  %5995 = vst [vmem:[%s5453 + $0xf30] sm:$0xff] %v5994
                  %v5996 = vld [vmem:[%s5452 + $0x878] sm:$0xff]
                  %5997 = vst [vmem:[%s5453 + $0xf38] sm:$0xff] %v5996
                  %v5998 = vld [vmem:[%s5452 + $0x880] sm:$0xff]
                  %5999 = vst [vmem:[%s5453 + $0xf40] sm:$0xff] %v5998
                  %v6000 = vld [vmem:[%s5452 + $0x888] sm:$0xff]
                  %6001 = vst [vmem:[%s5453 + $0xf48] sm:$0xff] %v6000
                  %v6002 = vld [vmem:[%s5452 + $0x890] sm:$0xff]
                  %6003 = vst [vmem:[%s5453 + $0xf50] sm:$0xff] %v6002
                  %v6004 = vld [vmem:[%s5452 + $0x898] sm:$0xff]
                  %6005 = vst [vmem:[%s5453 + $0xf58] sm:$0xff] %v6004
                  %v6006 = vld [vmem:[%s5452 + $0x8a0] sm:$0xff]
                  %6007 = vst [vmem:[%s5453 + $0xf60] sm:$0xff] %v6006
                  %v6008 = vld [vmem:[%s5452 + $0x8a8] sm:$0xff]
                  %6009 = vst [vmem:[%s5453 + $0xf68] sm:$0xff] %v6008
                  %v6010 = vld [vmem:[%s5452 + $0x8b0] sm:$0xff]
                  %6011 = vst [vmem:[%s5453 + $0xf70] sm:$0xff] %v6010
                  %v6012 = vld [vmem:[%s5452 + $0x8b8] sm:$0xff]
                  %6013 = vst [vmem:[%s5453 + $0xf78] sm:$0xff] %v6012
                  %v6014 = vld [vmem:[%s5452 + $0x8c0] sm:$0xff]
                  %6015 = vst [vmem:[%s5453 + $0xf80] sm:$0xff] %v6014
                  %v6016 = vld [vmem:[%s5452 + $0x8c8] sm:$0xff]
                  %6017 = vst [vmem:[%s5453 + $0xf88] sm:$0xff] %v6016
                  %v6018 = vld [vmem:[%s5452 + $0x8d0] sm:$0xff]
                  %6019 = vst [vmem:[%s5453 + $0xf90] sm:$0xff] %v6018
                  %v6020 = vld [vmem:[%s5452 + $0x8d8] sm:$0xff]
                  %6021 = vst [vmem:[%s5453 + $0xf98] sm:$0xff] %v6020
                  %v6022 = vld [vmem:[%s5452 + $0x8e0] sm:$0xff]
                  %6023 = vst [vmem:[%s5453 + $0xfa0] sm:$0xff] %v6022
                  %v6024 = vld [vmem:[%s5452 + $0x8e8] sm:$0xff]
                  %6025 = vst [vmem:[%s5453 + $0xfa8] sm:$0xff] %v6024
                  %v6026 = vld [vmem:[%s5452 + $0x8f0] sm:$0xff]
                  %6027 = vst [vmem:[%s5453 + $0xfb0] sm:$0xff] %v6026
                  %v6028 = vld [vmem:[%s5452 + $0x8f8] sm:$0xff]
                  %6029 = vst [vmem:[%s5453 + $0xfb8] sm:$0xff] %v6028
                $region72: #{tpu_custom_call.1} parent=66 // loop_footer
                  %s5451 = sadd.s32 1, %s5447
                $region73: #{tpu_custom_call.1} parent=66 // loop_footer_branch
                  %5446 = sbr.rel target = $region69
                $region74: #{tpu_custom_call.1} parent=66 // loop_exit
                  _
              $region67: #{tpu_custom_call.1} parent=51 // pred_fallthru
                _
              // Predicated region
              $region75: #{tpu_custom_call.1} parent=51 // pred_check
                _
              $region76: #{tpu_custom_call.1} parent=51 // pred_check_branch
                %6031 = sbr.rel target = $region78
              $region77: #{tpu_custom_call.1} parent=51 // pred_region
                _
              $region78: #{tpu_custom_call.1} parent=51 // pred_fallthru
                _
            $region52: #{tpu_custom_call.1} parent=47 // pred_fallthru
              _
            // Predicated region
            $region53: #{tpu_custom_call.1} parent=47 // pred_check
              _
            $region54: #{tpu_custom_call.1} parent=47 // pred_check_branch
              %4857 = sbr.rel target = $region56
            $region55: #{tpu_custom_call.1} parent=47 // pred_region
              %s4859 = ssub.s32 256, 1
              loop: start=0, step=1, limit=1
              $region57: #{tpu_custom_call.1} parent=55 // loop_pre_header
                _
              $region58: #{tpu_custom_call.1} parent=55 // loop_header
                %s4861 = sphi 0, %s4865
                %p4862 = scmp.ge.s32.totalorder %s4861, 1
                %s4866 = sphi %s4842, %s4842
                %s4867 = sphi %s4851, %s4851
              $region59: #{tpu_custom_call.1} parent=55 // loop_header_branch
                %4864 = sbr.rel (%p4862) target = $region63
              $region60: #{tpu_custom_call.1} parent=55 // loop_body
                %v4868 = vld [vmem:[%s4866] sm:%s4859]
                %4869 = vst [vmem:[%s4867] sm:%s4859] %v4868
                %v4870 = vld [vmem:[%s4866 + $0x8] sm:%s4859]
                %4871 = vst [vmem:[%s4867 + $0x8] sm:%s4859] %v4870
                %v4872 = vld [vmem:[%s4866 + $0x10] sm:%s4859]
                %4873 = vst [vmem:[%s4867 + $0x10] sm:%s4859] %v4872
                %v4874 = vld [vmem:[%s4866 + $0x18] sm:%s4859]
                %4875 = vst [vmem:[%s4867 + $0x18] sm:%s4859] %v4874
                %v4876 = vld [vmem:[%s4866 + $0x20] sm:%s4859]
                %4877 = vst [vmem:[%s4867 + $0x20] sm:%s4859] %v4876
                %v4878 = vld [vmem:[%s4866 + $0x28] sm:%s4859]
                %4879 = vst [vmem:[%s4867 + $0x28] sm:%s4859] %v4878
                %v4880 = vld [vmem:[%s4866 + $0x30] sm:%s4859]
                %4881 = vst [vmem:[%s4867 + $0x30] sm:%s4859] %v4880
                %v4882 = vld [vmem:[%s4866 + $0x38] sm:%s4859]
                %4883 = vst [vmem:[%s4867 + $0x38] sm:%s4859] %v4882
                %v4884 = vld [vmem:[%s4866 + $0x40] sm:%s4859]
                %4885 = vst [vmem:[%s4867 + $0x40] sm:%s4859] %v4884
                %v4886 = vld [vmem:[%s4866 + $0x48] sm:%s4859]
                %4887 = vst [vmem:[%s4867 + $0x48] sm:%s4859] %v4886
                %v4888 = vld [vmem:[%s4866 + $0x50] sm:%s4859]
                %4889 = vst [vmem:[%s4867 + $0x50] sm:%s4859] %v4888
                %v4890 = vld [vmem:[%s4866 + $0x58] sm:%s4859]
                %4891 = vst [vmem:[%s4867 + $0x58] sm:%s4859] %v4890
                %v4892 = vld [vmem:[%s4866 + $0x60] sm:%s4859]
                %4893 = vst [vmem:[%s4867 + $0x60] sm:%s4859] %v4892
                %v4894 = vld [vmem:[%s4866 + $0x68] sm:%s4859]
                %4895 = vst [vmem:[%s4867 + $0x68] sm:%s4859] %v4894
                %v4896 = vld [vmem:[%s4866 + $0x70] sm:%s4859]
                %4897 = vst [vmem:[%s4867 + $0x70] sm:%s4859] %v4896
                %v4898 = vld [vmem:[%s4866 + $0x78] sm:%s4859]
                %4899 = vst [vmem:[%s4867 + $0x78] sm:%s4859] %v4898
                %v4900 = vld [vmem:[%s4866 + $0x80] sm:%s4859]
                %4901 = vst [vmem:[%s4867 + $0x80] sm:%s4859] %v4900
                %v4902 = vld [vmem:[%s4866 + $0x88] sm:%s4859]
                %4903 = vst [vmem:[%s4867 + $0x88] sm:%s4859] %v4902
                %v4904 = vld [vmem:[%s4866 + $0x90] sm:%s4859]
                %4905 = vst [vmem:[%s4867 + $0x90] sm:%s4859] %v4904
                %v4906 = vld [vmem:[%s4866 + $0x98] sm:%s4859]
                %4907 = vst [vmem:[%s4867 + $0x98] sm:%s4859] %v4906
                %v4908 = vld [vmem:[%s4866 + $0xa0] sm:%s4859]
                %4909 = vst [vmem:[%s4867 + $0xa0] sm:%s4859] %v4908
                %v4910 = vld [vmem:[%s4866 + $0xa8] sm:%s4859]
                %4911 = vst [vmem:[%s4867 + $0xa8] sm:%s4859] %v4910
                %v4912 = vld [vmem:[%s4866 + $0xb0] sm:%s4859]
                %4913 = vst [vmem:[%s4867 + $0xb0] sm:%s4859] %v4912
                %v4914 = vld [vmem:[%s4866 + $0xb8] sm:%s4859]
                %4915 = vst [vmem:[%s4867 + $0xb8] sm:%s4859] %v4914
                %v4916 = vld [vmem:[%s4866 + $0xc0] sm:%s4859]
                %4917 = vst [vmem:[%s4867 + $0xc0] sm:%s4859] %v4916
                %v4918 = vld [vmem:[%s4866 + $0xc8] sm:%s4859]
                %4919 = vst [vmem:[%s4867 + $0xc8] sm:%s4859] %v4918
                %v4920 = vld [vmem:[%s4866 + $0xd0] sm:%s4859]
                %4921 = vst [vmem:[%s4867 + $0xd0] sm:%s4859] %v4920
                %v4922 = vld [vmem:[%s4866 + $0xd8] sm:%s4859]
                %4923 = vst [vmem:[%s4867 + $0xd8] sm:%s4859] %v4922
                %v4924 = vld [vmem:[%s4866 + $0xe0] sm:%s4859]
                %4925 = vst [vmem:[%s4867 + $0xe0] sm:%s4859] %v4924
                %v4926 = vld [vmem:[%s4866 + $0xe8] sm:%s4859]
                %4927 = vst [vmem:[%s4867 + $0xe8] sm:%s4859] %v4926
                %v4928 = vld [vmem:[%s4866 + $0xf0] sm:%s4859]
                %4929 = vst [vmem:[%s4867 + $0xf0] sm:%s4859] %v4928
                %v4930 = vld [vmem:[%s4866 + $0xf8] sm:%s4859]
                %4931 = vst [vmem:[%s4867 + $0xf8] sm:%s4859] %v4930
                %v4932 = vld [vmem:[%s4866 + $0x100] sm:%s4859]
                %4933 = vst [vmem:[%s4867 + $0x100] sm:%s4859] %v4932
                %v4934 = vld [vmem:[%s4866 + $0x108] sm:%s4859]
                %4935 = vst [vmem:[%s4867 + $0x108] sm:%s4859] %v4934
                %v4936 = vld [vmem:[%s4866 + $0x110] sm:%s4859]
                %4937 = vst [vmem:[%s4867 + $0x110] sm:%s4859] %v4936
                %v4938 = vld [vmem:[%s4866 + $0x118] sm:%s4859]
                %4939 = vst [vmem:[%s4867 + $0x118] sm:%s4859] %v4938
                %v4940 = vld [vmem:[%s4866 + $0x120] sm:%s4859]
                %4941 = vst [vmem:[%s4867 + $0x120] sm:%s4859] %v4940
                %v4942 = vld [vmem:[%s4866 + $0x128] sm:%s4859]
                %4943 = vst [vmem:[%s4867 + $0x128] sm:%s4859] %v4942
                %v4944 = vld [vmem:[%s4866 + $0x130] sm:%s4859]
                %4945 = vst [vmem:[%s4867 + $0x130] sm:%s4859] %v4944
                %v4946 = vld [vmem:[%s4866 + $0x138] sm:%s4859]
                %4947 = vst [vmem:[%s4867 + $0x138] sm:%s4859] %v4946
                %v4948 = vld [vmem:[%s4866 + $0x140] sm:%s4859]
                %4949 = vst [vmem:[%s4867 + $0x140] sm:%s4859] %v4948
                %v4950 = vld [vmem:[%s4866 + $0x148] sm:%s4859]
                %4951 = vst [vmem:[%s4867 + $0x148] sm:%s4859] %v4950
                %v4952 = vld [vmem:[%s4866 + $0x150] sm:%s4859]
                %4953 = vst [vmem:[%s4867 + $0x150] sm:%s4859] %v4952
                %v4954 = vld [vmem:[%s4866 + $0x158] sm:%s4859]
                %4955 = vst [vmem:[%s4867 + $0x158] sm:%s4859] %v4954
                %v4956 = vld [vmem:[%s4866 + $0x160] sm:%s4859]
                %4957 = vst [vmem:[%s4867 + $0x160] sm:%s4859] %v4956
                %v4958 = vld [vmem:[%s4866 + $0x168] sm:%s4859]
                %4959 = vst [vmem:[%s4867 + $0x168] sm:%s4859] %v4958
                %v4960 = vld [vmem:[%s4866 + $0x170] sm:%s4859]
                %4961 = vst [vmem:[%s4867 + $0x170] sm:%s4859] %v4960
                %v4962 = vld [vmem:[%s4866 + $0x178] sm:%s4859]
                %4963 = vst [vmem:[%s4867 + $0x178] sm:%s4859] %v4962
                %v4964 = vld [vmem:[%s4866 + $0x180] sm:%s4859]
                %4965 = vst [vmem:[%s4867 + $0x180] sm:%s4859] %v4964
                %v4966 = vld [vmem:[%s4866 + $0x188] sm:%s4859]
                %4967 = vst [vmem:[%s4867 + $0x188] sm:%s4859] %v4966
                %v4968 = vld [vmem:[%s4866 + $0x190] sm:%s4859]
                %4969 = vst [vmem:[%s4867 + $0x190] sm:%s4859] %v4968
                %v4970 = vld [vmem:[%s4866 + $0x198] sm:%s4859]
                %4971 = vst [vmem:[%s4867 + $0x198] sm:%s4859] %v4970
                %v4972 = vld [vmem:[%s4866 + $0x1a0] sm:%s4859]
                %4973 = vst [vmem:[%s4867 + $0x1a0] sm:%s4859] %v4972
                %v4974 = vld [vmem:[%s4866 + $0x1a8] sm:%s4859]
                %4975 = vst [vmem:[%s4867 + $0x1a8] sm:%s4859] %v4974
                %v4976 = vld [vmem:[%s4866 + $0x1b0] sm:%s4859]
                %4977 = vst [vmem:[%s4867 + $0x1b0] sm:%s4859] %v4976
                %v4978 = vld [vmem:[%s4866 + $0x1b8] sm:%s4859]
                %4979 = vst [vmem:[%s4867 + $0x1b8] sm:%s4859] %v4978
                %v4980 = vld [vmem:[%s4866 + $0x1c0] sm:%s4859]
                %4981 = vst [vmem:[%s4867 + $0x1c0] sm:%s4859] %v4980
                %v4982 = vld [vmem:[%s4866 + $0x1c8] sm:%s4859]
                %4983 = vst [vmem:[%s4867 + $0x1c8] sm:%s4859] %v4982
                %v4984 = vld [vmem:[%s4866 + $0x1d0] sm:%s4859]
                %4985 = vst [vmem:[%s4867 + $0x1d0] sm:%s4859] %v4984
                %v4986 = vld [vmem:[%s4866 + $0x1d8] sm:%s4859]
                %4987 = vst [vmem:[%s4867 + $0x1d8] sm:%s4859] %v4986
                %v4988 = vld [vmem:[%s4866 + $0x1e0] sm:%s4859]
                %4989 = vst [vmem:[%s4867 + $0x1e0] sm:%s4859] %v4988
                %v4990 = vld [vmem:[%s4866 + $0x1e8] sm:%s4859]
                %4991 = vst [vmem:[%s4867 + $0x1e8] sm:%s4859] %v4990
                %v4992 = vld [vmem:[%s4866 + $0x1f0] sm:%s4859]
                %4993 = vst [vmem:[%s4867 + $0x1f0] sm:%s4859] %v4992
                %v4994 = vld [vmem:[%s4866 + $0x1f8] sm:%s4859]
                %4995 = vst [vmem:[%s4867 + $0x1f8] sm:%s4859] %v4994
                %v4996 = vld [vmem:[%s4866 + $0x200] sm:%s4859]
                %4997 = vst [vmem:[%s4867 + $0x200] sm:%s4859] %v4996
                %v4998 = vld [vmem:[%s4866 + $0x208] sm:%s4859]
                %4999 = vst [vmem:[%s4867 + $0x208] sm:%s4859] %v4998
                %v5000 = vld [vmem:[%s4866 + $0x210] sm:%s4859]
                %5001 = vst [vmem:[%s4867 + $0x210] sm:%s4859] %v5000
                %v5002 = vld [vmem:[%s4866 + $0x218] sm:%s4859]
                %5003 = vst [vmem:[%s4867 + $0x218] sm:%s4859] %v5002
                %v5004 = vld [vmem:[%s4866 + $0x220] sm:%s4859]
                %5005 = vst [vmem:[%s4867 + $0x220] sm:%s4859] %v5004
                %v5006 = vld [vmem:[%s4866 + $0x228] sm:%s4859]
                %5007 = vst [vmem:[%s4867 + $0x228] sm:%s4859] %v5006
                %v5008 = vld [vmem:[%s4866 + $0x230] sm:%s4859]
                %5009 = vst [vmem:[%s4867 + $0x230] sm:%s4859] %v5008
                %v5010 = vld [vmem:[%s4866 + $0x238] sm:%s4859]
                %5011 = vst [vmem:[%s4867 + $0x238] sm:%s4859] %v5010
                %v5012 = vld [vmem:[%s4866 + $0x240] sm:%s4859]
                %5013 = vst [vmem:[%s4867 + $0x480] sm:%s4859] %v5012
                %v5014 = vld [vmem:[%s4866 + $0x248] sm:%s4859]
                %5015 = vst [vmem:[%s4867 + $0x488] sm:%s4859] %v5014
                %v5016 = vld [vmem:[%s4866 + $0x250] sm:%s4859]
                %5017 = vst [vmem:[%s4867 + $0x490] sm:%s4859] %v5016
                %v5018 = vld [vmem:[%s4866 + $0x258] sm:%s4859]
                %5019 = vst [vmem:[%s4867 + $0x498] sm:%s4859] %v5018
                %v5020 = vld [vmem:[%s4866 + $0x260] sm:%s4859]
                %5021 = vst [vmem:[%s4867 + $0x4a0] sm:%s4859] %v5020
                %v5022 = vld [vmem:[%s4866 + $0x268] sm:%s4859]
                %5023 = vst [vmem:[%s4867 + $0x4a8] sm:%s4859] %v5022
                %v5024 = vld [vmem:[%s4866 + $0x270] sm:%s4859]
                %5025 = vst [vmem:[%s4867 + $0x4b0] sm:%s4859] %v5024
                %v5026 = vld [vmem:[%s4866 + $0x278] sm:%s4859]
                %5027 = vst [vmem:[%s4867 + $0x4b8] sm:%s4859] %v5026
                %v5028 = vld [vmem:[%s4866 + $0x280] sm:%s4859]
                %5029 = vst [vmem:[%s4867 + $0x4c0] sm:%s4859] %v5028
                %v5030 = vld [vmem:[%s4866 + $0x288] sm:%s4859]
                %5031 = vst [vmem:[%s4867 + $0x4c8] sm:%s4859] %v5030
                %v5032 = vld [vmem:[%s4866 + $0x290] sm:%s4859]
                %5033 = vst [vmem:[%s4867 + $0x4d0] sm:%s4859] %v5032
                %v5034 = vld [vmem:[%s4866 + $0x298] sm:%s4859]
                %5035 = vst [vmem:[%s4867 + $0x4d8] sm:%s4859] %v5034
                %v5036 = vld [vmem:[%s4866 + $0x2a0] sm:%s4859]
                %5037 = vst [vmem:[%s4867 + $0x4e0] sm:%s4859] %v5036
                %v5038 = vld [vmem:[%s4866 + $0x2a8] sm:%s4859]
                %5039 = vst [vmem:[%s4867 + $0x4e8] sm:%s4859] %v5038
                %v5040 = vld [vmem:[%s4866 + $0x2b0] sm:%s4859]
                %5041 = vst [vmem:[%s4867 + $0x4f0] sm:%s4859] %v5040
                %v5042 = vld [vmem:[%s4866 + $0x2b8] sm:%s4859]
                %5043 = vst [vmem:[%s4867 + $0x4f8] sm:%s4859] %v5042
                %v5044 = vld [vmem:[%s4866 + $0x2c0] sm:%s4859]
                %5045 = vst [vmem:[%s4867 + $0x500] sm:%s4859] %v5044
                %v5046 = vld [vmem:[%s4866 + $0x2c8] sm:%s4859]
                %5047 = vst [vmem:[%s4867 + $0x508] sm:%s4859] %v5046
                %v5048 = vld [vmem:[%s4866 + $0x2d0] sm:%s4859]
                %5049 = vst [vmem:[%s4867 + $0x510] sm:%s4859] %v5048
                %v5050 = vld [vmem:[%s4866 + $0x2d8] sm:%s4859]
                %5051 = vst [vmem:[%s4867 + $0x518] sm:%s4859] %v5050
                %v5052 = vld [vmem:[%s4866 + $0x2e0] sm:%s4859]
                %5053 = vst [vmem:[%s4867 + $0x520] sm:%s4859] %v5052
                %v5054 = vld [vmem:[%s4866 + $0x2e8] sm:%s4859]
                %5055 = vst [vmem:[%s4867 + $0x528] sm:%s4859] %v5054
                %v5056 = vld [vmem:[%s4866 + $0x2f0] sm:%s4859]
                %5057 = vst [vmem:[%s4867 + $0x530] sm:%s4859] %v5056
                %v5058 = vld [vmem:[%s4866 + $0x2f8] sm:%s4859]
                %5059 = vst [vmem:[%s4867 + $0x538] sm:%s4859] %v5058
                %v5060 = vld [vmem:[%s4866 + $0x300] sm:%s4859]
                %5061 = vst [vmem:[%s4867 + $0x540] sm:%s4859] %v5060
                %v5062 = vld [vmem:[%s4866 + $0x308] sm:%s4859]
                %5063 = vst [vmem:[%s4867 + $0x548] sm:%s4859] %v5062
                %v5064 = vld [vmem:[%s4866 + $0x310] sm:%s4859]
                %5065 = vst [vmem:[%s4867 + $0x550] sm:%s4859] %v5064
                %v5066 = vld [vmem:[%s4866 + $0x318] sm:%s4859]
                %5067 = vst [vmem:[%s4867 + $0x558] sm:%s4859] %v5066
                %v5068 = vld [vmem:[%s4866 + $0x320] sm:%s4859]
                %5069 = vst [vmem:[%s4867 + $0x560] sm:%s4859] %v5068
                %v5070 = vld [vmem:[%s4866 + $0x328] sm:%s4859]
                %5071 = vst [vmem:[%s4867 + $0x568] sm:%s4859] %v5070
                %v5072 = vld [vmem:[%s4866 + $0x330] sm:%s4859]
                %5073 = vst [vmem:[%s4867 + $0x570] sm:%s4859] %v5072
                %v5074 = vld [vmem:[%s4866 + $0x338] sm:%s4859]
                %5075 = vst [vmem:[%s4867 + $0x578] sm:%s4859] %v5074
                %v5076 = vld [vmem:[%s4866 + $0x340] sm:%s4859]
                %5077 = vst [vmem:[%s4867 + $0x580] sm:%s4859] %v5076
                %v5078 = vld [vmem:[%s4866 + $0x348] sm:%s4859]
                %5079 = vst [vmem:[%s4867 + $0x588] sm:%s4859] %v5078
                %v5080 = vld [vmem:[%s4866 + $0x350] sm:%s4859]
                %5081 = vst [vmem:[%s4867 + $0x590] sm:%s4859] %v5080
                %v5082 = vld [vmem:[%s4866 + $0x358] sm:%s4859]
                %5083 = vst [vmem:[%s4867 + $0x598] sm:%s4859] %v5082
                %v5084 = vld [vmem:[%s4866 + $0x360] sm:%s4859]
                %5085 = vst [vmem:[%s4867 + $0x5a0] sm:%s4859] %v5084
                %v5086 = vld [vmem:[%s4866 + $0x368] sm:%s4859]
                %5087 = vst [vmem:[%s4867 + $0x5a8] sm:%s4859] %v5086
                %v5088 = vld [vmem:[%s4866 + $0x370] sm:%s4859]
                %5089 = vst [vmem:[%s4867 + $0x5b0] sm:%s4859] %v5088
                %v5090 = vld [vmem:[%s4866 + $0x378] sm:%s4859]
                %5091 = vst [vmem:[%s4867 + $0x5b8] sm:%s4859] %v5090
                %v5092 = vld [vmem:[%s4866 + $0x380] sm:%s4859]
                %5093 = vst [vmem:[%s4867 + $0x5c0] sm:%s4859] %v5092
                %v5094 = vld [vmem:[%s4866 + $0x388] sm:%s4859]
                %5095 = vst [vmem:[%s4867 + $0x5c8] sm:%s4859] %v5094
                %v5096 = vld [vmem:[%s4866 + $0x390] sm:%s4859]
                %5097 = vst [vmem:[%s4867 + $0x5d0] sm:%s4859] %v5096
                %v5098 = vld [vmem:[%s4866 + $0x398] sm:%s4859]
                %5099 = vst [vmem:[%s4867 + $0x5d8] sm:%s4859] %v5098
                %v5100 = vld [vmem:[%s4866 + $0x3a0] sm:%s4859]
                %5101 = vst [vmem:[%s4867 + $0x5e0] sm:%s4859] %v5100
                %v5102 = vld [vmem:[%s4866 + $0x3a8] sm:%s4859]
                %5103 = vst [vmem:[%s4867 + $0x5e8] sm:%s4859] %v5102
                %v5104 = vld [vmem:[%s4866 + $0x3b0] sm:%s4859]
                %5105 = vst [vmem:[%s4867 + $0x5f0] sm:%s4859] %v5104
                %v5106 = vld [vmem:[%s4866 + $0x3b8] sm:%s4859]
                %5107 = vst [vmem:[%s4867 + $0x5f8] sm:%s4859] %v5106
                %v5108 = vld [vmem:[%s4866 + $0x3c0] sm:%s4859]
                %5109 = vst [vmem:[%s4867 + $0x600] sm:%s4859] %v5108
                %v5110 = vld [vmem:[%s4866 + $0x3c8] sm:%s4859]
                %5111 = vst [vmem:[%s4867 + $0x608] sm:%s4859] %v5110
                %v5112 = vld [vmem:[%s4866 + $0x3d0] sm:%s4859]
                %5113 = vst [vmem:[%s4867 + $0x610] sm:%s4859] %v5112
                %v5114 = vld [vmem:[%s4866 + $0x3d8] sm:%s4859]
                %5115 = vst [vmem:[%s4867 + $0x618] sm:%s4859] %v5114
                %v5116 = vld [vmem:[%s4866 + $0x3e0] sm:%s4859]
                %5117 = vst [vmem:[%s4867 + $0x620] sm:%s4859] %v5116
                %v5118 = vld [vmem:[%s4866 + $0x3e8] sm:%s4859]
                %5119 = vst [vmem:[%s4867 + $0x628] sm:%s4859] %v5118
                %v5120 = vld [vmem:[%s4866 + $0x3f0] sm:%s4859]
                %5121 = vst [vmem:[%s4867 + $0x630] sm:%s4859] %v5120
                %v5122 = vld [vmem:[%s4866 + $0x3f8] sm:%s4859]
                %5123 = vst [vmem:[%s4867 + $0x638] sm:%s4859] %v5122
                %v5124 = vld [vmem:[%s4866 + $0x400] sm:%s4859]
                %5125 = vst [vmem:[%s4867 + $0x640] sm:%s4859] %v5124
                %v5126 = vld [vmem:[%s4866 + $0x408] sm:%s4859]
                %5127 = vst [vmem:[%s4867 + $0x648] sm:%s4859] %v5126
                %v5128 = vld [vmem:[%s4866 + $0x410] sm:%s4859]
                %5129 = vst [vmem:[%s4867 + $0x650] sm:%s4859] %v5128
                %v5130 = vld [vmem:[%s4866 + $0x418] sm:%s4859]
                %5131 = vst [vmem:[%s4867 + $0x658] sm:%s4859] %v5130
                %v5132 = vld [vmem:[%s4866 + $0x420] sm:%s4859]
                %5133 = vst [vmem:[%s4867 + $0x660] sm:%s4859] %v5132
                %v5134 = vld [vmem:[%s4866 + $0x428] sm:%s4859]
                %5135 = vst [vmem:[%s4867 + $0x668] sm:%s4859] %v5134
                %v5136 = vld [vmem:[%s4866 + $0x430] sm:%s4859]
                %5137 = vst [vmem:[%s4867 + $0x670] sm:%s4859] %v5136
                %v5138 = vld [vmem:[%s4866 + $0x438] sm:%s4859]
                %5139 = vst [vmem:[%s4867 + $0x678] sm:%s4859] %v5138
                %v5140 = vld [vmem:[%s4866 + $0x440] sm:%s4859]
                %5141 = vst [vmem:[%s4867 + $0x680] sm:%s4859] %v5140
                %v5142 = vld [vmem:[%s4866 + $0x448] sm:%s4859]
                %5143 = vst [vmem:[%s4867 + $0x688] sm:%s4859] %v5142
                %v5144 = vld [vmem:[%s4866 + $0x450] sm:%s4859]
                %5145 = vst [vmem:[%s4867 + $0x690] sm:%s4859] %v5144
                %v5146 = vld [vmem:[%s4866 + $0x458] sm:%s4859]
                %5147 = vst [vmem:[%s4867 + $0x698] sm:%s4859] %v5146
                %v5148 = vld [vmem:[%s4866 + $0x460] sm:%s4859]
                %5149 = vst [vmem:[%s4867 + $0x6a0] sm:%s4859] %v5148
                %v5150 = vld [vmem:[%s4866 + $0x468] sm:%s4859]
                %5151 = vst [vmem:[%s4867 + $0x6a8] sm:%s4859] %v5150
                %v5152 = vld [vmem:[%s4866 + $0x470] sm:%s4859]
                %5153 = vst [vmem:[%s4867 + $0x6b0] sm:%s4859] %v5152
                %v5154 = vld [vmem:[%s4866 + $0x478] sm:%s4859]
                %5155 = vst [vmem:[%s4867 + $0x6b8] sm:%s4859] %v5154
                %v5156 = vld [vmem:[%s4866 + $0x480] sm:%s4859]
                %5157 = vst [vmem:[%s4867 + $0x900] sm:%s4859] %v5156
                %v5158 = vld [vmem:[%s4866 + $0x488] sm:%s4859]
                %5159 = vst [vmem:[%s4867 + $0x908] sm:%s4859] %v5158
                %v5160 = vld [vmem:[%s4866 + $0x490] sm:%s4859]
                %5161 = vst [vmem:[%s4867 + $0x910] sm:%s4859] %v5160
                %v5162 = vld [vmem:[%s4866 + $0x498] sm:%s4859]
                %5163 = vst [vmem:[%s4867 + $0x918] sm:%s4859] %v5162
                %v5164 = vld [vmem:[%s4866 + $0x4a0] sm:%s4859]
                %5165 = vst [vmem:[%s4867 + $0x920] sm:%s4859] %v5164
                %v5166 = vld [vmem:[%s4866 + $0x4a8] sm:%s4859]
                %5167 = vst [vmem:[%s4867 + $0x928] sm:%s4859] %v5166
                %v5168 = vld [vmem:[%s4866 + $0x4b0] sm:%s4859]
                %5169 = vst [vmem:[%s4867 + $0x930] sm:%s4859] %v5168
                %v5170 = vld [vmem:[%s4866 + $0x4b8] sm:%s4859]
                %5171 = vst [vmem:[%s4867 + $0x938] sm:%s4859] %v5170
                %v5172 = vld [vmem:[%s4866 + $0x4c0] sm:%s4859]
                %5173 = vst [vmem:[%s4867 + $0x940] sm:%s4859] %v5172
                %v5174 = vld [vmem:[%s4866 + $0x4c8] sm:%s4859]
                %5175 = vst [vmem:[%s4867 + $0x948] sm:%s4859] %v5174
                %v5176 = vld [vmem:[%s4866 + $0x4d0] sm:%s4859]
                %5177 = vst [vmem:[%s4867 + $0x950] sm:%s4859] %v5176
                %v5178 = vld [vmem:[%s4866 + $0x4d8] sm:%s4859]
                %5179 = vst [vmem:[%s4867 + $0x958] sm:%s4859] %v5178
                %v5180 = vld [vmem:[%s4866 + $0x4e0] sm:%s4859]
                %5181 = vst [vmem:[%s4867 + $0x960] sm:%s4859] %v5180
                %v5182 = vld [vmem:[%s4866 + $0x4e8] sm:%s4859]
                %5183 = vst [vmem:[%s4867 + $0x968] sm:%s4859] %v5182
                %v5184 = vld [vmem:[%s4866 + $0x4f0] sm:%s4859]
                %5185 = vst [vmem:[%s4867 + $0x970] sm:%s4859] %v5184
                %v5186 = vld [vmem:[%s4866 + $0x4f8] sm:%s4859]
                %5187 = vst [vmem:[%s4867 + $0x978] sm:%s4859] %v5186
                %v5188 = vld [vmem:[%s4866 + $0x500] sm:%s4859]
                %5189 = vst [vmem:[%s4867 + $0x980] sm:%s4859] %v5188
                %v5190 = vld [vmem:[%s4866 + $0x508] sm:%s4859]
                %5191 = vst [vmem:[%s4867 + $0x988] sm:%s4859] %v5190
                %v5192 = vld [vmem:[%s4866 + $0x510] sm:%s4859]
                %5193 = vst [vmem:[%s4867 + $0x990] sm:%s4859] %v5192
                %v5194 = vld [vmem:[%s4866 + $0x518] sm:%s4859]
                %5195 = vst [vmem:[%s4867 + $0x998] sm:%s4859] %v5194
                %v5196 = vld [vmem:[%s4866 + $0x520] sm:%s4859]
                %5197 = vst [vmem:[%s4867 + $0x9a0] sm:%s4859] %v5196
                %v5198 = vld [vmem:[%s4866 + $0x528] sm:%s4859]
                %5199 = vst [vmem:[%s4867 + $0x9a8] sm:%s4859] %v5198
                %v5200 = vld [vmem:[%s4866 + $0x530] sm:%s4859]
                %5201 = vst [vmem:[%s4867 + $0x9b0] sm:%s4859] %v5200
                %v5202 = vld [vmem:[%s4866 + $0x538] sm:%s4859]
                %5203 = vst [vmem:[%s4867 + $0x9b8] sm:%s4859] %v5202
                %v5204 = vld [vmem:[%s4866 + $0x540] sm:%s4859]
                %5205 = vst [vmem:[%s4867 + $0x9c0] sm:%s4859] %v5204
                %v5206 = vld [vmem:[%s4866 + $0x548] sm:%s4859]
                %5207 = vst [vmem:[%s4867 + $0x9c8] sm:%s4859] %v5206
                %v5208 = vld [vmem:[%s4866 + $0x550] sm:%s4859]
                %5209 = vst [vmem:[%s4867 + $0x9d0] sm:%s4859] %v5208
                %v5210 = vld [vmem:[%s4866 + $0x558] sm:%s4859]
                %5211 = vst [vmem:[%s4867 + $0x9d8] sm:%s4859] %v5210
                %v5212 = vld [vmem:[%s4866 + $0x560] sm:%s4859]
                %5213 = vst [vmem:[%s4867 + $0x9e0] sm:%s4859] %v5212
                %v5214 = vld [vmem:[%s4866 + $0x568] sm:%s4859]
                %5215 = vst [vmem:[%s4867 + $0x9e8] sm:%s4859] %v5214
                %v5216 = vld [vmem:[%s4866 + $0x570] sm:%s4859]
                %5217 = vst [vmem:[%s4867 + $0x9f0] sm:%s4859] %v5216
                %v5218 = vld [vmem:[%s4866 + $0x578] sm:%s4859]
                %5219 = vst [vmem:[%s4867 + $0x9f8] sm:%s4859] %v5218
                %v5220 = vld [vmem:[%s4866 + $0x580] sm:%s4859]
                %5221 = vst [vmem:[%s4867 + $0xa00] sm:%s4859] %v5220
                %v5222 = vld [vmem:[%s4866 + $0x588] sm:%s4859]
                %5223 = vst [vmem:[%s4867 + $0xa08] sm:%s4859] %v5222
                %v5224 = vld [vmem:[%s4866 + $0x590] sm:%s4859]
                %5225 = vst [vmem:[%s4867 + $0xa10] sm:%s4859] %v5224
                %v5226 = vld [vmem:[%s4866 + $0x598] sm:%s4859]
                %5227 = vst [vmem:[%s4867 + $0xa18] sm:%s4859] %v5226
                %v5228 = vld [vmem:[%s4866 + $0x5a0] sm:%s4859]
                %5229 = vst [vmem:[%s4867 + $0xa20] sm:%s4859] %v5228
                %v5230 = vld [vmem:[%s4866 + $0x5a8] sm:%s4859]
                %5231 = vst [vmem:[%s4867 + $0xa28] sm:%s4859] %v5230
                %v5232 = vld [vmem:[%s4866 + $0x5b0] sm:%s4859]
                %5233 = vst [vmem:[%s4867 + $0xa30] sm:%s4859] %v5232
                %v5234 = vld [vmem:[%s4866 + $0x5b8] sm:%s4859]
                %5235 = vst [vmem:[%s4867 + $0xa38] sm:%s4859] %v5234
                %v5236 = vld [vmem:[%s4866 + $0x5c0] sm:%s4859]
                %5237 = vst [vmem:[%s4867 + $0xa40] sm:%s4859] %v5236
                %v5238 = vld [vmem:[%s4866 + $0x5c8] sm:%s4859]
                %5239 = vst [vmem:[%s4867 + $0xa48] sm:%s4859] %v5238
                %v5240 = vld [vmem:[%s4866 + $0x5d0] sm:%s4859]
                %5241 = vst [vmem:[%s4867 + $0xa50] sm:%s4859] %v5240
                %v5242 = vld [vmem:[%s4866 + $0x5d8] sm:%s4859]
                %5243 = vst [vmem:[%s4867 + $0xa58] sm:%s4859] %v5242
                %v5244 = vld [vmem:[%s4866 + $0x5e0] sm:%s4859]
                %5245 = vst [vmem:[%s4867 + $0xa60] sm:%s4859] %v5244
                %v5246 = vld [vmem:[%s4866 + $0x5e8] sm:%s4859]
                %5247 = vst [vmem:[%s4867 + $0xa68] sm:%s4859] %v5246
                %v5248 = vld [vmem:[%s4866 + $0x5f0] sm:%s4859]
                %5249 = vst [vmem:[%s4867 + $0xa70] sm:%s4859] %v5248
                %v5250 = vld [vmem:[%s4866 + $0x5f8] sm:%s4859]
                %5251 = vst [vmem:[%s4867 + $0xa78] sm:%s4859] %v5250
                %v5252 = vld [vmem:[%s4866 + $0x600] sm:%s4859]
                %5253 = vst [vmem:[%s4867 + $0xa80] sm:%s4859] %v5252
                %v5254 = vld [vmem:[%s4866 + $0x608] sm:%s4859]
                %5255 = vst [vmem:[%s4867 + $0xa88] sm:%s4859] %v5254
                %v5256 = vld [vmem:[%s4866 + $0x610] sm:%s4859]
                %5257 = vst [vmem:[%s4867 + $0xa90] sm:%s4859] %v5256
                %v5258 = vld [vmem:[%s4866 + $0x618] sm:%s4859]
                %5259 = vst [vmem:[%s4867 + $0xa98] sm:%s4859] %v5258
                %v5260 = vld [vmem:[%s4866 + $0x620] sm:%s4859]
                %5261 = vst [vmem:[%s4867 + $0xaa0] sm:%s4859] %v5260
                %v5262 = vld [vmem:[%s4866 + $0x628] sm:%s4859]
                %5263 = vst [vmem:[%s4867 + $0xaa8] sm:%s4859] %v5262
                %v5264 = vld [vmem:[%s4866 + $0x630] sm:%s4859]
                %5265 = vst [vmem:[%s4867 + $0xab0] sm:%s4859] %v5264
                %v5266 = vld [vmem:[%s4866 + $0x638] sm:%s4859]
                %5267 = vst [vmem:[%s4867 + $0xab8] sm:%s4859] %v5266
                %v5268 = vld [vmem:[%s4866 + $0x640] sm:%s4859]
                %5269 = vst [vmem:[%s4867 + $0xac0] sm:%s4859] %v5268
                %v5270 = vld [vmem:[%s4866 + $0x648] sm:%s4859]
                %5271 = vst [vmem:[%s4867 + $0xac8] sm:%s4859] %v5270
                %v5272 = vld [vmem:[%s4866 + $0x650] sm:%s4859]
                %5273 = vst [vmem:[%s4867 + $0xad0] sm:%s4859] %v5272
                %v5274 = vld [vmem:[%s4866 + $0x658] sm:%s4859]
                %5275 = vst [vmem:[%s4867 + $0xad8] sm:%s4859] %v5274
                %v5276 = vld [vmem:[%s4866 + $0x660] sm:%s4859]
                %5277 = vst [vmem:[%s4867 + $0xae0] sm:%s4859] %v5276
                %v5278 = vld [vmem:[%s4866 + $0x668] sm:%s4859]
                %5279 = vst [vmem:[%s4867 + $0xae8] sm:%s4859] %v5278
                %v5280 = vld [vmem:[%s4866 + $0x670] sm:%s4859]
                %5281 = vst [vmem:[%s4867 + $0xaf0] sm:%s4859] %v5280
                %v5282 = vld [vmem:[%s4866 + $0x678] sm:%s4859]
                %5283 = vst [vmem:[%s4867 + $0xaf8] sm:%s4859] %v5282
                %v5284 = vld [vmem:[%s4866 + $0x680] sm:%s4859]
                %5285 = vst [vmem:[%s4867 + $0xb00] sm:%s4859] %v5284
                %v5286 = vld [vmem:[%s4866 + $0x688] sm:%s4859]
                %5287 = vst [vmem:[%s4867 + $0xb08] sm:%s4859] %v5286
                %v5288 = vld [vmem:[%s4866 + $0x690] sm:%s4859]
                %5289 = vst [vmem:[%s4867 + $0xb10] sm:%s4859] %v5288
                %v5290 = vld [vmem:[%s4866 + $0x698] sm:%s4859]
                %5291 = vst [vmem:[%s4867 + $0xb18] sm:%s4859] %v5290
                %v5292 = vld [vmem:[%s4866 + $0x6a0] sm:%s4859]
                %5293 = vst [vmem:[%s4867 + $0xb20] sm:%s4859] %v5292
                %v5294 = vld [vmem:[%s4866 + $0x6a8] sm:%s4859]
                %5295 = vst [vmem:[%s4867 + $0xb28] sm:%s4859] %v5294
                %v5296 = vld [vmem:[%s4866 + $0x6b0] sm:%s4859]
                %5297 = vst [vmem:[%s4867 + $0xb30] sm:%s4859] %v5296
                %v5298 = vld [vmem:[%s4866 + $0x6b8] sm:%s4859]
                %5299 = vst [vmem:[%s4867 + $0xb38] sm:%s4859] %v5298
                %v5300 = vld [vmem:[%s4866 + $0x6c0] sm:%s4859]
                %5301 = vst [vmem:[%s4867 + $0xd80] sm:%s4859] %v5300
                %v5302 = vld [vmem:[%s4866 + $0x6c8] sm:%s4859]
                %5303 = vst [vmem:[%s4867 + $0xd88] sm:%s4859] %v5302
                %v5304 = vld [vmem:[%s4866 + $0x6d0] sm:%s4859]
                %5305 = vst [vmem:[%s4867 + $0xd90] sm:%s4859] %v5304
                %v5306 = vld [vmem:[%s4866 + $0x6d8] sm:%s4859]
                %5307 = vst [vmem:[%s4867 + $0xd98] sm:%s4859] %v5306
                %v5308 = vld [vmem:[%s4866 + $0x6e0] sm:%s4859]
                %5309 = vst [vmem:[%s4867 + $0xda0] sm:%s4859] %v5308
                %v5310 = vld [vmem:[%s4866 + $0x6e8] sm:%s4859]
                %5311 = vst [vmem:[%s4867 + $0xda8] sm:%s4859] %v5310
                %v5312 = vld [vmem:[%s4866 + $0x6f0] sm:%s4859]
                %5313 = vst [vmem:[%s4867 + $0xdb0] sm:%s4859] %v5312
                %v5314 = vld [vmem:[%s4866 + $0x6f8] sm:%s4859]
                %5315 = vst [vmem:[%s4867 + $0xdb8] sm:%s4859] %v5314
                %v5316 = vld [vmem:[%s4866 + $0x700] sm:%s4859]
                %5317 = vst [vmem:[%s4867 + $0xdc0] sm:%s4859] %v5316
                %v5318 = vld [vmem:[%s4866 + $0x708] sm:%s4859]
                %5319 = vst [vmem:[%s4867 + $0xdc8] sm:%s4859] %v5318
                %v5320 = vld [vmem:[%s4866 + $0x710] sm:%s4859]
                %5321 = vst [vmem:[%s4867 + $0xdd0] sm:%s4859] %v5320
                %v5322 = vld [vmem:[%s4866 + $0x718] sm:%s4859]
                %5323 = vst [vmem:[%s4867 + $0xdd8] sm:%s4859] %v5322
                %v5324 = vld [vmem:[%s4866 + $0x720] sm:%s4859]
                %5325 = vst [vmem:[%s4867 + $0xde0] sm:%s4859] %v5324
                %v5326 = vld [vmem:[%s4866 + $0x728] sm:%s4859]
                %5327 = vst [vmem:[%s4867 + $0xde8] sm:%s4859] %v5326
                %v5328 = vld [vmem:[%s4866 + $0x730] sm:%s4859]
                %5329 = vst [vmem:[%s4867 + $0xdf0] sm:%s4859] %v5328
                %v5330 = vld [vmem:[%s4866 + $0x738] sm:%s4859]
                %5331 = vst [vmem:[%s4867 + $0xdf8] sm:%s4859] %v5330
                %v5332 = vld [vmem:[%s4866 + $0x740] sm:%s4859]
                %5333 = vst [vmem:[%s4867 + $0xe00] sm:%s4859] %v5332
                %v5334 = vld [vmem:[%s4866 + $0x748] sm:%s4859]
                %5335 = vst [vmem:[%s4867 + $0xe08] sm:%s4859] %v5334
                %v5336 = vld [vmem:[%s4866 + $0x750] sm:%s4859]
                %5337 = vst [vmem:[%s4867 + $0xe10] sm:%s4859] %v5336
                %v5338 = vld [vmem:[%s4866 + $0x758] sm:%s4859]
                %5339 = vst [vmem:[%s4867 + $0xe18] sm:%s4859] %v5338
                %v5340 = vld [vmem:[%s4866 + $0x760] sm:%s4859]
                %5341 = vst [vmem:[%s4867 + $0xe20] sm:%s4859] %v5340
                %v5342 = vld [vmem:[%s4866 + $0x768] sm:%s4859]
                %5343 = vst [vmem:[%s4867 + $0xe28] sm:%s4859] %v5342
                %v5344 = vld [vmem:[%s4866 + $0x770] sm:%s4859]
                %5345 = vst [vmem:[%s4867 + $0xe30] sm:%s4859] %v5344
                %v5346 = vld [vmem:[%s4866 + $0x778] sm:%s4859]
                %5347 = vst [vmem:[%s4867 + $0xe38] sm:%s4859] %v5346
                %v5348 = vld [vmem:[%s4866 + $0x780] sm:%s4859]
                %5349 = vst [vmem:[%s4867 + $0xe40] sm:%s4859] %v5348
                %v5350 = vld [vmem:[%s4866 + $0x788] sm:%s4859]
                %5351 = vst [vmem:[%s4867 + $0xe48] sm:%s4859] %v5350
                %v5352 = vld [vmem:[%s4866 + $0x790] sm:%s4859]
                %5353 = vst [vmem:[%s4867 + $0xe50] sm:%s4859] %v5352
                %v5354 = vld [vmem:[%s4866 + $0x798] sm:%s4859]
                %5355 = vst [vmem:[%s4867 + $0xe58] sm:%s4859] %v5354
                %v5356 = vld [vmem:[%s4866 + $0x7a0] sm:%s4859]
                %5357 = vst [vmem:[%s4867 + $0xe60] sm:%s4859] %v5356
                %v5358 = vld [vmem:[%s4866 + $0x7a8] sm:%s4859]
                %5359 = vst [vmem:[%s4867 + $0xe68] sm:%s4859] %v5358
                %v5360 = vld [vmem:[%s4866 + $0x7b0] sm:%s4859]
                %5361 = vst [vmem:[%s4867 + $0xe70] sm:%s4859] %v5360
                %v5362 = vld [vmem:[%s4866 + $0x7b8] sm:%s4859]
                %5363 = vst [vmem:[%s4867 + $0xe78] sm:%s4859] %v5362
                %v5364 = vld [vmem:[%s4866 + $0x7c0] sm:%s4859]
                %5365 = vst [vmem:[%s4867 + $0xe80] sm:%s4859] %v5364
                %v5366 = vld [vmem:[%s4866 + $0x7c8] sm:%s4859]
                %5367 = vst [vmem:[%s4867 + $0xe88] sm:%s4859] %v5366
                %v5368 = vld [vmem:[%s4866 + $0x7d0] sm:%s4859]
                %5369 = vst [vmem:[%s4867 + $0xe90] sm:%s4859] %v5368
                %v5370 = vld [vmem:[%s4866 + $0x7d8] sm:%s4859]
                %5371 = vst [vmem:[%s4867 + $0xe98] sm:%s4859] %v5370
                %v5372 = vld [vmem:[%s4866 + $0x7e0] sm:%s4859]
                %5373 = vst [vmem:[%s4867 + $0xea0] sm:%s4859] %v5372
                %v5374 = vld [vmem:[%s4866 + $0x7e8] sm:%s4859]
                %5375 = vst [vmem:[%s4867 + $0xea8] sm:%s4859] %v5374
                %v5376 = vld [vmem:[%s4866 + $0x7f0] sm:%s4859]
                %5377 = vst [vmem:[%s4867 + $0xeb0] sm:%s4859] %v5376
                %v5378 = vld [vmem:[%s4866 + $0x7f8] sm:%s4859]
                %5379 = vst [vmem:[%s4867 + $0xeb8] sm:%s4859] %v5378
                %v5380 = vld [vmem:[%s4866 + $0x800] sm:%s4859]
                %5381 = vst [vmem:[%s4867 + $0xec0] sm:%s4859] %v5380
                %v5382 = vld [vmem:[%s4866 + $0x808] sm:%s4859]
                %5383 = vst [vmem:[%s4867 + $0xec8] sm:%s4859] %v5382
                %v5384 = vld [vmem:[%s4866 + $0x810] sm:%s4859]
                %5385 = vst [vmem:[%s4867 + $0xed0] sm:%s4859] %v5384
                %v5386 = vld [vmem:[%s4866 + $0x818] sm:%s4859]
                %5387 = vst [vmem:[%s4867 + $0xed8] sm:%s4859] %v5386
                %v5388 = vld [vmem:[%s4866 + $0x820] sm:%s4859]
                %5389 = vst [vmem:[%s4867 + $0xee0] sm:%s4859] %v5388
                %v5390 = vld [vmem:[%s4866 + $0x828] sm:%s4859]
                %5391 = vst [vmem:[%s4867 + $0xee8] sm:%s4859] %v5390
                %v5392 = vld [vmem:[%s4866 + $0x830] sm:%s4859]
                %5393 = vst [vmem:[%s4867 + $0xef0] sm:%s4859] %v5392
                %v5394 = vld [vmem:[%s4866 + $0x838] sm:%s4859]
                %5395 = vst [vmem:[%s4867 + $0xef8] sm:%s4859] %v5394
                %v5396 = vld [vmem:[%s4866 + $0x840] sm:%s4859]
                %5397 = vst [vmem:[%s4867 + $0xf00] sm:%s4859] %v5396
                %v5398 = vld [vmem:[%s4866 + $0x848] sm:%s4859]
                %5399 = vst [vmem:[%s4867 + $0xf08] sm:%s4859] %v5398
                %v5400 = vld [vmem:[%s4866 + $0x850] sm:%s4859]
                %5401 = vst [vmem:[%s4867 + $0xf10] sm:%s4859] %v5400
                %v5402 = vld [vmem:[%s4866 + $0x858] sm:%s4859]
                %5403 = vst [vmem:[%s4867 + $0xf18] sm:%s4859] %v5402
                %v5404 = vld [vmem:[%s4866 + $0x860] sm:%s4859]
                %5405 = vst [vmem:[%s4867 + $0xf20] sm:%s4859] %v5404
                %v5406 = vld [vmem:[%s4866 + $0x868] sm:%s4859]
                %5407 = vst [vmem:[%s4867 + $0xf28] sm:%s4859] %v5406
                %v5408 = vld [vmem:[%s4866 + $0x870] sm:%s4859]
                %5409 = vst [vmem:[%s4867 + $0xf30] sm:%s4859] %v5408
                %v5410 = vld [vmem:[%s4866 + $0x878] sm:%s4859]
                %5411 = vst [vmem:[%s4867 + $0xf38] sm:%s4859] %v5410
                %v5412 = vld [vmem:[%s4866 + $0x880] sm:%s4859]
                %5413 = vst [vmem:[%s4867 + $0xf40] sm:%s4859] %v5412
                %v5414 = vld [vmem:[%s4866 + $0x888] sm:%s4859]
                %5415 = vst [vmem:[%s4867 + $0xf48] sm:%s4859] %v5414
                %v5416 = vld [vmem:[%s4866 + $0x890] sm:%s4859]
                %5417 = vst [vmem:[%s4867 + $0xf50] sm:%s4859] %v5416
                %v5418 = vld [vmem:[%s4866 + $0x898] sm:%s4859]
                %5419 = vst [vmem:[%s4867 + $0xf58] sm:%s4859] %v5418
                %v5420 = vld [vmem:[%s4866 + $0x8a0] sm:%s4859]
                %5421 = vst [vmem:[%s4867 + $0xf60] sm:%s4859] %v5420
                %v5422 = vld [vmem:[%s4866 + $0x8a8] sm:%s4859]
                %5423 = vst [vmem:[%s4867 + $0xf68] sm:%s4859] %v5422
                %v5424 = vld [vmem:[%s4866 + $0x8b0] sm:%s4859]
                %5425 = vst [vmem:[%s4867 + $0xf70] sm:%s4859] %v5424
                %v5426 = vld [vmem:[%s4866 + $0x8b8] sm:%s4859]
                %5427 = vst [vmem:[%s4867 + $0xf78] sm:%s4859] %v5426
                %v5428 = vld [vmem:[%s4866 + $0x8c0] sm:%s4859]
                %5429 = vst [vmem:[%s4867 + $0xf80] sm:%s4859] %v5428
                %v5430 = vld [vmem:[%s4866 + $0x8c8] sm:%s4859]
                %5431 = vst [vmem:[%s4867 + $0xf88] sm:%s4859] %v5430
                %v5432 = vld [vmem:[%s4866 + $0x8d0] sm:%s4859]
                %5433 = vst [vmem:[%s4867 + $0xf90] sm:%s4859] %v5432
                %v5434 = vld [vmem:[%s4866 + $0x8d8] sm:%s4859]
                %5435 = vst [vmem:[%s4867 + $0xf98] sm:%s4859] %v5434
                %v5436 = vld [vmem:[%s4866 + $0x8e0] sm:%s4859]
                %5437 = vst [vmem:[%s4867 + $0xfa0] sm:%s4859] %v5436
                %v5438 = vld [vmem:[%s4866 + $0x8e8] sm:%s4859]
                %5439 = vst [vmem:[%s4867 + $0xfa8] sm:%s4859] %v5438
                %v5440 = vld [vmem:[%s4866 + $0x8f0] sm:%s4859]
                %5441 = vst [vmem:[%s4867 + $0xfb0] sm:%s4859] %v5440
                %v5442 = vld [vmem:[%s4866 + $0x8f8] sm:%s4859]
                %5443 = vst [vmem:[%s4867 + $0xfb8] sm:%s4859] %v5442
              $region61: #{tpu_custom_call.1} parent=55 // loop_footer
                %s4865 = sadd.s32 1, %s4861
              $region62: #{tpu_custom_call.1} parent=55 // loop_footer_branch
                %4860 = sbr.rel target = $region58
              $region63: #{tpu_custom_call.1} parent=55 // loop_exit
                _
            $region56: #{tpu_custom_call.1} parent=47 // pred_fallthru
              _
          $region48: #{tpu_custom_call.1} parent=43 // pred_fallthru
            _
          %6032 = vnop
        $region44: #{tpu_custom_call.1} parent=31 // pred_fallthru
          _
      $region32: #{tpu_custom_call.1} parent=5 // pred_fallthru
        _
      %p6033 = scmp.le.s32.totalorder 2, %s11
      // Predicated region
      $region79: #{tpu_custom_call.1} parent=5 // pred_check
        %p6034 = pneg %p6033
      $region80: #{tpu_custom_call.1} parent=5 // pred_check_branch
        %6036 = sbr.rel (%p6034) target = $region82
      $region81: #{tpu_custom_call.1} parent=5 // pred_region
        %s6037 = ssub.s32 %s11, 2
        // Predicated region
        $region83: #{tpu_custom_call.1} parent=81 // pred_check
          %p6038 = pneg %p124
        $region84: #{tpu_custom_call.1} parent=81 // pred_check_branch
          %6040 = sbr.rel (%p6038) target = $region86
        $region85: #{tpu_custom_call.1} parent=81 // pred_region
          %s6041 = sand.u32 %s109, 1
          %s6042 = sand.u32 %s109, 1
          %s6043 = smul.addr %s6042, 2304
          %s6044 = scalar_lea.vmem [#allocation6], %s6043
        $region86: #{tpu_custom_call.1} parent=81 // pred_fallthru
          _
      $region82: #{tpu_custom_call.1} parent=5 // pred_fallthru
        _
    $region6: #{tpu_custom_call.1} parent=1 // loop_footer
      %s15 = sadd.s32 1, %s11
    $region7: #{tpu_custom_call.1} parent=1 // loop_footer_branch
      %10 = sbr.rel target = $region3
    $region8: #{tpu_custom_call.1} parent=1 // loop_exit
      _
    %6045 = vsyncpa [#allocation3], 1
    %s6046 = scalar_lea.sflag [#allocation3], 1
    %6047 = vsyncpa %s6046, 1
    %6048 = vsyncpa [#allocation5], 1

</llo_original>
